<compile_context>
chip_gen: v7x
topology: tpu7x:2x2x1
jax: 0.10.0
libtpu: 0.0.40
codegen_flags: <defaults>
</compile_context>

<pallas_src>
import functools

import numpy as np
import jax
import jax.numpy as jnp
from jax.experimental import pallas as pl
from jax.experimental.pallas import tpu as pltpu


WEIGHT_ORDER = (
    "w_qkv", "b_qkv", "w_osa", "b_osa", "g1", "be1",
    "w_q", "b_q", "w_kv", "b_kv", "w_oca", "b_oca", "g2", "be2",
    "w1", "b1", "w2", "b2", "g3", "be3",
)


def _layer_norm(x, gamma, beta, eps=1e-5):
    mean = jnp.mean(x, axis=-1, keepdims=True)
    var = jnp.mean((x - mean) ** 2, axis=-1, keepdims=True)
    return gamma * ((x - mean) / jnp.sqrt(var + eps)) + beta


def _softmax(s):
    # Last-axis softmax in f32; divide goes to the EUP via approx reciprocal
    # (~1e-3 rel error, well inside the comparison tolerance).
    m = jnp.max(s, axis=-1, keepdims=True)
    e = jnp.exp(s - m)
    return e * pl.reciprocal(jnp.sum(e, axis=-1, keepdims=True), approx=True)


def decoder_layer_kernel(
    x_enc_ref, x_dec_ref,
    w_qkv_ref, b_qkv_ref, w_osa_ref, b_osa_ref, g1_ref, be1_ref,
    w_q_ref, b_q_ref, w_kv_ref, b_kv_ref, w_oca_ref, b_oca_ref, g2_ref, be2_ref,
    w1_ref, b1_ref, w2_ref, b2_ref, g3_ref, be3_ref,
    out_ref,
    *, n_heads, head_size,
):
    D = n_heads * head_size
    bf16 = jnp.bfloat16

    x_enc = x_enc_ref[...]        # (Te, D) f32 — leading batch dim squeezed by BlockSpec
    x_dec = x_dec_ref[...]        # (Td, D) f32

    def mha(q, k, v):
        # q: (Tq, D), k/v: (Tk, D) f32.  Columns are head-contiguous, so one
        # reshape + (1,0,2) relayout per operand gives the leading-batch
        # (H, T, hs) layout Mosaic's batched dot_general requires.
        Tq, Tk = q.shape[0], k.shape[0]
        q3 = jnp.transpose(q.reshape(Tq, n_heads, head_size), (1, 0, 2)).astype(bf16)
        k3 = jnp.transpose(k.reshape(Tk, n_heads, head_size), (1, 0, 2)).astype(bf16)
        v3 = jnp.transpose(v.reshape(Tk, n_heads, head_size), (1, 0, 2)).astype(bf16)
        s = jnp.einsum("hqd,hkd->hqk", q3, k3,
                       preferred_element_type=jnp.float32)        # (H, Tq, Tk)
        p = _softmax(s).astype(bf16)
        ctx = jnp.einsum("hqk,hkd->hqd", p, v3,
                         preferred_element_type=jnp.float32)      # (H, Tq, hs)
        return jnp.transpose(ctx, (1, 0, 2)).reshape(Tq, D)       # (Tq, D) f32

    # ------------------- multi-head self-attention (x_dec) -------------------
    # TODO(synk): attention masks not wired through (mask=None path only).
    # 1/sqrt(head_size) is pre-folded into the Q columns of w_qkv / b_qkv.
    qkv = jnp.dot(x_dec.astype(bf16), w_qkv_ref[...],
                  preferred_element_type=jnp.float32) + b_qkv_ref[...]
    sa = mha(qkv[:, :D], qkv[:, D:2 * D], qkv[:, 2 * D:])
    sa = jnp.dot(sa.astype(bf16), w_osa_ref[...],
                 preferred_element_type=jnp.float32) + b_osa_ref[...]
    res = _layer_norm(sa + x_dec, g1_ref[...], be1_ref[...])       # f32

    # ----------------- multi-head cross-attention (enc -> k,v) ---------------
    kv = jnp.dot(x_enc.astype(bf16), w_kv_ref[...],
                 preferred_element_type=jnp.float32) + b_kv_ref[...]
    q2 = jnp.dot(res.astype(bf16), w_q_ref[...],
                 preferred_element_type=jnp.float32) + b_q_ref[...]   # scale pre-folded
    ca = mha(q2, kv[:, :D], kv[:, D:])
    ca = jnp.dot(ca.astype(bf16), w_oca_ref[...],
                 preferred_element_type=jnp.float32) + b_oca_ref[...]
    res2 = _layer_norm(ca + res, g2_ref[...], be2_ref[...])

    # --------------------------------- FFN -----------------------------------
    h = jnp.dot(res2.astype(bf16), w1_ref[...],
                preferred_element_type=jnp.float32) + b1_ref[...]
    h = jnp.maximum(h, 0.0)
    ff = jnp.dot(h.astype(bf16), w2_ref[...],
                 preferred_element_type=jnp.float32) + b2_ref[...]
    out = _layer_norm(ff + res2, g3_ref[...], be3_ref[...])

    out_ref[...] = out.astype(out_ref.dtype)


def _head_slab_to_blocked_perm(d_model, n_heads, n_parts):
    """Column perm: per-head [q|k|v] slabs -> blocked [Q_all | K_all | V_all]."""
    hs = d_model // n_heads
    idx = np.arange(n_parts * d_model).reshape(n_heads, n_parts, hs)
    return jnp.asarray(idx.transpose(1, 0, 2).reshape(-1))


def prepare_params(params, n_heads):
    """One-time host-side weight prep (call at init/load time, NOT per step).

    * Permute qkv/kv projection columns from per-head [q|k|v] slabs to
      head-contiguous [Q_all | K_all | V_all] blocks.
    * Fold 1/sqrt(head_size) into the Q projection columns and biases.
    * Cast matmul weights to bf16 (biases / LayerNorm params stay f32).
    """
    D = params["w_osa"].shape[0]
    hs = D // n_heads
    scale = 1.0 / (hs ** 0.5)
    bf16 = jnp.bfloat16
    perm3 = _head_slab_to_blocked_perm(D, n_heads, 3)
    perm2 = _head_slab_to_blocked_perm(D, n_heads, 2)

    w_qkv = params["w_qkv"][:, perm3].at[:, :D].multiply(scale)
    b_qkv = params["b_qkv"][:, perm3].at[:, :D].multiply(scale)

    return dict(
        w_qkv=w_qkv.astype(bf16), b_qkv=b_qkv,
        w_osa=params["w_osa"].astype(bf16), b_osa=params["b_osa"],
        g1=params["g1"], be1=params["be1"],
        w_q=(params["w_q"] * scale).astype(bf16), b_q=params["b_q"] * scale,
        w_kv=params["w_kv"][:, perm2].astype(bf16), b_kv=params["b_kv"][:, perm2],
        w_oca=params["w_oca"].astype(bf16), b_oca=params["b_oca"],
        g2=params["g2"], be2=params["be2"],
        w1=params["w1"].astype(bf16), b1=params["b1"],
        w2=params["w2"].astype(bf16), b2=params["b2"],
        g3=params["g3"], be3=params["be3"],
    )


def _vmem_limit_bytes(weights, T, Te, D, d_ff, n_heads):
    # Footprint-derived limit (NOT the full per-TC VMEM): weights (worst-case
    # double-buffered if Buffered(1) is unsupported), double-buffered I/O
    # tiles, in-kernel activation temporaries, +30% headroom and a few MiB for
    # Mosaic internal scratch.  Capped well below the 128 MiB / 64 MiB caps.
    weight_bytes = sum(int(w.size) * w.dtype.itemsize for w in weights)
    io_bytes = 2 * 4 * (Te * D + 2 * T * D)
    act_bytes = 4 * (3 * T * D + 2 * Te * D
                     + 2 * n_heads * T * max(T, Te)
                     + T * d_ff + 8 * T * D)
    total = 2 * weight_bytes + io_bytes + act_bytes
    return min(int(total * 1.3) + (4 << 20), 96 << 20)


def _cost_estimate(weights, B, T, Te, D, d_ff, n_heads):
    proj_flops = (2 * T * D * 3 * D            # qkv projection
                  + 2 * Te * D * 2 * D         # kv projection
                  + 3 * 2 * T * D * D          # q, self-out, cross-out projections
                  + 2 * 2 * T * D * d_ff)      # FFN
    attn_flops = 4 * T * T * D + 4 * T * Te * D
    weight_bytes = sum(int(w.size) * w.dtype.itemsize for w in weights)
    return pl.CostEstimate(
        flops=B * (proj_flops + attn_flops),
        transcendentals=B * (n_heads * T * (T + Te) + 16 * T),
        bytes_accessed=weight_bytes + 4 * B * (2 * T * D + Te * D),
    )


def decoder_layer(x_enc, x_dec, prepared_params, n_heads):
    B, T, D = x_dec.shape
    Te = x_enc.shape[1]
    hs = D // n_heads
    weights = [prepared_params[k] for k in WEIGHT_ORDER]
    d_ff = prepared_params["w1"].shape[1]

    # Leading batch dim squeezed: kernel sees clean (T, D) refs, stores stay
    # fully lane-dense.
    enc_spec = pl.BlockSpec((None, Te, D), lambda b: (b, 0, 0))
    dec_spec = pl.BlockSpec((None, T, D), lambda b: (b, 0, 0))
    out_spec = pl.BlockSpec((None, T, D), lambda b: (b, 0, 0))

    kernel = functools.partial(decoder_layer_kernel, n_heads=n_heads, head_size=hs)
    compiler_params = pltpu.CompilerParams(
        dimension_semantics=("parallel",),
        vmem_limit_bytes=_vmem_limit_bytes(weights, T, Te, D, d_ff, n_heads),
    )
    cost = _cost_estimate(weights, B, T, Te, D, d_ff, n_heads)

    def run(single_buffer_weights):
        if single_buffer_weights:
            # Grid-invariant operands: constant index_map, nothing to pipeline
            # -> single buffer, halving their VMEM footprint.
            weight_specs = [
                pl.BlockSpec(w.shape, lambda b: (0, 0), pipeline_mode=pl.Buffered(1))
                for w in weights
            ]
        else:
            weight_specs = [pl.BlockSpec(w.shape, lambda b: (0, 0)) for w in weights]
        return pl.pallas_call(
            kernel,
            out_shape=jax.ShapeDtypeStruct((B, T, D), jnp.float32),
            grid=(B,),
            in_specs=[enc_spec, dec_spec] + weight_specs,
            out_specs=out_spec,
            compiler_params=compiler_params,
            cost_estimate=cost,
        )(x_enc, x_dec, *weights)

    try:
        return run(single_buffer_weights=True)
    except Exception:
        # Fallback for jax versions without BlockSpec.pipeline_mode /
        # Buffered(1) support: default double-buffered weight specs.
        return run(single_buffer_weights=False)


def init_params(key, d_model, d_ff):
    D = d_model
    ks = jax.random.split(key, 12)

    def w(k, shape):
        return jax.random.normal(k, shape, jnp.float32) * 0.02

    return dict(
        # MultiHeadSA
        w_qkv=w(ks[0], (D, 3 * D)), b_qkv=w(ks[1], (1, 3 * D)),
        w_osa=w(ks[2], (D, D)), b_osa=w(ks[3], (1, D)),
        g1=jnp.ones((1, D), jnp.float32), be1=jnp.zeros((1, D), jnp.float32),
        # MultiHeadCA
        w_q=w(ks[4], (D, D)), b_q=w(ks[5], (1, D)),
        w_kv=w(ks[6], (D, 2 * D)), b_kv=w(ks[7], (1, 2 * D)),
        w_oca=w(ks[8], (D, D)), b_oca=w(ks[9], (1, D)),
        g2=jnp.ones((1, D), jnp.float32), be2=jnp.zeros((1, D), jnp.float32),
        # FeedForward
        w1=w(ks[10], (D, d_ff)), b1=jnp.zeros((1, d_ff), jnp.float32),
        w2=w(ks[11], (d_ff, D)), b2=jnp.zeros((1, D), jnp.float32),
        g3=jnp.ones((1, D), jnp.float32), be3=jnp.zeros((1, D), jnp.float32),
    )


def reference(x_enc, x_dec, params, n_heads):
    """Pure-JAX f32 mirror of the PyTorch Decoder_Layer forward (eval mode)."""
    B, T, D = x_dec.shape
    hs = D // n_heads

    def ln(x, g, b, eps=1e-5):
        m = x.mean(-1, keepdims=True)
        v = ((x - m) ** 2).mean(-1, keepdims=True)
        return g[0] * (x - m) / jnp.sqrt(v + eps) + b[0]

    def attn(q, k, v):  # (B, H, T, hs)
        s = jnp.einsum("bhqd,bhkd->bhqk", q, k) / (hs ** 0.5)
        p = jax.nn.softmax(s, axis=-1)
        return jnp.einsum("bhqk,bhkd->bhqd", p, v)

    qkv = x_dec @ params["w_qkv"] + params["b_qkv"][0]
    qkv = qkv.reshape(B, T, n_heads, 3 * hs).transpose(0, 2, 1, 3)
    q, k, v = jnp.split(qkv, 3, axis=-1)
    sa = attn(q, k, v).transpose(0, 2, 1, 3).reshape(B, T, D)
    sa = sa @ params["w_osa"] + params["b_osa"][0]
    res = ln(sa + x_dec, params["g1"], params["be1"])

    kv = x_enc @ params["w_kv"] + params["b_kv"][0]
    kv = kv.reshape(B, T, n_heads, 2 * hs).transpose(0, 2, 1, 3)
    k2, v2 = jnp.split(kv, 2, axis=-1)
    q2 = (res @ params["w_q"] + params["b_q"][0]).reshape(B, T, n_heads, hs).transpose(0, 2, 1, 3)
    ca = attn(q2, k2, v2).transpose(0, 2, 1, 3).reshape(B, T, D)
    ca = ca @ params["w_oca"] + params["b_oca"][0]
    res2 = ln(ca + res, params["g2"], params["be2"])

    h = jax.nn.relu(res2 @ params["w1"] + params["b1"][0])
    ff = h @ params["w2"] + params["b2"][0]
    return ln(ff + res2, params["g3"], params["be3"])


if __name__ == "__main__":
    B, T = 2, 16
    input_dim = d_model = 128   # input_dim == d_model (required by residual add); lane-dense
    n_heads, d_ff = 4, 256

    key = jax.random.PRNGKey(0)
    k_enc, k_dec, k_par = jax.random.split(key, 3)
    x_enc = jax.random.normal(k_enc, (B, T, d_model), jnp.float32)
    x_dec = jax.random.normal(k_dec, (B, T, input_dim), jnp.float32)
    params = init_params(k_par, d_model, d_ff)

    # One-time weight preparation (permute + fold scale + bf16 cast).
    prepped = prepare_params(params, n_heads)

    out = decoder_layer(x_enc, x_dec, prepped, n_heads)
    out = jax.block_until_ready(out)

    ref = reference(x_enc, x_dec, params, n_heads)
    assert out.shape == (B, T, d_model)
    assert jnp.allclose(out, ref, atol=2e-2, rtol=2e-2), (
        f"max abs diff {float(jnp.max(jnp.abs(out - ref)))}")

    print("KERNEL_OK")
</pallas_src>

<mosaic_0001>
module attributes {stable_mosaic.version = 11 : i64} {
  func.func @decoder_layer_kernel(%arg0: i32, %arg1: memref<1x16x128xf32, #tpu.memory_space<vmem>>, %arg2: memref<1x16x128xf32, #tpu.memory_space<vmem>>, %arg3: memref<128x384xbf16, #tpu.memory_space<vmem>>, %arg4: memref<1x384xf32, #tpu.memory_space<vmem>>, %arg5: memref<128x128xbf16, #tpu.memory_space<vmem>>, %arg6: memref<1x128xf32, #tpu.memory_space<vmem>>, %arg7: memref<1x128xf32, #tpu.memory_space<vmem>>, %arg8: memref<1x128xf32, #tpu.memory_space<vmem>>, %arg9: memref<128x128xbf16, #tpu.memory_space<vmem>>, %arg10: memref<1x128xf32, #tpu.memory_space<vmem>>, %arg11: memref<128x256xbf16, #tpu.memory_space<vmem>>, %arg12: memref<1x256xf32, #tpu.memory_space<vmem>>, %arg13: memref<128x128xbf16, #tpu.memory_space<vmem>>, %arg14: memref<1x128xf32, #tpu.memory_space<vmem>>, %arg15: memref<1x128xf32, #tpu.memory_space<vmem>>, %arg16: memref<1x128xf32, #tpu.memory_space<vmem>>, %arg17: memref<128x256xbf16, #tpu.memory_space<vmem>>, %arg18: memref<1x256xf32, #tpu.memory_space<vmem>>, %arg19: memref<256x128xbf16, #tpu.memory_space<vmem>>, %arg20: memref<1x128xf32, #tpu.memory_space<vmem>>, %arg21: memref<1x128xf32, #tpu.memory_space<vmem>>, %arg22: memref<1x128xf32, #tpu.memory_space<vmem>>, %arg23: memref<1x16x128xf32, #tpu.memory_space<vmem>>) attributes {dimension_semantics = [#tpu.dimension_semantics<parallel>], iteration_bounds = array<i64: 2>, scalar_prefetch = 0 : i64, scratch_operands = 0 : i64, tpu.core_type = #tpu.core_type<tc>, window_params = [{transform_indices = @transform_0, window_bounds = array<i64: 1, 16, 128>}, {transform_indices = @transform_1, window_bounds = array<i64: 1, 16, 128>}, {pipeline_mode = #tpu.pipeline_mode<synchronous>, transform_indices = @transform_2, window_bounds = array<i64: 128, 384>}, {pipeline_mode = #tpu.pipeline_mode<synchronous>, transform_indices = @transform_3, window_bounds = array<i64: 1, 384>}, {pipeline_mode = #tpu.pipeline_mode<synchronous>, transform_indices = @transform_4, window_bounds = array<i64: 128, 128>}, {pipeline_mode = #tpu.pipeline_mode<synchronous>, transform_indices = @transform_5, window_bounds = array<i64: 1, 128>}, {pipeline_mode = #tpu.pipeline_mode<synchronous>, transform_indices = @transform_6, window_bounds = array<i64: 1, 128>}, {pipeline_mode = #tpu.pipeline_mode<synchronous>, transform_indices = @transform_7, window_bounds = array<i64: 1, 128>}, {pipeline_mode = #tpu.pipeline_mode<synchronous>, transform_indices = @transform_8, window_bounds = array<i64: 128, 128>}, {pipeline_mode = #tpu.pipeline_mode<synchronous>, transform_indices = @transform_9, window_bounds = array<i64: 1, 128>}, {pipeline_mode = #tpu.pipeline_mode<synchronous>, transform_indices = @transform_10, window_bounds = array<i64: 128, 256>}, {pipeline_mode = #tpu.pipeline_mode<synchronous>, transform_indices = @transform_11, window_bounds = array<i64: 1, 256>}, {pipeline_mode = #tpu.pipeline_mode<synchronous>, transform_indices = @transform_12, window_bounds = array<i64: 128, 128>}, {pipeline_mode = #tpu.pipeline_mode<synchronous>, transform_indices = @transform_13, window_bounds = array<i64: 1, 128>}, {pipeline_mode = #tpu.pipeline_mode<synchronous>, transform_indices = @transform_14, window_bounds = array<i64: 1, 128>}, {pipeline_mode = #tpu.pipeline_mode<synchronous>, transform_indices = @transform_15, window_bounds = array<i64: 1, 128>}, {pipeline_mode = #tpu.pipeline_mode<synchronous>, transform_indices = @transform_16, window_bounds = array<i64: 128, 256>}, {pipeline_mode = #tpu.pipeline_mode<synchronous>, transform_indices = @transform_17, window_bounds = array<i64: 1, 256>}, {pipeline_mode = #tpu.pipeline_mode<synchronous>, transform_indices = @transform_18, window_bounds = array<i64: 256, 128>}, {pipeline_mode = #tpu.pipeline_mode<synchronous>, transform_indices = @transform_19, window_bounds = array<i64: 1, 128>}, {pipeline_mode = #tpu.pipeline_mode<synchronous>, transform_indices = @transform_20, window_bounds = array<i64: 1, 128>}, {pipeline_mode = #tpu.pipeline_mode<synchronous>, transform_indices = @transform_21, window_bounds = array<i64: 1, 128>}, {transform_indices = @transform_22, window_bounds = array<i64: 1, 16, 128>}]} {
    %c0 = arith.constant 0 : index
    %c0_0 = arith.constant 0 : index
    %c0_1 = arith.constant 0 : index
    %0 = vector.load %arg1[%c0, %c0_0, %c0_1] : memref<1x16x128xf32, #tpu.memory_space<vmem>>, vector<1x16x128xf32>
    %1 = vector.shape_cast %0 : vector<1x16x128xf32> to vector<16x128xf32>
    %c0_2 = arith.constant 0 : index
    %c0_3 = arith.constant 0 : index
    %c0_4 = arith.constant 0 : index
    %2 = vector.load %arg2[%c0_2, %c0_3, %c0_4] : memref<1x16x128xf32, #tpu.memory_space<vmem>>, vector<1x16x128xf32>
    %3 = vector.shape_cast %2 : vector<1x16x128xf32> to vector<16x128xf32>
    %4 = arith.truncf %3 : vector<16x128xf32> to vector<16x128xbf16>
    %c0_5 = arith.constant 0 : index
    %c0_6 = arith.constant 0 : index
    %5 = vector.load %arg3[%c0_5, %c0_6] : memref<128x384xbf16, #tpu.memory_space<vmem>>, vector<128x384xbf16>
    %cst = arith.constant dense<0.000000e+00> : vector<16x384xf32>
    %6 = tpu.matmul %4, %5, %cst {dimension_numbers = #tpu.dot_dimension_numbers<[1], [0], [0], [1], [0, 0, 1, 1], [], []>} : vector<16x128xbf16>, vector<128x384xbf16>, vector<16x384xf32> -> vector<16x384xf32>
    %c0_7 = arith.constant 0 : index
    %c0_8 = arith.constant 0 : index
    %7 = vector.load %arg4[%c0_7, %c0_8] : memref<1x384xf32, #tpu.memory_space<vmem>>, vector<1x384xf32>
    %8 = vector.broadcast %7 : vector<1x384xf32> to vector<16x384xf32>
    %9 = arith.addf %6, %8 : vector<16x384xf32>
    %10 = vector.extract_strided_slice %9 {offsets = [0, 0], sizes = [16, 128], strides = [1, 1]} : vector<16x384xf32> to vector<16x128xf32>
    %11 = vector.extract_strided_slice %9 {offsets = [0, 128], sizes = [16, 128], strides = [1, 1]} : vector<16x384xf32> to vector<16x128xf32>
    %12 = vector.extract_strided_slice %9 {offsets = [0, 256], sizes = [16, 128], strides = [1, 1]} : vector<16x384xf32> to vector<16x128xf32>
    %13 = vector.shape_cast %10 : vector<16x128xf32> to vector<16x4x32xf32>
    %14 = tpu.transpose %13, [1, 0, 2] : vector<16x4x32xf32> -> vector<4x16x32xf32>
    %15 = arith.truncf %14 : vector<4x16x32xf32> to vector<4x16x32xbf16>
    %16 = vector.shape_cast %11 : vector<16x128xf32> to vector<16x4x32xf32>
    %17 = tpu.transpose %16, [1, 0, 2] : vector<16x4x32xf32> -> vector<4x16x32xf32>
    %18 = arith.truncf %17 : vector<4x16x32xf32> to vector<4x16x32xbf16>
    %19 = vector.shape_cast %12 : vector<16x128xf32> to vector<16x4x32xf32>
    %20 = tpu.transpose %19, [1, 0, 2] : vector<16x4x32xf32> -> vector<4x16x32xf32>
    %21 = arith.truncf %20 : vector<4x16x32xf32> to vector<4x16x32xbf16>
    "tpu.trace_start"() <{level = 10 : i32, message = "hqd,hkd->hqk"}> : () -> ()
    %cst_9 = arith.constant dense<0.000000e+00> : vector<4x16x16xf32>
    %22 = tpu.matmul %15, %18, %cst_9 {dimension_numbers = #tpu.dot_dimension_numbers<[2], [2], [1], [1], [0, 0, 0, 1, 1, 1], [0], [0]>} : vector<4x16x32xbf16>, vector<4x16x32xbf16>, vector<4x16x16xf32> -> vector<4x16x16xf32>
    "tpu.trace_stop"() : () -> ()
    %cst_10 = arith.constant dense<0xFF800000> : vector<4x16xf32>
    %23 = vector.multi_reduction <maximumf>, %22, %cst_10 [2] : vector<4x16x16xf32> to vector<4x16xf32>
    %24 = vector.shape_cast %23 : vector<4x16xf32> to vector<4x16x1xf32>
    %25 = vector.broadcast %24 : vector<4x16x1xf32> to vector<4x16x16xf32>
    %26 = arith.subf %22, %25 : vector<4x16x16xf32>
    %27 = math.exp %26 : vector<4x16x16xf32>
    %cst_11 = arith.constant dense<0.000000e+00> : vector<4x16xf32>
    %28 = vector.multi_reduction <add>, %27, %cst_11 [2] : vector<4x16x16xf32> to vector<4x16xf32>
    %29 = vector.shape_cast %28 : vector<4x16xf32> to vector<4x16x1xf32>
    %30 = tpu.reciprocal %29 {approx = true} : vector<4x16x1xf32> -> vector<4x16x1xf32>
    %31 = vector.broadcast %30 : vector<4x16x1xf32> to vector<4x16x16xf32>
    %32 = arith.mulf %27, %31 : vector<4x16x16xf32>
    %33 = arith.truncf %32 : vector<4x16x16xf32> to vector<4x16x16xbf16>
    "tpu.trace_start"() <{level = 10 : i32, message = "hqk,hkd->hqd"}> : () -> ()
    %cst_12 = arith.constant dense<0.000000e+00> : vector<4x16x32xf32>
    %34 = tpu.matmul %33, %21, %cst_12 {dimension_numbers = #tpu.dot_dimension_numbers<[2], [1], [1], [2], [0, 0, 0, 1, 1, 2], [0], [0]>} : vector<4x16x16xbf16>, vector<4x16x32xbf16>, vector<4x16x32xf32> -> vector<4x16x32xf32>
    "tpu.trace_stop"() : () -> ()
    %35 = tpu.transpose %34, [1, 0, 2] : vector<4x16x32xf32> -> vector<16x4x32xf32>
    %36 = vector.shape_cast %35 : vector<16x4x32xf32> to vector<16x128xf32>
    %37 = arith.truncf %36 : vector<16x128xf32> to vector<16x128xbf16>
    %c0_13 = arith.constant 0 : index
    %c0_14 = arith.constant 0 : index
    %38 = vector.load %arg5[%c0_13, %c0_14] : memref<128x128xbf16, #tpu.memory_space<vmem>>, vector<128x128xbf16>
    %cst_15 = arith.constant dense<0.000000e+00> : vector<16x128xf32>
    %39 = tpu.matmul %37, %38, %cst_15 {dimension_numbers = #tpu.dot_dimension_numbers<[1], [0], [0], [1], [0, 0, 1, 1], [], []>} : vector<16x128xbf16>, vector<128x128xbf16>, vector<16x128xf32> -> vector<16x128xf32>
    %c0_16 = arith.constant 0 : index
    %c0_17 = arith.constant 0 : index
    %40 = vector.load %arg6[%c0_16, %c0_17] : memref<1x128xf32, #tpu.memory_space<vmem>>, vector<1x128xf32>
    %41 = vector.broadcast %40 : vector<1x128xf32> to vector<16x128xf32>
    %42 = arith.addf %39, %41 : vector<16x128xf32>
    %43 = arith.addf %42, %3 : vector<16x128xf32>
    %c0_18 = arith.constant 0 : index
    %c0_19 = arith.constant 0 : index
    %44 = vector.load %arg7[%c0_18, %c0_19] : memref<1x128xf32, #tpu.memory_space<vmem>>, vector<1x128xf32>
    %c0_20 = arith.constant 0 : index
    %c0_21 = arith.constant 0 : index
    %45 = vector.load %arg8[%c0_20, %c0_21] : memref<1x128xf32, #tpu.memory_space<vmem>>, vector<1x128xf32>
    %cst_22 = arith.constant dense<0.000000e+00> : vector<16xf32>
    %46 = vector.multi_reduction <add>, %43, %cst_22 [1] : vector<16x128xf32> to vector<16xf32>
    %47 = vector.shape_cast %46 : vector<16xf32> to vector<16x1xf32>
    %cst_23 = arith.constant 1.280000e+02 : f32
    %48 = vector.broadcast %cst_23 : f32 to vector<16x1xf32>
    %49 = arith.divf %47, %48 : vector<16x1xf32>
    %50 = vector.broadcast %49 : vector<16x1xf32> to vector<16x128xf32>
    %51 = arith.subf %43, %50 : vector<16x128xf32>
    %52 = arith.mulf %51, %51 : vector<16x128xf32>
    %cst_24 = arith.constant dense<0.000000e+00> : vector<16xf32>
    %53 = vector.multi_reduction <add>, %52, %cst_24 [1] : vector<16x128xf32> to vector<16xf32>
    %54 = vector.shape_cast %53 : vector<16xf32> to vector<16x1xf32>
    %cst_25 = arith.constant 1.280000e+02 : f32
    %55 = vector.broadcast %cst_25 : f32 to vector<16x1xf32>
    %56 = arith.divf %54, %55 : vector<16x1xf32>
    %57 = vector.broadcast %49 : vector<16x1xf32> to vector<16x128xf32>
    %58 = arith.subf %43, %57 : vector<16x128xf32>
    %cst_26 = arith.constant 9.99999974E-6 : f32
    %59 = vector.broadcast %cst_26 : f32 to vector<16x1xf32>
    %60 = arith.addf %56, %59 : vector<16x1xf32>
    %61 = math.sqrt %60 : vector<16x1xf32>
    %62 = vector.broadcast %61 : vector<16x1xf32> to vector<16x128xf32>
    %63 = arith.divf %58, %62 : vector<16x128xf32>
    %64 = vector.broadcast %44 : vector<1x128xf32> to vector<16x128xf32>
    %65 = arith.mulf %64, %63 : vector<16x128xf32>
    %66 = vector.broadcast %45 : vector<1x128xf32> to vector<16x128xf32>
    %67 = arith.addf %65, %66 : vector<16x128xf32>
    %68 = arith.truncf %1 : vector<16x128xf32> to vector<16x128xbf16>
    %c0_27 = arith.constant 0 : index
    %c0_28 = arith.constant 0 : index
    %69 = vector.load %arg11[%c0_27, %c0_28] : memref<128x256xbf16, #tpu.memory_space<vmem>>, vector<128x256xbf16>
    %cst_29 = arith.constant dense<0.000000e+00> : vector<16x256xf32>
    %70 = tpu.matmul %68, %69, %cst_29 {dimension_numbers = #tpu.dot_dimension_numbers<[1], [0], [0], [1], [0, 0, 1, 1], [], []>} : vector<16x128xbf16>, vector<128x256xbf16>, vector<16x256xf32> -> vector<16x256xf32>
    %c0_30 = arith.constant 0 : index
    %c0_31 = arith.constant 0 : index
    %71 = vector.load %arg12[%c0_30, %c0_31] : memref<1x256xf32, #tpu.memory_space<vmem>>, vector<1x256xf32>
    %72 = vector.broadcast %71 : vector<1x256xf32> to vector<16x256xf32>
    %73 = arith.addf %70, %72 : vector<16x256xf32>
    %74 = arith.truncf %67 : vector<16x128xf32> to vector<16x128xbf16>
    %c0_32 = arith.constant 0 : index
    %c0_33 = arith.constant 0 : index
    %75 = vector.load %arg9[%c0_32, %c0_33] : memref<128x128xbf16, #tpu.memory_space<vmem>>, vector<128x128xbf16>
    %cst_34 = arith.constant dense<0.000000e+00> : vector<16x128xf32>
    %76 = tpu.matmul %74, %75, %cst_34 {dimension_numbers = #tpu.dot_dimension_numbers<[1], [0], [0], [1], [0, 0, 1, 1], [], []>} : vector<16x128xbf16>, vector<128x128xbf16>, vector<16x128xf32> -> vector<16x128xf32>
    %c0_35 = arith.constant 0 : index
    %c0_36 = arith.constant 0 : index
    %77 = vector.load %arg10[%c0_35, %c0_36] : memref<1x128xf32, #tpu.memory_space<vmem>>, vector<1x128xf32>
    %78 = vector.broadcast %77 : vector<1x128xf32> to vector<16x128xf32>
    %79 = arith.addf %76, %78 : vector<16x128xf32>
    %80 = vector.extract_strided_slice %73 {offsets = [0, 0], sizes = [16, 128], strides = [1, 1]} : vector<16x256xf32> to vector<16x128xf32>
    %81 = vector.extract_strided_slice %73 {offsets = [0, 128], sizes = [16, 128], strides = [1, 1]} : vector<16x256xf32> to vector<16x128xf32>
    %82 = vector.shape_cast %79 : vector<16x128xf32> to vector<16x4x32xf32>
    %83 = tpu.transpose %82, [1, 0, 2] : vector<16x4x32xf32> -> vector<4x16x32xf32>
    %84 = arith.truncf %83 : vector<4x16x32xf32> to vector<4x16x32xbf16>
    %85 = vector.shape_cast %80 : vector<16x128xf32> to vector<16x4x32xf32>
    %86 = tpu.transpose %85, [1, 0, 2] : vector<16x4x32xf32> -> vector<4x16x32xf32>
    %87 = arith.truncf %86 : vector<4x16x32xf32> to vector<4x16x32xbf16>
    %88 = vector.shape_cast %81 : vector<16x128xf32> to vector<16x4x32xf32>
    %89 = tpu.transpose %88, [1, 0, 2] : vector<16x4x32xf32> -> vector<4x16x32xf32>
    %90 = arith.truncf %89 : vector<4x16x32xf32> to vector<4x16x32xbf16>
    "tpu.trace_start"() <{level = 10 : i32, message = "hqd,hkd->hqk"}> : () -> ()
    %cst_37 = arith.constant dense<0.000000e+00> : vector<4x16x16xf32>
    %91 = tpu.matmul %84, %87, %cst_37 {dimension_numbers = #tpu.dot_dimension_numbers<[2], [2], [1], [1], [0, 0, 0, 1, 1, 1], [0], [0]>} : vector<4x16x32xbf16>, vector<4x16x32xbf16>, vector<4x16x16xf32> -> vector<4x16x16xf32>
    "tpu.trace_stop"() : () -> ()
    %cst_38 = arith.constant dense<0xFF800000> : vector<4x16xf32>
    %92 = vector.multi_reduction <maximumf>, %91, %cst_38 [2] : vector<4x16x16xf32> to vector<4x16xf32>
    %93 = vector.shape_cast %92 : vector<4x16xf32> to vector<4x16x1xf32>
    %94 = vector.broadcast %93 : vector<4x16x1xf32> to vector<4x16x16xf32>
    %95 = arith.subf %91, %94 : vector<4x16x16xf32>
    %96 = math.exp %95 : vector<4x16x16xf32>
    %cst_39 = arith.constant dense<0.000000e+00> : vector<4x16xf32>
    %97 = vector.multi_reduction <add>, %96, %cst_39 [2] : vector<4x16x16xf32> to vector<4x16xf32>
    %98 = vector.shape_cast %97 : vector<4x16xf32> to vector<4x16x1xf32>
    %99 = tpu.reciprocal %98 {approx = true} : vector<4x16x1xf32> -> vector<4x16x1xf32>
    %100 = vector.broadcast %99 : vector<4x16x1xf32> to vector<4x16x16xf32>
    %101 = arith.mulf %96, %100 : vector<4x16x16xf32>
    %102 = arith.truncf %101 : vector<4x16x16xf32> to vector<4x16x16xbf16>
    "tpu.trace_start"() <{level = 10 : i32, message = "hqk,hkd->hqd"}> : () -> ()
    %cst_40 = arith.constant dense<0.000000e+00> : vector<4x16x32xf32>
    %103 = tpu.matmul %102, %90, %cst_40 {dimension_numbers = #tpu.dot_dimension_numbers<[2], [1], [1], [2], [0, 0, 0, 1, 1, 2], [0], [0]>} : vector<4x16x16xbf16>, vector<4x16x32xbf16>, vector<4x16x32xf32> -> vector<4x16x32xf32>
    "tpu.trace_stop"() : () -> ()
    %104 = tpu.transpose %103, [1, 0, 2] : vector<4x16x32xf32> -> vector<16x4x32xf32>
    %105 = vector.shape_cast %104 : vector<16x4x32xf32> to vector<16x128xf32>
    %106 = arith.truncf %105 : vector<16x128xf32> to vector<16x128xbf16>
    %c0_41 = arith.constant 0 : index
    %c0_42 = arith.constant 0 : index
    %107 = vector.load %arg13[%c0_41, %c0_42] : memref<128x128xbf16, #tpu.memory_space<vmem>>, vector<128x128xbf16>
    %cst_43 = arith.constant dense<0.000000e+00> : vector<16x128xf32>
    %108 = tpu.matmul %106, %107, %cst_43 {dimension_numbers = #tpu.dot_dimension_numbers<[1], [0], [0], [1], [0, 0, 1, 1], [], []>} : vector<16x128xbf16>, vector<128x128xbf16>, vector<16x128xf32> -> vector<16x128xf32>
    %c0_44 = arith.constant 0 : index
    %c0_45 = arith.constant 0 : index
    %109 = vector.load %arg14[%c0_44, %c0_45] : memref<1x128xf32, #tpu.memory_space<vmem>>, vector<1x128xf32>
    %110 = vector.broadcast %109 : vector<1x128xf32> to vector<16x128xf32>
    %111 = arith.addf %108, %110 : vector<16x128xf32>
    %112 = arith.addf %111, %67 : vector<16x128xf32>
    %c0_46 = arith.constant 0 : index
    %c0_47 = arith.constant 0 : index
    %113 = vector.load %arg15[%c0_46, %c0_47] : memref<1x128xf32, #tpu.memory_space<vmem>>, vector<1x128xf32>
    %c0_48 = arith.constant 0 : index
    %c0_49 = arith.constant 0 : index
    %114 = vector.load %arg16[%c0_48, %c0_49] : memref<1x128xf32, #tpu.memory_space<vmem>>, vector<1x128xf32>
    %cst_50 = arith.constant dense<0.000000e+00> : vector<16xf32>
    %115 = vector.multi_reduction <add>, %112, %cst_50 [1] : vector<16x128xf32> to vector<16xf32>
    %116 = vector.shape_cast %115 : vector<16xf32> to vector<16x1xf32>
    %cst_51 = arith.constant 1.280000e+02 : f32
    %117 = vector.broadcast %cst_51 : f32 to vector<16x1xf32>
    %118 = arith.divf %116, %117 : vector<16x1xf32>
    %119 = vector.broadcast %118 : vector<16x1xf32> to vector<16x128xf32>
    %120 = arith.subf %112, %119 : vector<16x128xf32>
    %121 = arith.mulf %120, %120 : vector<16x128xf32>
    %cst_52 = arith.constant dense<0.000000e+00> : vector<16xf32>
    %122 = vector.multi_reduction <add>, %121, %cst_52 [1] : vector<16x128xf32> to vector<16xf32>
    %123 = vector.shape_cast %122 : vector<16xf32> to vector<16x1xf32>
    %cst_53 = arith.constant 1.280000e+02 : f32
    %124 = vector.broadcast %cst_53 : f32 to vector<16x1xf32>
    %125 = arith.divf %123, %124 : vector<16x1xf32>
    %126 = vector.broadcast %118 : vector<16x1xf32> to vector<16x128xf32>
    %127 = arith.subf %112, %126 : vector<16x128xf32>
    %cst_54 = arith.constant 9.99999974E-6 : f32
    %128 = vector.broadcast %cst_54 : f32 to vector<16x1xf32>
    %129 = arith.addf %125, %128 : vector<16x1xf32>
    %130 = math.sqrt %129 : vector<16x1xf32>
    %131 = vector.broadcast %130 : vector<16x1xf32> to vector<16x128xf32>
    %132 = arith.divf %127, %131 : vector<16x128xf32>
    %133 = vector.broadcast %113 : vector<1x128xf32> to vector<16x128xf32>
    %134 = arith.mulf %133, %132 : vector<16x128xf32>
    %135 = vector.broadcast %114 : vector<1x128xf32> to vector<16x128xf32>
    %136 = arith.addf %134, %135 : vector<16x128xf32>
    %137 = arith.truncf %136 : vector<16x128xf32> to vector<16x128xbf16>
    %c0_55 = arith.constant 0 : index
    %c0_56 = arith.constant 0 : index
    %138 = vector.load %arg17[%c0_55, %c0_56] : memref<128x256xbf16, #tpu.memory_space<vmem>>, vector<128x256xbf16>
    %cst_57 = arith.constant dense<0.000000e+00> : vector<16x256xf32>
    %139 = tpu.matmul %137, %138, %cst_57 {dimension_numbers = #tpu.dot_dimension_numbers<[1], [0], [0], [1], [0, 0, 1, 1], [], []>} : vector<16x128xbf16>, vector<128x256xbf16>, vector<16x256xf32> -> vector<16x256xf32>
    %c0_58 = arith.constant 0 : index
    %c0_59 = arith.constant 0 : index
    %140 = vector.load %arg18[%c0_58, %c0_59] : memref<1x256xf32, #tpu.memory_space<vmem>>, vector<1x256xf32>
    %141 = vector.broadcast %140 : vector<1x256xf32> to vector<16x256xf32>
    %142 = arith.addf %139, %141 : vector<16x256xf32>
    %cst_60 = arith.constant 0.000000e+00 : f32
    %143 = vector.broadcast %cst_60 : f32 to vector<16x256xf32>
    %144 = arith.maximumf %142, %143 : vector<16x256xf32>
    %145 = arith.truncf %144 : vector<16x256xf32> to vector<16x256xbf16>
    %c0_61 = arith.constant 0 : index
    %c0_62 = arith.constant 0 : index
    %146 = vector.load %arg19[%c0_61, %c0_62] : memref<256x128xbf16, #tpu.memory_space<vmem>>, vector<256x128xbf16>
    %cst_63 = arith.constant dense<0.000000e+00> : vector<16x128xf32>
    %147 = tpu.matmul %145, %146, %cst_63 {dimension_numbers = #tpu.dot_dimension_numbers<[1], [0], [0], [1], [0, 0, 1, 1], [], []>} : vector<16x256xbf16>, vector<256x128xbf16>, vector<16x128xf32> -> vector<16x128xf32>
    %c0_64 = arith.constant 0 : index
    %c0_65 = arith.constant 0 : index
    %148 = vector.load %arg20[%c0_64, %c0_65] : memref<1x128xf32, #tpu.memory_space<vmem>>, vector<1x128xf32>
    %149 = vector.broadcast %148 : vector<1x128xf32> to vector<16x128xf32>
    %150 = arith.addf %147, %149 : vector<16x128xf32>
    %151 = arith.addf %150, %136 : vector<16x128xf32>
    %c0_66 = arith.constant 0 : index
    %c0_67 = arith.constant 0 : index
    %152 = vector.load %arg21[%c0_66, %c0_67] : memref<1x128xf32, #tpu.memory_space<vmem>>, vector<1x128xf32>
    %c0_68 = arith.constant 0 : index
    %c0_69 = arith.constant 0 : index
    %153 = vector.load %arg22[%c0_68, %c0_69] : memref<1x128xf32, #tpu.memory_space<vmem>>, vector<1x128xf32>
    %cst_70 = arith.constant dense<0.000000e+00> : vector<16xf32>
    %154 = vector.multi_reduction <add>, %151, %cst_70 [1] : vector<16x128xf32> to vector<16xf32>
    %155 = vector.shape_cast %154 : vector<16xf32> to vector<16x1xf32>
    %cst_71 = arith.constant 1.280000e+02 : f32
    %156 = vector.broadcast %cst_71 : f32 to vector<16x1xf32>
    %157 = arith.divf %155, %156 : vector<16x1xf32>
    %158 = vector.broadcast %157 : vector<16x1xf32> to vector<16x128xf32>
    %159 = arith.subf %151, %158 : vector<16x128xf32>
    %160 = arith.mulf %159, %159 : vector<16x128xf32>
    %cst_72 = arith.constant dense<0.000000e+00> : vector<16xf32>
    %161 = vector.multi_reduction <add>, %160, %cst_72 [1] : vector<16x128xf32> to vector<16xf32>
    %162 = vector.shape_cast %161 : vector<16xf32> to vector<16x1xf32>
    %cst_73 = arith.constant 1.280000e+02 : f32
    %163 = vector.broadcast %cst_73 : f32 to vector<16x1xf32>
    %164 = arith.divf %162, %163 : vector<16x1xf32>
    %165 = vector.broadcast %157 : vector<16x1xf32> to vector<16x128xf32>
    %166 = arith.subf %151, %165 : vector<16x128xf32>
    %cst_74 = arith.constant 9.99999974E-6 : f32
    %167 = vector.broadcast %cst_74 : f32 to vector<16x1xf32>
    %168 = arith.addf %164, %167 : vector<16x1xf32>
    %169 = math.sqrt %168 : vector<16x1xf32>
    %170 = vector.broadcast %169 : vector<16x1xf32> to vector<16x128xf32>
    %171 = arith.divf %166, %170 : vector<16x128xf32>
    %172 = vector.broadcast %152 : vector<1x128xf32> to vector<16x128xf32>
    %173 = arith.mulf %172, %171 : vector<16x128xf32>
    %174 = vector.broadcast %153 : vector<1x128xf32> to vector<16x128xf32>
    %175 = arith.addf %173, %174 : vector<16x128xf32>
    %c0_75 = arith.constant 0 : index
    %c0_76 = arith.constant 0 : index
    %c0_77 = arith.constant 0 : index
    %176 = vector.load %arg23[%c0_75, %c0_76, %c0_77] : memref<1x16x128xf32, #tpu.memory_space<vmem>>, vector<1x16x128xf32>
    %177 = vector.shape_cast %176 : vector<1x16x128xf32> to vector<16x128xf32>
    %178 = vector.shape_cast %175 : vector<16x128xf32> to vector<1x16x128xf32>
    tpu.vector_store %arg23[%c0_75, %c0_76, %c0_77], %178 {strides = array<i32>} : memref<1x16x128xf32, #tpu.memory_space<vmem>>, vector<1x16x128xf32>,
    return
  }
  func.func @transform_0(%arg0: i32) -> (i32, i32, i32) {
    %c0_i32 = arith.constant 0 : i32
    %c0_i32_0 = arith.constant 0 : i32
    %c0_i32_1 = arith.constant 0 : i32
    return %arg0, %c0_i32, %c0_i32_0 : i32, i32, i32
  }
  func.func @transform_1(%arg0: i32) -> (i32, i32, i32) {
    %c0_i32 = arith.constant 0 : i32
    %c0_i32_0 = arith.constant 0 : i32
    %c0_i32_1 = arith.constant 0 : i32
    return %arg0, %c0_i32, %c0_i32_0 : i32, i32, i32
  }
  func.func @transform_2(%arg0: i32) -> (i32, i32) {
    %c0_i32 = arith.constant 0 : i32
    %c0_i32_0 = arith.constant 0 : i32
    %c0_i32_1 = arith.constant 0 : i32
    return %c0_i32, %c0_i32_0 : i32, i32
  }
  func.func @transform_3(%arg0: i32) -> (i32, i32) {
    %c0_i32 = arith.constant 0 : i32
    %c0_i32_0 = arith.constant 0 : i32
    %c0_i32_1 = arith.constant 0 : i32
    return %c0_i32, %c0_i32_0 : i32, i32
  }
  func.func @transform_4(%arg0: i32) -> (i32, i32) {
    %c0_i32 = arith.constant 0 : i32
    %c0_i32_0 = arith.constant 0 : i32
    %c0_i32_1 = arith.constant 0 : i32
    return %c0_i32, %c0_i32_0 : i32, i32
  }
  func.func @transform_5(%arg0: i32) -> (i32, i32) {
    %c0_i32 = arith.constant 0 : i32
    %c0_i32_0 = arith.constant 0 : i32
    %c0_i32_1 = arith.constant 0 : i32
    return %c0_i32, %c0_i32_0 : i32, i32
  }
  func.func @transform_6(%arg0: i32) -> (i32, i32) {
    %c0_i32 = arith.constant 0 : i32
    %c0_i32_0 = arith.constant 0 : i32
    %c0_i32_1 = arith.constant 0 : i32
    return %c0_i32, %c0_i32_0 : i32, i32
  }
  func.func @transform_7(%arg0: i32) -> (i32, i32) {
    %c0_i32 = arith.constant 0 : i32
    %c0_i32_0 = arith.constant 0 : i32
    %c0_i32_1 = arith.constant 0 : i32
    return %c0_i32, %c0_i32_0 : i32, i32
  }
  func.func @transform_8(%arg0: i32) -> (i32, i32) {
    %c0_i32 = arith.constant 0 : i32
    %c0_i32_0 = arith.constant 0 : i32
    %c0_i32_1 = arith.constant 0 : i32
    return %c0_i32, %c0_i32_0 : i32, i32
  }
  func.func @transform_9(%arg0: i32) -> (i32, i32) {
    %c0_i32 = arith.constant 0 : i32
    %c0_i32_0 = arith.constant 0 : i32
    %c0_i32_1 = arith.constant 0 : i32
    return %c0_i32, %c0_i32_0 : i32, i32
  }
  func.func @transform_10(%arg0: i32) -> (i32, i32) {
    %c0_i32 = arith.constant 0 : i32
    %c0_i32_0 = arith.constant 0 : i32
    %c0_i32_1 = arith.constant 0 : i32
    return %c0_i32, %c0_i32_0 : i32, i32
  }
  func.func @transform_11(%arg0: i32) -> (i32, i32) {
    %c0_i32 = arith.constant 0 : i32
    %c0_i32_0 = arith.constant 0 : i32
    %c0_i32_1 = arith.constant 0 : i32
    return %c0_i32, %c0_i32_0 : i32, i32
  }
  func.func @transform_12(%arg0: i32) -> (i32, i32) {
    %c0_i32 = arith.constant 0 : i32
    %c0_i32_0 = arith.constant 0 : i32
    %c0_i32_1 = arith.constant 0 : i32
    return %c0_i32, %c0_i32_0 : i32, i32
  }
  func.func @transform_13(%arg0: i32) -> (i32, i32) {
    %c0_i32 = arith.constant 0 : i32
    %c0_i32_0 = arith.constant 0 : i32
    %c0_i32_1 = arith.constant 0 : i32
    return %c0_i32, %c0_i32_0 : i32, i32
  }
  func.func @transform_14(%arg0: i32) -> (i32, i32) {
    %c0_i32 = arith.constant 0 : i32
    %c0_i32_0 = arith.constant 0 : i32
    %c0_i32_1 = arith.constant 0 : i32
    return %c0_i32, %c0_i32_0 : i32, i32
  }
  func.func @transform_15(%arg0: i32) -> (i32, i32) {
    %c0_i32 = arith.constant 0 : i32
    %c0_i32_0 = arith.constant 0 : i32
    %c0_i32_1 = arith.constant 0 : i32
    return %c0_i32, %c0_i32_0 : i32, i32
  }
  func.func @transform_16(%arg0: i32) -> (i32, i32) {
    %c0_i32 = arith.constant 0 : i32
    %c0_i32_0 = arith.constant 0 : i32
    %c0_i32_1 = arith.constant 0 : i32
    return %c0_i32, %c0_i32_0 : i32, i32
  }
  func.func @transform_17(%arg0: i32) -> (i32, i32) {
    %c0_i32 = arith.constant 0 : i32
    %c0_i32_0 = arith.constant 0 : i32
    %c0_i32_1 = arith.constant 0 : i32
    return %c0_i32, %c0_i32_0 : i32, i32
  }
  func.func @transform_18(%arg0: i32) -> (i32, i32) {
    %c0_i32 = arith.constant 0 : i32
    %c0_i32_0 = arith.constant 0 : i32
    %c0_i32_1 = arith.constant 0 : i32
    return %c0_i32, %c0_i32_0 : i32, i32
  }
  func.func @transform_19(%arg0: i32) -> (i32, i32) {
    %c0_i32 = arith.constant 0 : i32
    %c0_i32_0 = arith.constant 0 : i32
    %c0_i32_1 = arith.constant 0 : i32
    return %c0_i32, %c0_i32_0 : i32, i32
  }
  func.func @transform_20(%arg0: i32) -> (i32, i32) {
    %c0_i32 = arith.constant 0 : i32
    %c0_i32_0 = arith.constant 0 : i32
    %c0_i32_1 = arith.constant 0 : i32
    return %c0_i32, %c0_i32_0 : i32, i32
  }
  func.func @transform_21(%arg0: i32) -> (i32, i32) {
    %c0_i32 = arith.constant 0 : i32
    %c0_i32_0 = arith.constant 0 : i32
    %c0_i32_1 = arith.constant 0 : i32
    return %c0_i32, %c0_i32_0 : i32, i32
  }
  func.func @transform_22(%arg0: i32) -> (i32, i32, i32) {
    %c0_i32 = arith.constant 0 : i32
    %c0_i32_0 = arith.constant 0 : i32
    %c0_i32_1 = arith.constant 0 : i32
    return %arg0, %c0_i32, %c0_i32_0 : i32, i32, i32
  }
}

module attributes {stable_mosaic.version = 11 : i64} {
  func.func @decoder_layer_kernel(%arg0: i32, %arg1: memref<1x16x128xf32, #tpu.memory_space<vmem>>, %arg2: memref<1x16x128xf32, #tpu.memory_space<vmem>>, %arg3: memref<128x384xbf16, #tpu.memory_space<vmem>>, %arg4: memref<1x384xf32, #tpu.memory_space<vmem>>, %arg5: memref<128x128xbf16, #tpu.memory_space<vmem>>, %arg6: memref<1x128xf32, #tpu.memory_space<vmem>>, %arg7: memref<1x128xf32, #tpu.memory_space<vmem>>, %arg8: memref<1x128xf32, #tpu.memory_space<vmem>>, %arg9: memref<128x128xbf16, #tpu.memory_space<vmem>>, %arg10: memref<1x128xf32, #tpu.memory_space<vmem>>, %arg11: memref<128x256xbf16, #tpu.memory_space<vmem>>, %arg12: memref<1x256xf32, #tpu.memory_space<vmem>>, %arg13: memref<128x128xbf16, #tpu.memory_space<vmem>>, %arg14: memref<1x128xf32, #tpu.memory_space<vmem>>, %arg15: memref<1x128xf32, #tpu.memory_space<vmem>>, %arg16: memref<1x128xf32, #tpu.memory_space<vmem>>, %arg17: memref<128x256xbf16, #tpu.memory_space<vmem>>, %arg18: memref<1x256xf32, #tpu.memory_space<vmem>>, %arg19: memref<256x128xbf16, #tpu.memory_space<vmem>>, %arg20: memref<1x128xf32, #tpu.memory_space<vmem>>, %arg21: memref<1x128xf32, #tpu.memory_space<vmem>>, %arg22: memref<1x128xf32, #tpu.memory_space<vmem>>, %arg23: memref<1x16x128xf32, #tpu.memory_space<vmem>>) attributes {dimension_semantics = [#tpu.dimension_semantics<parallel>], iteration_bounds = array<i64: 2>, scalar_prefetch = 0 : i64, scratch_operands = 0 : i64, tpu.core_type = #tpu.core_type<tc>, window_params = [{transform_indices = @transform_0, window_bounds = array<i64: 1, 16, 128>}, {transform_indices = @transform_1, window_bounds = array<i64: 1, 16, 128>}, {pipeline_mode = #tpu.pipeline_mode<synchronous>, transform_indices = @transform_2, window_bounds = array<i64: 128, 384>}, {pipeline_mode = #tpu.pipeline_mode<synchronous>, transform_indices = @transform_3, window_bounds = array<i64: 1, 384>}, {pipeline_mode = #tpu.pipeline_mode<synchronous>, transform_indices = @transform_4, window_bounds = array<i64: 128, 128>}, {pipeline_mode = #tpu.pipeline_mode<synchronous>, transform_indices = @transform_5, window_bounds = array<i64: 1, 128>}, {pipeline_mode = #tpu.pipeline_mode<synchronous>, transform_indices = @transform_6, window_bounds = array<i64: 1, 128>}, {pipeline_mode = #tpu.pipeline_mode<synchronous>, transform_indices = @transform_7, window_bounds = array<i64: 1, 128>}, {pipeline_mode = #tpu.pipeline_mode<synchronous>, transform_indices = @transform_8, window_bounds = array<i64: 128, 128>}, {pipeline_mode = #tpu.pipeline_mode<synchronous>, transform_indices = @transform_9, window_bounds = array<i64: 1, 128>}, {pipeline_mode = #tpu.pipeline_mode<synchronous>, transform_indices = @transform_10, window_bounds = array<i64: 128, 256>}, {pipeline_mode = #tpu.pipeline_mode<synchronous>, transform_indices = @transform_11, window_bounds = array<i64: 1, 256>}, {pipeline_mode = #tpu.pipeline_mode<synchronous>, transform_indices = @transform_12, window_bounds = array<i64: 128, 128>}, {pipeline_mode = #tpu.pipeline_mode<synchronous>, transform_indices = @transform_13, window_bounds = array<i64: 1, 128>}, {pipeline_mode = #tpu.pipeline_mode<synchronous>, transform_indices = @transform_14, window_bounds = array<i64: 1, 128>}, {pipeline_mode = #tpu.pipeline_mode<synchronous>, transform_indices = @transform_15, window_bounds = array<i64: 1, 128>}, {pipeline_mode = #tpu.pipeline_mode<synchronous>, transform_indices = @transform_16, window_bounds = array<i64: 128, 256>}, {pipeline_mode = #tpu.pipeline_mode<synchronous>, transform_indices = @transform_17, window_bounds = array<i64: 1, 256>}, {pipeline_mode = #tpu.pipeline_mode<synchronous>, transform_indices = @transform_18, window_bounds = array<i64: 256, 128>}, {pipeline_mode = #tpu.pipeline_mode<synchronous>, transform_indices = @transform_19, window_bounds = array<i64: 1, 128>}, {pipeline_mode = #tpu.pipeline_mode<synchronous>, transform_indices = @transform_20, window_bounds = array<i64: 1, 128>}, {pipeline_mode = #tpu.pipeline_mode<synchronous>, transform_indices = @transform_21, window_bounds = array<i64: 1, 128>}, {transform_indices = @transform_22, window_bounds = array<i64: 1, 16, 128>}]} {
    %c0 = arith.constant 0 : index
    %c0_0 = arith.constant 0 : index
    %c0_1 = arith.constant 0 : index
    %0 = vector.load %arg1[%c0, %c0_0, %c0_1] : memref<1x16x128xf32, #tpu.memory_space<vmem>>, vector<1x16x128xf32>
    %1 = vector.shape_cast %0 : vector<1x16x128xf32> to vector<16x128xf32>
    %c0_2 = arith.constant 0 : index
    %c0_3 = arith.constant 0 : index
    %c0_4 = arith.constant 0 : index
    %2 = vector.load %arg2[%c0_2, %c0_3, %c0_4] : memref<1x16x128xf32, #tpu.memory_space<vmem>>, vector<1x16x128xf32>
    %3 = vector.shape_cast %2 : vector<1x16x128xf32> to vector<16x128xf32>
    %4 = arith.truncf %3 : vector<16x128xf32> to vector<16x128xbf16>
    %c0_5 = arith.constant 0 : index
    %c0_6 = arith.constant 0 : index
    %5 = vector.load %arg3[%c0_5, %c0_6] : memref<128x384xbf16, #tpu.memory_space<vmem>>, vector<128x384xbf16>
    %cst = arith.constant dense<0.000000e+00> : vector<16x384xf32>
    %6 = tpu.matmul %4, %5, %cst {dimension_numbers = #tpu.dot_dimension_numbers<[1], [0], [0], [1], [0, 0, 1, 1], [], []>} : vector<16x128xbf16>, vector<128x384xbf16>, vector<16x384xf32> -> vector<16x384xf32>
    %c0_7 = arith.constant 0 : index
    %c0_8 = arith.constant 0 : index
    %7 = vector.load %arg4[%c0_7, %c0_8] : memref<1x384xf32, #tpu.memory_space<vmem>>, vector<1x384xf32>
    %8 = vector.broadcast %7 : vector<1x384xf32> to vector<16x384xf32>
    %9 = arith.addf %6, %8 : vector<16x384xf32>
    %10 = vector.extract_strided_slice %9 {offsets = [0, 0], sizes = [16, 128], strides = [1, 1]} : vector<16x384xf32> to vector<16x128xf32>
    %11 = vector.extract_strided_slice %9 {offsets = [0, 128], sizes = [16, 128], strides = [1, 1]} : vector<16x384xf32> to vector<16x128xf32>
    %12 = vector.extract_strided_slice %9 {offsets = [0, 256], sizes = [16, 128], strides = [1, 1]} : vector<16x384xf32> to vector<16x128xf32>
    %13 = vector.shape_cast %10 : vector<16x128xf32> to vector<16x4x32xf32>
    %14 = tpu.transpose %13, [1, 0, 2] : vector<16x4x32xf32> -> vector<4x16x32xf32>
    %15 = arith.truncf %14 : vector<4x16x32xf32> to vector<4x16x32xbf16>
    %16 = vector.shape_cast %11 : vector<16x128xf32> to vector<16x4x32xf32>
    %17 = tpu.transpose %16, [1, 0, 2] : vector<16x4x32xf32> -> vector<4x16x32xf32>
    %18 = arith.truncf %17 : vector<4x16x32xf32> to vector<4x16x32xbf16>
    %19 = vector.shape_cast %12 : vector<16x128xf32> to vector<16x4x32xf32>
    %20 = tpu.transpose %19, [1, 0, 2] : vector<16x4x32xf32> -> vector<4x16x32xf32>
    %21 = arith.truncf %20 : vector<4x16x32xf32> to vector<4x16x32xbf16>
    "tpu.trace_start"() <{level = 10 : i32, message = "hqd,hkd->hqk"}> : () -> ()
    %cst_9 = arith.constant dense<0.000000e+00> : vector<4x16x16xf32>
    %22 = tpu.matmul %15, %18, %cst_9 {dimension_numbers = #tpu.dot_dimension_numbers<[2], [2], [1], [1], [0, 0, 0, 1, 1, 1], [0], [0]>} : vector<4x16x32xbf16>, vector<4x16x32xbf16>, vector<4x16x16xf32> -> vector<4x16x16xf32>
    "tpu.trace_stop"() : () -> ()
    %cst_10 = arith.constant dense<0xFF800000> : vector<4x16xf32>
    %23 = vector.multi_reduction <maximumf>, %22, %cst_10 [2] : vector<4x16x16xf32> to vector<4x16xf32>
    %24 = vector.shape_cast %23 : vector<4x16xf32> to vector<4x16x1xf32>
    %25 = vector.broadcast %24 : vector<4x16x1xf32> to vector<4x16x16xf32>
    %26 = arith.subf %22, %25 : vector<4x16x16xf32>
    %27 = math.exp %26 : vector<4x16x16xf32>
    %cst_11 = arith.constant dense<0.000000e+00> : vector<4x16xf32>
    %28 = vector.multi_reduction <add>, %27, %cst_11 [2] : vector<4x16x16xf32> to vector<4x16xf32>
    %29 = vector.shape_cast %28 : vector<4x16xf32> to vector<4x16x1xf32>
    %30 = tpu.reciprocal %29 {approx = true} : vector<4x16x1xf32> -> vector<4x16x1xf32>
    %31 = vector.broadcast %30 : vector<4x16x1xf32> to vector<4x16x16xf32>
    %32 = arith.mulf %27, %31 : vector<4x16x16xf32>
    %33 = arith.truncf %32 : vector<4x16x16xf32> to vector<4x16x16xbf16>
    "tpu.trace_start"() <{level = 10 : i32, message = "hqk,hkd->hqd"}> : () -> ()
    %cst_12 = arith.constant dense<0.000000e+00> : vector<4x16x32xf32>
    %34 = tpu.matmul %33, %21, %cst_12 {dimension_numbers = #tpu.dot_dimension_numbers<[2], [1], [1], [2], [0, 0, 0, 1, 1, 2], [0], [0]>} : vector<4x16x16xbf16>, vector<4x16x32xbf16>, vector<4x16x32xf32> -> vector<4x16x32xf32>
    "tpu.trace_stop"() : () -> ()
    %35 = tpu.transpose %34, [1, 0, 2] : vector<4x16x32xf32> -> vector<16x4x32xf32>
    %36 = vector.shape_cast %35 : vector<16x4x32xf32> to vector<16x128xf32>
    %37 = arith.truncf %36 : vector<16x128xf32> to vector<16x128xbf16>
    %c0_13 = arith.constant 0 : index
    %c0_14 = arith.constant 0 : index
    %38 = vector.load %arg5[%c0_13, %c0_14] : memref<128x128xbf16, #tpu.memory_space<vmem>>, vector<128x128xbf16>
    %cst_15 = arith.constant dense<0.000000e+00> : vector<16x128xf32>
    %39 = tpu.matmul %37, %38, %cst_15 {dimension_numbers = #tpu.dot_dimension_numbers<[1], [0], [0], [1], [0, 0, 1, 1], [], []>} : vector<16x128xbf16>, vector<128x128xbf16>, vector<16x128xf32> -> vector<16x128xf32>
    %c0_16 = arith.constant 0 : index
    %c0_17 = arith.constant 0 : index
    %40 = vector.load %arg6[%c0_16, %c0_17] : memref<1x128xf32, #tpu.memory_space<vmem>>, vector<1x128xf32>
    %41 = vector.broadcast %40 : vector<1x128xf32> to vector<16x128xf32>
    %42 = arith.addf %39, %41 : vector<16x128xf32>
    %43 = arith.addf %42, %3 : vector<16x128xf32>
    %c0_18 = arith.constant 0 : index
    %c0_19 = arith.constant 0 : index
    %44 = vector.load %arg7[%c0_18, %c0_19] : memref<1x128xf32, #tpu.memory_space<vmem>>, vector<1x128xf32>
    %c0_20 = arith.constant 0 : index
    %c0_21 = arith.constant 0 : index
    %45 = vector.load %arg8[%c0_20, %c0_21] : memref<1x128xf32, #tpu.memory_space<vmem>>, vector<1x128xf32>
    %cst_22 = arith.constant dense<0.000000e+00> : vector<16xf32>
    %46 = vector.multi_reduction <add>, %43, %cst_22 [1] : vector<16x128xf32> to vector<16xf32>
    %47 = vector.shape_cast %46 : vector<16xf32> to vector<16x1xf32>
    %cst_23 = arith.constant 1.280000e+02 : f32
    %48 = vector.broadcast %cst_23 : f32 to vector<16x1xf32>
    %49 = arith.divf %47, %48 : vector<16x1xf32>
    %50 = vector.broadcast %49 : vector<16x1xf32> to vector<16x128xf32>
    %51 = arith.subf %43, %50 : vector<16x128xf32>
    %52 = arith.mulf %51, %51 : vector<16x128xf32>
    %cst_24 = arith.constant dense<0.000000e+00> : vector<16xf32>
    %53 = vector.multi_reduction <add>, %52, %cst_24 [1] : vector<16x128xf32> to vector<16xf32>
    %54 = vector.shape_cast %53 : vector<16xf32> to vector<16x1xf32>
    %cst_25 = arith.constant 1.280000e+02 : f32
    %55 = vector.broadcast %cst_25 : f32 to vector<16x1xf32>
    %56 = arith.divf %54, %55 : vector<16x1xf32>
    %57 = vector.broadcast %49 : vector<16x1xf32> to vector<16x128xf32>
    %58 = arith.subf %43, %57 : vector<16x128xf32>
    %cst_26 = arith.constant 9.99999974E-6 : f32
    %59 = vector.broadcast %cst_26 : f32 to vector<16x1xf32>
    %60 = arith.addf %56, %59 : vector<16x1xf32>
    %61 = math.sqrt %60 : vector<16x1xf32>
    %62 = vector.broadcast %61 : vector<16x1xf32> to vector<16x128xf32>
    %63 = arith.divf %58, %62 : vector<16x128xf32>
    %64 = vector.broadcast %44 : vector<1x128xf32> to vector<16x128xf32>
    %65 = arith.mulf %64, %63 : vector<16x128xf32>
    %66 = vector.broadcast %45 : vector<1x128xf32> to vector<16x128xf32>
    %67 = arith.addf %65, %66 : vector<16x128xf32>
    %68 = arith.truncf %1 : vector<16x128xf32> to vector<16x128xbf16>
    %c0_27 = arith.constant 0 : index
    %c0_28 = arith.constant 0 : index
    %69 = vector.load %arg11[%c0_27, %c0_28] : memref<128x256xbf16, #tpu.memory_space<vmem>>, vector<128x256xbf16>
    %cst_29 = arith.constant dense<0.000000e+00> : vector<16x256xf32>
    %70 = tpu.matmul %68, %69, %cst_29 {dimension_numbers = #tpu.dot_dimension_numbers<[1], [0], [0], [1], [0, 0, 1, 1], [], []>} : vector<16x128xbf16>, vector<128x256xbf16>, vector<16x256xf32> -> vector<16x256xf32>
    %c0_30 = arith.constant 0 : index
    %c0_31 = arith.constant 0 : index
    %71 = vector.load %arg12[%c0_30, %c0_31] : memref<1x256xf32, #tpu.memory_space<vmem>>, vector<1x256xf32>
    %72 = vector.broadcast %71 : vector<1x256xf32> to vector<16x256xf32>
    %73 = arith.addf %70, %72 : vector<16x256xf32>
    %74 = arith.truncf %67 : vector<16x128xf32> to vector<16x128xbf16>
    %c0_32 = arith.constant 0 : index
    %c0_33 = arith.constant 0 : index
    %75 = vector.load %arg9[%c0_32, %c0_33] : memref<128x128xbf16, #tpu.memory_space<vmem>>, vector<128x128xbf16>
    %cst_34 = arith.constant dense<0.000000e+00> : vector<16x128xf32>
    %76 = tpu.matmul %74, %75, %cst_34 {dimension_numbers = #tpu.dot_dimension_numbers<[1], [0], [0], [1], [0, 0, 1, 1], [], []>} : vector<16x128xbf16>, vector<128x128xbf16>, vector<16x128xf32> -> vector<16x128xf32>
    %c0_35 = arith.constant 0 : index
    %c0_36 = arith.constant 0 : index
    %77 = vector.load %arg10[%c0_35, %c0_36] : memref<1x128xf32, #tpu.memory_space<vmem>>, vector<1x128xf32>
    %78 = vector.broadcast %77 : vector<1x128xf32> to vector<16x128xf32>
    %79 = arith.addf %76, %78 : vector<16x128xf32>
    %80 = vector.extract_strided_slice %73 {offsets = [0, 0], sizes = [16, 128], strides = [1, 1]} : vector<16x256xf32> to vector<16x128xf32>
    %81 = vector.extract_strided_slice %73 {offsets = [0, 128], sizes = [16, 128], strides = [1, 1]} : vector<16x256xf32> to vector<16x128xf32>
    %82 = vector.shape_cast %79 : vector<16x128xf32> to vector<16x4x32xf32>
    %83 = tpu.transpose %82, [1, 0, 2] : vector<16x4x32xf32> -> vector<4x16x32xf32>
    %84 = arith.truncf %83 : vector<4x16x32xf32> to vector<4x16x32xbf16>
    %85 = vector.shape_cast %80 : vector<16x128xf32> to vector<16x4x32xf32>
    %86 = tpu.transpose %85, [1, 0, 2] : vector<16x4x32xf32> -> vector<4x16x32xf32>
    %87 = arith.truncf %86 : vector<4x16x32xf32> to vector<4x16x32xbf16>
    %88 = vector.shape_cast %81 : vector<16x128xf32> to vector<16x4x32xf32>
    %89 = tpu.transpose %88, [1, 0, 2] : vector<16x4x32xf32> -> vector<4x16x32xf32>
    %90 = arith.truncf %89 : vector<4x16x32xf32> to vector<4x16x32xbf16>
    "tpu.trace_start"() <{level = 10 : i32, message = "hqd,hkd->hqk"}> : () -> ()
    %cst_37 = arith.constant dense<0.000000e+00> : vector<4x16x16xf32>
    %91 = tpu.matmul %84, %87, %cst_37 {dimension_numbers = #tpu.dot_dimension_numbers<[2], [2], [1], [1], [0, 0, 0, 1, 1, 1], [0], [0]>} : vector<4x16x32xbf16>, vector<4x16x32xbf16>, vector<4x16x16xf32> -> vector<4x16x16xf32>
    "tpu.trace_stop"() : () -> ()
    %cst_38 = arith.constant dense<0xFF800000> : vector<4x16xf32>
    %92 = vector.multi_reduction <maximumf>, %91, %cst_38 [2] : vector<4x16x16xf32> to vector<4x16xf32>
    %93 = vector.shape_cast %92 : vector<4x16xf32> to vector<4x16x1xf32>
    %94 = vector.broadcast %93 : vector<4x16x1xf32> to vector<4x16x16xf32>
    %95 = arith.subf %91, %94 : vector<4x16x16xf32>
    %96 = math.exp %95 : vector<4x16x16xf32>
    %cst_39 = arith.constant dense<0.000000e+00> : vector<4x16xf32>
    %97 = vector.multi_reduction <add>, %96, %cst_39 [2] : vector<4x16x16xf32> to vector<4x16xf32>
    %98 = vector.shape_cast %97 : vector<4x16xf32> to vector<4x16x1xf32>
    %99 = tpu.reciprocal %98 {approx = true} : vector<4x16x1xf32> -> vector<4x16x1xf32>
    %100 = vector.broadcast %99 : vector<4x16x1xf32> to vector<4x16x16xf32>
    %101 = arith.mulf %96, %100 : vector<4x16x16xf32>
    %102 = arith.truncf %101 : vector<4x16x16xf32> to vector<4x16x16xbf16>
    "tpu.trace_start"() <{level = 10 : i32, message = "hqk,hkd->hqd"}> : () -> ()
    %cst_40 = arith.constant dense<0.000000e+00> : vector<4x16x32xf32>
    %103 = tpu.matmul %102, %90, %cst_40 {dimension_numbers = #tpu.dot_dimension_numbers<[2], [1], [1], [2], [0, 0, 0, 1, 1, 2], [0], [0]>} : vector<4x16x16xbf16>, vector<4x16x32xbf16>, vector<4x16x32xf32> -> vector<4x16x32xf32>
    "tpu.trace_stop"() : () -> ()
    %104 = tpu.transpose %103, [1, 0, 2] : vector<4x16x32xf32> -> vector<16x4x32xf32>
    %105 = vector.shape_cast %104 : vector<16x4x32xf32> to vector<16x128xf32>
    %106 = arith.truncf %105 : vector<16x128xf32> to vector<16x128xbf16>
    %c0_41 = arith.constant 0 : index
    %c0_42 = arith.constant 0 : index
    %107 = vector.load %arg13[%c0_41, %c0_42] : memref<128x128xbf16, #tpu.memory_space<vmem>>, vector<128x128xbf16>
    %cst_43 = arith.constant dense<0.000000e+00> : vector<16x128xf32>
    %108 = tpu.matmul %106, %107, %cst_43 {dimension_numbers = #tpu.dot_dimension_numbers<[1], [0], [0], [1], [0, 0, 1, 1], [], []>} : vector<16x128xbf16>, vector<128x128xbf16>, vector<16x128xf32> -> vector<16x128xf32>
    %c0_44 = arith.constant 0 : index
    %c0_45 = arith.constant 0 : index
    %109 = vector.load %arg14[%c0_44, %c0_45] : memref<1x128xf32, #tpu.memory_space<vmem>>, vector<1x128xf32>
    %110 = vector.broadcast %109 : vector<1x128xf32> to vector<16x128xf32>
    %111 = arith.addf %108, %110 : vector<16x128xf32>
    %112 = arith.addf %111, %67 : vector<16x128xf32>
    %c0_46 = arith.constant 0 : index
    %c0_47 = arith.constant 0 : index
    %113 = vector.load %arg15[%c0_46, %c0_47] : memref<1x128xf32, #tpu.memory_space<vmem>>, vector<1x128xf32>
    %c0_48 = arith.constant 0 : index
    %c0_49 = arith.constant 0 : index
    %114 = vector.load %arg16[%c0_48, %c0_49] : memref<1x128xf32, #tpu.memory_space<vmem>>, vector<1x128xf32>
    %cst_50 = arith.constant dense<0.000000e+00> : vector<16xf32>
    %115 = vector.multi_reduction <add>, %112, %cst_50 [1] : vector<16x128xf32> to vector<16xf32>
    %116 = vector.shape_cast %115 : vector<16xf32> to vector<16x1xf32>
    %cst_51 = arith.constant 1.280000e+02 : f32
    %117 = vector.broadcast %cst_51 : f32 to vector<16x1xf32>
    %118 = arith.divf %116, %117 : vector<16x1xf32>
    %119 = vector.broadcast %118 : vector<16x1xf32> to vector<16x128xf32>
    %120 = arith.subf %112, %119 : vector<16x128xf32>
    %121 = arith.mulf %120, %120 : vector<16x128xf32>
    %cst_52 = arith.constant dense<0.000000e+00> : vector<16xf32>
    %122 = vector.multi_reduction <add>, %121, %cst_52 [1] : vector<16x128xf32> to vector<16xf32>
    %123 = vector.shape_cast %122 : vector<16xf32> to vector<16x1xf32>
    %cst_53 = arith.constant 1.280000e+02 : f32
    %124 = vector.broadcast %cst_53 : f32 to vector<16x1xf32>
    %125 = arith.divf %123, %124 : vector<16x1xf32>
    %126 = vector.broadcast %118 : vector<16x1xf32> to vector<16x128xf32>
    %127 = arith.subf %112, %126 : vector<16x128xf32>
    %cst_54 = arith.constant 9.99999974E-6 : f32
    %128 = vector.broadcast %cst_54 : f32 to vector<16x1xf32>
    %129 = arith.addf %125, %128 : vector<16x1xf32>
    %130 = math.sqrt %129 : vector<16x1xf32>
    %131 = vector.broadcast %130 : vector<16x1xf32> to vector<16x128xf32>
    %132 = arith.divf %127, %131 : vector<16x128xf32>
    %133 = vector.broadcast %113 : vector<1x128xf32> to vector<16x128xf32>
    %134 = arith.mulf %133, %132 : vector<16x128xf32>
    %135 = vector.broadcast %114 : vector<1x128xf32> to vector<16x128xf32>
    %136 = arith.addf %134, %135 : vector<16x128xf32>
    %137 = arith.truncf %136 : vector<16x128xf32> to vector<16x128xbf16>
    %c0_55 = arith.constant 0 : index
    %c0_56 = arith.constant 0 : index
    %138 = vector.load %arg17[%c0_55, %c0_56] : memref<128x256xbf16, #tpu.memory_space<vmem>>, vector<128x256xbf16>
    %cst_57 = arith.constant dense<0.000000e+00> : vector<16x256xf32>
    %139 = tpu.matmul %137, %138, %cst_57 {dimension_numbers = #tpu.dot_dimension_numbers<[1], [0], [0], [1], [0, 0, 1, 1], [], []>} : vector<16x128xbf16>, vector<128x256xbf16>, vector<16x256xf32> -> vector<16x256xf32>
    %c0_58 = arith.constant 0 : index
    %c0_59 = arith.constant 0 : index
    %140 = vector.load %arg18[%c0_58, %c0_59] : memref<1x256xf32, #tpu.memory_space<vmem>>, vector<1x256xf32>
    %141 = vector.broadcast %140 : vector<1x256xf32> to vector<16x256xf32>
    %142 = arith.addf %139, %141 : vector<16x256xf32>
    %cst_60 = arith.constant 0.000000e+00 : f32
    %143 = vector.broadcast %cst_60 : f32 to vector<16x256xf32>
    %144 = arith.maximumf %142, %143 : vector<16x256xf32>
    %145 = arith.truncf %144 : vector<16x256xf32> to vector<16x256xbf16>
    %c0_61 = arith.constant 0 : index
    %c0_62 = arith.constant 0 : index
    %146 = vector.load %arg19[%c0_61, %c0_62] : memref<256x128xbf16, #tpu.memory_space<vmem>>, vector<256x128xbf16>
    %cst_63 = arith.constant dense<0.000000e+00> : vector<16x128xf32>
    %147 = tpu.matmul %145, %146, %cst_63 {dimension_numbers = #tpu.dot_dimension_numbers<[1], [0], [0], [1], [0, 0, 1, 1], [], []>} : vector<16x256xbf16>, vector<256x128xbf16>, vector<16x128xf32> -> vector<16x128xf32>
    %c0_64 = arith.constant 0 : index
    %c0_65 = arith.constant 0 : index
    %148 = vector.load %arg20[%c0_64, %c0_65] : memref<1x128xf32, #tpu.memory_space<vmem>>, vector<1x128xf32>
    %149 = vector.broadcast %148 : vector<1x128xf32> to vector<16x128xf32>
    %150 = arith.addf %147, %149 : vector<16x128xf32>
    %151 = arith.addf %150, %136 : vector<16x128xf32>
    %c0_66 = arith.constant 0 : index
    %c0_67 = arith.constant 0 : index
    %152 = vector.load %arg21[%c0_66, %c0_67] : memref<1x128xf32, #tpu.memory_space<vmem>>, vector<1x128xf32>
    %c0_68 = arith.constant 0 : index
    %c0_69 = arith.constant 0 : index
    %153 = vector.load %arg22[%c0_68, %c0_69] : memref<1x128xf32, #tpu.memory_space<vmem>>, vector<1x128xf32>
    %cst_70 = arith.constant dense<0.000000e+00> : vector<16xf32>
    %154 = vector.multi_reduction <add>, %151, %cst_70 [1] : vector<16x128xf32> to vector<16xf32>
    %155 = vector.shape_cast %154 : vector<16xf32> to vector<16x1xf32>
    %cst_71 = arith.constant 1.280000e+02 : f32
    %156 = vector.broadcast %cst_71 : f32 to vector<16x1xf32>
    %157 = arith.divf %155, %156 : vector<16x1xf32>
    %158 = vector.broadcast %157 : vector<16x1xf32> to vector<16x128xf32>
    %159 = arith.subf %151, %158 : vector<16x128xf32>
    %160 = arith.mulf %159, %159 : vector<16x128xf32>
    %cst_72 = arith.constant dense<0.000000e+00> : vector<16xf32>
    %161 = vector.multi_reduction <add>, %160, %cst_72 [1] : vector<16x128xf32> to vector<16xf32>
    %162 = vector.shape_cast %161 : vector<16xf32> to vector<16x1xf32>
    %cst_73 = arith.constant 1.280000e+02 : f32
    %163 = vector.broadcast %cst_73 : f32 to vector<16x1xf32>
    %164 = arith.divf %162, %163 : vector<16x1xf32>
    %165 = vector.broadcast %157 : vector<16x1xf32> to vector<16x128xf32>
    %166 = arith.subf %151, %165 : vector<16x128xf32>
    %cst_74 = arith.constant 9.99999974E-6 : f32
    %167 = vector.broadcast %cst_74 : f32 to vector<16x1xf32>
    %168 = arith.addf %164, %167 : vector<16x1xf32>
    %169 = math.sqrt %168 : vector<16x1xf32>
    %170 = vector.broadcast %169 : vector<16x1xf32> to vector<16x128xf32>
    %171 = arith.divf %166, %170 : vector<16x128xf32>
    %172 = vector.broadcast %152 : vector<1x128xf32> to vector<16x128xf32>
    %173 = arith.mulf %172, %171 : vector<16x128xf32>
    %174 = vector.broadcast %153 : vector<1x128xf32> to vector<16x128xf32>
    %175 = arith.addf %173, %174 : vector<16x128xf32>
    %c0_75 = arith.constant 0 : index
    %c0_76 = arith.constant 0 : index
    %c0_77 = arith.constant 0 : index
    %176 = vector.load %arg23[%c0_75, %c0_76, %c0_77] : memref<1x16x128xf32, #tpu.memory_space<vmem>>, vector<1x16x128xf32>
    %177 = vector.shape_cast %176 : vector<1x16x128xf32> to vector<16x128xf32>
    %178 = vector.shape_cast %175 : vector<16x128xf32> to vector<1x16x128xf32>
    tpu.vector_store %arg23[%c0_75, %c0_76, %c0_77], %178 {strides = array<i32>} : memref<1x16x128xf32, #tpu.memory_space<vmem>>, vector<1x16x128xf32>,
    return
  }
  func.func @transform_0(%arg0: i32) -> (i32, i32, i32) {
    %c0_i32 = arith.constant 0 : i32
    %c0_i32_0 = arith.constant 0 : i32
    %c0_i32_1 = arith.constant 0 : i32
    return %arg0, %c0_i32, %c0_i32_0 : i32, i32, i32
  }
  func.func @transform_1(%arg0: i32) -> (i32, i32, i32) {
    %c0_i32 = arith.constant 0 : i32
    %c0_i32_0 = arith.constant 0 : i32
    %c0_i32_1 = arith.constant 0 : i32
    return %arg0, %c0_i32, %c0_i32_0 : i32, i32, i32
  }
  func.func @transform_2(%arg0: i32) -> (i32, i32) {
    %c0_i32 = arith.constant 0 : i32
    %c0_i32_0 = arith.constant 0 : i32
    %c0_i32_1 = arith.constant 0 : i32
    return %c0_i32, %c0_i32_0 : i32, i32
  }
  func.func @transform_3(%arg0: i32) -> (i32, i32) {
    %c0_i32 = arith.constant 0 : i32
    %c0_i32_0 = arith.constant 0 : i32
    %c0_i32_1 = arith.constant 0 : i32
    return %c0_i32, %c0_i32_0 : i32, i32
  }
  func.func @transform_4(%arg0: i32) -> (i32, i32) {
    %c0_i32 = arith.constant 0 : i32
    %c0_i32_0 = arith.constant 0 : i32
    %c0_i32_1 = arith.constant 0 : i32
    return %c0_i32, %c0_i32_0 : i32, i32
  }
  func.func @transform_5(%arg0: i32) -> (i32, i32) {
    %c0_i32 = arith.constant 0 : i32
    %c0_i32_0 = arith.constant 0 : i32
    %c0_i32_1 = arith.constant 0 : i32
    return %c0_i32, %c0_i32_0 : i32, i32
  }
  func.func @transform_6(%arg0: i32) -> (i32, i32) {
    %c0_i32 = arith.constant 0 : i32
    %c0_i32_0 = arith.constant 0 : i32
    %c0_i32_1 = arith.constant 0 : i32
    return %c0_i32, %c0_i32_0 : i32, i32
  }
  func.func @transform_7(%arg0: i32) -> (i32, i32) {
    %c0_i32 = arith.constant 0 : i32
    %c0_i32_0 = arith.constant 0 : i32
    %c0_i32_1 = arith.constant 0 : i32
    return %c0_i32, %c0_i32_0 : i32, i32
  }
  func.func @transform_8(%arg0: i32) -> (i32, i32) {
    %c0_i32 = arith.constant 0 : i32
    %c0_i32_0 = arith.constant 0 : i32
    %c0_i32_1 = arith.constant 0 : i32
    return %c0_i32, %c0_i32_0 : i32, i32
  }
  func.func @transform_9(%arg0: i32) -> (i32, i32) {
    %c0_i32 = arith.constant 0 : i32
    %c0_i32_0 = arith.constant 0 : i32
    %c0_i32_1 = arith.constant 0 : i32
    return %c0_i32, %c0_i32_0 : i32, i32
  }
  func.func @transform_10(%arg0: i32) -> (i32, i32) {
    %c0_i32 = arith.constant 0 : i32
    %c0_i32_0 = arith.constant 0 : i32
    %c0_i32_1 = arith.constant 0 : i32
    return %c0_i32, %c0_i32_0 : i32, i32
  }
  func.func @transform_11(%arg0: i32) -> (i32, i32) {
    %c0_i32 = arith.constant 0 : i32
    %c0_i32_0 = arith.constant 0 : i32
    %c0_i32_1 = arith.constant 0 : i32
    return %c0_i32, %c0_i32_0 : i32, i32
  }
  func.func @transform_12(%arg0: i32) -> (i32, i32) {
    %c0_i32 = arith.constant 0 : i32
    %c0_i32_0 = arith.constant 0 : i32
    %c0_i32_1 = arith.constant 0 : i32
    return %c0_i32, %c0_i32_0 : i32, i32
  }
  func.func @transform_13(%arg0: i32) -> (i32, i32) {
    %c0_i32 = arith.constant 0 : i32
    %c0_i32_0 = arith.constant 0 : i32
    %c0_i32_1 = arith.constant 0 : i32
    return %c0_i32, %c0_i32_0 : i32, i32
  }
  func.func @transform_14(%arg0: i32) -> (i32, i32) {
    %c0_i32 = arith.constant 0 : i32
    %c0_i32_0 = arith.constant 0 : i32
    %c0_i32_1 = arith.constant 0 : i32
    return %c0_i32, %c0_i32_0 : i32, i32
  }
  func.func @transform_15(%arg0: i32) -> (i32, i32) {
    %c0_i32 = arith.constant 0 : i32
    %c0_i32_0 = arith.constant 0 : i32
    %c0_i32_1 = arith.constant 0 : i32
    return %c0_i32, %c0_i32_0 : i32, i32
  }
  func.func @transform_16(%arg0: i32) -> (i32, i32) {
    %c0_i32 = arith.constant 0 : i32
    %c0_i32_0 = arith.constant 0 : i32
    %c0_i32_1 = arith.constant 0 : i32
    return %c0_i32, %c0_i32_0 : i32, i32
  }
  func.func @transform_17(%arg0: i32) -> (i32, i32) {
    %c0_i32 = arith.constant 0 : i32
    %c0_i32_0 = arith.constant 0 : i32
    %c0_i32_1 = arith.constant 0 : i32
    return %c0_i32, %c0_i32_0 : i32, i32
  }
  func.func @transform_18(%arg0: i32) -> (i32, i32) {
    %c0_i32 = arith.constant 0 : i32
    %c0_i32_0 = arith.constant 0 : i32
    %c0_i32_1 = arith.constant 0 : i32
    return %c0_i32, %c0_i32_0 : i32, i32
  }
  func.func @transform_19(%arg0: i32) -> (i32, i32) {
    %c0_i32 = arith.constant 0 : i32
    %c0_i32_0 = arith.constant 0 : i32
    %c0_i32_1 = arith.constant 0 : i32
    return %c0_i32, %c0_i32_0 : i32, i32
  }
  func.func @transform_20(%arg0: i32) -> (i32, i32) {
    %c0_i32 = arith.constant 0 : i32
    %c0_i32_0 = arith.constant 0 : i32
    %c0_i32_1 = arith.constant 0 : i32
    return %c0_i32, %c0_i32_0 : i32, i32
  }
  func.func @transform_21(%arg0: i32) -> (i32, i32) {
    %c0_i32 = arith.constant 0 : i32
    %c0_i32_0 = arith.constant 0 : i32
    %c0_i32_1 = arith.constant 0 : i32
    return %c0_i32, %c0_i32_0 : i32, i32
  }
  func.func @transform_22(%arg0: i32) -> (i32, i32, i32) {
    %c0_i32 = arith.constant 0 : i32
    %c0_i32_0 = arith.constant 0 : i32
    %c0_i32_1 = arith.constant 0 : i32
    return %arg0, %c0_i32, %c0_i32_0 : i32, i32, i32
  }
}

</mosaic_0001>

<llo_original>
// kernel: tpu_custom_call.1
$region0: #{tpu_custom_call.1}
  #allocation0 [shape = 'u32[]', space=smem, size = 0x4, offset = 0x4, fixed_abs, tag = 'smem constant byte address 0x4 - core index']
  #allocation1 [shape = 'u32[144,128]{1,0:T(1,128)}', space=vmem, size = 0x12000, scoped, tag = 'internal scratch']
  %s0 = inlined_call_operand.hbm [shape: f32[2,16,128], index: 0, kind: input, shape index: {}]
  %s1 = inlined_call_operand.hbm [shape: f32[2,16,128], index: 1, kind: input, shape index: {}]
  %s2 = inlined_call_operand.hbm [shape: bf16[128,384], index: 2, kind: input, shape index: {}]
  %s3 = inlined_call_operand.vmem [shape: f32[1,384], index: 3, kind: input, shape index: {}]
  %s4 = inlined_call_operand.hbm [shape: bf16[128,128], index: 4, kind: input, shape index: {}]
  %s5 = inlined_call_operand.vmem [shape: f32[1,128], index: 5, kind: input, shape index: {}]
  %s6 = inlined_call_operand.vmem [shape: f32[1,128], index: 6, kind: input, shape index: {}]
  %s7 = inlined_call_operand.vmem [shape: f32[1,128], index: 7, kind: input, shape index: {}]
  %s8 = inlined_call_operand.hbm [shape: bf16[128,128], index: 8, kind: input, shape index: {}]
  %s9 = inlined_call_operand.vmem [shape: f32[1,128], index: 9, kind: input, shape index: {}]
  %s10 = inlined_call_operand.hbm [shape: bf16[128,256], index: 10, kind: input, shape index: {}]
  %s11 = inlined_call_operand.vmem [shape: f32[1,256], index: 11, kind: input, shape index: {}]
  %s12 = inlined_call_operand.hbm [shape: bf16[128,128], index: 12, kind: input, shape index: {}]
  %s13 = inlined_call_operand.vmem [shape: f32[1,128], index: 13, kind: input, shape index: {}]
  %s14 = inlined_call_operand.vmem [shape: f32[1,128], index: 14, kind: input, shape index: {}]
  %s15 = inlined_call_operand.vmem [shape: f32[1,128], index: 15, kind: input, shape index: {}]
  %s16 = inlined_call_operand.hbm [shape: bf16[128,256], index: 16, kind: input, shape index: {}]
  %s17 = inlined_call_operand.vmem [shape: f32[1,256], index: 17, kind: input, shape index: {}]
  %s18 = inlined_call_operand.hbm [shape: bf16[256,128], index: 18, kind: input, shape index: {}]
  %s19 = inlined_call_operand.vmem [shape: f32[1,128], index: 19, kind: input, shape index: {}]
  %s20 = inlined_call_operand.vmem [shape: f32[1,128], index: 20, kind: input, shape index: {}]
  %s21 = inlined_call_operand.vmem [shape: f32[1,128], index: 21, kind: input, shape index: {}]
  %s22 = inlined_call_operand.hbm [shape: f32[2,16,128], index: 22, kind: output, shape index: {}]
  %s23 = sld [smem:[#allocation0]]
  $region157: #{tpu_custom_call.1} parent=0
    _
  %s25 = ssub.s32 1, %s23
  %s26 = scalar_select 0, %s25, %s23
  $region1: #{tpu_custom_call.1} parent=0
    #allocation2 [shape = 'u8[16384]{0}', space=vmem, size = 0x4000, scoped, tag = 'input window, operand 0']
    #allocation3 [shape = 's32[2]{0}', space=sflag, size = 0x8, scoped, tag = 'scoped memory for tpu_custom_call.1']
    #allocation4 [shape = 's32[2]{0}', space=sflag, size = 0x8, scoped, tag = 'scoped memory for tpu_custom_call.1']
    #allocation5 [shape = 'u8[16384]{0}', space=vmem, size = 0x4000, scoped, tag = 'input window, operand 1']
    #allocation6 [shape = 's32[2]{0}', space=sflag, size = 0x8, scoped, tag = 'scoped memory for tpu_custom_call.1']
    #allocation7 [shape = 'u8[98304]{0}', space=vmem, size = 0x18000, scoped, tag = 'input window, operand 2, single buffered']
    #allocation8 [shape = 'u8[32768]{0}', space=vmem, size = 0x8000, scoped, tag = 'input window, operand 4, single buffered']
    #allocation9 [shape = 's32[1]{0}', space=sflag, size = 0x4, scoped, tag = 'scoped memory for tpu_custom_call.1']
    #allocation10 [shape = 'u8[32768]{0}', space=vmem, size = 0x8000, scoped, tag = 'input window, operand 8, single buffered']
    #allocation11 [shape = 'u8[65536]{0}', space=vmem, size = 0x10000, scoped, tag = 'input window, operand 10, single buffered']
    #allocation12 [shape = 's32[1]{0}', space=sflag, size = 0x4, scoped, tag = 'scoped memory for tpu_custom_call.1']
    #allocation13 [shape = 'u8[32768]{0}', space=vmem, size = 0x8000, scoped, tag = 'input window, operand 12, single buffered']
    #allocation14 [shape = 'u8[65536]{0}', space=vmem, size = 0x10000, scoped, tag = 'input window, operand 16, single buffered']
    #allocation15 [shape = 's32[1]{0}', space=sflag, size = 0x4, scoped, tag = 'scoped memory for tpu_custom_call.1']
    #allocation16 [shape = 'u8[65536]{0}', space=vmem, size = 0x10000, scoped, tag = 'input window, operand 18, single buffered']
    #allocation17 [shape = 'u8[16384]{0}', space=vmem, size = 0x4000, scoped, tag = 'output window, operand 0']
    %27 = vsyncpa [#allocation3], 0
    %s28 = scalar_lea.sflag [#allocation3], 1
    %29 = vsyncpa %s28, 0
    %30 = vsyncpa [#allocation6], 0
    %s31 = scalar_lea.sflag [#allocation6], 1
    %32 = vsyncpa %s31, 0
    %33 = vsyncpa [#allocation9], 0
    %34 = vsyncpa [#allocation12], 0
    %35 = vsyncpa [#allocation15], 0
    %36 = vsyncpa [#allocation4], 0
    %s37 = scalar_lea.sflag [#allocation4], 1
    %38 = vsyncpa %s37, 0
    loop: start=0, step=1, limit=4
    $region2: #{tpu_custom_call.1} parent=1 // loop_pre_header
      _
    $region3: #{tpu_custom_call.1} parent=1 // loop_header
      %s40 = sphi 0, %s44
      %p41 = scmp.ge.s32.totalorder %s40, 4
      %s50 = sphi 0, %s52
      %s53 = sphi 0, %s50
      %s54 = sphi 0, %s53
      %s70 = sphi 0, %s54
      %s76 = sphi 0, %s78
      %s79 = sphi 0, %s76
      %s80 = sphi 0, %s79
      %s96 = sphi 0, %s80
      %s100 = sphi 0, %s100
      %s102 = sphi 0, %s100
      %s103 = sphi 0, %s102
      %s117 = sphi 0, %s103
      %s121 = sphi 0, %s121
      %s123 = sphi 0, %s121
      %s124 = sphi 0, %s123
      %s138 = sphi 0, %s124
      %s142 = sphi 0, %s142
      %s144 = sphi 0, %s142
      %s145 = sphi 0, %s144
      %s159 = sphi 0, %s145
      %s163 = sphi 0, %s163
      %s165 = sphi 0, %s163
      %s166 = sphi 0, %s165
      %s180 = sphi 0, %s166
      %s184 = sphi 0, %s184
      %s186 = sphi 0, %s184
      %s187 = sphi 0, %s186
      %s201 = sphi 0, %s187
      %s205 = sphi 0, %s205
      %s207 = sphi 0, %s205
      %s208 = sphi 0, %s207
      %s222 = sphi 0, %s208
      %s226 = sphi 0, %s226
      %s228 = sphi 0, %s226
      %s229 = sphi 0, %s228
      %s243 = sphi 0, %s229
      %s247 = sphi 0, %s247
      %s249 = sphi 0, %s247
      %s250 = sphi 0, %s249
      %s264 = sphi 0, %s250
      %s268 = sphi 0, %s268
      %s270 = sphi 0, %s268
      %s271 = sphi 0, %s270
      %s285 = sphi 0, %s271
      %s289 = sphi 0, %s289
      %s291 = sphi 0, %s289
      %s292 = sphi 0, %s291
      %s306 = sphi 0, %s292
      %s310 = sphi 0, %s310
      %s312 = sphi 0, %s310
      %s313 = sphi 0, %s312
      %s327 = sphi 0, %s313
      %s331 = sphi 0, %s331
      %s333 = sphi 0, %s331
      %s334 = sphi 0, %s333
      %s348 = sphi 0, %s334
      %s352 = sphi 0, %s352
      %s354 = sphi 0, %s352
      %s355 = sphi 0, %s354
      %s369 = sphi 0, %s355
      %s373 = sphi 0, %s373
      %s375 = sphi 0, %s373
      %s376 = sphi 0, %s375
      %s390 = sphi 0, %s376
      %s394 = sphi 0, %s394
      %s396 = sphi 0, %s394
      %s397 = sphi 0, %s396
      %s411 = sphi 0, %s397
      %s415 = sphi 0, %s415
      %s417 = sphi 0, %s415
      %s418 = sphi 0, %s417
      %s432 = sphi 0, %s418
      %s436 = sphi 0, %s436
      %s438 = sphi 0, %s436
      %s439 = sphi 0, %s438
      %s453 = sphi 0, %s439
      %s457 = sphi 0, %s457
      %s459 = sphi 0, %s457
      %s460 = sphi 0, %s459
      %s474 = sphi 0, %s460
      %s478 = sphi 0, %s478
      %s480 = sphi 0, %s478
      %s481 = sphi 0, %s480
      %s495 = sphi 0, %s481
      %s499 = sphi 0, %s499
      %s501 = sphi 0, %s499
      %s502 = sphi 0, %s501
      %s516 = sphi 0, %s502
      %s522 = sphi 0, %s524
      %s525 = sphi 0, %s522
      %s526 = sphi 0, %s525
      %s542 = sphi 0, %s526
    $region4: #{tpu_custom_call.1} parent=1 // loop_header_branch
      %43 = sbr.rel (%p41) target = $region8
    $region5: #{tpu_custom_call.1} parent=1 // loop_body
      %s45 = ssub.s32 %s40, 1
      %s46 = ssub.s32 %s40, 2
      %s47 = sadd.s32 %s40, 1
      %s48 = ssub.s32 %s40, %s47
      %p49 = scmp.eq.s32.totalorder %s48, 0
      %s51 = sadd.s32 %s50, 1
      %s52 = scalar_select %p49, %s50, %s51
      %p55 = pneg %p49
      %p56 = scmp.eq.s32.totalorder %s40, 1
      %p57 = por %p55, %p56
      %p58 = scmp.ne.s32.totalorder %s50, %s53
      %p59 = scmp.eq.s32.totalorder %s40, 0
      %p60 = por %p58, %p59
      %p61 = scmp.ne.s32.totalorder %s50, %s53
      %p62 = scmp.eq.s32.totalorder %s45, 1
      %p63 = por %p61, %p62
      %p64 = scmp.ne.s32.totalorder %s53, %s54
      %p65 = scmp.eq.s32.totalorder %s45, 0
      %p66 = por %p64, %p65
      %p67 = scmp.ne.s32.totalorder %s53, %s54
      %p68 = scmp.eq.s32.totalorder %s46, 1
      %p69 = por %p67, %p68
      %p71 = scmp.ne.s32.totalorder %s54, %s70
      %p72 = scmp.eq.s32.totalorder %s46, 0
      %p73 = por %p71, %p72
      %s74 = ssub.s32 %s40, %s47
      %p75 = scmp.eq.s32.totalorder %s74, 0
      %s77 = sadd.s32 %s76, 1
      %s78 = scalar_select %p75, %s76, %s77
      %p81 = pneg %p75
      %p82 = scmp.eq.s32.totalorder %s40, 1
      %p83 = por %p81, %p82
      %p84 = scmp.ne.s32.totalorder %s76, %s79
      %p85 = scmp.eq.s32.totalorder %s40, 0
      %p86 = por %p84, %p85
      %p87 = scmp.ne.s32.totalorder %s76, %s79
      %p88 = scmp.eq.s32.totalorder %s45, 1
      %p89 = por %p87, %p88
      %p90 = scmp.ne.s32.totalorder %s79, %s80
      %p91 = scmp.eq.s32.totalorder %s45, 0
      %p92 = por %p90, %p91
      %p93 = scmp.ne.s32.totalorder %s79, %s80
      %p94 = scmp.eq.s32.totalorder %s46, 1
      %p95 = por %p93, %p94
      %p97 = scmp.ne.s32.totalorder %s80, %s96
      %p98 = scmp.eq.s32.totalorder %s46, 0
      %p99 = por %p97, %p98
      %s101 = sadd.s32 %s100, 1
      %p104 = scmp.eq.s32.totalorder %s40, 1
      %p105 = scmp.ne.s32.totalorder %s100, %s102
      %p106 = scmp.eq.s32.totalorder %s40, 0
      %p107 = por %p105, %p106
      %p108 = scmp.ne.s32.totalorder %s100, %s102
      %p109 = scmp.eq.s32.totalorder %s45, 1
      %p110 = por %p108, %p109
      %p111 = scmp.ne.s32.totalorder %s102, %s103
      %p112 = scmp.eq.s32.totalorder %s45, 0
      %p113 = por %p111, %p112
      %p114 = scmp.ne.s32.totalorder %s102, %s103
      %p115 = scmp.eq.s32.totalorder %s46, 1
      %p116 = por %p114, %p115
      %p118 = scmp.ne.s32.totalorder %s103, %s117
      %p119 = scmp.eq.s32.totalorder %s46, 0
      %p120 = por %p118, %p119
      %s122 = sadd.s32 %s121, 1
      %p125 = scmp.eq.s32.totalorder %s40, 1
      %p126 = scmp.ne.s32.totalorder %s121, %s123
      %p127 = scmp.eq.s32.totalorder %s40, 0
      %p128 = por %p126, %p127
      %p129 = scmp.ne.s32.totalorder %s121, %s123
      %p130 = scmp.eq.s32.totalorder %s45, 1
      %p131 = por %p129, %p130
      %p132 = scmp.ne.s32.totalorder %s123, %s124
      %p133 = scmp.eq.s32.totalorder %s45, 0
      %p134 = por %p132, %p133
      %p135 = scmp.ne.s32.totalorder %s123, %s124
      %p136 = scmp.eq.s32.totalorder %s46, 1
      %p137 = por %p135, %p136
      %p139 = scmp.ne.s32.totalorder %s124, %s138
      %p140 = scmp.eq.s32.totalorder %s46, 0
      %p141 = por %p139, %p140
      %s143 = sadd.s32 %s142, 1
      %p146 = scmp.eq.s32.totalorder %s40, 1
      %p147 = scmp.ne.s32.totalorder %s142, %s144
      %p148 = scmp.eq.s32.totalorder %s40, 0
      %p149 = por %p147, %p148
      %p150 = scmp.ne.s32.totalorder %s142, %s144
      %p151 = scmp.eq.s32.totalorder %s45, 1
      %p152 = por %p150, %p151
      %p153 = scmp.ne.s32.totalorder %s144, %s145
      %p154 = scmp.eq.s32.totalorder %s45, 0
      %p155 = por %p153, %p154
      %p156 = scmp.ne.s32.totalorder %s144, %s145
      %p157 = scmp.eq.s32.totalorder %s46, 1
      %p158 = por %p156, %p157
      %p160 = scmp.ne.s32.totalorder %s145, %s159
      %p161 = scmp.eq.s32.totalorder %s46, 0
      %p162 = por %p160, %p161
      %s164 = sadd.s32 %s163, 1
      %p167 = scmp.eq.s32.totalorder %s40, 1
      %p168 = scmp.ne.s32.totalorder %s163, %s165
      %p169 = scmp.eq.s32.totalorder %s40, 0
      %p170 = por %p168, %p169
      %p171 = scmp.ne.s32.totalorder %s163, %s165
      %p172 = scmp.eq.s32.totalorder %s45, 1
      %p173 = por %p171, %p172
      %p174 = scmp.ne.s32.totalorder %s165, %s166
      %p175 = scmp.eq.s32.totalorder %s45, 0
      %p176 = por %p174, %p175
      %p177 = scmp.ne.s32.totalorder %s165, %s166
      %p178 = scmp.eq.s32.totalorder %s46, 1
      %p179 = por %p177, %p178
      %p181 = scmp.ne.s32.totalorder %s166, %s180
      %p182 = scmp.eq.s32.totalorder %s46, 0
      %p183 = por %p181, %p182
      %s185 = sadd.s32 %s184, 1
      %p188 = scmp.eq.s32.totalorder %s40, 1
      %p189 = scmp.ne.s32.totalorder %s184, %s186
      %p190 = scmp.eq.s32.totalorder %s40, 0
      %p191 = por %p189, %p190
      %p192 = scmp.ne.s32.totalorder %s184, %s186
      %p193 = scmp.eq.s32.totalorder %s45, 1
      %p194 = por %p192, %p193
      %p195 = scmp.ne.s32.totalorder %s186, %s187
      %p196 = scmp.eq.s32.totalorder %s45, 0
      %p197 = por %p195, %p196
      %p198 = scmp.ne.s32.totalorder %s186, %s187
      %p199 = scmp.eq.s32.totalorder %s46, 1
      %p200 = por %p198, %p199
      %p202 = scmp.ne.s32.totalorder %s187, %s201
      %p203 = scmp.eq.s32.totalorder %s46, 0
      %p204 = por %p202, %p203
      %s206 = sadd.s32 %s205, 1
      %p209 = scmp.eq.s32.totalorder %s40, 1
      %p210 = scmp.ne.s32.totalorder %s205, %s207
      %p211 = scmp.eq.s32.totalorder %s40, 0
      %p212 = por %p210, %p211
      %p213 = scmp.ne.s32.totalorder %s205, %s207
      %p214 = scmp.eq.s32.totalorder %s45, 1
      %p215 = por %p213, %p214
      %p216 = scmp.ne.s32.totalorder %s207, %s208
      %p217 = scmp.eq.s32.totalorder %s45, 0
      %p218 = por %p216, %p217
      %p219 = scmp.ne.s32.totalorder %s207, %s208
      %p220 = scmp.eq.s32.totalorder %s46, 1
      %p221 = por %p219, %p220
      %p223 = scmp.ne.s32.totalorder %s208, %s222
      %p224 = scmp.eq.s32.totalorder %s46, 0
      %p225 = por %p223, %p224
      %s227 = sadd.s32 %s226, 1
      %p230 = scmp.eq.s32.totalorder %s40, 1
      %p231 = scmp.ne.s32.totalorder %s226, %s228
      %p232 = scmp.eq.s32.totalorder %s40, 0
      %p233 = por %p231, %p232
      %p234 = scmp.ne.s32.totalorder %s226, %s228
      %p235 = scmp.eq.s32.totalorder %s45, 1
      %p236 = por %p234, %p235
      %p237 = scmp.ne.s32.totalorder %s228, %s229
      %p238 = scmp.eq.s32.totalorder %s45, 0
      %p239 = por %p237, %p238
      %p240 = scmp.ne.s32.totalorder %s228, %s229
      %p241 = scmp.eq.s32.totalorder %s46, 1
      %p242 = por %p240, %p241
      %p244 = scmp.ne.s32.totalorder %s229, %s243
      %p245 = scmp.eq.s32.totalorder %s46, 0
      %p246 = por %p244, %p245
      %s248 = sadd.s32 %s247, 1
      %p251 = scmp.eq.s32.totalorder %s40, 1
      %p252 = scmp.ne.s32.totalorder %s247, %s249
      %p253 = scmp.eq.s32.totalorder %s40, 0
      %p254 = por %p252, %p253
      %p255 = scmp.ne.s32.totalorder %s247, %s249
      %p256 = scmp.eq.s32.totalorder %s45, 1
      %p257 = por %p255, %p256
      %p258 = scmp.ne.s32.totalorder %s249, %s250
      %p259 = scmp.eq.s32.totalorder %s45, 0
      %p260 = por %p258, %p259
      %p261 = scmp.ne.s32.totalorder %s249, %s250
      %p262 = scmp.eq.s32.totalorder %s46, 1
      %p263 = por %p261, %p262
      %p265 = scmp.ne.s32.totalorder %s250, %s264
      %p266 = scmp.eq.s32.totalorder %s46, 0
      %p267 = por %p265, %p266
      %s269 = sadd.s32 %s268, 1
      %p272 = scmp.eq.s32.totalorder %s40, 1
      %p273 = scmp.ne.s32.totalorder %s268, %s270
      %p274 = scmp.eq.s32.totalorder %s40, 0
      %p275 = por %p273, %p274
      %p276 = scmp.ne.s32.totalorder %s268, %s270
      %p277 = scmp.eq.s32.totalorder %s45, 1
      %p278 = por %p276, %p277
      %p279 = scmp.ne.s32.totalorder %s270, %s271
      %p280 = scmp.eq.s32.totalorder %s45, 0
      %p281 = por %p279, %p280
      %p282 = scmp.ne.s32.totalorder %s270, %s271
      %p283 = scmp.eq.s32.totalorder %s46, 1
      %p284 = por %p282, %p283
      %p286 = scmp.ne.s32.totalorder %s271, %s285
      %p287 = scmp.eq.s32.totalorder %s46, 0
      %p288 = por %p286, %p287
      %s290 = sadd.s32 %s289, 1
      %p293 = scmp.eq.s32.totalorder %s40, 1
      %p294 = scmp.ne.s32.totalorder %s289, %s291
      %p295 = scmp.eq.s32.totalorder %s40, 0
      %p296 = por %p294, %p295
      %p297 = scmp.ne.s32.totalorder %s289, %s291
      %p298 = scmp.eq.s32.totalorder %s45, 1
      %p299 = por %p297, %p298
      %p300 = scmp.ne.s32.totalorder %s291, %s292
      %p301 = scmp.eq.s32.totalorder %s45, 0
      %p302 = por %p300, %p301
      %p303 = scmp.ne.s32.totalorder %s291, %s292
      %p304 = scmp.eq.s32.totalorder %s46, 1
      %p305 = por %p303, %p304
      %p307 = scmp.ne.s32.totalorder %s292, %s306
      %p308 = scmp.eq.s32.totalorder %s46, 0
      %p309 = por %p307, %p308
      %s311 = sadd.s32 %s310, 1
      %p314 = scmp.eq.s32.totalorder %s40, 1
      %p315 = scmp.ne.s32.totalorder %s310, %s312
      %p316 = scmp.eq.s32.totalorder %s40, 0
      %p317 = por %p315, %p316
      %p318 = scmp.ne.s32.totalorder %s310, %s312
      %p319 = scmp.eq.s32.totalorder %s45, 1
      %p320 = por %p318, %p319
      %p321 = scmp.ne.s32.totalorder %s312, %s313
      %p322 = scmp.eq.s32.totalorder %s45, 0
      %p323 = por %p321, %p322
      %p324 = scmp.ne.s32.totalorder %s312, %s313
      %p325 = scmp.eq.s32.totalorder %s46, 1
      %p326 = por %p324, %p325
      %p328 = scmp.ne.s32.totalorder %s313, %s327
      %p329 = scmp.eq.s32.totalorder %s46, 0
      %p330 = por %p328, %p329
      %s332 = sadd.s32 %s331, 1
      %p335 = scmp.eq.s32.totalorder %s40, 1
      %p336 = scmp.ne.s32.totalorder %s331, %s333
      %p337 = scmp.eq.s32.totalorder %s40, 0
      %p338 = por %p336, %p337
      %p339 = scmp.ne.s32.totalorder %s331, %s333
      %p340 = scmp.eq.s32.totalorder %s45, 1
      %p341 = por %p339, %p340
      %p342 = scmp.ne.s32.totalorder %s333, %s334
      %p343 = scmp.eq.s32.totalorder %s45, 0
      %p344 = por %p342, %p343
      %p345 = scmp.ne.s32.totalorder %s333, %s334
      %p346 = scmp.eq.s32.totalorder %s46, 1
      %p347 = por %p345, %p346
      %p349 = scmp.ne.s32.totalorder %s334, %s348
      %p350 = scmp.eq.s32.totalorder %s46, 0
      %p351 = por %p349, %p350
      %s353 = sadd.s32 %s352, 1
      %p356 = scmp.eq.s32.totalorder %s40, 1
      %p357 = scmp.ne.s32.totalorder %s352, %s354
      %p358 = scmp.eq.s32.totalorder %s40, 0
      %p359 = por %p357, %p358
      %p360 = scmp.ne.s32.totalorder %s352, %s354
      %p361 = scmp.eq.s32.totalorder %s45, 1
      %p362 = por %p360, %p361
      %p363 = scmp.ne.s32.totalorder %s354, %s355
      %p364 = scmp.eq.s32.totalorder %s45, 0
      %p365 = por %p363, %p364
      %p366 = scmp.ne.s32.totalorder %s354, %s355
      %p367 = scmp.eq.s32.totalorder %s46, 1
      %p368 = por %p366, %p367
      %p370 = scmp.ne.s32.totalorder %s355, %s369
      %p371 = scmp.eq.s32.totalorder %s46, 0
      %p372 = por %p370, %p371
      %s374 = sadd.s32 %s373, 1
      %p377 = scmp.eq.s32.totalorder %s40, 1
      %p378 = scmp.ne.s32.totalorder %s373, %s375
      %p379 = scmp.eq.s32.totalorder %s40, 0
      %p380 = por %p378, %p379
      %p381 = scmp.ne.s32.totalorder %s373, %s375
      %p382 = scmp.eq.s32.totalorder %s45, 1
      %p383 = por %p381, %p382
      %p384 = scmp.ne.s32.totalorder %s375, %s376
      %p385 = scmp.eq.s32.totalorder %s45, 0
      %p386 = por %p384, %p385
      %p387 = scmp.ne.s32.totalorder %s375, %s376
      %p388 = scmp.eq.s32.totalorder %s46, 1
      %p389 = por %p387, %p388
      %p391 = scmp.ne.s32.totalorder %s376, %s390
      %p392 = scmp.eq.s32.totalorder %s46, 0
      %p393 = por %p391, %p392
      %s395 = sadd.s32 %s394, 1
      %p398 = scmp.eq.s32.totalorder %s40, 1
      %p399 = scmp.ne.s32.totalorder %s394, %s396
      %p400 = scmp.eq.s32.totalorder %s40, 0
      %p401 = por %p399, %p400
      %p402 = scmp.ne.s32.totalorder %s394, %s396
      %p403 = scmp.eq.s32.totalorder %s45, 1
      %p404 = por %p402, %p403
      %p405 = scmp.ne.s32.totalorder %s396, %s397
      %p406 = scmp.eq.s32.totalorder %s45, 0
      %p407 = por %p405, %p406
      %p408 = scmp.ne.s32.totalorder %s396, %s397
      %p409 = scmp.eq.s32.totalorder %s46, 1
      %p410 = por %p408, %p409
      %p412 = scmp.ne.s32.totalorder %s397, %s411
      %p413 = scmp.eq.s32.totalorder %s46, 0
      %p414 = por %p412, %p413
      %s416 = sadd.s32 %s415, 1
      %p419 = scmp.eq.s32.totalorder %s40, 1
      %p420 = scmp.ne.s32.totalorder %s415, %s417
      %p421 = scmp.eq.s32.totalorder %s40, 0
      %p422 = por %p420, %p421
      %p423 = scmp.ne.s32.totalorder %s415, %s417
      %p424 = scmp.eq.s32.totalorder %s45, 1
      %p425 = por %p423, %p424
      %p426 = scmp.ne.s32.totalorder %s417, %s418
      %p427 = scmp.eq.s32.totalorder %s45, 0
      %p428 = por %p426, %p427
      %p429 = scmp.ne.s32.totalorder %s417, %s418
      %p430 = scmp.eq.s32.totalorder %s46, 1
      %p431 = por %p429, %p430
      %p433 = scmp.ne.s32.totalorder %s418, %s432
      %p434 = scmp.eq.s32.totalorder %s46, 0
      %p435 = por %p433, %p434
      %s437 = sadd.s32 %s436, 1
      %p440 = scmp.eq.s32.totalorder %s40, 1
      %p441 = scmp.ne.s32.totalorder %s436, %s438
      %p442 = scmp.eq.s32.totalorder %s40, 0
      %p443 = por %p441, %p442
      %p444 = scmp.ne.s32.totalorder %s436, %s438
      %p445 = scmp.eq.s32.totalorder %s45, 1
      %p446 = por %p444, %p445
      %p447 = scmp.ne.s32.totalorder %s438, %s439
      %p448 = scmp.eq.s32.totalorder %s45, 0
      %p449 = por %p447, %p448
      %p450 = scmp.ne.s32.totalorder %s438, %s439
      %p451 = scmp.eq.s32.totalorder %s46, 1
      %p452 = por %p450, %p451
      %p454 = scmp.ne.s32.totalorder %s439, %s453
      %p455 = scmp.eq.s32.totalorder %s46, 0
      %p456 = por %p454, %p455
      %s458 = sadd.s32 %s457, 1
      %p461 = scmp.eq.s32.totalorder %s40, 1
      %p462 = scmp.ne.s32.totalorder %s457, %s459
      %p463 = scmp.eq.s32.totalorder %s40, 0
      %p464 = por %p462, %p463
      %p465 = scmp.ne.s32.totalorder %s457, %s459
      %p466 = scmp.eq.s32.totalorder %s45, 1
      %p467 = por %p465, %p466
      %p468 = scmp.ne.s32.totalorder %s459, %s460
      %p469 = scmp.eq.s32.totalorder %s45, 0
      %p470 = por %p468, %p469
      %p471 = scmp.ne.s32.totalorder %s459, %s460
      %p472 = scmp.eq.s32.totalorder %s46, 1
      %p473 = por %p471, %p472
      %p475 = scmp.ne.s32.totalorder %s460, %s474
      %p476 = scmp.eq.s32.totalorder %s46, 0
      %p477 = por %p475, %p476
      %s479 = sadd.s32 %s478, 1
      %p482 = scmp.eq.s32.totalorder %s40, 1
      %p483 = scmp.ne.s32.totalorder %s478, %s480
      %p484 = scmp.eq.s32.totalorder %s40, 0
      %p485 = por %p483, %p484
      %p486 = scmp.ne.s32.totalorder %s478, %s480
      %p487 = scmp.eq.s32.totalorder %s45, 1
      %p488 = por %p486, %p487
      %p489 = scmp.ne.s32.totalorder %s480, %s481
      %p490 = scmp.eq.s32.totalorder %s45, 0
      %p491 = por %p489, %p490
      %p492 = scmp.ne.s32.totalorder %s480, %s481
      %p493 = scmp.eq.s32.totalorder %s46, 1
      %p494 = por %p492, %p493
      %p496 = scmp.ne.s32.totalorder %s481, %s495
      %p497 = scmp.eq.s32.totalorder %s46, 0
      %p498 = por %p496, %p497
      %s500 = sadd.s32 %s499, 1
      %p503 = scmp.eq.s32.totalorder %s40, 1
      %p504 = scmp.ne.s32.totalorder %s499, %s501
      %p505 = scmp.eq.s32.totalorder %s40, 0
      %p506 = por %p504, %p505
      %p507 = scmp.ne.s32.totalorder %s499, %s501
      %p508 = scmp.eq.s32.totalorder %s45, 1
      %p509 = por %p507, %p508
      %p510 = scmp.ne.s32.totalorder %s501, %s502
      %p511 = scmp.eq.s32.totalorder %s45, 0
      %p512 = por %p510, %p511
      %p513 = scmp.ne.s32.totalorder %s501, %s502
      %p514 = scmp.eq.s32.totalorder %s46, 1
      %p515 = por %p513, %p514
      %p517 = scmp.ne.s32.totalorder %s502, %s516
      %p518 = scmp.eq.s32.totalorder %s46, 0
      %p519 = por %p517, %p518
      %s520 = ssub.s32 %s40, %s47
      %p521 = scmp.eq.s32.totalorder %s520, 0
      %s523 = sadd.s32 %s522, 1
      %s524 = scalar_select %p521, %s522, %s523
      %p527 = pneg %p521
      %p528 = scmp.eq.s32.totalorder %s40, 1
      %p529 = por %p527, %p528
      %p530 = scmp.ne.s32.totalorder %s522, %s525
      %p531 = scmp.eq.s32.totalorder %s40, 0
      %p532 = por %p530, %p531
      %p533 = scmp.ne.s32.totalorder %s522, %s525
      %p534 = scmp.eq.s32.totalorder %s45, 1
      %p535 = por %p533, %p534
      %p536 = scmp.ne.s32.totalorder %s525, %s526
      %p537 = scmp.eq.s32.totalorder %s45, 0
      %p538 = por %p536, %p537
      %p539 = scmp.ne.s32.totalorder %s525, %s526
      %p540 = scmp.eq.s32.totalorder %s46, 1
      %p541 = por %p539, %p540
      %p543 = scmp.ne.s32.totalorder %s526, %s542
      %p544 = scmp.eq.s32.totalorder %s46, 0
      %p545 = por %p543, %p544
      %p546 = scmp.le.s32.totalorder 1, %s40
      %p547 = scmp.lt.s32.totalorder %s40, 3
      %p548 = pnand %p546, %p547
      %p549 = pneg %p548
      // Predicated region
      $region9: #{tpu_custom_call.1} parent=5 // pred_check
        _
      $region10: #{tpu_custom_call.1} parent=5 // pred_check_branch
        %551 = sbr.rel (%p548) target = $region12
      $region11: #{tpu_custom_call.1} parent=5 // pred_region
        %s552 = ssub.s32 %s40, 1
        // Predicated region
        $region13: #{tpu_custom_call.1} parent=11 // pred_check
          %p553 = pneg %p113
        $region14: #{tpu_custom_call.1} parent=11 // pred_check_branch
          %555 = sbr.rel (%p553) target = $region16
        $region15: #{tpu_custom_call.1} parent=11 // pred_region
          %s557 = ssub.s32 3072, 3072
          %558 = vsyncadd [#allocation6], %s557
          %s559 = sshll.u32 [#allocation7], 4
          %s560 = int_to_ptr.vmem [resolvable:$true] %s559
          %565 = dma.hbm_to_vmem [thread:$0]  %s2, 3072, %s560, [#allocation6], 192, 192, 12
        $region16: #{tpu_custom_call.1} parent=11 // pred_fallthru
          _
        // Predicated region
        $region17: #{tpu_custom_call.1} parent=11 // pred_check
          %p566 = pneg %p134
        $region18: #{tpu_custom_call.1} parent=11 // pred_check_branch
          %568 = sbr.rel (%p566) target = $region20
        $region19: #{tpu_custom_call.1} parent=11 // pred_region
          _
        $region20: #{tpu_custom_call.1} parent=11 // pred_fallthru
          _
        // Predicated region
        $region21: #{tpu_custom_call.1} parent=11 // pred_check
          %p569 = pneg %p155
        $region22: #{tpu_custom_call.1} parent=11 // pred_check_branch
          %571 = sbr.rel (%p569) target = $region24
        $region23: #{tpu_custom_call.1} parent=11 // pred_region
          %s573 = ssub.s32 1024, 1024
          %574 = vsyncadd [#allocation9], %s573
          %s575 = sshll.u32 [#allocation8], 4
          %s576 = int_to_ptr.vmem [resolvable:$true] %s575
          %581 = dma.hbm_to_vmem [thread:$0]  %s4, 1024, %s576, [#allocation9], 64, 64, 4
        $region24: #{tpu_custom_call.1} parent=11 // pred_fallthru
          _
        // Predicated region
        $region25: #{tpu_custom_call.1} parent=11 // pred_check
          %p582 = pneg %p176
        $region26: #{tpu_custom_call.1} parent=11 // pred_check_branch
          %584 = sbr.rel (%p582) target = $region28
        $region27: #{tpu_custom_call.1} parent=11 // pred_region
          _
        $region28: #{tpu_custom_call.1} parent=11 // pred_fallthru
          _
        // Predicated region
        $region29: #{tpu_custom_call.1} parent=11 // pred_check
          %p585 = pneg %p197
        $region30: #{tpu_custom_call.1} parent=11 // pred_check_branch
          %587 = sbr.rel (%p585) target = $region32
        $region31: #{tpu_custom_call.1} parent=11 // pred_region
          _
        $region32: #{tpu_custom_call.1} parent=11 // pred_fallthru
          _
        // Predicated region
        $region33: #{tpu_custom_call.1} parent=11 // pred_check
          %p588 = pneg %p218
        $region34: #{tpu_custom_call.1} parent=11 // pred_check_branch
          %590 = sbr.rel (%p588) target = $region36
        $region35: #{tpu_custom_call.1} parent=11 // pred_region
          _
        $region36: #{tpu_custom_call.1} parent=11 // pred_fallthru
          _
        // Predicated region
        $region37: #{tpu_custom_call.1} parent=11 // pred_check
          %p591 = pneg %p239
        $region38: #{tpu_custom_call.1} parent=11 // pred_check_branch
          %593 = sbr.rel (%p591) target = $region40
        $region39: #{tpu_custom_call.1} parent=11 // pred_region
          %s595 = ssub.s32 1024, 1024
          %596 = vsyncadd [#allocation9], %s595
          %s597 = sshll.u32 [#allocation10], 4
          %s598 = int_to_ptr.vmem [resolvable:$true] %s597
          %603 = dma.hbm_to_vmem [thread:$0]  %s8, 1024, %s598, [#allocation9], 64, 64, 4
        $region40: #{tpu_custom_call.1} parent=11 // pred_fallthru
          _
        // Predicated region
        $region41: #{tpu_custom_call.1} parent=11 // pred_check
          %p604 = pneg %p260
        $region42: #{tpu_custom_call.1} parent=11 // pred_check_branch
          %606 = sbr.rel (%p604) target = $region44
        $region43: #{tpu_custom_call.1} parent=11 // pred_region
          _
        $region44: #{tpu_custom_call.1} parent=11 // pred_fallthru
          _
        // Predicated region
        $region45: #{tpu_custom_call.1} parent=11 // pred_check
          %p607 = pneg %p281
        $region46: #{tpu_custom_call.1} parent=11 // pred_check_branch
          %609 = sbr.rel (%p607) target = $region48
        $region47: #{tpu_custom_call.1} parent=11 // pred_region
          %s611 = ssub.s32 2048, 2048
          %612 = vsyncadd [#allocation12], %s611
          %s613 = sshll.u32 [#allocation11], 4
          %s614 = int_to_ptr.vmem [resolvable:$true] %s613
          %619 = dma.hbm_to_vmem [thread:$0]  %s10, 2048, %s614, [#allocation12], 128, 128, 8
        $region48: #{tpu_custom_call.1} parent=11 // pred_fallthru
          _
        // Predicated region
        $region49: #{tpu_custom_call.1} parent=11 // pred_check
          %p620 = pneg %p302
        $region50: #{tpu_custom_call.1} parent=11 // pred_check_branch
          %622 = sbr.rel (%p620) target = $region52
        $region51: #{tpu_custom_call.1} parent=11 // pred_region
          _
        $region52: #{tpu_custom_call.1} parent=11 // pred_fallthru
          _
        // Predicated region
        $region53: #{tpu_custom_call.1} parent=11 // pred_check
          %p623 = pneg %p323
        $region54: #{tpu_custom_call.1} parent=11 // pred_check_branch
          %625 = sbr.rel (%p623) target = $region56
        $region55: #{tpu_custom_call.1} parent=11 // pred_region
          %s627 = ssub.s32 1024, 1024
          %628 = vsyncadd [#allocation12], %s627
          %s629 = sshll.u32 [#allocation13], 4
          %s630 = int_to_ptr.vmem [resolvable:$true] %s629
          %635 = dma.hbm_to_vmem [thread:$0]  %s12, 1024, %s630, [#allocation12], 64, 64, 4
        $region56: #{tpu_custom_call.1} parent=11 // pred_fallthru
          _
        // Predicated region
        $region57: #{tpu_custom_call.1} parent=11 // pred_check
          %p636 = pneg %p344
        $region58: #{tpu_custom_call.1} parent=11 // pred_check_branch
          %638 = sbr.rel (%p636) target = $region60
        $region59: #{tpu_custom_call.1} parent=11 // pred_region
          _
        $region60: #{tpu_custom_call.1} parent=11 // pred_fallthru
          _
        // Predicated region
        $region61: #{tpu_custom_call.1} parent=11 // pred_check
          %p639 = pneg %p365
        $region62: #{tpu_custom_call.1} parent=11 // pred_check_branch
          %641 = sbr.rel (%p639) target = $region64
        $region63: #{tpu_custom_call.1} parent=11 // pred_region
          _
        $region64: #{tpu_custom_call.1} parent=11 // pred_fallthru
          _
        // Predicated region
        $region65: #{tpu_custom_call.1} parent=11 // pred_check
          %p642 = pneg %p386
        $region66: #{tpu_custom_call.1} parent=11 // pred_check_branch
          %644 = sbr.rel (%p642) target = $region68
        $region67: #{tpu_custom_call.1} parent=11 // pred_region
          _
        $region68: #{tpu_custom_call.1} parent=11 // pred_fallthru
          _
        // Predicated region
        $region69: #{tpu_custom_call.1} parent=11 // pred_check
          %p645 = pneg %p407
        $region70: #{tpu_custom_call.1} parent=11 // pred_check_branch
          %647 = sbr.rel (%p645) target = $region72
        $region71: #{tpu_custom_call.1} parent=11 // pred_region
          %s649 = ssub.s32 2048, 2048
          %650 = vsyncadd [#allocation15], %s649
          %s651 = sshll.u32 [#allocation14], 4
          %s652 = int_to_ptr.vmem [resolvable:$true] %s651
          %657 = dma.hbm_to_vmem [thread:$0]  %s16, 2048, %s652, [#allocation15], 128, 128, 8
        $region72: #{tpu_custom_call.1} parent=11 // pred_fallthru
          _
        // Predicated region
        $region73: #{tpu_custom_call.1} parent=11 // pred_check
          %p658 = pneg %p428
        $region74: #{tpu_custom_call.1} parent=11 // pred_check_branch
          %660 = sbr.rel (%p658) target = $region76
        $region75: #{tpu_custom_call.1} parent=11 // pred_region
          _
        $region76: #{tpu_custom_call.1} parent=11 // pred_fallthru
          _
        // Predicated region
        $region77: #{tpu_custom_call.1} parent=11 // pred_check
          %p661 = pneg %p449
        $region78: #{tpu_custom_call.1} parent=11 // pred_check_branch
          %663 = sbr.rel (%p661) target = $region80
        $region79: #{tpu_custom_call.1} parent=11 // pred_region
          %s665 = ssub.s32 2048, 2048
          %666 = vsyncadd [#allocation15], %s665
          %s667 = sshll.u32 [#allocation16], 4
          %s668 = int_to_ptr.vmem [resolvable:$true] %s667
          %673 = dma.hbm_to_vmem [thread:$0]  %s18, 2048, %s668, [#allocation15], 64, 64, 4
        $region80: #{tpu_custom_call.1} parent=11 // pred_fallthru
          _
        // Predicated region
        $region81: #{tpu_custom_call.1} parent=11 // pred_check
          %p674 = pneg %p470
        $region82: #{tpu_custom_call.1} parent=11 // pred_check_branch
          %676 = sbr.rel (%p674) target = $region84
        $region83: #{tpu_custom_call.1} parent=11 // pred_region
          _
        $region84: #{tpu_custom_call.1} parent=11 // pred_fallthru
          _
        // Predicated region
        $region85: #{tpu_custom_call.1} parent=11 // pred_check
          %p677 = pneg %p491
        $region86: #{tpu_custom_call.1} parent=11 // pred_check_branch
          %679 = sbr.rel (%p677) target = $region88
        $region87: #{tpu_custom_call.1} parent=11 // pred_region
          _
        $region88: #{tpu_custom_call.1} parent=11 // pred_fallthru
          _
        // Predicated region
        $region89: #{tpu_custom_call.1} parent=11 // pred_check
          %p680 = pneg %p512
        $region90: #{tpu_custom_call.1} parent=11 // pred_check_branch
          %682 = sbr.rel (%p680) target = $region92
        $region91: #{tpu_custom_call.1} parent=11 // pred_region
          _
        $region92: #{tpu_custom_call.1} parent=11 // pred_fallthru
          _
      $region12: #{tpu_custom_call.1} parent=5 // pred_fallthru
        _
      %p683 = scmp.lt.s32.totalorder %s40, 2
      // Predicated region
      $region93: #{tpu_custom_call.1} parent=5 // pred_check
        %p684 = pneg %p683
      $region94: #{tpu_custom_call.1} parent=5 // pred_check_branch
        %686 = sbr.rel (%p684) target = $region96
      $region95: #{tpu_custom_call.1} parent=5 // pred_region
        // Predicated region
        $region97: #{tpu_custom_call.1} parent=95 // pred_check
          %p687 = pneg %p60
        $region98: #{tpu_custom_call.1} parent=95 // pred_check_branch
          %689 = sbr.rel (%p687) target = $region100
        $region99: #{tpu_custom_call.1} parent=95 // pred_region
          %s690 = sand.u32 %s50, 1
          %s691 = scalar_lea.sflag [#allocation3], %s690
          %s692 = sand.u32 %s50, 1
          %s693 = smul.addr %s692, 16
          %s694 = scalar_lea.vmem [#allocation2], %s693
          %s696 = ssub.s32 256, 256
          %697 = vsyncadd %s691, %s696
          %s698 = smul.addr %s40, 2
          %s699 = smul.addr %s698, 128
          %s700 = scalar_lea.hbm %s0, %s699
          %s701 = sshll.u32 %s694, 4
          %s702 = int_to_ptr.vmem [resolvable:$true] %s701
          %707 = dma.hbm_to_vmem [thread:$0]  %s700, 256, %s702, %s691, 128, 128, 8
        $region100: #{tpu_custom_call.1} parent=95 // pred_fallthru
          _
        // Predicated region
        $region101: #{tpu_custom_call.1} parent=95 // pred_check
          %p708 = pneg %p86
        $region102: #{tpu_custom_call.1} parent=95 // pred_check_branch
          %710 = sbr.rel (%p708) target = $region104
        $region103: #{tpu_custom_call.1} parent=95 // pred_region
          %s711 = sand.u32 %s40, 1
          %s712 = scalar_lea.sflag [#allocation6], %s711
          %s713 = sand.u32 %s76, 1
          %s714 = smul.addr %s713, 16
          %s715 = scalar_lea.vmem [#allocation5], %s714
          %s717 = ssub.s32 256, 256
          %718 = vsyncadd %s712, %s717
          %s719 = smul.addr %s40, 2
          %s720 = smul.addr %s719, 128
          %s721 = scalar_lea.hbm %s1, %s720
          %s722 = sshll.u32 %s715, 4
          %s723 = int_to_ptr.vmem [resolvable:$true] %s722
          %728 = dma.hbm_to_vmem [thread:$0]  %s721, 256, %s723, %s712, 128, 128, 8
        $region104: #{tpu_custom_call.1} parent=95 // pred_fallthru
          _
      $region96: #{tpu_custom_call.1} parent=5 // pred_fallthru
        _
      %p729 = scmp.le.s32.totalorder 1, %s40
      %p730 = scmp.lt.s32.totalorder %s40, 3
      %p731 = pnand %p729, %p730
      %p732 = pneg %p731
      // Predicated region
      $region105: #{tpu_custom_call.1} parent=5 // pred_check
        _
      $region106: #{tpu_custom_call.1} parent=5 // pred_check_branch
        %734 = sbr.rel (%p731) target = $region108
      $region107: #{tpu_custom_call.1} parent=5 // pred_region
        %s735 = ssub.s32 %s40, 1
        %s736 = sand.u32 %s53, 1
        %s737 = scalar_lea.sflag [#allocation3], %s736
        %s738 = sand.u32 %s53, 1
        %s739 = smul.addr %s738, 16
        %s740 = scalar_lea.vmem [#allocation2], %s739
        // Predicated region
        $region109: #{tpu_custom_call.1} parent=107 // pred_check
          %p741 = pneg %p66
        $region110: #{tpu_custom_call.1} parent=107 // pred_check_branch
          %743 = sbr.rel (%p741) target = $region112
        $region111: #{tpu_custom_call.1} parent=107 // pred_region
          %744 = dma.done %s737, 256
        $region112: #{tpu_custom_call.1} parent=107 // pred_fallthru
          _
        %s745 = sand.u32 %s45, 1
        %s746 = scalar_lea.sflag [#allocation6], %s745
        %s747 = sand.u32 %s79, 1
        %s748 = smul.addr %s747, 16
        %s749 = scalar_lea.vmem [#allocation5], %s748
        // Predicated region
        $region113: #{tpu_custom_call.1} parent=107 // pred_check
          %p750 = pneg %p92
        $region114: #{tpu_custom_call.1} parent=107 // pred_check_branch
          %752 = sbr.rel (%p750) target = $region116
        $region115: #{tpu_custom_call.1} parent=107 // pred_region
          %753 = dma.done %s746, 256
        $region116: #{tpu_custom_call.1} parent=107 // pred_fallthru
          _
        // Predicated region
        $region117: #{tpu_custom_call.1} parent=107 // pred_check
          %p754 = pneg %p113
        $region118: #{tpu_custom_call.1} parent=107 // pred_check_branch
          %756 = sbr.rel (%p754) target = $region120
        $region119: #{tpu_custom_call.1} parent=107 // pred_region
          %757 = dma.done [#allocation6], 3072
        $region120: #{tpu_custom_call.1} parent=107 // pred_fallthru
          _
        // Predicated region
        $region121: #{tpu_custom_call.1} parent=107 // pred_check
          %p758 = pneg %p155
        $region122: #{tpu_custom_call.1} parent=107 // pred_check_branch
          %760 = sbr.rel (%p758) target = $region124
        $region123: #{tpu_custom_call.1} parent=107 // pred_region
          %761 = dma.done [#allocation9], 1024
        $region124: #{tpu_custom_call.1} parent=107 // pred_fallthru
          _
        // Predicated region
        $region125: #{tpu_custom_call.1} parent=107 // pred_check
          %p762 = pneg %p239
        $region126: #{tpu_custom_call.1} parent=107 // pred_check_branch
          %764 = sbr.rel (%p762) target = $region128
        $region127: #{tpu_custom_call.1} parent=107 // pred_region
          %765 = dma.done [#allocation9], 1024
        $region128: #{tpu_custom_call.1} parent=107 // pred_fallthru
          _
        // Predicated region
        $region129: #{tpu_custom_call.1} parent=107 // pred_check
          %p766 = pneg %p281
        $region130: #{tpu_custom_call.1} parent=107 // pred_check_branch
          %768 = sbr.rel (%p766) target = $region132
        $region131: #{tpu_custom_call.1} parent=107 // pred_region
          %769 = dma.done [#allocation12], 2048
        $region132: #{tpu_custom_call.1} parent=107 // pred_fallthru
          _
        // Predicated region
        $region133: #{tpu_custom_call.1} parent=107 // pred_check
          %p770 = pneg %p323
        $region134: #{tpu_custom_call.1} parent=107 // pred_check_branch
          %772 = sbr.rel (%p770) target = $region136
        $region135: #{tpu_custom_call.1} parent=107 // pred_region
          %773 = dma.done [#allocation12], 1024
        $region136: #{tpu_custom_call.1} parent=107 // pred_fallthru
          _
        // Predicated region
        $region137: #{tpu_custom_call.1} parent=107 // pred_check
          %p774 = pneg %p407
        $region138: #{tpu_custom_call.1} parent=107 // pred_check_branch
          %776 = sbr.rel (%p774) target = $region140
        $region139: #{tpu_custom_call.1} parent=107 // pred_region
          %777 = dma.done [#allocation15], 2048
        $region140: #{tpu_custom_call.1} parent=107 // pred_fallthru
          _
        // Predicated region
        $region141: #{tpu_custom_call.1} parent=107 // pred_check
          %p778 = pneg %p449
        $region142: #{tpu_custom_call.1} parent=107 // pred_check_branch
          %780 = sbr.rel (%p778) target = $region144
        $region143: #{tpu_custom_call.1} parent=107 // pred_region
          %781 = dma.done [#allocation15], 2048
        $region144: #{tpu_custom_call.1} parent=107 // pred_fallthru
          _
        %s782 = sand.u32 %s53, 1
        %s783 = scalar_lea.sflag [#allocation3], %s782
        %s784 = sand.u32 %s53, 1
        %s785 = smul.addr %s784, 16
        %s786 = scalar_lea.vmem [#allocation2], %s785
        %p787 = pneg %p66
        %p788 = pneg %p63
        %s789 = sand.u32 %s45, 1
        %s790 = scalar_lea.sflag [#allocation6], %s789
        %s791 = sand.u32 %s79, 1
        %s792 = smul.addr %s791, 16
        %s793 = scalar_lea.vmem [#allocation5], %s792
        %p794 = pneg %p92
        %p795 = pneg %p89
        %p796 = pneg %p113
        %p797 = pneg %p110
        %p798 = pneg %p134
        %p799 = pneg %p131
        %p800 = pneg %p155
        %p801 = pneg %p152
        %p802 = pneg %p176
        %p803 = pneg %p173
        %p804 = pneg %p197
        %p805 = pneg %p194
        %p806 = pneg %p218
        %p807 = pneg %p215
        %p808 = pneg %p239
        %p809 = pneg %p236
        %p810 = pneg %p260
        %p811 = pneg %p257
        %p812 = pneg %p281
        %p813 = pneg %p278
        %p814 = pneg %p302
        %p815 = pneg %p299
        %p816 = pneg %p323
        %p817 = pneg %p320
        %p818 = pneg %p344
        %p819 = pneg %p341
        %p820 = pneg %p365
        %p821 = pneg %p362
        %p822 = pneg %p386
        %p823 = pneg %p383
        %p824 = pneg %p407
        %p825 = pneg %p404
        %p826 = pneg %p428
        %p827 = pneg %p425
        %p828 = pneg %p449
        %p829 = pneg %p446
        %p830 = pneg %p470
        %p831 = pneg %p467
        %p832 = pneg %p491
        %p833 = pneg %p488
        %p834 = pneg %p512
        %p835 = pneg %p509
        %p836 = pneg %p538
        %p837 = pneg %p535
        %s838 = sand.u32 %s525, 1
        %s839 = scalar_lea.sflag [#allocation4], %s838
        %s840 = sand.u32 %s525, 1
        %s841 = smul.addr %s840, 16
        %s842 = scalar_lea.vmem [#allocation17], %s841
        %v844 = vld [vmem:[%s740] sm:$0xff]
        %v845 = vld [vmem:[%s740 + $0x8] sm:$0xff]
        %v846 = vld [vmem:[%s749] sm:$0xff]
        %v847 = vld [vmem:[%s749 + $0x8] sm:$0xff]
        %v848 = vpack.c.bf16 %v847, %v846
        %v849 = vld [vmem:[#allocation7] sm:$0xff]
        %v850 = vld [vmem:[#allocation7 + $0x8] sm:$0xf]
        %v851 = vld [vmem:[#allocation7 + $0xc] sm:$0xff]
        %v852 = vld [vmem:[#allocation7 + $0x14] sm:$0xf]
        %v853 = vld [vmem:[#allocation7 + $0x18] sm:$0xff]
        %v854 = vld [vmem:[#allocation7 + $0x20] sm:$0xf]
        %v855 = vld [vmem:[#allocation7 + $0x24] sm:$0xff]
        %v856 = vld [vmem:[#allocation7 + $0x2c] sm:$0xf]
        %v857 = vld [vmem:[#allocation7 + $0x30] sm:$0xff]
        %v858 = vld [vmem:[#allocation7 + $0x38] sm:$0xf]
        %v859 = vld [vmem:[#allocation7 + $0x3c] sm:$0xff]
        %v860 = vld [vmem:[#allocation7 + $0x44] sm:$0xf]
        %v861 = vld [vmem:[#allocation7 + $0x48] sm:$0xff]
        %v862 = vld [vmem:[#allocation7 + $0x50] sm:$0xf]
        %v863 = vld [vmem:[#allocation7 + $0x54] sm:$0xff]
        %v864 = vld [vmem:[#allocation7 + $0x5c] sm:$0xf]
        %v865 = vld [vmem:[#allocation7 + $0x60] sm:$0xff]
        %v866 = vld [vmem:[#allocation7 + $0x68] sm:$0xf]
        %v867 = vld [vmem:[#allocation7 + $0x6c] sm:$0xff]
        %v868 = vld [vmem:[#allocation7 + $0x74] sm:$0xf]
        %v869 = vld [vmem:[#allocation7 + $0x78] sm:$0xff]
        %v870 = vld [vmem:[#allocation7 + $0x80] sm:$0xf]
        %v871 = vld [vmem:[#allocation7 + $0x84] sm:$0xff]
        %v872 = vld [vmem:[#allocation7 + $0x8c] sm:$0xf]
        %v873 = vld [vmem:[#allocation7 + $0x90] sm:$0xff]
        %v874 = vld [vmem:[#allocation7 + $0x98] sm:$0xf]
        %v875 = vld [vmem:[#allocation7 + $0x9c] sm:$0xff]
        %v876 = vld [vmem:[#allocation7 + $0xa4] sm:$0xf]
        %v877 = vld [vmem:[#allocation7 + $0xa8] sm:$0xff]
        %v878 = vld [vmem:[#allocation7 + $0xb0] sm:$0xf]
        %v879 = vld [vmem:[#allocation7 + $0xb4] sm:$0xff]
        %v880 = vld [vmem:[#allocation7 + $0xbc] sm:$0xf]
        %v881 = vld [vmem:[%s3] sm:$0x7]
        %v883 = vlaneseq
        %v884 = vshrl.u32 %v883, 7
        %v885 = vsub.s32 0, %v884
        %v886 = vrot.slane %v881, %v885
        %v887 = vlaneseq
        %v888 = vshrl.u32 %v887, 7
        %v889 = vsub.s32 1, %v888
        %v890 = vrot.slane %v881, %v889
        %v891 = vlaneseq
        %v892 = vshrl.u32 %v891, 7
        %v893 = vsub.s32 2, %v892
        %v894 = vrot.slane %v881, %v893
        %v930 = vunpack.c.l.b16 %v849
        %v931 = vunpack.c.h.b16 %v849
        %v932 = vunpack.c.l.b16 %v850
        %v933 = vunpack.c.l.b16 %v851
        %v934 = vunpack.c.h.b16 %v851
        %v935 = vunpack.c.l.b16 %v852
        %v936 = vunpack.c.l.b16 %v853
        %v937 = vunpack.c.h.b16 %v853
        %v938 = vunpack.c.l.b16 %v854
        %v939 = vunpack.c.l.b16 %v855
        %v940 = vunpack.c.h.b16 %v855
        %v941 = vunpack.c.l.b16 %v856
        %v942 = vunpack.c.l.b16 %v857
        %v943 = vunpack.c.h.b16 %v857
        %v944 = vunpack.c.l.b16 %v858
        %v945 = vunpack.c.l.b16 %v859
        %v946 = vunpack.c.h.b16 %v859
        %v947 = vunpack.c.l.b16 %v860
        %v948 = vunpack.c.l.b16 %v861
        %v949 = vunpack.c.h.b16 %v861
        %v950 = vunpack.c.l.b16 %v862
        %v951 = vunpack.c.l.b16 %v863
        %v952 = vunpack.c.h.b16 %v863
        %v953 = vunpack.c.l.b16 %v864
        %v954 = vunpack.c.l.b16 %v865
        %v955 = vunpack.c.h.b16 %v865
        %v956 = vunpack.c.l.b16 %v866
        %v957 = vunpack.c.l.b16 %v867
        %v958 = vunpack.c.h.b16 %v867
        %v959 = vunpack.c.l.b16 %v868
        %v960 = vunpack.c.l.b16 %v869
        %v961 = vunpack.c.h.b16 %v869
        %v962 = vunpack.c.l.b16 %v870
        %v963 = vunpack.c.l.b16 %v871
        %v964 = vunpack.c.h.b16 %v871
        %v965 = vunpack.c.l.b16 %v872
        %v966 = vunpack.c.l.b16 %v873
        %v967 = vunpack.c.h.b16 %v873
        %v968 = vunpack.c.l.b16 %v874
        %v969 = vunpack.c.l.b16 %v875
        %v970 = vunpack.c.h.b16 %v875
        %v971 = vunpack.c.l.b16 %v876
        %v972 = vunpack.c.l.b16 %v877
        %v973 = vunpack.c.h.b16 %v877
        %v974 = vunpack.c.l.b16 %v878
        %v975 = vunpack.c.l.b16 %v879
        %v976 = vunpack.c.h.b16 %v879
        %v977 = vunpack.c.l.b16 %v880
        %v978 = vpack.c.b16 %v933, %v930
        %v979 = vpack.c.b16 %v934, %v931
        %v980 = vpack.c.b16 %v935, %v932
        %v981 = vpack.c.b16 %v939, %v936
        %v982 = vpack.c.b16 %v940, %v937
        %v983 = vpack.c.b16 %v941, %v938
        %v984 = vpack.c.b16 %v945, %v942
        %v985 = vpack.c.b16 %v946, %v943
        %v986 = vpack.c.b16 %v947, %v944
        %v987 = vpack.c.b16 %v951, %v948
        %v988 = vpack.c.b16 %v952, %v949
        %v989 = vpack.c.b16 %v953, %v950
        %v990 = vpack.c.b16 %v957, %v954
        %v991 = vpack.c.b16 %v958, %v955
        %v992 = vpack.c.b16 %v959, %v956
        %v993 = vpack.c.b16 %v963, %v960
        %v994 = vpack.c.b16 %v964, %v961
        %v995 = vpack.c.b16 %v965, %v962
        %v996 = vpack.c.b16 %v969, %v966
        %v997 = vpack.c.b16 %v970, %v967
        %v998 = vpack.c.b16 %v971, %v968
        %v999 = vpack.c.b16 %v975, %v972
        %v1000 = vpack.c.b16 %v976, %v973
        %v1001 = vpack.c.b16 %v977, %v974
        %1026 = vmatprep.subr.bf16.mxu0 %v979
        %1027 = vmatpush1.bf16.msra.mxu0 %v978
        %1028 = vmatprep.subr.bf16.mxu0 %v982
        %1029 = vmatpush1.bf16.msra.mxu0 %v981
        %1030 = vmatprep.subr.bf16.mxu0 %v985
        %1031 = vmatpush1.bf16.msra.mxu0 %v984
        %1032 = vmatprep.subr.bf16.mxu0 %v988
        %1033 = vmatpush1.bf16.msra.mxu0 %v987
        %1034 = vmatprep.subr.bf16.mxu0 %v991
        %1035 = vmatpush1.bf16.msra.mxu0 %v990
        %1036 = vmatprep.subr.bf16.mxu0 %v994
        %1037 = vmatpush1.bf16.msra.mxu0 %v993
        %1038 = vmatprep.subr.bf16.mxu0 %v997
        %1039 = vmatpush1.bf16.msra.mxu0 %v996
        %1040 = vmatprep.subr.bf16.mxu0 %v1000
        %1041 = vmatpush1.bf16.msra.mxu0 %v999
        %1042 = vmatprep.subr.bf16.mxu0 0
        %1043 = vmatpush1.bf16.msra.mxu0 0
        %1044 = vmatprep.subr.bf16.mxu0 0
        %1045 = vmatpush1.bf16.msra.mxu0 0
        %1046 = vmatprep.subr.bf16.mxu0 0
        %1047 = vmatpush1.bf16.msra.mxu0 0
        %1048 = vmatprep.subr.bf16.mxu0 0
        %1049 = vmatpush1.bf16.msra.mxu0 0
        %1050 = vmatprep.subr.bf16.mxu0 0
        %1051 = vmatpush1.bf16.msra.mxu0 0
        %1052 = vmatprep.subr.bf16.mxu0 0
        %1053 = vmatpush1.bf16.msra.mxu0 0
        %1054 = vmatprep.subr.bf16.mxu0 0
        %1055 = vmatpush1.bf16.msra.mxu0 0
        %1056 = vmatprep.subr.bf16.mxu0 0
        %1057 = vmatpush1.bf16.msra.mxu0 0
        %1058 = vmatprep.mubr.bf16.mxu0 0
        %1059 = vmatmul.mubr.bf16.gmra.mrb[0].mxu0 %v848
        %v1060 = vpop.f32.mrb[0].mxu0
        %v1061 = vadd.f32 %v886, %v1060
        %v1062 = vpop.f32.mrb[0].mxu0
        %v1063 = vadd.f32 %v890, %v1062
        %v1064 = vpop.f32.mrb[0].mxu0
        %v1065 = vadd.f32 %v886, %v1064
        %v1066 = vpop.f32.mrb[0].mxu0
        %v1067 = vadd.f32 %v890, %v1066
        %1068 = vdwg.mxu0
        %1069 = vmatprep.subr.bf16.mxu0 0
        %1070 = vmatpush1.bf16.msra.mxu0 %v980
        %1071 = vmatprep.subr.bf16.mxu0 0
        %1072 = vmatpush1.bf16.msra.mxu0 %v983
        %1073 = vmatprep.subr.bf16.mxu0 0
        %1074 = vmatpush1.bf16.msra.mxu0 %v986
        %1075 = vmatprep.subr.bf16.mxu0 0
        %1076 = vmatpush1.bf16.msra.mxu0 %v989
        %1077 = vmatprep.subr.bf16.mxu0 0
        %1078 = vmatpush1.bf16.msra.mxu0 %v992
        %1079 = vmatprep.subr.bf16.mxu0 0
        %1080 = vmatpush1.bf16.msra.mxu0 %v995
        %1081 = vmatprep.subr.bf16.mxu0 0
        %1082 = vmatpush1.bf16.msra.mxu0 %v998
        %1083 = vmatprep.subr.bf16.mxu0 0
        %1084 = vmatpush1.bf16.msra.mxu0 %v1001
        %1085 = vmatprep.subr.bf16.mxu0 0
        %1086 = vmatpush1.bf16.msra.mxu0 0
        %1087 = vmatprep.subr.bf16.mxu0 0
        %1088 = vmatpush1.bf16.msra.mxu0 0
        %1089 = vmatprep.subr.bf16.mxu0 0
        %1090 = vmatpush1.bf16.msra.mxu0 0
        %1091 = vmatprep.subr.bf16.mxu0 0
        %1092 = vmatpush1.bf16.msra.mxu0 0
        %1093 = vmatprep.subr.bf16.mxu0 0
        %1094 = vmatpush1.bf16.msra.mxu0 0
        %1095 = vmatprep.subr.bf16.mxu0 0
        %1096 = vmatpush1.bf16.msra.mxu0 0
        %1097 = vmatprep.subr.bf16.mxu0 0
        %1098 = vmatpush1.bf16.msra.mxu0 0
        %1099 = vmatprep.subr.bf16.mxu0 0
        %1100 = vmatpush1.bf16.msra.mxu0 0
        %1101 = vmatprep.mubr.bf16.mxu0 0
        %1102 = vmatmul.mubr.bf16.gmra.mrb[0].mxu0 %v848
        %v1103 = vpop.f32.mrb[0].mxu0
        %v1104 = vadd.f32 %v894, %v1103
        %v1105 = vpop.f32.mrb[0].mxu0
        %v1106 = vpop.f32.mrb[0].mxu0
        %v1107 = vadd.f32 %v894, %v1106
        %v1108 = vpop.f32.mrb[0].mxu0
        %1109 = vdwg.mxu0
        %1112 = vrot.lane.b32.xlu0 %v1061, 96
        %v1113 = vpop.permute.xlu0 %1112
        %1114 = vrot.lane.b32.xlu0 %v1065, 96
        %v1115 = vpop.permute.xlu0 %1114
        %1118 = vrot.lane.b32.xlu0 %v1061, 64
        %v1119 = vpop.permute.xlu0 %1118
        %1120 = vrot.lane.b32.xlu0 %v1065, 64
        %v1121 = vpop.permute.xlu0 %1120
        %1124 = vrot.lane.b32.xlu0 %v1061, 32
        %v1125 = vpop.permute.xlu0 %1124
        %1126 = vrot.lane.b32.xlu0 %v1065, 32
        %v1127 = vpop.permute.xlu0 %1126
        %v1130 = vcombine.low %v1061, %v1119
        %v1131 = vcombine.high %v1061, %v1119
        %v1133 = vunpack.c.l.s4 1983009808
        %v1134 = vunpack.c.0.s8 %v1133
        %v1135 = vlaneseq
        %v1136 = vshrl.u32 %v1135, 7
        %v1137 = vsub.s32 %v1134, %v1136
        %v1138 = vrot.slane %v1130, %v1137
        %v1140 = vunpack.c.l.s4 1983009808
        %v1141 = vunpack.c.0.s8 %v1140
        %v1142 = vlaneseq
        %v1143 = vshrl.u32 %v1142, 7
        %v1144 = vsub.s32 %v1141, %v1143
        %v1145 = vrot.slane %v1131, %v1144
        %v1146 = vcombine.low %v1113, %v1125
        %v1147 = vcombine.high %v1113, %v1125
        %v1149 = vunpack.c.l.s4 1983009808
        %v1150 = vunpack.c.0.s8 %v1149
        %v1151 = vlaneseq
        %v1152 = vshrl.u32 %v1151, 7
        %v1153 = vsub.s32 %v1150, %v1152
        %v1154 = vrot.slane %v1146, %v1153
        %v1156 = vunpack.c.l.s4 1983009808
        %v1157 = vunpack.c.0.s8 %v1156
        %v1158 = vlaneseq
        %v1159 = vshrl.u32 %v1158, 7
        %v1160 = vsub.s32 %v1157, %v1159
        %v1161 = vrot.slane %v1147, %v1160
        %v1162 = vcombine.low %v1138, %v1154
        %v1163 = vcombine.high %v1138, %v1154
        %v1165 = vunpack.c.l.s4 1934713408
        %v1166 = vunpack.c.0.s8 %v1165
        %v1167 = vlaneseq
        %v1168 = vshrl.u32 %v1167, 7
        %v1169 = vsub.s32 %v1166, %v1168
        %v1170 = vrot.slane %v1162, %v1169
        %v1172 = vunpack.c.l.s4 1934713408
        %v1173 = vunpack.c.0.s8 %v1172
        %v1174 = vlaneseq
        %v1175 = vshrl.u32 %v1174, 7
        %v1176 = vsub.s32 %v1173, %v1175
        %v1177 = vrot.slane %v1163, %v1176
        %v1178 = vcombine.low %v1145, %v1161
        %v1179 = vcombine.high %v1145, %v1161
        %v1181 = vunpack.c.l.s4 1934713408
        %v1182 = vunpack.c.0.s8 %v1181
        %v1183 = vlaneseq
        %v1184 = vshrl.u32 %v1183, 7
        %v1185 = vsub.s32 %v1182, %v1184
        %v1186 = vrot.slane %v1178, %v1185
        %v1188 = vunpack.c.l.s4 1934713408
        %v1189 = vunpack.c.0.s8 %v1188
        %v1190 = vlaneseq
        %v1191 = vshrl.u32 %v1190, 7
        %v1192 = vsub.s32 %v1189, %v1191
        %v1193 = vrot.slane %v1179, %v1192
        %v1194 = vcombine.high %v1170, 0.0
        %v1195 = vcombine.high %v1177, 0.0
        %v1196 = vcombine.high %v1186, 0.0
        %v1197 = vcombine.high %v1193, 0.0
        %v1198 = vcombine.low %v1065, %v1121
        %v1199 = vcombine.high %v1065, %v1121
        %v1201 = vunpack.c.l.s4 1983009808
        %v1202 = vunpack.c.0.s8 %v1201
        %v1203 = vlaneseq
        %v1204 = vshrl.u32 %v1203, 7
        %v1205 = vsub.s32 %v1202, %v1204
        %v1206 = vrot.slane %v1198, %v1205
        %v1208 = vunpack.c.l.s4 1983009808
        %v1209 = vunpack.c.0.s8 %v1208
        %v1210 = vlaneseq
        %v1211 = vshrl.u32 %v1210, 7
        %v1212 = vsub.s32 %v1209, %v1211
        %v1213 = vrot.slane %v1199, %v1212
        %v1214 = vcombine.low %v1115, %v1127
        %v1215 = vcombine.high %v1115, %v1127
        %v1217 = vunpack.c.l.s4 1983009808
        %v1218 = vunpack.c.0.s8 %v1217
        %v1219 = vlaneseq
        %v1220 = vshrl.u32 %v1219, 7
        %v1221 = vsub.s32 %v1218, %v1220
        %v1222 = vrot.slane %v1214, %v1221
        %v1224 = vunpack.c.l.s4 1983009808
        %v1225 = vunpack.c.0.s8 %v1224
        %v1226 = vlaneseq
        %v1227 = vshrl.u32 %v1226, 7
        %v1228 = vsub.s32 %v1225, %v1227
        %v1229 = vrot.slane %v1215, %v1228
        %v1230 = vcombine.low %v1206, %v1222
        %v1231 = vcombine.high %v1206, %v1222
        %v1233 = vunpack.c.l.s4 1934713408
        %v1234 = vunpack.c.0.s8 %v1233
        %v1235 = vlaneseq
        %v1236 = vshrl.u32 %v1235, 7
        %v1237 = vsub.s32 %v1234, %v1236
        %v1238 = vrot.slane %v1230, %v1237
        %v1240 = vunpack.c.l.s4 1934713408
        %v1241 = vunpack.c.0.s8 %v1240
        %v1242 = vlaneseq
        %v1243 = vshrl.u32 %v1242, 7
        %v1244 = vsub.s32 %v1241, %v1243
        %v1245 = vrot.slane %v1231, %v1244
        %v1246 = vcombine.low %v1213, %v1229
        %v1247 = vcombine.high %v1213, %v1229
        %v1249 = vunpack.c.l.s4 1934713408
        %v1250 = vunpack.c.0.s8 %v1249
        %v1251 = vlaneseq
        %v1252 = vshrl.u32 %v1251, 7
        %v1253 = vsub.s32 %v1250, %v1252
        %v1254 = vrot.slane %v1246, %v1253
        %v1256 = vunpack.c.l.s4 1934713408
        %v1257 = vunpack.c.0.s8 %v1256
        %v1258 = vlaneseq
        %v1259 = vshrl.u32 %v1258, 7
        %v1260 = vsub.s32 %v1257, %v1259
        %v1261 = vrot.slane %v1247, %v1260
        %v1262 = vcombine.high %v1238, 0.0
        %v1263 = vcombine.high %v1245, 0.0
        %v1264 = vcombine.high %v1254, 0.0
        %v1265 = vcombine.high %v1261, 0.0
        %v1266 = vcombine.low %v1170, %v1177
        %v1268 = vunpack.c.l.s4 1983009808
        %v1269 = vunpack.c.0.s8 %v1268
        %v1270 = vlaneseq
        %v1271 = vshrl.u32 %v1270, 7
        %v1272 = vsub.s32 %v1269, %v1271
        %v1273 = vrot.slane %v1266, %v1272
        %v1274 = vcombine.low %v1194, %v1195
        %v1276 = vunpack.c.l.s4 1983009808
        %v1277 = vunpack.c.0.s8 %v1276
        %v1278 = vlaneseq
        %v1279 = vshrl.u32 %v1278, 7
        %v1280 = vsub.s32 %v1277, %v1279
        %v1281 = vrot.slane %v1274, %v1280
        %v1282 = vcombine.low %v1186, %v1193
        %v1284 = vunpack.c.l.s4 1983009808
        %v1285 = vunpack.c.0.s8 %v1284
        %v1286 = vlaneseq
        %v1287 = vshrl.u32 %v1286, 7
        %v1288 = vsub.s32 %v1285, %v1287
        %v1289 = vrot.slane %v1282, %v1288
        %v1290 = vcombine.low %v1196, %v1197
        %v1292 = vunpack.c.l.s4 1983009808
        %v1293 = vunpack.c.0.s8 %v1292
        %v1294 = vlaneseq
        %v1295 = vshrl.u32 %v1294, 7
        %v1296 = vsub.s32 %v1293, %v1295
        %v1297 = vrot.slane %v1290, %v1296
        %v1298 = vcombine.low %v1273, %v1281
        %v1299 = vcombine.high %v1273, %v1281
        %v1301 = vunpack.c.l.s4 1934713408
        %v1302 = vunpack.c.0.s8 %v1301
        %v1303 = vlaneseq
        %v1304 = vshrl.u32 %v1303, 7
        %v1305 = vsub.s32 %v1302, %v1304
        %v1306 = vrot.slane %v1298, %v1305
        %v1308 = vunpack.c.l.s4 1934713408
        %v1309 = vunpack.c.0.s8 %v1308
        %v1310 = vlaneseq
        %v1311 = vshrl.u32 %v1310, 7
        %v1312 = vsub.s32 %v1309, %v1311
        %v1313 = vrot.slane %v1299, %v1312
        %v1314 = vcombine.low %v1289, %v1297
        %v1315 = vcombine.high %v1289, %v1297
        %v1317 = vunpack.c.l.s4 1934713408
        %v1318 = vunpack.c.0.s8 %v1317
        %v1319 = vlaneseq
        %v1320 = vshrl.u32 %v1319, 7
        %v1321 = vsub.s32 %v1318, %v1320
        %v1322 = vrot.slane %v1314, %v1321
        %v1324 = vunpack.c.l.s4 1934713408
        %v1325 = vunpack.c.0.s8 %v1324
        %v1326 = vlaneseq
        %v1327 = vshrl.u32 %v1326, 7
        %v1328 = vsub.s32 %v1325, %v1327
        %v1329 = vrot.slane %v1315, %v1328
        %v1330 = vcombine.low %v1306, %v1322
        %v1331 = vcombine.high %v1306, %v1322
        %v1332 = vcombine.low %v1313, %v1329
        %v1333 = vcombine.high %v1313, %v1329
        %v1334 = vcombine.low %v1238, %v1245
        %v1336 = vunpack.c.l.s4 1983009808
        %v1337 = vunpack.c.0.s8 %v1336
        %v1338 = vlaneseq
        %v1339 = vshrl.u32 %v1338, 7
        %v1340 = vsub.s32 %v1337, %v1339
        %v1341 = vrot.slane %v1334, %v1340
        %v1342 = vcombine.low %v1262, %v1263
        %v1344 = vunpack.c.l.s4 1983009808
        %v1345 = vunpack.c.0.s8 %v1344
        %v1346 = vlaneseq
        %v1347 = vshrl.u32 %v1346, 7
        %v1348 = vsub.s32 %v1345, %v1347
        %v1349 = vrot.slane %v1342, %v1348
        %v1350 = vcombine.low %v1254, %v1261
        %v1352 = vunpack.c.l.s4 1983009808
        %v1353 = vunpack.c.0.s8 %v1352
        %v1354 = vlaneseq
        %v1355 = vshrl.u32 %v1354, 7
        %v1356 = vsub.s32 %v1353, %v1355
        %v1357 = vrot.slane %v1350, %v1356
        %v1358 = vcombine.low %v1264, %v1265
        %v1360 = vunpack.c.l.s4 1983009808
        %v1361 = vunpack.c.0.s8 %v1360
        %v1362 = vlaneseq
        %v1363 = vshrl.u32 %v1362, 7
        %v1364 = vsub.s32 %v1361, %v1363
        %v1365 = vrot.slane %v1358, %v1364
        %v1366 = vcombine.low %v1341, %v1349
        %v1367 = vcombine.high %v1341, %v1349
        %v1369 = vunpack.c.l.s4 1934713408
        %v1370 = vunpack.c.0.s8 %v1369
        %v1371 = vlaneseq
        %v1372 = vshrl.u32 %v1371, 7
        %v1373 = vsub.s32 %v1370, %v1372
        %v1374 = vrot.slane %v1366, %v1373
        %v1376 = vunpack.c.l.s4 1934713408
        %v1377 = vunpack.c.0.s8 %v1376
        %v1378 = vlaneseq
        %v1379 = vshrl.u32 %v1378, 7
        %v1380 = vsub.s32 %v1377, %v1379
        %v1381 = vrot.slane %v1367, %v1380
        %v1382 = vcombine.low %v1357, %v1365
        %v1383 = vcombine.high %v1357, %v1365
        %v1385 = vunpack.c.l.s4 1934713408
        %v1386 = vunpack.c.0.s8 %v1385
        %v1387 = vlaneseq
        %v1388 = vshrl.u32 %v1387, 7
        %v1389 = vsub.s32 %v1386, %v1388
        %v1390 = vrot.slane %v1382, %v1389
        %v1392 = vunpack.c.l.s4 1934713408
        %v1393 = vunpack.c.0.s8 %v1392
        %v1394 = vlaneseq
        %v1395 = vshrl.u32 %v1394, 7
        %v1396 = vsub.s32 %v1393, %v1395
        %v1397 = vrot.slane %v1383, %v1396
        %v1398 = vcombine.low %v1374, %v1390
        %v1399 = vcombine.high %v1374, %v1390
        %v1400 = vcombine.low %v1381, %v1397
        %v1401 = vcombine.high %v1381, %v1397
        %v1402 = vpack.c.bf16 %v1398, %v1330
        %v1403 = vpack.c.bf16 %v1399, %v1331
        %v1404 = vpack.c.bf16 %v1400, %v1332
        %v1405 = vpack.c.bf16 %v1401, %v1333
        %1408 = vrot.lane.b32.xlu0 %v1063, 96
        %v1409 = vpop.permute.xlu0 %1408
        %1410 = vrot.lane.b32.xlu0 %v1067, 96
        %v1411 = vpop.permute.xlu0 %1410
        %1414 = vrot.lane.b32.xlu0 %v1063, 64
        %v1415 = vpop.permute.xlu0 %1414
        %1416 = vrot.lane.b32.xlu0 %v1067, 64
        %v1417 = vpop.permute.xlu0 %1416
        %1420 = vrot.lane.b32.xlu0 %v1063, 32
        %v1421 = vpop.permute.xlu0 %1420
        %1422 = vrot.lane.b32.xlu0 %v1067, 32
        %v1423 = vpop.permute.xlu0 %1422
        %v1426 = vcombine.low %v1063, %v1415
        %v1427 = vcombine.high %v1063, %v1415
        %v1429 = vunpack.c.l.s4 1983009808
        %v1430 = vunpack.c.0.s8 %v1429
        %v1431 = vlaneseq
        %v1432 = vshrl.u32 %v1431, 7
        %v1433 = vsub.s32 %v1430, %v1432
        %v1434 = vrot.slane %v1426, %v1433
        %v1436 = vunpack.c.l.s4 1983009808
        %v1437 = vunpack.c.0.s8 %v1436
        %v1438 = vlaneseq
        %v1439 = vshrl.u32 %v1438, 7
        %v1440 = vsub.s32 %v1437, %v1439
        %v1441 = vrot.slane %v1427, %v1440
        %v1442 = vcombine.low %v1409, %v1421
        %v1443 = vcombine.high %v1409, %v1421
        %v1445 = vunpack.c.l.s4 1983009808
        %v1446 = vunpack.c.0.s8 %v1445
        %v1447 = vlaneseq
        %v1448 = vshrl.u32 %v1447, 7
        %v1449 = vsub.s32 %v1446, %v1448
        %v1450 = vrot.slane %v1442, %v1449
        %v1452 = vunpack.c.l.s4 1983009808
        %v1453 = vunpack.c.0.s8 %v1452
        %v1454 = vlaneseq
        %v1455 = vshrl.u32 %v1454, 7
        %v1456 = vsub.s32 %v1453, %v1455
        %v1457 = vrot.slane %v1443, %v1456
        %v1458 = vcombine.low %v1434, %v1450
        %v1459 = vcombine.high %v1434, %v1450
        %v1461 = vunpack.c.l.s4 1934713408
        %v1462 = vunpack.c.0.s8 %v1461
        %v1463 = vlaneseq
        %v1464 = vshrl.u32 %v1463, 7
        %v1465 = vsub.s32 %v1462, %v1464
        %v1466 = vrot.slane %v1458, %v1465
        %v1468 = vunpack.c.l.s4 1934713408
        %v1469 = vunpack.c.0.s8 %v1468
        %v1470 = vlaneseq
        %v1471 = vshrl.u32 %v1470, 7
        %v1472 = vsub.s32 %v1469, %v1471
        %v1473 = vrot.slane %v1459, %v1472
        %v1474 = vcombine.low %v1441, %v1457
        %v1475 = vcombine.high %v1441, %v1457
        %v1477 = vunpack.c.l.s4 1934713408
        %v1478 = vunpack.c.0.s8 %v1477
        %v1479 = vlaneseq
        %v1480 = vshrl.u32 %v1479, 7
        %v1481 = vsub.s32 %v1478, %v1480
        %v1482 = vrot.slane %v1474, %v1481
        %v1484 = vunpack.c.l.s4 1934713408
        %v1485 = vunpack.c.0.s8 %v1484
        %v1486 = vlaneseq
        %v1487 = vshrl.u32 %v1486, 7
        %v1488 = vsub.s32 %v1485, %v1487
        %v1489 = vrot.slane %v1475, %v1488
        %v1490 = vcombine.high %v1466, 0.0
        %v1491 = vcombine.high %v1473, 0.0
        %v1492 = vcombine.high %v1482, 0.0
        %v1493 = vcombine.high %v1489, 0.0
        %v1494 = vcombine.low %v1067, %v1417
        %v1495 = vcombine.high %v1067, %v1417
        %v1497 = vunpack.c.l.s4 1983009808
        %v1498 = vunpack.c.0.s8 %v1497
        %v1499 = vlaneseq
        %v1500 = vshrl.u32 %v1499, 7
        %v1501 = vsub.s32 %v1498, %v1500
        %v1502 = vrot.slane %v1494, %v1501
        %v1504 = vunpack.c.l.s4 1983009808
        %v1505 = vunpack.c.0.s8 %v1504
        %v1506 = vlaneseq
        %v1507 = vshrl.u32 %v1506, 7
        %v1508 = vsub.s32 %v1505, %v1507
        %v1509 = vrot.slane %v1495, %v1508
        %v1510 = vcombine.low %v1411, %v1423
        %v1511 = vcombine.high %v1411, %v1423
        %v1513 = vunpack.c.l.s4 1983009808
        %v1514 = vunpack.c.0.s8 %v1513
        %v1515 = vlaneseq
        %v1516 = vshrl.u32 %v1515, 7
        %v1517 = vsub.s32 %v1514, %v1516
        %v1518 = vrot.slane %v1510, %v1517
        %v1520 = vunpack.c.l.s4 1983009808
        %v1521 = vunpack.c.0.s8 %v1520
        %v1522 = vlaneseq
        %v1523 = vshrl.u32 %v1522, 7
        %v1524 = vsub.s32 %v1521, %v1523
        %v1525 = vrot.slane %v1511, %v1524
        %v1526 = vcombine.low %v1502, %v1518
        %v1527 = vcombine.high %v1502, %v1518
        %v1529 = vunpack.c.l.s4 1934713408
        %v1530 = vunpack.c.0.s8 %v1529
        %v1531 = vlaneseq
        %v1532 = vshrl.u32 %v1531, 7
        %v1533 = vsub.s32 %v1530, %v1532
        %v1534 = vrot.slane %v1526, %v1533
        %v1536 = vunpack.c.l.s4 1934713408
        %v1537 = vunpack.c.0.s8 %v1536
        %v1538 = vlaneseq
        %v1539 = vshrl.u32 %v1538, 7
        %v1540 = vsub.s32 %v1537, %v1539
        %v1541 = vrot.slane %v1527, %v1540
        %v1542 = vcombine.low %v1509, %v1525
        %v1543 = vcombine.high %v1509, %v1525
        %v1545 = vunpack.c.l.s4 1934713408
        %v1546 = vunpack.c.0.s8 %v1545
        %v1547 = vlaneseq
        %v1548 = vshrl.u32 %v1547, 7
        %v1549 = vsub.s32 %v1546, %v1548
        %v1550 = vrot.slane %v1542, %v1549
        %v1552 = vunpack.c.l.s4 1934713408
        %v1553 = vunpack.c.0.s8 %v1552
        %v1554 = vlaneseq
        %v1555 = vshrl.u32 %v1554, 7
        %v1556 = vsub.s32 %v1553, %v1555
        %v1557 = vrot.slane %v1543, %v1556
        %v1558 = vcombine.high %v1534, 0.0
        %v1559 = vcombine.high %v1541, 0.0
        %v1560 = vcombine.high %v1550, 0.0
        %v1561 = vcombine.high %v1557, 0.0
        %v1562 = vcombine.low %v1466, %v1473
        %v1564 = vunpack.c.l.s4 1983009808
        %v1565 = vunpack.c.0.s8 %v1564
        %v1566 = vlaneseq
        %v1567 = vshrl.u32 %v1566, 7
        %v1568 = vsub.s32 %v1565, %v1567
        %v1569 = vrot.slane %v1562, %v1568
        %v1570 = vcombine.low %v1490, %v1491
        %v1572 = vunpack.c.l.s4 1983009808
        %v1573 = vunpack.c.0.s8 %v1572
        %v1574 = vlaneseq
        %v1575 = vshrl.u32 %v1574, 7
        %v1576 = vsub.s32 %v1573, %v1575
        %v1577 = vrot.slane %v1570, %v1576
        %v1578 = vcombine.low %v1482, %v1489
        %v1580 = vunpack.c.l.s4 1983009808
        %v1581 = vunpack.c.0.s8 %v1580
        %v1582 = vlaneseq
        %v1583 = vshrl.u32 %v1582, 7
        %v1584 = vsub.s32 %v1581, %v1583
        %v1585 = vrot.slane %v1578, %v1584
        %v1586 = vcombine.low %v1492, %v1493
        %v1588 = vunpack.c.l.s4 1983009808
        %v1589 = vunpack.c.0.s8 %v1588
        %v1590 = vlaneseq
        %v1591 = vshrl.u32 %v1590, 7
        %v1592 = vsub.s32 %v1589, %v1591
        %v1593 = vrot.slane %v1586, %v1592
        %v1594 = vcombine.low %v1569, %v1577
        %v1595 = vcombine.high %v1569, %v1577
        %v1597 = vunpack.c.l.s4 1934713408
        %v1598 = vunpack.c.0.s8 %v1597
        %v1599 = vlaneseq
        %v1600 = vshrl.u32 %v1599, 7
        %v1601 = vsub.s32 %v1598, %v1600
        %v1602 = vrot.slane %v1594, %v1601
        %v1604 = vunpack.c.l.s4 1934713408
        %v1605 = vunpack.c.0.s8 %v1604
        %v1606 = vlaneseq
        %v1607 = vshrl.u32 %v1606, 7
        %v1608 = vsub.s32 %v1605, %v1607
        %v1609 = vrot.slane %v1595, %v1608
        %v1610 = vcombine.low %v1585, %v1593
        %v1611 = vcombine.high %v1585, %v1593
        %v1613 = vunpack.c.l.s4 1934713408
        %v1614 = vunpack.c.0.s8 %v1613
        %v1615 = vlaneseq
        %v1616 = vshrl.u32 %v1615, 7
        %v1617 = vsub.s32 %v1614, %v1616
        %v1618 = vrot.slane %v1610, %v1617
        %v1620 = vunpack.c.l.s4 1934713408
        %v1621 = vunpack.c.0.s8 %v1620
        %v1622 = vlaneseq
        %v1623 = vshrl.u32 %v1622, 7
        %v1624 = vsub.s32 %v1621, %v1623
        %v1625 = vrot.slane %v1611, %v1624
        %v1626 = vcombine.low %v1602, %v1618
        %v1627 = vcombine.high %v1602, %v1618
        %v1628 = vcombine.low %v1609, %v1625
        %v1629 = vcombine.high %v1609, %v1625
        %v1630 = vcombine.low %v1534, %v1541
        %v1632 = vunpack.c.l.s4 1983009808
        %v1633 = vunpack.c.0.s8 %v1632
        %v1634 = vlaneseq
        %v1635 = vshrl.u32 %v1634, 7
        %v1636 = vsub.s32 %v1633, %v1635
        %v1637 = vrot.slane %v1630, %v1636
        %v1638 = vcombine.low %v1558, %v1559
        %v1640 = vunpack.c.l.s4 1983009808
        %v1641 = vunpack.c.0.s8 %v1640
        %v1642 = vlaneseq
        %v1643 = vshrl.u32 %v1642, 7
        %v1644 = vsub.s32 %v1641, %v1643
        %v1645 = vrot.slane %v1638, %v1644
        %v1646 = vcombine.low %v1550, %v1557
        %v1648 = vunpack.c.l.s4 1983009808
        %v1649 = vunpack.c.0.s8 %v1648
        %v1650 = vlaneseq
        %v1651 = vshrl.u32 %v1650, 7
        %v1652 = vsub.s32 %v1649, %v1651
        %v1653 = vrot.slane %v1646, %v1652
        %v1654 = vcombine.low %v1560, %v1561
        %v1656 = vunpack.c.l.s4 1983009808
        %v1657 = vunpack.c.0.s8 %v1656
        %v1658 = vlaneseq
        %v1659 = vshrl.u32 %v1658, 7
        %v1660 = vsub.s32 %v1657, %v1659
        %v1661 = vrot.slane %v1654, %v1660
        %v1662 = vcombine.low %v1637, %v1645
        %v1663 = vcombine.high %v1637, %v1645
        %v1665 = vunpack.c.l.s4 1934713408
        %v1666 = vunpack.c.0.s8 %v1665
        %v1667 = vlaneseq
        %v1668 = vshrl.u32 %v1667, 7
        %v1669 = vsub.s32 %v1666, %v1668
        %v1670 = vrot.slane %v1662, %v1669
        %v1672 = vunpack.c.l.s4 1934713408
        %v1673 = vunpack.c.0.s8 %v1672
        %v1674 = vlaneseq
        %v1675 = vshrl.u32 %v1674, 7
        %v1676 = vsub.s32 %v1673, %v1675
        %v1677 = vrot.slane %v1663, %v1676
        %v1678 = vcombine.low %v1653, %v1661
        %v1679 = vcombine.high %v1653, %v1661
        %v1681 = vunpack.c.l.s4 1934713408
        %v1682 = vunpack.c.0.s8 %v1681
        %v1683 = vlaneseq
        %v1684 = vshrl.u32 %v1683, 7
        %v1685 = vsub.s32 %v1682, %v1684
        %v1686 = vrot.slane %v1678, %v1685
        %v1688 = vunpack.c.l.s4 1934713408
        %v1689 = vunpack.c.0.s8 %v1688
        %v1690 = vlaneseq
        %v1691 = vshrl.u32 %v1690, 7
        %v1692 = vsub.s32 %v1689, %v1691
        %v1693 = vrot.slane %v1679, %v1692
        %v1694 = vcombine.low %v1670, %v1686
        %v1695 = vcombine.high %v1670, %v1686
        %v1696 = vcombine.low %v1677, %v1693
        %v1697 = vcombine.high %v1677, %v1693
        %v1698 = vpack.c.bf16 %v1694, %v1626
        %v1699 = vpack.c.bf16 %v1695, %v1627
        %v1700 = vpack.c.bf16 %v1696, %v1628
        %v1701 = vpack.c.bf16 %v1697, %v1629
        %1704 = vrot.lane.b32.xlu0 %v1104, 96
        %v1705 = vpop.permute.xlu0 %1704
        %1706 = vrot.lane.b32.xlu0 %v1107, 96
        %v1707 = vpop.permute.xlu0 %1706
        %1710 = vrot.lane.b32.xlu0 %v1104, 64
        %v1711 = vpop.permute.xlu0 %1710
        %1712 = vrot.lane.b32.xlu0 %v1107, 64
        %v1713 = vpop.permute.xlu0 %1712
        %1716 = vrot.lane.b32.xlu0 %v1104, 32
        %v1717 = vpop.permute.xlu0 %1716
        %1718 = vrot.lane.b32.xlu0 %v1107, 32
        %v1719 = vpop.permute.xlu0 %1718
        %v1722 = vcombine.low %v1104, %v1711
        %v1723 = vcombine.high %v1104, %v1711
        %v1725 = vunpack.c.l.s4 1983009808
        %v1726 = vunpack.c.0.s8 %v1725
        %v1727 = vlaneseq
        %v1728 = vshrl.u32 %v1727, 7
        %v1729 = vsub.s32 %v1726, %v1728
        %v1730 = vrot.slane %v1722, %v1729
        %v1732 = vunpack.c.l.s4 1983009808
        %v1733 = vunpack.c.0.s8 %v1732
        %v1734 = vlaneseq
        %v1735 = vshrl.u32 %v1734, 7
        %v1736 = vsub.s32 %v1733, %v1735
        %v1737 = vrot.slane %v1723, %v1736
        %v1738 = vcombine.low %v1705, %v1717
        %v1739 = vcombine.high %v1705, %v1717
        %v1741 = vunpack.c.l.s4 1983009808
        %v1742 = vunpack.c.0.s8 %v1741
        %v1743 = vlaneseq
        %v1744 = vshrl.u32 %v1743, 7
        %v1745 = vsub.s32 %v1742, %v1744
        %v1746 = vrot.slane %v1738, %v1745
        %v1748 = vunpack.c.l.s4 1983009808
        %v1749 = vunpack.c.0.s8 %v1748
        %v1750 = vlaneseq
        %v1751 = vshrl.u32 %v1750, 7
        %v1752 = vsub.s32 %v1749, %v1751
        %v1753 = vrot.slane %v1739, %v1752
        %v1754 = vcombine.low %v1730, %v1746
        %v1755 = vcombine.high %v1730, %v1746
        %v1757 = vunpack.c.l.s4 1934713408
        %v1758 = vunpack.c.0.s8 %v1757
        %v1759 = vlaneseq
        %v1760 = vshrl.u32 %v1759, 7
        %v1761 = vsub.s32 %v1758, %v1760
        %v1762 = vrot.slane %v1754, %v1761
        %v1764 = vunpack.c.l.s4 1934713408
        %v1765 = vunpack.c.0.s8 %v1764
        %v1766 = vlaneseq
        %v1767 = vshrl.u32 %v1766, 7
        %v1768 = vsub.s32 %v1765, %v1767
        %v1769 = vrot.slane %v1755, %v1768
        %v1770 = vcombine.low %v1737, %v1753
        %v1771 = vcombine.high %v1737, %v1753
        %v1773 = vunpack.c.l.s4 1934713408
        %v1774 = vunpack.c.0.s8 %v1773
        %v1775 = vlaneseq
        %v1776 = vshrl.u32 %v1775, 7
        %v1777 = vsub.s32 %v1774, %v1776
        %v1778 = vrot.slane %v1770, %v1777
        %v1780 = vunpack.c.l.s4 1934713408
        %v1781 = vunpack.c.0.s8 %v1780
        %v1782 = vlaneseq
        %v1783 = vshrl.u32 %v1782, 7
        %v1784 = vsub.s32 %v1781, %v1783
        %v1785 = vrot.slane %v1771, %v1784
        %v1786 = vcombine.high %v1762, 0.0
        %v1787 = vcombine.high %v1769, 0.0
        %v1788 = vcombine.high %v1778, 0.0
        %v1789 = vcombine.high %v1785, 0.0
        %v1790 = vcombine.low %v1107, %v1713
        %v1791 = vcombine.high %v1107, %v1713
        %v1793 = vunpack.c.l.s4 1983009808
        %v1794 = vunpack.c.0.s8 %v1793
        %v1795 = vlaneseq
        %v1796 = vshrl.u32 %v1795, 7
        %v1797 = vsub.s32 %v1794, %v1796
        %v1798 = vrot.slane %v1790, %v1797
        %v1800 = vunpack.c.l.s4 1983009808
        %v1801 = vunpack.c.0.s8 %v1800
        %v1802 = vlaneseq
        %v1803 = vshrl.u32 %v1802, 7
        %v1804 = vsub.s32 %v1801, %v1803
        %v1805 = vrot.slane %v1791, %v1804
        %v1806 = vcombine.low %v1707, %v1719
        %v1807 = vcombine.high %v1707, %v1719
        %v1809 = vunpack.c.l.s4 1983009808
        %v1810 = vunpack.c.0.s8 %v1809
        %v1811 = vlaneseq
        %v1812 = vshrl.u32 %v1811, 7
        %v1813 = vsub.s32 %v1810, %v1812
        %v1814 = vrot.slane %v1806, %v1813
        %v1816 = vunpack.c.l.s4 1983009808
        %v1817 = vunpack.c.0.s8 %v1816
        %v1818 = vlaneseq
        %v1819 = vshrl.u32 %v1818, 7
        %v1820 = vsub.s32 %v1817, %v1819
        %v1821 = vrot.slane %v1807, %v1820
        %v1822 = vcombine.low %v1798, %v1814
        %v1823 = vcombine.high %v1798, %v1814
        %v1825 = vunpack.c.l.s4 1934713408
        %v1826 = vunpack.c.0.s8 %v1825
        %v1827 = vlaneseq
        %v1828 = vshrl.u32 %v1827, 7
        %v1829 = vsub.s32 %v1826, %v1828
        %v1830 = vrot.slane %v1822, %v1829
        %v1832 = vunpack.c.l.s4 1934713408
        %v1833 = vunpack.c.0.s8 %v1832
        %v1834 = vlaneseq
        %v1835 = vshrl.u32 %v1834, 7
        %v1836 = vsub.s32 %v1833, %v1835
        %v1837 = vrot.slane %v1823, %v1836
        %v1838 = vcombine.low %v1805, %v1821
        %v1839 = vcombine.high %v1805, %v1821
        %v1841 = vunpack.c.l.s4 1934713408
        %v1842 = vunpack.c.0.s8 %v1841
        %v1843 = vlaneseq
        %v1844 = vshrl.u32 %v1843, 7
        %v1845 = vsub.s32 %v1842, %v1844
        %v1846 = vrot.slane %v1838, %v1845
        %v1848 = vunpack.c.l.s4 1934713408
        %v1849 = vunpack.c.0.s8 %v1848
        %v1850 = vlaneseq
        %v1851 = vshrl.u32 %v1850, 7
        %v1852 = vsub.s32 %v1849, %v1851
        %v1853 = vrot.slane %v1839, %v1852
        %v1854 = vcombine.high %v1830, 0.0
        %v1855 = vcombine.high %v1837, 0.0
        %v1856 = vcombine.high %v1846, 0.0
        %v1857 = vcombine.high %v1853, 0.0
        %v1858 = vcombine.low %v1762, %v1769
        %v1860 = vunpack.c.l.s4 1983009808
        %v1861 = vunpack.c.0.s8 %v1860
        %v1862 = vlaneseq
        %v1863 = vshrl.u32 %v1862, 7
        %v1864 = vsub.s32 %v1861, %v1863
        %v1865 = vrot.slane %v1858, %v1864
        %v1866 = vcombine.low %v1786, %v1787
        %v1868 = vunpack.c.l.s4 1983009808
        %v1869 = vunpack.c.0.s8 %v1868
        %v1870 = vlaneseq
        %v1871 = vshrl.u32 %v1870, 7
        %v1872 = vsub.s32 %v1869, %v1871
        %v1873 = vrot.slane %v1866, %v1872
        %v1874 = vcombine.low %v1778, %v1785
        %v1876 = vunpack.c.l.s4 1983009808
        %v1877 = vunpack.c.0.s8 %v1876
        %v1878 = vlaneseq
        %v1879 = vshrl.u32 %v1878, 7
        %v1880 = vsub.s32 %v1877, %v1879
        %v1881 = vrot.slane %v1874, %v1880
        %v1882 = vcombine.low %v1788, %v1789
        %v1884 = vunpack.c.l.s4 1983009808
        %v1885 = vunpack.c.0.s8 %v1884
        %v1886 = vlaneseq
        %v1887 = vshrl.u32 %v1886, 7
        %v1888 = vsub.s32 %v1885, %v1887
        %v1889 = vrot.slane %v1882, %v1888
        %v1890 = vcombine.low %v1865, %v1873
        %v1891 = vcombine.high %v1865, %v1873
        %v1893 = vunpack.c.l.s4 1934713408
        %v1894 = vunpack.c.0.s8 %v1893
        %v1895 = vlaneseq
        %v1896 = vshrl.u32 %v1895, 7
        %v1897 = vsub.s32 %v1894, %v1896
        %v1898 = vrot.slane %v1890, %v1897
        %v1900 = vunpack.c.l.s4 1934713408
        %v1901 = vunpack.c.0.s8 %v1900
        %v1902 = vlaneseq
        %v1903 = vshrl.u32 %v1902, 7
        %v1904 = vsub.s32 %v1901, %v1903
        %v1905 = vrot.slane %v1891, %v1904
        %v1906 = vcombine.low %v1881, %v1889
        %v1907 = vcombine.high %v1881, %v1889
        %v1909 = vunpack.c.l.s4 1934713408
        %v1910 = vunpack.c.0.s8 %v1909
        %v1911 = vlaneseq
        %v1912 = vshrl.u32 %v1911, 7
        %v1913 = vsub.s32 %v1910, %v1912
        %v1914 = vrot.slane %v1906, %v1913
        %v1916 = vunpack.c.l.s4 1934713408
        %v1917 = vunpack.c.0.s8 %v1916
        %v1918 = vlaneseq
        %v1919 = vshrl.u32 %v1918, 7
        %v1920 = vsub.s32 %v1917, %v1919
        %v1921 = vrot.slane %v1907, %v1920
        %v1922 = vcombine.low %v1898, %v1914
        %v1923 = vcombine.high %v1898, %v1914
        %v1924 = vcombine.low %v1905, %v1921
        %v1925 = vcombine.high %v1905, %v1921
        %v1926 = vcombine.low %v1830, %v1837
        %v1928 = vunpack.c.l.s4 1983009808
        %v1929 = vunpack.c.0.s8 %v1928
        %v1930 = vlaneseq
        %v1931 = vshrl.u32 %v1930, 7
        %v1932 = vsub.s32 %v1929, %v1931
        %v1933 = vrot.slane %v1926, %v1932
        %v1934 = vcombine.low %v1854, %v1855
        %v1936 = vunpack.c.l.s4 1983009808
        %v1937 = vunpack.c.0.s8 %v1936
        %v1938 = vlaneseq
        %v1939 = vshrl.u32 %v1938, 7
        %v1940 = vsub.s32 %v1937, %v1939
        %v1941 = vrot.slane %v1934, %v1940
        %v1942 = vcombine.low %v1846, %v1853
        %v1944 = vunpack.c.l.s4 1983009808
        %v1945 = vunpack.c.0.s8 %v1944
        %v1946 = vlaneseq
        %v1947 = vshrl.u32 %v1946, 7
        %v1948 = vsub.s32 %v1945, %v1947
        %v1949 = vrot.slane %v1942, %v1948
        %v1950 = vcombine.low %v1856, %v1857
        %v1952 = vunpack.c.l.s4 1983009808
        %v1953 = vunpack.c.0.s8 %v1952
        %v1954 = vlaneseq
        %v1955 = vshrl.u32 %v1954, 7
        %v1956 = vsub.s32 %v1953, %v1955
        %v1957 = vrot.slane %v1950, %v1956
        %v1958 = vcombine.low %v1933, %v1941
        %v1959 = vcombine.high %v1933, %v1941
        %v1961 = vunpack.c.l.s4 1934713408
        %v1962 = vunpack.c.0.s8 %v1961
        %v1963 = vlaneseq
        %v1964 = vshrl.u32 %v1963, 7
        %v1965 = vsub.s32 %v1962, %v1964
        %v1966 = vrot.slane %v1958, %v1965
        %v1968 = vunpack.c.l.s4 1934713408
        %v1969 = vunpack.c.0.s8 %v1968
        %v1970 = vlaneseq
        %v1971 = vshrl.u32 %v1970, 7
        %v1972 = vsub.s32 %v1969, %v1971
        %v1973 = vrot.slane %v1959, %v1972
        %v1974 = vcombine.low %v1949, %v1957
        %v1975 = vcombine.high %v1949, %v1957
        %v1977 = vunpack.c.l.s4 1934713408
        %v1978 = vunpack.c.0.s8 %v1977
        %v1979 = vlaneseq
        %v1980 = vshrl.u32 %v1979, 7
        %v1981 = vsub.s32 %v1978, %v1980
        %v1982 = vrot.slane %v1974, %v1981
        %v1984 = vunpack.c.l.s4 1934713408
        %v1985 = vunpack.c.0.s8 %v1984
        %v1986 = vlaneseq
        %v1987 = vshrl.u32 %v1986, 7
        %v1988 = vsub.s32 %v1985, %v1987
        %v1989 = vrot.slane %v1975, %v1988
        %v1990 = vcombine.low %v1966, %v1982
        %v1991 = vcombine.high %v1966, %v1982
        %v1992 = vcombine.low %v1973, %v1989
        %v1993 = vcombine.high %v1973, %v1989
        %v1994 = vpack.c.bf16 %v1990, %v1922
        %v1995 = vpack.c.bf16 %v1991, %v1923
        %v1996 = vpack.c.bf16 %v1992, %v1924
        %v1997 = vpack.c.bf16 %v1993, %v1925
        %vm1998 = vcmask 261120
        %v2000 = vsel %vm1998, %v1402, 0
        %v2003 = vsel %vm1998, %v1698, 0
        %2005 = vmatprep.subr.bf16.mxu0 0
        %2006 = vmatpush1.bf16.xpose.msra.mxu0 %v2003
        %2007 = vmatprep.subr.bf16.mxu0 0
        %2008 = vmatpush1.bf16.xpose.msra.mxu0 0
        %2009 = vmatprep.subr.bf16.mxu0 0
        %2010 = vmatpush1.bf16.xpose.msra.mxu0 0
        %2011 = vmatprep.subr.bf16.mxu0 0
        %2012 = vmatpush1.bf16.xpose.msra.mxu0 0
        %2013 = vmatprep.subr.bf16.mxu0 0
        %2014 = vmatpush1.bf16.xpose.msra.mxu0 0
        %2015 = vmatprep.subr.bf16.mxu0 0
        %2016 = vmatpush1.bf16.xpose.msra.mxu0 0
        %2017 = vmatprep.subr.bf16.mxu0 0
        %2018 = vmatpush1.bf16.xpose.msra.mxu0 0
        %2019 = vmatprep.subr.bf16.mxu0 0
        %2020 = vmatpush1.bf16.xpose.msra.mxu0 0
        %2021 = vmatprep.subr.bf16.mxu0 0
        %2022 = vmatpush1.bf16.xpose.msra.mxu0 0
        %2023 = vmatprep.subr.bf16.mxu0 0
        %2024 = vmatpush1.bf16.xpose.msra.mxu0 0
        %2025 = vmatprep.subr.bf16.mxu0 0
        %2026 = vmatpush1.bf16.xpose.msra.mxu0 0
        %2027 = vmatprep.subr.bf16.mxu0 0
        %2028 = vmatpush1.bf16.xpose.msra.mxu0 0
        %2029 = vmatprep.subr.bf16.mxu0 0
        %2030 = vmatpush1.bf16.xpose.msra.mxu0 0
        %2031 = vmatprep.subr.bf16.mxu0 0
        %2032 = vmatpush1.bf16.xpose.msra.mxu0 0
        %2033 = vmatprep.subr.bf16.mxu0 0
        %2034 = vmatpush1.bf16.xpose.msra.mxu0 0
        %2035 = vmatprep.subr.bf16.mxu0 0
        %2036 = vmatpush1.bf16.xpose.msra.mxu0 0
        %2037 = vmatprep.mubr.bf16.mxu0 0
        %2038 = vmatmul.mubr.bf16.gmra.mrb[0].mxu0 %v2000
        %v2039 = vpop.f32.mrb[0].mxu0
        %v2040 = vadd.f32 0.0, %v2039
        %v2041 = vpop.f32.mrb[0].mxu0
        %v2042 = vpop.f32.mrb[0].mxu0
        %v2043 = vadd.f32 0.0, %v2042
        %v2044 = vpop.f32.mrb[0].mxu0
        %2045 = vdwg.mxu0
        %v2047 = vsel %vm1998, %v1403, 0
        %v2050 = vsel %vm1998, %v1699, 0
        %2052 = vmatprep.subr.bf16.mxu0 0
        %2053 = vmatpush1.bf16.xpose.msra.mxu0 %v2050
        %2054 = vmatprep.subr.bf16.mxu0 0
        %2055 = vmatpush1.bf16.xpose.msra.mxu0 0
        %2056 = vmatprep.subr.bf16.mxu0 0
        %2057 = vmatpush1.bf16.xpose.msra.mxu0 0
        %2058 = vmatprep.subr.bf16.mxu0 0
        %2059 = vmatpush1.bf16.xpose.msra.mxu0 0
        %2060 = vmatprep.subr.bf16.mxu0 0
        %2061 = vmatpush1.bf16.xpose.msra.mxu0 0
        %2062 = vmatprep.subr.bf16.mxu0 0
        %2063 = vmatpush1.bf16.xpose.msra.mxu0 0
        %2064 = vmatprep.subr.bf16.mxu0 0
        %2065 = vmatpush1.bf16.xpose.msra.mxu0 0
        %2066 = vmatprep.subr.bf16.mxu0 0
        %2067 = vmatpush1.bf16.xpose.msra.mxu0 0
        %2068 = vmatprep.subr.bf16.mxu0 0
        %2069 = vmatpush1.bf16.xpose.msra.mxu0 0
        %2070 = vmatprep.subr.bf16.mxu0 0
        %2071 = vmatpush1.bf16.xpose.msra.mxu0 0
        %2072 = vmatprep.subr.bf16.mxu0 0
        %2073 = vmatpush1.bf16.xpose.msra.mxu0 0
        %2074 = vmatprep.subr.bf16.mxu0 0
        %2075 = vmatpush1.bf16.xpose.msra.mxu0 0
        %2076 = vmatprep.subr.bf16.mxu0 0
        %2077 = vmatpush1.bf16.xpose.msra.mxu0 0
        %2078 = vmatprep.subr.bf16.mxu0 0
        %2079 = vmatpush1.bf16.xpose.msra.mxu0 0
        %2080 = vmatprep.subr.bf16.mxu0 0
        %2081 = vmatpush1.bf16.xpose.msra.mxu0 0
        %2082 = vmatprep.subr.bf16.mxu0 0
        %2083 = vmatpush1.bf16.xpose.msra.mxu0 0
        %2084 = vmatprep.mubr.bf16.mxu0 0
        %2085 = vmatmul.mubr.bf16.gmra.mrb[0].mxu0 %v2047
        %v2086 = vpop.f32.mrb[0].mxu0
        %v2087 = vadd.f32 0.0, %v2086
        %v2088 = vpop.f32.mrb[0].mxu0
        %v2089 = vpop.f32.mrb[0].mxu0
        %v2090 = vadd.f32 0.0, %v2089
        %v2091 = vpop.f32.mrb[0].mxu0
        %2092 = vdwg.mxu0
        %v2094 = vsel %vm1998, %v1404, 0
        %v2097 = vsel %vm1998, %v1700, 0
        %2099 = vmatprep.subr.bf16.mxu0 0
        %2100 = vmatpush1.bf16.xpose.msra.mxu0 %v2097
        %2101 = vmatprep.subr.bf16.mxu0 0
        %2102 = vmatpush1.bf16.xpose.msra.mxu0 0
        %2103 = vmatprep.subr.bf16.mxu0 0
        %2104 = vmatpush1.bf16.xpose.msra.mxu0 0
        %2105 = vmatprep.subr.bf16.mxu0 0
        %2106 = vmatpush1.bf16.xpose.msra.mxu0 0
        %2107 = vmatprep.subr.bf16.mxu0 0
        %2108 = vmatpush1.bf16.xpose.msra.mxu0 0
        %2109 = vmatprep.subr.bf16.mxu0 0
        %2110 = vmatpush1.bf16.xpose.msra.mxu0 0
        %2111 = vmatprep.subr.bf16.mxu0 0
        %2112 = vmatpush1.bf16.xpose.msra.mxu0 0
        %2113 = vmatprep.subr.bf16.mxu0 0
        %2114 = vmatpush1.bf16.xpose.msra.mxu0 0
        %2115 = vmatprep.subr.bf16.mxu0 0
        %2116 = vmatpush1.bf16.xpose.msra.mxu0 0
        %2117 = vmatprep.subr.bf16.mxu0 0
        %2118 = vmatpush1.bf16.xpose.msra.mxu0 0
        %2119 = vmatprep.subr.bf16.mxu0 0
        %2120 = vmatpush1.bf16.xpose.msra.mxu0 0
        %2121 = vmatprep.subr.bf16.mxu0 0
        %2122 = vmatpush1.bf16.xpose.msra.mxu0 0
        %2123 = vmatprep.subr.bf16.mxu0 0
        %2124 = vmatpush1.bf16.xpose.msra.mxu0 0
        %2125 = vmatprep.subr.bf16.mxu0 0
        %2126 = vmatpush1.bf16.xpose.msra.mxu0 0
        %2127 = vmatprep.subr.bf16.mxu0 0
        %2128 = vmatpush1.bf16.xpose.msra.mxu0 0
        %2129 = vmatprep.subr.bf16.mxu0 0
        %2130 = vmatpush1.bf16.xpose.msra.mxu0 0
        %2131 = vmatprep.mubr.bf16.mxu0 0
        %2132 = vmatmul.mubr.bf16.gmra.mrb[0].mxu0 %v2094
        %v2133 = vpop.f32.mrb[0].mxu0
        %v2134 = vadd.f32 0.0, %v2133
        %v2135 = vpop.f32.mrb[0].mxu0
        %v2136 = vpop.f32.mrb[0].mxu0
        %v2137 = vadd.f32 0.0, %v2136
        %v2138 = vpop.f32.mrb[0].mxu0
        %2139 = vdwg.mxu0
        %v2141 = vsel %vm1998, %v1405, 0
        %v2144 = vsel %vm1998, %v1701, 0
        %2146 = vmatprep.subr.bf16.mxu0 0
        %2147 = vmatpush1.bf16.xpose.msra.mxu0 %v2144
        %2148 = vmatprep.subr.bf16.mxu0 0
        %2149 = vmatpush1.bf16.xpose.msra.mxu0 0
        %2150 = vmatprep.subr.bf16.mxu0 0
        %2151 = vmatpush1.bf16.xpose.msra.mxu0 0
        %2152 = vmatprep.subr.bf16.mxu0 0
        %2153 = vmatpush1.bf16.xpose.msra.mxu0 0
        %2154 = vmatprep.subr.bf16.mxu0 0
        %2155 = vmatpush1.bf16.xpose.msra.mxu0 0
        %2156 = vmatprep.subr.bf16.mxu0 0
        %2157 = vmatpush1.bf16.xpose.msra.mxu0 0
        %2158 = vmatprep.subr.bf16.mxu0 0
        %2159 = vmatpush1.bf16.xpose.msra.mxu0 0
        %2160 = vmatprep.subr.bf16.mxu0 0
        %2161 = vmatpush1.bf16.xpose.msra.mxu0 0
        %2162 = vmatprep.subr.bf16.mxu0 0
        %2163 = vmatpush1.bf16.xpose.msra.mxu0 0
        %2164 = vmatprep.subr.bf16.mxu0 0
        %2165 = vmatpush1.bf16.xpose.msra.mxu0 0
        %2166 = vmatprep.subr.bf16.mxu0 0
        %2167 = vmatpush1.bf16.xpose.msra.mxu0 0
        %2168 = vmatprep.subr.bf16.mxu0 0
        %2169 = vmatpush1.bf16.xpose.msra.mxu0 0
        %2170 = vmatprep.subr.bf16.mxu0 0
        %2171 = vmatpush1.bf16.xpose.msra.mxu0 0
        %2172 = vmatprep.subr.bf16.mxu0 0
        %2173 = vmatpush1.bf16.xpose.msra.mxu0 0
        %2174 = vmatprep.subr.bf16.mxu0 0
        %2175 = vmatpush1.bf16.xpose.msra.mxu0 0
        %2176 = vmatprep.subr.bf16.mxu0 0
        %2177 = vmatpush1.bf16.xpose.msra.mxu0 0
        %2178 = vmatprep.mubr.bf16.mxu0 0
        %2179 = vmatmul.mubr.bf16.gmra.mrb[0].mxu0 %v2141
        %v2180 = vpop.f32.mrb[0].mxu0
        %v2181 = vadd.f32 0.0, %v2180
        %v2182 = vpop.f32.mrb[0].mxu0
        %v2183 = vpop.f32.mrb[0].mxu0
        %v2184 = vadd.f32 0.0, %v2183
        %v2185 = vpop.f32.mrb[0].mxu0
        %2186 = vdwg.mxu0
        %vm2187 = vcmask 130048
        %v2188 = vsel %vm2187, %v2040, -inf
        %2189 = vmax.xlane.f32.xlu0 %v2188
        %v2190 = vpop.xlane.xlu0 %2189
        %v2191 = vsel %vm2187, %v2043, -inf
        %2192 = vmax.xlane.f32.xlu0 %v2191
        %v2193 = vpop.xlane.xlu0 %2192
        %v2194 = vsel %vm2187, %v2087, -inf
        %2195 = vmax.xlane.f32.xlu0 %v2194
        %v2196 = vpop.xlane.xlu0 %2195
        %v2197 = vsel %vm2187, %v2090, -inf
        %2198 = vmax.xlane.f32.xlu0 %v2197
        %v2199 = vpop.xlane.xlu0 %2198
        %v2200 = vsel %vm2187, %v2134, -inf
        %2201 = vmax.xlane.f32.xlu0 %v2200
        %v2202 = vpop.xlane.xlu0 %2201
        %v2203 = vsel %vm2187, %v2137, -inf
        %2204 = vmax.xlane.f32.xlu0 %v2203
        %v2205 = vpop.xlane.xlu0 %2204
        %v2206 = vsel %vm2187, %v2181, -inf
        %2207 = vmax.xlane.f32.xlu0 %v2206
        %v2208 = vpop.xlane.xlu0 %2207
        %v2209 = vsel %vm2187, %v2184, -inf
        %2210 = vmax.xlane.f32.xlu0 %v2209
        %v2211 = vpop.xlane.xlu0 %2210
        %v2212 = vsub.f32 %v2040, %v2190
        %v2213 = vsub.f32 %v2043, %v2193
        %v2214 = vsub.f32 %v2087, %v2196
        %v2215 = vsub.f32 %v2090, %v2199
        %v2216 = vsub.f32 %v2134, %v2202
        %v2217 = vsub.f32 %v2137, %v2205
        %v2218 = vsub.f32 %v2181, %v2208
        %v2219 = vsub.f32 %v2184, %v2211
        %v2220 = vmul.f32 %v2212, 1.442695
        %v2221 = vpow.pop %v2220
        %v2222 = vmul.f32 %v2213, 1.442695
        %v2223 = vpow.pop %v2222
        %v2224 = vmul.f32 %v2214, 1.442695
        %v2225 = vpow.pop %v2224
        %v2226 = vmul.f32 %v2215, 1.442695
        %v2227 = vpow.pop %v2226
        %v2228 = vmul.f32 %v2216, 1.442695
        %v2229 = vpow.pop %v2228
        %v2230 = vmul.f32 %v2217, 1.442695
        %v2231 = vpow.pop %v2230
        %v2232 = vmul.f32 %v2218, 1.442695
        %v2233 = vpow.pop %v2232
        %v2234 = vmul.f32 %v2219, 1.442695
        %v2235 = vpow.pop %v2234
        %v2236 = vsel %vm2187, %v2221, 0.0
        %2237 = vadd.xlane.f32.xlu0 %v2236
        %v2238 = vpop.xlane.xlu0 %2237
        %v2239 = vsel %vm2187, %v2223, 0.0
        %2240 = vadd.xlane.f32.xlu0 %v2239
        %v2241 = vpop.xlane.xlu0 %2240
        %v2242 = vsel %vm2187, %v2225, 0.0
        %2243 = vadd.xlane.f32.xlu0 %v2242
        %v2244 = vpop.xlane.xlu0 %2243
        %v2245 = vsel %vm2187, %v2227, 0.0
        %2246 = vadd.xlane.f32.xlu0 %v2245
        %v2247 = vpop.xlane.xlu0 %2246
        %v2248 = vsel %vm2187, %v2229, 0.0
        %2249 = vadd.xlane.f32.xlu0 %v2248
        %v2250 = vpop.xlane.xlu0 %2249
        %v2251 = vsel %vm2187, %v2231, 0.0
        %2252 = vadd.xlane.f32.xlu0 %v2251
        %v2253 = vpop.xlane.xlu0 %2252
        %v2254 = vsel %vm2187, %v2233, 0.0
        %2255 = vadd.xlane.f32.xlu0 %v2254
        %v2256 = vpop.xlane.xlu0 %2255
        %v2257 = vsel %vm2187, %v2235, 0.0
        %2258 = vadd.xlane.f32.xlu0 %v2257
        %v2259 = vpop.xlane.xlu0 %2258
        %v2260 = vrcp.pop %v2238
        %v2261 = vrcp.pop %v2241
        %v2262 = vrcp.pop %v2244
        %v2263 = vrcp.pop %v2247
        %v2264 = vrcp.pop %v2250
        %v2265 = vrcp.pop %v2253
        %v2266 = vrcp.pop %v2256
        %v2267 = vrcp.pop %v2259
        %v2268 = vmul.f32 %v2221, %v2260
        %v2269 = vmul.f32 %v2223, %v2261
        %v2270 = vmul.f32 %v2225, %v2262
        %v2271 = vmul.f32 %v2227, %v2263
        %v2272 = vmul.f32 %v2229, %v2264
        %v2273 = vmul.f32 %v2231, %v2265
        %v2274 = vmul.f32 %v2233, %v2266
        %v2275 = vmul.f32 %v2235, %v2267
        %v2276 = vpack.c.bf16 %v2269, %v2268
        %v2277 = vpack.c.bf16 %v2271, %v2270
        %v2278 = vpack.c.bf16 %v2273, %v2272
        %v2279 = vpack.c.bf16 %v2275, %v2274
        %v2281 = vsel %vm2187, %v2276, 0
        %2283 = vmatprep.subr.bf16.mxu0 0
        %2284 = vmatpush1.bf16.msra.mxu0 %v1994
        %2285 = vmatprep.subr.bf16.mxu0 0
        %2286 = vmatpush1.bf16.msra.mxu0 0
        %2287 = vmatprep.subr.bf16.mxu0 0
        %2288 = vmatpush1.bf16.msra.mxu0 0
        %2289 = vmatprep.subr.bf16.mxu0 0
        %2290 = vmatpush1.bf16.msra.mxu0 0
        %2291 = vmatprep.subr.bf16.mxu0 0
        %2292 = vmatpush1.bf16.msra.mxu0 0
        %2293 = vmatprep.subr.bf16.mxu0 0
        %2294 = vmatpush1.bf16.msra.mxu0 0
        %2295 = vmatprep.subr.bf16.mxu0 0
        %2296 = vmatpush1.bf16.msra.mxu0 0
        %2297 = vmatprep.subr.bf16.mxu0 0
        %2298 = vmatpush1.bf16.msra.mxu0 0
        %2299 = vmatprep.subr.bf16.mxu0 0
        %2300 = vmatpush1.bf16.msra.mxu0 0
        %2301 = vmatprep.subr.bf16.mxu0 0
        %2302 = vmatpush1.bf16.msra.mxu0 0
        %2303 = vmatprep.subr.bf16.mxu0 0
        %2304 = vmatpush1.bf16.msra.mxu0 0
        %2305 = vmatprep.subr.bf16.mxu0 0
        %2306 = vmatpush1.bf16.msra.mxu0 0
        %2307 = vmatprep.subr.bf16.mxu0 0
        %2308 = vmatpush1.bf16.msra.mxu0 0
        %2309 = vmatprep.subr.bf16.mxu0 0
        %2310 = vmatpush1.bf16.msra.mxu0 0
        %2311 = vmatprep.subr.bf16.mxu0 0
        %2312 = vmatpush1.bf16.msra.mxu0 0
        %2313 = vmatprep.subr.bf16.mxu0 0
        %2314 = vmatpush1.bf16.msra.mxu0 0
        %2315 = vmatprep.mubr.bf16.mxu0 0
        %2316 = vmatmul.mubr.bf16.gmra.mrb[0].mxu0 %v2281
        %v2317 = vpop.f32.mrb[0].mxu0
        %v2318 = vadd.f32 0.0, %v2317
        %v2319 = vpop.f32.mrb[0].mxu0
        %v2320 = vpop.f32.mrb[0].mxu0
        %v2321 = vadd.f32 0.0, %v2320
        %v2322 = vpop.f32.mrb[0].mxu0
        %2323 = vdwg.mxu0
        %v2325 = vsel %vm2187, %v2277, 0
        %2327 = vmatprep.subr.bf16.mxu0 0
        %2328 = vmatpush1.bf16.msra.mxu0 %v1995
        %2329 = vmatprep.subr.bf16.mxu0 0
        %2330 = vmatpush1.bf16.msra.mxu0 0
        %2331 = vmatprep.subr.bf16.mxu0 0
        %2332 = vmatpush1.bf16.msra.mxu0 0
        %2333 = vmatprep.subr.bf16.mxu0 0
        %2334 = vmatpush1.bf16.msra.mxu0 0
        %2335 = vmatprep.subr.bf16.mxu0 0
        %2336 = vmatpush1.bf16.msra.mxu0 0
        %2337 = vmatprep.subr.bf16.mxu0 0
        %2338 = vmatpush1.bf16.msra.mxu0 0
        %2339 = vmatprep.subr.bf16.mxu0 0
        %2340 = vmatpush1.bf16.msra.mxu0 0
        %2341 = vmatprep.subr.bf16.mxu0 0
        %2342 = vmatpush1.bf16.msra.mxu0 0
        %2343 = vmatprep.subr.bf16.mxu0 0
        %2344 = vmatpush1.bf16.msra.mxu0 0
        %2345 = vmatprep.subr.bf16.mxu0 0
        %2346 = vmatpush1.bf16.msra.mxu0 0
        %2347 = vmatprep.subr.bf16.mxu0 0
        %2348 = vmatpush1.bf16.msra.mxu0 0
        %2349 = vmatprep.subr.bf16.mxu0 0
        %2350 = vmatpush1.bf16.msra.mxu0 0
        %2351 = vmatprep.subr.bf16.mxu0 0
        %2352 = vmatpush1.bf16.msra.mxu0 0
        %2353 = vmatprep.subr.bf16.mxu0 0
        %2354 = vmatpush1.bf16.msra.mxu0 0
        %2355 = vmatprep.subr.bf16.mxu0 0
        %2356 = vmatpush1.bf16.msra.mxu0 0
        %2357 = vmatprep.subr.bf16.mxu0 0
        %2358 = vmatpush1.bf16.msra.mxu0 0
        %2359 = vmatprep.mubr.bf16.mxu0 0
        %2360 = vmatmul.mubr.bf16.gmra.mrb[0].mxu0 %v2325
        %v2361 = vpop.f32.mrb[0].mxu0
        %v2362 = vadd.f32 0.0, %v2361
        %v2363 = vpop.f32.mrb[0].mxu0
        %v2364 = vpop.f32.mrb[0].mxu0
        %v2365 = vadd.f32 0.0, %v2364
        %v2366 = vpop.f32.mrb[0].mxu0
        %2367 = vdwg.mxu0
        %v2369 = vsel %vm2187, %v2278, 0
        %2371 = vmatprep.subr.bf16.mxu0 0
        %2372 = vmatpush1.bf16.msra.mxu0 %v1996
        %2373 = vmatprep.subr.bf16.mxu0 0
        %2374 = vmatpush1.bf16.msra.mxu0 0
        %2375 = vmatprep.subr.bf16.mxu0 0
        %2376 = vmatpush1.bf16.msra.mxu0 0
        %2377 = vmatprep.subr.bf16.mxu0 0
        %2378 = vmatpush1.bf16.msra.mxu0 0
        %2379 = vmatprep.subr.bf16.mxu0 0
        %2380 = vmatpush1.bf16.msra.mxu0 0
        %2381 = vmatprep.subr.bf16.mxu0 0
        %2382 = vmatpush1.bf16.msra.mxu0 0
        %2383 = vmatprep.subr.bf16.mxu0 0
        %2384 = vmatpush1.bf16.msra.mxu0 0
        %2385 = vmatprep.subr.bf16.mxu0 0
        %2386 = vmatpush1.bf16.msra.mxu0 0
        %2387 = vmatprep.subr.bf16.mxu0 0
        %2388 = vmatpush1.bf16.msra.mxu0 0
        %2389 = vmatprep.subr.bf16.mxu0 0
        %2390 = vmatpush1.bf16.msra.mxu0 0
        %2391 = vmatprep.subr.bf16.mxu0 0
        %2392 = vmatpush1.bf16.msra.mxu0 0
        %2393 = vmatprep.subr.bf16.mxu0 0
        %2394 = vmatpush1.bf16.msra.mxu0 0
        %2395 = vmatprep.subr.bf16.mxu0 0
        %2396 = vmatpush1.bf16.msra.mxu0 0
        %2397 = vmatprep.subr.bf16.mxu0 0
        %2398 = vmatpush1.bf16.msra.mxu0 0
        %2399 = vmatprep.subr.bf16.mxu0 0
        %2400 = vmatpush1.bf16.msra.mxu0 0
        %2401 = vmatprep.subr.bf16.mxu0 0
        %2402 = vmatpush1.bf16.msra.mxu0 0
        %2403 = vmatprep.mubr.bf16.mxu0 0
        %2404 = vmatmul.mubr.bf16.gmra.mrb[0].mxu0 %v2369
        %v2405 = vpop.f32.mrb[0].mxu0
        %v2406 = vadd.f32 0.0, %v2405
        %v2407 = vpop.f32.mrb[0].mxu0
        %v2408 = vpop.f32.mrb[0].mxu0
        %v2409 = vadd.f32 0.0, %v2408
        %v2410 = vpop.f32.mrb[0].mxu0
        %2411 = vdwg.mxu0
        %v2413 = vsel %vm2187, %v2279, 0
        %2415 = vmatprep.subr.bf16.mxu0 0
        %2416 = vmatpush1.bf16.msra.mxu0 %v1997
        %2417 = vmatprep.subr.bf16.mxu0 0
        %2418 = vmatpush1.bf16.msra.mxu0 0
        %2419 = vmatprep.subr.bf16.mxu0 0
        %2420 = vmatpush1.bf16.msra.mxu0 0
        %2421 = vmatprep.subr.bf16.mxu0 0
        %2422 = vmatpush1.bf16.msra.mxu0 0
        %2423 = vmatprep.subr.bf16.mxu0 0
        %2424 = vmatpush1.bf16.msra.mxu0 0
        %2425 = vmatprep.subr.bf16.mxu0 0
        %2426 = vmatpush1.bf16.msra.mxu0 0
        %2427 = vmatprep.subr.bf16.mxu0 0
        %2428 = vmatpush1.bf16.msra.mxu0 0
        %2429 = vmatprep.subr.bf16.mxu0 0
        %2430 = vmatpush1.bf16.msra.mxu0 0
        %2431 = vmatprep.subr.bf16.mxu0 0
        %2432 = vmatpush1.bf16.msra.mxu0 0
        %2433 = vmatprep.subr.bf16.mxu0 0
        %2434 = vmatpush1.bf16.msra.mxu0 0
        %2435 = vmatprep.subr.bf16.mxu0 0
        %2436 = vmatpush1.bf16.msra.mxu0 0
        %2437 = vmatprep.subr.bf16.mxu0 0
        %2438 = vmatpush1.bf16.msra.mxu0 0
        %2439 = vmatprep.subr.bf16.mxu0 0
        %2440 = vmatpush1.bf16.msra.mxu0 0
        %2441 = vmatprep.subr.bf16.mxu0 0
        %2442 = vmatpush1.bf16.msra.mxu0 0
        %2443 = vmatprep.subr.bf16.mxu0 0
        %2444 = vmatpush1.bf16.msra.mxu0 0
        %2445 = vmatprep.subr.bf16.mxu0 0
        %2446 = vmatpush1.bf16.msra.mxu0 0
        %2447 = vmatprep.mubr.bf16.mxu0 0
        %2448 = vmatmul.mubr.bf16.gmra.mrb[0].mxu0 %v2413
        %v2449 = vpop.f32.mrb[0].mxu0
        %v2450 = vadd.f32 0.0, %v2449
        %v2451 = vpop.f32.mrb[0].mxu0
        %v2452 = vpop.f32.mrb[0].mxu0
        %v2453 = vadd.f32 0.0, %v2452
        %v2454 = vpop.f32.mrb[0].mxu0
        %2455 = vdwg.mxu0
        %v2456 = vcombine.low %v2318, %v2406
        %v2457 = vcombine.high %v2318, %v2406
        %v2459 = vunpack.c.l.s4 1983009808
        %v2460 = vunpack.c.0.s8 %v2459
        %v2461 = vlaneseq
        %v2462 = vshrl.u32 %v2461, 7
        %v2463 = vsub.s32 %v2460, %v2462
        %v2464 = vrot.slane %v2456, %v2463
        %v2466 = vunpack.c.l.s4 1983009808
        %v2467 = vunpack.c.0.s8 %v2466
        %v2468 = vlaneseq
        %v2469 = vshrl.u32 %v2468, 7
        %v2470 = vsub.s32 %v2467, %v2469
        %v2471 = vrot.slane %v2457, %v2470
        %v2472 = vcombine.low %v2362, %v2450
        %v2473 = vcombine.high %v2362, %v2450
        %v2475 = vunpack.c.l.s4 1983009808
        %v2476 = vunpack.c.0.s8 %v2475
        %v2477 = vlaneseq
        %v2478 = vshrl.u32 %v2477, 7
        %v2479 = vsub.s32 %v2476, %v2478
        %v2480 = vrot.slane %v2472, %v2479
        %v2482 = vunpack.c.l.s4 1983009808
        %v2483 = vunpack.c.0.s8 %v2482
        %v2484 = vlaneseq
        %v2485 = vshrl.u32 %v2484, 7
        %v2486 = vsub.s32 %v2483, %v2485
        %v2487 = vrot.slane %v2473, %v2486
        %v2488 = vcombine.low %v2464, %v2480
        %v2489 = vcombine.high %v2464, %v2480
        %v2491 = vunpack.c.l.s4 1934713408
        %v2492 = vunpack.c.0.s8 %v2491
        %v2493 = vlaneseq
        %v2494 = vshrl.u32 %v2493, 7
        %v2495 = vsub.s32 %v2492, %v2494
        %v2496 = vrot.slane %v2488, %v2495
        %v2498 = vunpack.c.l.s4 1934713408
        %v2499 = vunpack.c.0.s8 %v2498
        %v2500 = vlaneseq
        %v2501 = vshrl.u32 %v2500, 7
        %v2502 = vsub.s32 %v2499, %v2501
        %v2503 = vrot.slane %v2489, %v2502
        %v2504 = vcombine.low %v2471, %v2487
        %v2505 = vcombine.high %v2471, %v2487
        %v2507 = vunpack.c.l.s4 1934713408
        %v2508 = vunpack.c.0.s8 %v2507
        %v2509 = vlaneseq
        %v2510 = vshrl.u32 %v2509, 7
        %v2511 = vsub.s32 %v2508, %v2510
        %v2512 = vrot.slane %v2504, %v2511
        %v2514 = vunpack.c.l.s4 1934713408
        %v2515 = vunpack.c.0.s8 %v2514
        %v2516 = vlaneseq
        %v2517 = vshrl.u32 %v2516, 7
        %v2518 = vsub.s32 %v2515, %v2517
        %v2519 = vrot.slane %v2505, %v2518
        %v2520 = vcombine.high %v2496, 0.0
        %v2521 = vcombine.high %v2503, 0.0
        %v2522 = vcombine.high %v2512, 0.0
        %v2523 = vcombine.high %v2519, 0.0
        %v2524 = vcombine.low %v2321, %v2409
        %v2525 = vcombine.high %v2321, %v2409
        %v2527 = vunpack.c.l.s4 1983009808
        %v2528 = vunpack.c.0.s8 %v2527
        %v2529 = vlaneseq
        %v2530 = vshrl.u32 %v2529, 7
        %v2531 = vsub.s32 %v2528, %v2530
        %v2532 = vrot.slane %v2524, %v2531
        %v2534 = vunpack.c.l.s4 1983009808
        %v2535 = vunpack.c.0.s8 %v2534
        %v2536 = vlaneseq
        %v2537 = vshrl.u32 %v2536, 7
        %v2538 = vsub.s32 %v2535, %v2537
        %v2539 = vrot.slane %v2525, %v2538
        %v2540 = vcombine.low %v2365, %v2453
        %v2541 = vcombine.high %v2365, %v2453
        %v2543 = vunpack.c.l.s4 1983009808
        %v2544 = vunpack.c.0.s8 %v2543
        %v2545 = vlaneseq
        %v2546 = vshrl.u32 %v2545, 7
        %v2547 = vsub.s32 %v2544, %v2546
        %v2548 = vrot.slane %v2540, %v2547
        %v2550 = vunpack.c.l.s4 1983009808
        %v2551 = vunpack.c.0.s8 %v2550
        %v2552 = vlaneseq
        %v2553 = vshrl.u32 %v2552, 7
        %v2554 = vsub.s32 %v2551, %v2553
        %v2555 = vrot.slane %v2541, %v2554
        %v2556 = vcombine.low %v2532, %v2548
        %v2557 = vcombine.high %v2532, %v2548
        %v2559 = vunpack.c.l.s4 1934713408
        %v2560 = vunpack.c.0.s8 %v2559
        %v2561 = vlaneseq
        %v2562 = vshrl.u32 %v2561, 7
        %v2563 = vsub.s32 %v2560, %v2562
        %v2564 = vrot.slane %v2556, %v2563
        %v2566 = vunpack.c.l.s4 1934713408
        %v2567 = vunpack.c.0.s8 %v2566
        %v2568 = vlaneseq
        %v2569 = vshrl.u32 %v2568, 7
        %v2570 = vsub.s32 %v2567, %v2569
        %v2571 = vrot.slane %v2557, %v2570
        %v2572 = vcombine.low %v2539, %v2555
        %v2573 = vcombine.high %v2539, %v2555
        %v2575 = vunpack.c.l.s4 1934713408
        %v2576 = vunpack.c.0.s8 %v2575
        %v2577 = vlaneseq
        %v2578 = vshrl.u32 %v2577, 7
        %v2579 = vsub.s32 %v2576, %v2578
        %v2580 = vrot.slane %v2572, %v2579
        %v2582 = vunpack.c.l.s4 1934713408
        %v2583 = vunpack.c.0.s8 %v2582
        %v2584 = vlaneseq
        %v2585 = vshrl.u32 %v2584, 7
        %v2586 = vsub.s32 %v2583, %v2585
        %v2587 = vrot.slane %v2573, %v2586
        %v2588 = vcombine.high %v2564, 0.0
        %v2589 = vcombine.high %v2571, 0.0
        %v2590 = vcombine.high %v2580, 0.0
        %v2591 = vcombine.high %v2587, 0.0
        %v2592 = vcombine.low %v2496, %v2503
        %v2594 = vunpack.c.l.s4 1983009808
        %v2595 = vunpack.c.0.s8 %v2594
        %v2596 = vlaneseq
        %v2597 = vshrl.u32 %v2596, 7
        %v2598 = vsub.s32 %v2595, %v2597
        %v2599 = vrot.slane %v2592, %v2598
        %v2600 = vcombine.low %v2520, %v2521
        %v2602 = vunpack.c.l.s4 1983009808
        %v2603 = vunpack.c.0.s8 %v2602
        %v2604 = vlaneseq
        %v2605 = vshrl.u32 %v2604, 7
        %v2606 = vsub.s32 %v2603, %v2605
        %v2607 = vrot.slane %v2600, %v2606
        %v2608 = vcombine.low %v2512, %v2519
        %v2610 = vunpack.c.l.s4 1983009808
        %v2611 = vunpack.c.0.s8 %v2610
        %v2612 = vlaneseq
        %v2613 = vshrl.u32 %v2612, 7
        %v2614 = vsub.s32 %v2611, %v2613
        %v2615 = vrot.slane %v2608, %v2614
        %v2616 = vcombine.low %v2522, %v2523
        %v2618 = vunpack.c.l.s4 1983009808
        %v2619 = vunpack.c.0.s8 %v2618
        %v2620 = vlaneseq
        %v2621 = vshrl.u32 %v2620, 7
        %v2622 = vsub.s32 %v2619, %v2621
        %v2623 = vrot.slane %v2616, %v2622
        %v2624 = vcombine.low %v2599, %v2607
        %v2625 = vcombine.high %v2599, %v2607
        %v2627 = vunpack.c.l.s4 1934713408
        %v2628 = vunpack.c.0.s8 %v2627
        %v2629 = vlaneseq
        %v2630 = vshrl.u32 %v2629, 7
        %v2631 = vsub.s32 %v2628, %v2630
        %v2632 = vrot.slane %v2624, %v2631
        %v2634 = vunpack.c.l.s4 1934713408
        %v2635 = vunpack.c.0.s8 %v2634
        %v2636 = vlaneseq
        %v2637 = vshrl.u32 %v2636, 7
        %v2638 = vsub.s32 %v2635, %v2637
        %v2639 = vrot.slane %v2625, %v2638
        %v2640 = vcombine.low %v2615, %v2623
        %v2641 = vcombine.high %v2615, %v2623
        %v2643 = vunpack.c.l.s4 1934713408
        %v2644 = vunpack.c.0.s8 %v2643
        %v2645 = vlaneseq
        %v2646 = vshrl.u32 %v2645, 7
        %v2647 = vsub.s32 %v2644, %v2646
        %v2648 = vrot.slane %v2640, %v2647
        %v2650 = vunpack.c.l.s4 1934713408
        %v2651 = vunpack.c.0.s8 %v2650
        %v2652 = vlaneseq
        %v2653 = vshrl.u32 %v2652, 7
        %v2654 = vsub.s32 %v2651, %v2653
        %v2655 = vrot.slane %v2641, %v2654
        %v2656 = vcombine.low %v2632, %v2648
        %v2657 = vcombine.high %v2632, %v2648
        %v2658 = vcombine.low %v2639, %v2655
        %v2659 = vcombine.high %v2639, %v2655
        %v2660 = vcombine.low %v2564, %v2571
        %v2662 = vunpack.c.l.s4 1983009808
        %v2663 = vunpack.c.0.s8 %v2662
        %v2664 = vlaneseq
        %v2665 = vshrl.u32 %v2664, 7
        %v2666 = vsub.s32 %v2663, %v2665
        %v2667 = vrot.slane %v2660, %v2666
        %v2668 = vcombine.low %v2588, %v2589
        %v2670 = vunpack.c.l.s4 1983009808
        %v2671 = vunpack.c.0.s8 %v2670
        %v2672 = vlaneseq
        %v2673 = vshrl.u32 %v2672, 7
        %v2674 = vsub.s32 %v2671, %v2673
        %v2675 = vrot.slane %v2668, %v2674
        %v2676 = vcombine.low %v2580, %v2587
        %v2678 = vunpack.c.l.s4 1983009808
        %v2679 = vunpack.c.0.s8 %v2678
        %v2680 = vlaneseq
        %v2681 = vshrl.u32 %v2680, 7
        %v2682 = vsub.s32 %v2679, %v2681
        %v2683 = vrot.slane %v2676, %v2682
        %v2684 = vcombine.low %v2590, %v2591
        %v2686 = vunpack.c.l.s4 1983009808
        %v2687 = vunpack.c.0.s8 %v2686
        %v2688 = vlaneseq
        %v2689 = vshrl.u32 %v2688, 7
        %v2690 = vsub.s32 %v2687, %v2689
        %v2691 = vrot.slane %v2684, %v2690
        %v2692 = vcombine.low %v2667, %v2675
        %v2693 = vcombine.high %v2667, %v2675
        %v2695 = vunpack.c.l.s4 1934713408
        %v2696 = vunpack.c.0.s8 %v2695
        %v2697 = vlaneseq
        %v2698 = vshrl.u32 %v2697, 7
        %v2699 = vsub.s32 %v2696, %v2698
        %v2700 = vrot.slane %v2692, %v2699
        %v2702 = vunpack.c.l.s4 1934713408
        %v2703 = vunpack.c.0.s8 %v2702
        %v2704 = vlaneseq
        %v2705 = vshrl.u32 %v2704, 7
        %v2706 = vsub.s32 %v2703, %v2705
        %v2707 = vrot.slane %v2693, %v2706
        %v2708 = vcombine.low %v2683, %v2691
        %v2709 = vcombine.high %v2683, %v2691
        %v2711 = vunpack.c.l.s4 1934713408
        %v2712 = vunpack.c.0.s8 %v2711
        %v2713 = vlaneseq
        %v2714 = vshrl.u32 %v2713, 7
        %v2715 = vsub.s32 %v2712, %v2714
        %v2716 = vrot.slane %v2708, %v2715
        %v2718 = vunpack.c.l.s4 1934713408
        %v2719 = vunpack.c.0.s8 %v2718
        %v2720 = vlaneseq
        %v2721 = vshrl.u32 %v2720, 7
        %v2722 = vsub.s32 %v2719, %v2721
        %v2723 = vrot.slane %v2709, %v2722
        %v2724 = vcombine.low %v2700, %v2716
        %v2725 = vcombine.high %v2700, %v2716
        %v2726 = vcombine.low %v2707, %v2723
        %v2727 = vcombine.high %v2707, %v2723
        %2730 = vrot.lane.b32.xlu0 %v2657, 32
        %v2731 = vpop.permute.xlu0 %2730
        %2732 = vrot.lane.b32.xlu0 %v2725, 32
        %v2733 = vpop.permute.xlu0 %2732
        %2738 = vrot.lane.b32.xlu0 %v2658, 64
        %v2739 = vpop.permute.xlu0 %2738
        %2740 = vrot.lane.b32.xlu0 %v2726, 64
        %v2741 = vpop.permute.xlu0 %2740
        %2746 = vrot.lane.b32.xlu0 %v2659, 96
        %v2747 = vpop.permute.xlu0 %2746
        %2748 = vrot.lane.b32.xlu0 %v2727, 96
        %v2749 = vpop.permute.xlu0 %2748
        %v2752 = vsel %vm1998, %v2656, %v2731
        %v2753 = vsel %vm1998, %v2724, %v2733
        %vm2754 = vcmask 523264
        %v2755 = vsel %vm2754, %v2752, %v2739
        %v2756 = vsel %vm2754, %v2753, %v2741
        %vm2757 = vcmask 785408
        %v2758 = vsel %vm2757, %v2755, %v2747
        %v2759 = vsel %vm2757, %v2756, %v2749
        %v2760 = vpack.c.bf16 %v2759, %v2758
        %v2761 = vld [vmem:[#allocation8] sm:$0xf]
        %v2762 = vld [vmem:[#allocation8 + $0x4] sm:$0xf]
        %v2763 = vld [vmem:[#allocation8 + $0x8] sm:$0xf]
        %v2764 = vld [vmem:[#allocation8 + $0xc] sm:$0xf]
        %v2765 = vld [vmem:[#allocation8 + $0x10] sm:$0xf]
        %v2766 = vld [vmem:[#allocation8 + $0x14] sm:$0xf]
        %v2767 = vld [vmem:[#allocation8 + $0x18] sm:$0xf]
        %v2768 = vld [vmem:[#allocation8 + $0x1c] sm:$0xf]
        %v2769 = vld [vmem:[#allocation8 + $0x20] sm:$0xf]
        %v2770 = vld [vmem:[#allocation8 + $0x24] sm:$0xf]
        %v2771 = vld [vmem:[#allocation8 + $0x28] sm:$0xf]
        %v2772 = vld [vmem:[#allocation8 + $0x2c] sm:$0xf]
        %v2773 = vld [vmem:[#allocation8 + $0x30] sm:$0xf]
        %v2774 = vld [vmem:[#allocation8 + $0x34] sm:$0xf]
        %v2775 = vld [vmem:[#allocation8 + $0x38] sm:$0xf]
        %v2776 = vld [vmem:[#allocation8 + $0x3c] sm:$0xf]
        %v2777 = vld [vmem:[%s5] sm:$0x1]
        %v2779 = vlaneseq
        %v2780 = vshrl.u32 %v2779, 7
        %v2781 = vsub.s32 0, %v2780
        %v2782 = vrot.slane %v2777, %v2781
        %v2800 = vunpack.c.l.b16 %v2761
        %v2801 = vunpack.c.l.b16 %v2762
        %v2802 = vunpack.c.l.b16 %v2763
        %v2803 = vunpack.c.l.b16 %v2764
        %v2804 = vunpack.c.l.b16 %v2765
        %v2805 = vunpack.c.l.b16 %v2766
        %v2806 = vunpack.c.l.b16 %v2767
        %v2807 = vunpack.c.l.b16 %v2768
        %v2808 = vunpack.c.l.b16 %v2769
        %v2809 = vunpack.c.l.b16 %v2770
        %v2810 = vunpack.c.l.b16 %v2771
        %v2811 = vunpack.c.l.b16 %v2772
        %v2812 = vunpack.c.l.b16 %v2773
        %v2813 = vunpack.c.l.b16 %v2774
        %v2814 = vunpack.c.l.b16 %v2775
        %v2815 = vunpack.c.l.b16 %v2776
        %v2816 = vpack.c.b16 %v2801, %v2800
        %v2817 = vpack.c.b16 %v2803, %v2802
        %v2818 = vpack.c.b16 %v2805, %v2804
        %v2819 = vpack.c.b16 %v2807, %v2806
        %v2820 = vpack.c.b16 %v2809, %v2808
        %v2821 = vpack.c.b16 %v2811, %v2810
        %v2822 = vpack.c.b16 %v2813, %v2812
        %v2823 = vpack.c.b16 %v2815, %v2814
        %2832 = vmatprep.subr.bf16.mxu0 0
        %2833 = vmatpush1.bf16.msra.mxu0 %v2816
        %2834 = vmatprep.subr.bf16.mxu0 0
        %2835 = vmatpush1.bf16.msra.mxu0 %v2817
        %2836 = vmatprep.subr.bf16.mxu0 0
        %2837 = vmatpush1.bf16.msra.mxu0 %v2818
        %2838 = vmatprep.subr.bf16.mxu0 0
        %2839 = vmatpush1.bf16.msra.mxu0 %v2819
        %2840 = vmatprep.subr.bf16.mxu0 0
        %2841 = vmatpush1.bf16.msra.mxu0 %v2820
        %2842 = vmatprep.subr.bf16.mxu0 0
        %2843 = vmatpush1.bf16.msra.mxu0 %v2821
        %2844 = vmatprep.subr.bf16.mxu0 0
        %2845 = vmatpush1.bf16.msra.mxu0 %v2822
        %2846 = vmatprep.subr.bf16.mxu0 0
        %2847 = vmatpush1.bf16.msra.mxu0 %v2823
        %2848 = vmatprep.subr.bf16.mxu0 0
        %2849 = vmatpush1.bf16.msra.mxu0 0
        %2850 = vmatprep.subr.bf16.mxu0 0
        %2851 = vmatpush1.bf16.msra.mxu0 0
        %2852 = vmatprep.subr.bf16.mxu0 0
        %2853 = vmatpush1.bf16.msra.mxu0 0
        %2854 = vmatprep.subr.bf16.mxu0 0
        %2855 = vmatpush1.bf16.msra.mxu0 0
        %2856 = vmatprep.subr.bf16.mxu0 0
        %2857 = vmatpush1.bf16.msra.mxu0 0
        %2858 = vmatprep.subr.bf16.mxu0 0
        %2859 = vmatpush1.bf16.msra.mxu0 0
        %2860 = vmatprep.subr.bf16.mxu0 0
        %2861 = vmatpush1.bf16.msra.mxu0 0
        %2862 = vmatprep.subr.bf16.mxu0 0
        %2863 = vmatpush1.bf16.msra.mxu0 0
        %2864 = vmatprep.mubr.bf16.mxu0 0
        %2865 = vmatmul.mubr.bf16.gmra.mrb[0].mxu0 %v2760
        %v2866 = vpop.f32.mrb[0].mxu0
        %v2867 = vadd.f32 %v2782, %v2866
        %v2868 = vpop.f32.mrb[0].mxu0
        %v2869 = vpop.f32.mrb[0].mxu0
        %v2870 = vadd.f32 %v2782, %v2869
        %v2871 = vpop.f32.mrb[0].mxu0
        %2872 = vdwg.mxu0
        %v2873 = vadd.f32 %v2867, %v846
        %v2874 = vadd.f32 %v2870, %v847
        %v2875 = vld [vmem:[%s6] sm:$0x1]
        %v2876 = vld [vmem:[%s7] sm:$0x1]
        %2877 = vadd.xlane.f32.xlu0 %v2873
        %v2878 = vpop.xlane.xlu0 %2877
        %2879 = vadd.xlane.f32.xlu0 %v2874
        %v2880 = vpop.xlane.xlu0 %2879
        %v2881 = vrcp.pop 128.0
        %v2882 = vmul.f32 %v2878, %v2881
        %v2883 = vmul.f32 %v2880, %v2881
        %v2884 = vsub.f32 %v2873, %v2882
        %v2885 = vsub.f32 %v2874, %v2883
        %v2886 = vmul.f32 %v2884, %v2884
        %v2887 = vmul.f32 %v2885, %v2885
        %2888 = vadd.xlane.f32.xlu0 %v2886
        %v2889 = vpop.xlane.xlu0 %2888
        %2890 = vadd.xlane.f32.xlu0 %v2887
        %v2891 = vpop.xlane.xlu0 %2890
        %v2892 = vmul.f32 %v2889, %v2881
        %v2893 = vmul.f32 %v2891, %v2881
        %v2894 = vadd.f32 %v2892, 1e-05
        %v2895 = vadd.f32 %v2893, 1e-05
        %v2896 = vrsqrt.pop %v2894
        %v2897 = vmul.f32 %v2894, %v2896
        %vm2898 = vcmp.eq.f32.partialorder %v2894, inf
        %v2899 = vsel %vm2898, %v2894, %v2897
        %vm2900 = vcmp.eq.f32.partialorder %v2894, 0.0
        %v2901 = vand.u32 %v2894, 2147483648
        %v2902 = vsel %vm2900, %v2901, %v2899
        %v2903 = vrsqrt.pop %v2895
        %v2904 = vmul.f32 %v2895, %v2903
        %vm2905 = vcmp.eq.f32.partialorder %v2895, inf
        %v2906 = vsel %vm2905, %v2895, %v2904
        %vm2907 = vcmp.eq.f32.partialorder %v2895, 0.0
        %v2908 = vand.u32 %v2895, 2147483648
        %v2909 = vsel %vm2907, %v2908, %v2906
        %v2910 = vrcp.pop %v2902
        %v2911 = vmul.f32 %v2884, %v2910
        %v2912 = vrcp.pop %v2909
        %v2913 = vmul.f32 %v2885, %v2912
        %v2915 = vlaneseq
        %v2916 = vshrl.u32 %v2915, 7
        %v2917 = vsub.s32 0, %v2916
        %v2918 = vrot.slane %v2875, %v2917
        %v2920 = vmul.f32 %v2918, %v2911
        %v2921 = vmul.f32 %v2918, %v2913
        %v2923 = vlaneseq
        %v2924 = vshrl.u32 %v2923, 7
        %v2925 = vsub.s32 0, %v2924
        %v2926 = vrot.slane %v2876, %v2925
        %v2928 = vadd.f32 %v2920, %v2926
        %v2929 = vadd.f32 %v2921, %v2926
        %v2930 = vpack.c.bf16 %v845, %v844
        %v2931 = vld [vmem:[#allocation11] sm:$0xff]
        %v2932 = vld [vmem:[#allocation11 + $0x8] sm:$0xff]
        %v2933 = vld [vmem:[#allocation11 + $0x10] sm:$0xff]
        %v2934 = vld [vmem:[#allocation11 + $0x18] sm:$0xff]
        %v2935 = vld [vmem:[#allocation11 + $0x20] sm:$0xff]
        %v2936 = vld [vmem:[#allocation11 + $0x28] sm:$0xff]
        %v2937 = vld [vmem:[#allocation11 + $0x30] sm:$0xff]
        %v2938 = vld [vmem:[#allocation11 + $0x38] sm:$0xff]
        %v2939 = vld [vmem:[#allocation11 + $0x40] sm:$0xff]
        %v2940 = vld [vmem:[#allocation11 + $0x48] sm:$0xff]
        %v2941 = vld [vmem:[#allocation11 + $0x50] sm:$0xff]
        %v2942 = vld [vmem:[#allocation11 + $0x58] sm:$0xff]
        %v2943 = vld [vmem:[#allocation11 + $0x60] sm:$0xff]
        %v2944 = vld [vmem:[#allocation11 + $0x68] sm:$0xff]
        %v2945 = vld [vmem:[#allocation11 + $0x70] sm:$0xff]
        %v2946 = vld [vmem:[#allocation11 + $0x78] sm:$0xff]
        %v2947 = vld [vmem:[%s11] sm:$0x3]
        %v2949 = vlaneseq
        %v2950 = vshrl.u32 %v2949, 7
        %v2951 = vsub.s32 0, %v2950
        %v2952 = vrot.slane %v2947, %v2951
        %v2953 = vlaneseq
        %v2954 = vshrl.u32 %v2953, 7
        %v2955 = vsub.s32 1, %v2954
        %v2956 = vrot.slane %v2947, %v2955
        %v2975 = vunpack.c.l.b16 %v2931
        %v2976 = vunpack.c.h.b16 %v2931
        %v2977 = vunpack.c.l.b16 %v2932
        %v2978 = vunpack.c.h.b16 %v2932
        %v2979 = vunpack.c.l.b16 %v2933
        %v2980 = vunpack.c.h.b16 %v2933
        %v2981 = vunpack.c.l.b16 %v2934
        %v2982 = vunpack.c.h.b16 %v2934
        %v2983 = vunpack.c.l.b16 %v2935
        %v2984 = vunpack.c.h.b16 %v2935
        %v2985 = vunpack.c.l.b16 %v2936
        %v2986 = vunpack.c.h.b16 %v2936
        %v2987 = vunpack.c.l.b16 %v2937
        %v2988 = vunpack.c.h.b16 %v2937
        %v2989 = vunpack.c.l.b16 %v2938
        %v2990 = vunpack.c.h.b16 %v2938
        %v2991 = vunpack.c.l.b16 %v2939
        %v2992 = vunpack.c.h.b16 %v2939
        %v2993 = vunpack.c.l.b16 %v2940
        %v2994 = vunpack.c.h.b16 %v2940
        %v2995 = vunpack.c.l.b16 %v2941
        %v2996 = vunpack.c.h.b16 %v2941
        %v2997 = vunpack.c.l.b16 %v2942
        %v2998 = vunpack.c.h.b16 %v2942
        %v2999 = vunpack.c.l.b16 %v2943
        %v3000 = vunpack.c.h.b16 %v2943
        %v3001 = vunpack.c.l.b16 %v2944
        %v3002 = vunpack.c.h.b16 %v2944
        %v3003 = vunpack.c.l.b16 %v2945
        %v3004 = vunpack.c.h.b16 %v2945
        %v3005 = vunpack.c.l.b16 %v2946
        %v3006 = vunpack.c.h.b16 %v2946
        %v3007 = vpack.c.b16 %v2977, %v2975
        %v3008 = vpack.c.b16 %v2978, %v2976
        %v3009 = vpack.c.b16 %v2981, %v2979
        %v3010 = vpack.c.b16 %v2982, %v2980
        %v3011 = vpack.c.b16 %v2985, %v2983
        %v3012 = vpack.c.b16 %v2986, %v2984
        %v3013 = vpack.c.b16 %v2989, %v2987
        %v3014 = vpack.c.b16 %v2990, %v2988
        %v3015 = vpack.c.b16 %v2993, %v2991
        %v3016 = vpack.c.b16 %v2994, %v2992
        %v3017 = vpack.c.b16 %v2997, %v2995
        %v3018 = vpack.c.b16 %v2998, %v2996
        %v3019 = vpack.c.b16 %v3001, %v2999
        %v3020 = vpack.c.b16 %v3002, %v3000
        %v3021 = vpack.c.b16 %v3005, %v3003
        %v3022 = vpack.c.b16 %v3006, %v3004
        %3039 = vmatprep.subr.bf16.mxu0 %v3008
        %3040 = vmatpush1.bf16.msra.mxu0 %v3007
        %3041 = vmatprep.subr.bf16.mxu0 %v3010
        %3042 = vmatpush1.bf16.msra.mxu0 %v3009
        %3043 = vmatprep.subr.bf16.mxu0 %v3012
        %3044 = vmatpush1.bf16.msra.mxu0 %v3011
        %3045 = vmatprep.subr.bf16.mxu0 %v3014
        %3046 = vmatpush1.bf16.msra.mxu0 %v3013
        %3047 = vmatprep.subr.bf16.mxu0 %v3016
        %3048 = vmatpush1.bf16.msra.mxu0 %v3015
        %3049 = vmatprep.subr.bf16.mxu0 %v3018
        %3050 = vmatpush1.bf16.msra.mxu0 %v3017
        %3051 = vmatprep.subr.bf16.mxu0 %v3020
        %3052 = vmatpush1.bf16.msra.mxu0 %v3019
        %3053 = vmatprep.subr.bf16.mxu0 %v3022
        %3054 = vmatpush1.bf16.msra.mxu0 %v3021
        %3055 = vmatprep.subr.bf16.mxu0 0
        %3056 = vmatpush1.bf16.msra.mxu0 0
        %3057 = vmatprep.subr.bf16.mxu0 0
        %3058 = vmatpush1.bf16.msra.mxu0 0
        %3059 = vmatprep.subr.bf16.mxu0 0
        %3060 = vmatpush1.bf16.msra.mxu0 0
        %3061 = vmatprep.subr.bf16.mxu0 0
        %3062 = vmatpush1.bf16.msra.mxu0 0
        %3063 = vmatprep.subr.bf16.mxu0 0
        %3064 = vmatpush1.bf16.msra.mxu0 0
        %3065 = vmatprep.subr.bf16.mxu0 0
        %3066 = vmatpush1.bf16.msra.mxu0 0
        %3067 = vmatprep.subr.bf16.mxu0 0
        %3068 = vmatpush1.bf16.msra.mxu0 0
        %3069 = vmatprep.subr.bf16.mxu0 0
        %3070 = vmatpush1.bf16.msra.mxu0 0
        %3071 = vmatprep.mubr.bf16.mxu0 0
        %3072 = vmatmul.mubr.bf16.gmra.mrb[0].mxu0 %v2930
        %v3073 = vpop.f32.mrb[0].mxu0
        %v3074 = vadd.f32 %v2952, %v3073
        %v3075 = vpop.f32.mrb[0].mxu0
        %v3076 = vadd.f32 %v2956, %v3075
        %v3077 = vpop.f32.mrb[0].mxu0
        %v3078 = vadd.f32 %v2952, %v3077
        %v3079 = vpop.f32.mrb[0].mxu0
        %v3080 = vadd.f32 %v2956, %v3079
        %3081 = vdwg.mxu0
        %v3082 = vpack.c.bf16 %v2929, %v2928
        %v3083 = vld [vmem:[#allocation10] sm:$0xf]
        %v3084 = vld [vmem:[#allocation10 + $0x4] sm:$0xf]
        %v3085 = vld [vmem:[#allocation10 + $0x8] sm:$0xf]
        %v3086 = vld [vmem:[#allocation10 + $0xc] sm:$0xf]
        %v3087 = vld [vmem:[#allocation10 + $0x10] sm:$0xf]
        %v3088 = vld [vmem:[#allocation10 + $0x14] sm:$0xf]
        %v3089 = vld [vmem:[#allocation10 + $0x18] sm:$0xf]
        %v3090 = vld [vmem:[#allocation10 + $0x1c] sm:$0xf]
        %v3091 = vld [vmem:[#allocation10 + $0x20] sm:$0xf]
        %v3092 = vld [vmem:[#allocation10 + $0x24] sm:$0xf]
        %v3093 = vld [vmem:[#allocation10 + $0x28] sm:$0xf]
        %v3094 = vld [vmem:[#allocation10 + $0x2c] sm:$0xf]
        %v3095 = vld [vmem:[#allocation10 + $0x30] sm:$0xf]
        %v3096 = vld [vmem:[#allocation10 + $0x34] sm:$0xf]
        %v3097 = vld [vmem:[#allocation10 + $0x38] sm:$0xf]
        %v3098 = vld [vmem:[#allocation10 + $0x3c] sm:$0xf]
        %v3099 = vld [vmem:[%s9] sm:$0x1]
        %v3101 = vlaneseq
        %v3102 = vshrl.u32 %v3101, 7
        %v3103 = vsub.s32 0, %v3102
        %v3104 = vrot.slane %v3099, %v3103
        %v3122 = vunpack.c.l.b16 %v3083
        %v3123 = vunpack.c.l.b16 %v3084
        %v3124 = vunpack.c.l.b16 %v3085
        %v3125 = vunpack.c.l.b16 %v3086
        %v3126 = vunpack.c.l.b16 %v3087
        %v3127 = vunpack.c.l.b16 %v3088
        %v3128 = vunpack.c.l.b16 %v3089
        %v3129 = vunpack.c.l.b16 %v3090
        %v3130 = vunpack.c.l.b16 %v3091
        %v3131 = vunpack.c.l.b16 %v3092
        %v3132 = vunpack.c.l.b16 %v3093
        %v3133 = vunpack.c.l.b16 %v3094
        %v3134 = vunpack.c.l.b16 %v3095
        %v3135 = vunpack.c.l.b16 %v3096
        %v3136 = vunpack.c.l.b16 %v3097
        %v3137 = vunpack.c.l.b16 %v3098
        %v3138 = vpack.c.b16 %v3123, %v3122
        %v3139 = vpack.c.b16 %v3125, %v3124
        %v3140 = vpack.c.b16 %v3127, %v3126
        %v3141 = vpack.c.b16 %v3129, %v3128
        %v3142 = vpack.c.b16 %v3131, %v3130
        %v3143 = vpack.c.b16 %v3133, %v3132
        %v3144 = vpack.c.b16 %v3135, %v3134
        %v3145 = vpack.c.b16 %v3137, %v3136
        %3154 = vmatprep.subr.bf16.mxu0 0
        %3155 = vmatpush1.bf16.msra.mxu0 %v3138
        %3156 = vmatprep.subr.bf16.mxu0 0
        %3157 = vmatpush1.bf16.msra.mxu0 %v3139
        %3158 = vmatprep.subr.bf16.mxu0 0
        %3159 = vmatpush1.bf16.msra.mxu0 %v3140
        %3160 = vmatprep.subr.bf16.mxu0 0
        %3161 = vmatpush1.bf16.msra.mxu0 %v3141
        %3162 = vmatprep.subr.bf16.mxu0 0
        %3163 = vmatpush1.bf16.msra.mxu0 %v3142
        %3164 = vmatprep.subr.bf16.mxu0 0
        %3165 = vmatpush1.bf16.msra.mxu0 %v3143
        %3166 = vmatprep.subr.bf16.mxu0 0
        %3167 = vmatpush1.bf16.msra.mxu0 %v3144
        %3168 = vmatprep.subr.bf16.mxu0 0
        %3169 = vmatpush1.bf16.msra.mxu0 %v3145
        %3170 = vmatprep.subr.bf16.mxu0 0
        %3171 = vmatpush1.bf16.msra.mxu0 0
        %3172 = vmatprep.subr.bf16.mxu0 0
        %3173 = vmatpush1.bf16.msra.mxu0 0
        %3174 = vmatprep.subr.bf16.mxu0 0
        %3175 = vmatpush1.bf16.msra.mxu0 0
        %3176 = vmatprep.subr.bf16.mxu0 0
        %3177 = vmatpush1.bf16.msra.mxu0 0
        %3178 = vmatprep.subr.bf16.mxu0 0
        %3179 = vmatpush1.bf16.msra.mxu0 0
        %3180 = vmatprep.subr.bf16.mxu0 0
        %3181 = vmatpush1.bf16.msra.mxu0 0
        %3182 = vmatprep.subr.bf16.mxu0 0
        %3183 = vmatpush1.bf16.msra.mxu0 0
        %3184 = vmatprep.subr.bf16.mxu0 0
        %3185 = vmatpush1.bf16.msra.mxu0 0
        %3186 = vmatprep.mubr.bf16.mxu0 0
        %3187 = vmatmul.mubr.bf16.gmra.mrb[0].mxu0 %v3082
        %v3188 = vpop.f32.mrb[0].mxu0
        %v3189 = vadd.f32 %v3104, %v3188
        %v3190 = vpop.f32.mrb[0].mxu0
        %v3191 = vpop.f32.mrb[0].mxu0
        %v3192 = vadd.f32 %v3104, %v3191
        %v3193 = vpop.f32.mrb[0].mxu0
        %3194 = vdwg.mxu0
        %3197 = vrot.lane.b32.xlu0 %v3189, 96
        %v3198 = vpop.permute.xlu0 %3197
        %3199 = vrot.lane.b32.xlu0 %v3192, 96
        %v3200 = vpop.permute.xlu0 %3199
        %3203 = vrot.lane.b32.xlu0 %v3189, 64
        %v3204 = vpop.permute.xlu0 %3203
        %3205 = vrot.lane.b32.xlu0 %v3192, 64
        %v3206 = vpop.permute.xlu0 %3205
        %3209 = vrot.lane.b32.xlu0 %v3189, 32
        %v3210 = vpop.permute.xlu0 %3209
        %3211 = vrot.lane.b32.xlu0 %v3192, 32
        %v3212 = vpop.permute.xlu0 %3211
        %v3215 = vcombine.low %v3189, %v3204
        %v3216 = vcombine.high %v3189, %v3204
        %v3218 = vunpack.c.l.s4 1983009808
        %v3219 = vunpack.c.0.s8 %v3218
        %v3220 = vlaneseq
        %v3221 = vshrl.u32 %v3220, 7
        %v3222 = vsub.s32 %v3219, %v3221
        %v3223 = vrot.slane %v3215, %v3222
        %v3225 = vunpack.c.l.s4 1983009808
        %v3226 = vunpack.c.0.s8 %v3225
        %v3227 = vlaneseq
        %v3228 = vshrl.u32 %v3227, 7
        %v3229 = vsub.s32 %v3226, %v3228
        %v3230 = vrot.slane %v3216, %v3229
        %v3231 = vcombine.low %v3198, %v3210
        %v3232 = vcombine.high %v3198, %v3210
        %v3234 = vunpack.c.l.s4 1983009808
        %v3235 = vunpack.c.0.s8 %v3234
        %v3236 = vlaneseq
        %v3237 = vshrl.u32 %v3236, 7
        %v3238 = vsub.s32 %v3235, %v3237
        %v3239 = vrot.slane %v3231, %v3238
        %v3241 = vunpack.c.l.s4 1983009808
        %v3242 = vunpack.c.0.s8 %v3241
        %v3243 = vlaneseq
        %v3244 = vshrl.u32 %v3243, 7
        %v3245 = vsub.s32 %v3242, %v3244
        %v3246 = vrot.slane %v3232, %v3245
        %v3247 = vcombine.low %v3223, %v3239
        %v3248 = vcombine.high %v3223, %v3239
        %v3250 = vunpack.c.l.s4 1934713408
        %v3251 = vunpack.c.0.s8 %v3250
        %v3252 = vlaneseq
        %v3253 = vshrl.u32 %v3252, 7
        %v3254 = vsub.s32 %v3251, %v3253
        %v3255 = vrot.slane %v3247, %v3254
        %v3257 = vunpack.c.l.s4 1934713408
        %v3258 = vunpack.c.0.s8 %v3257
        %v3259 = vlaneseq
        %v3260 = vshrl.u32 %v3259, 7
        %v3261 = vsub.s32 %v3258, %v3260
        %v3262 = vrot.slane %v3248, %v3261
        %v3263 = vcombine.low %v3230, %v3246
        %v3264 = vcombine.high %v3230, %v3246
        %v3266 = vunpack.c.l.s4 1934713408
        %v3267 = vunpack.c.0.s8 %v3266
        %v3268 = vlaneseq
        %v3269 = vshrl.u32 %v3268, 7
        %v3270 = vsub.s32 %v3267, %v3269
        %v3271 = vrot.slane %v3263, %v3270
        %v3273 = vunpack.c.l.s4 1934713408
        %v3274 = vunpack.c.0.s8 %v3273
        %v3275 = vlaneseq
        %v3276 = vshrl.u32 %v3275, 7
        %v3277 = vsub.s32 %v3274, %v3276
        %v3278 = vrot.slane %v3264, %v3277
        %v3279 = vcombine.high %v3255, 0.0
        %v3280 = vcombine.high %v3262, 0.0
        %v3281 = vcombine.high %v3271, 0.0
        %v3282 = vcombine.high %v3278, 0.0
        %v3283 = vcombine.low %v3192, %v3206
        %v3284 = vcombine.high %v3192, %v3206
        %v3286 = vunpack.c.l.s4 1983009808
        %v3287 = vunpack.c.0.s8 %v3286
        %v3288 = vlaneseq
        %v3289 = vshrl.u32 %v3288, 7
        %v3290 = vsub.s32 %v3287, %v3289
        %v3291 = vrot.slane %v3283, %v3290
        %v3293 = vunpack.c.l.s4 1983009808
        %v3294 = vunpack.c.0.s8 %v3293
        %v3295 = vlaneseq
        %v3296 = vshrl.u32 %v3295, 7
        %v3297 = vsub.s32 %v3294, %v3296
        %v3298 = vrot.slane %v3284, %v3297
        %v3299 = vcombine.low %v3200, %v3212
        %v3300 = vcombine.high %v3200, %v3212
        %v3302 = vunpack.c.l.s4 1983009808
        %v3303 = vunpack.c.0.s8 %v3302
        %v3304 = vlaneseq
        %v3305 = vshrl.u32 %v3304, 7
        %v3306 = vsub.s32 %v3303, %v3305
        %v3307 = vrot.slane %v3299, %v3306
        %v3309 = vunpack.c.l.s4 1983009808
        %v3310 = vunpack.c.0.s8 %v3309
        %v3311 = vlaneseq
        %v3312 = vshrl.u32 %v3311, 7
        %v3313 = vsub.s32 %v3310, %v3312
        %v3314 = vrot.slane %v3300, %v3313
        %v3315 = vcombine.low %v3291, %v3307
        %v3316 = vcombine.high %v3291, %v3307
        %v3318 = vunpack.c.l.s4 1934713408
        %v3319 = vunpack.c.0.s8 %v3318
        %v3320 = vlaneseq
        %v3321 = vshrl.u32 %v3320, 7
        %v3322 = vsub.s32 %v3319, %v3321
        %v3323 = vrot.slane %v3315, %v3322
        %v3325 = vunpack.c.l.s4 1934713408
        %v3326 = vunpack.c.0.s8 %v3325
        %v3327 = vlaneseq
        %v3328 = vshrl.u32 %v3327, 7
        %v3329 = vsub.s32 %v3326, %v3328
        %v3330 = vrot.slane %v3316, %v3329
        %v3331 = vcombine.low %v3298, %v3314
        %v3332 = vcombine.high %v3298, %v3314
        %v3334 = vunpack.c.l.s4 1934713408
        %v3335 = vunpack.c.0.s8 %v3334
        %v3336 = vlaneseq
        %v3337 = vshrl.u32 %v3336, 7
        %v3338 = vsub.s32 %v3335, %v3337
        %v3339 = vrot.slane %v3331, %v3338
        %v3341 = vunpack.c.l.s4 1934713408
        %v3342 = vunpack.c.0.s8 %v3341
        %v3343 = vlaneseq
        %v3344 = vshrl.u32 %v3343, 7
        %v3345 = vsub.s32 %v3342, %v3344
        %v3346 = vrot.slane %v3332, %v3345
        %v3347 = vcombine.high %v3323, 0.0
        %v3348 = vcombine.high %v3330, 0.0
        %v3349 = vcombine.high %v3339, 0.0
        %v3350 = vcombine.high %v3346, 0.0
        %v3351 = vcombine.low %v3255, %v3262
        %v3353 = vunpack.c.l.s4 1983009808
        %v3354 = vunpack.c.0.s8 %v3353
        %v3355 = vlaneseq
        %v3356 = vshrl.u32 %v3355, 7
        %v3357 = vsub.s32 %v3354, %v3356
        %v3358 = vrot.slane %v3351, %v3357
        %v3359 = vcombine.low %v3279, %v3280
        %v3361 = vunpack.c.l.s4 1983009808
        %v3362 = vunpack.c.0.s8 %v3361
        %v3363 = vlaneseq
        %v3364 = vshrl.u32 %v3363, 7
        %v3365 = vsub.s32 %v3362, %v3364
        %v3366 = vrot.slane %v3359, %v3365
        %v3367 = vcombine.low %v3271, %v3278
        %v3369 = vunpack.c.l.s4 1983009808
        %v3370 = vunpack.c.0.s8 %v3369
        %v3371 = vlaneseq
        %v3372 = vshrl.u32 %v3371, 7
        %v3373 = vsub.s32 %v3370, %v3372
        %v3374 = vrot.slane %v3367, %v3373
        %v3375 = vcombine.low %v3281, %v3282
        %v3377 = vunpack.c.l.s4 1983009808
        %v3378 = vunpack.c.0.s8 %v3377
        %v3379 = vlaneseq
        %v3380 = vshrl.u32 %v3379, 7
        %v3381 = vsub.s32 %v3378, %v3380
        %v3382 = vrot.slane %v3375, %v3381
        %v3383 = vcombine.low %v3358, %v3366
        %v3384 = vcombine.high %v3358, %v3366
        %v3386 = vunpack.c.l.s4 1934713408
        %v3387 = vunpack.c.0.s8 %v3386
        %v3388 = vlaneseq
        %v3389 = vshrl.u32 %v3388, 7
        %v3390 = vsub.s32 %v3387, %v3389
        %v3391 = vrot.slane %v3383, %v3390
        %v3393 = vunpack.c.l.s4 1934713408
        %v3394 = vunpack.c.0.s8 %v3393
        %v3395 = vlaneseq
        %v3396 = vshrl.u32 %v3395, 7
        %v3397 = vsub.s32 %v3394, %v3396
        %v3398 = vrot.slane %v3384, %v3397
        %v3399 = vcombine.low %v3374, %v3382
        %v3400 = vcombine.high %v3374, %v3382
        %v3402 = vunpack.c.l.s4 1934713408
        %v3403 = vunpack.c.0.s8 %v3402
        %v3404 = vlaneseq
        %v3405 = vshrl.u32 %v3404, 7
        %v3406 = vsub.s32 %v3403, %v3405
        %v3407 = vrot.slane %v3399, %v3406
        %v3409 = vunpack.c.l.s4 1934713408
        %v3410 = vunpack.c.0.s8 %v3409
        %v3411 = vlaneseq
        %v3412 = vshrl.u32 %v3411, 7
        %v3413 = vsub.s32 %v3410, %v3412
        %v3414 = vrot.slane %v3400, %v3413
        %v3415 = vcombine.low %v3391, %v3407
        %v3416 = vcombine.high %v3391, %v3407
        %v3417 = vcombine.low %v3398, %v3414
        %v3418 = vcombine.high %v3398, %v3414
        %v3419 = vcombine.low %v3323, %v3330
        %v3421 = vunpack.c.l.s4 1983009808
        %v3422 = vunpack.c.0.s8 %v3421
        %v3423 = vlaneseq
        %v3424 = vshrl.u32 %v3423, 7
        %v3425 = vsub.s32 %v3422, %v3424
        %v3426 = vrot.slane %v3419, %v3425
        %v3427 = vcombine.low %v3347, %v3348
        %v3429 = vunpack.c.l.s4 1983009808
        %v3430 = vunpack.c.0.s8 %v3429
        %v3431 = vlaneseq
        %v3432 = vshrl.u32 %v3431, 7
        %v3433 = vsub.s32 %v3430, %v3432
        %v3434 = vrot.slane %v3427, %v3433
        %v3435 = vcombine.low %v3339, %v3346
        %v3437 = vunpack.c.l.s4 1983009808
        %v3438 = vunpack.c.0.s8 %v3437
        %v3439 = vlaneseq
        %v3440 = vshrl.u32 %v3439, 7
        %v3441 = vsub.s32 %v3438, %v3440
        %v3442 = vrot.slane %v3435, %v3441
        %v3443 = vcombine.low %v3349, %v3350
        %v3445 = vunpack.c.l.s4 1983009808
        %v3446 = vunpack.c.0.s8 %v3445
        %v3447 = vlaneseq
        %v3448 = vshrl.u32 %v3447, 7
        %v3449 = vsub.s32 %v3446, %v3448
        %v3450 = vrot.slane %v3443, %v3449
        %v3451 = vcombine.low %v3426, %v3434
        %v3452 = vcombine.high %v3426, %v3434
        %v3454 = vunpack.c.l.s4 1934713408
        %v3455 = vunpack.c.0.s8 %v3454
        %v3456 = vlaneseq
        %v3457 = vshrl.u32 %v3456, 7
        %v3458 = vsub.s32 %v3455, %v3457
        %v3459 = vrot.slane %v3451, %v3458
        %v3461 = vunpack.c.l.s4 1934713408
        %v3462 = vunpack.c.0.s8 %v3461
        %v3463 = vlaneseq
        %v3464 = vshrl.u32 %v3463, 7
        %v3465 = vsub.s32 %v3462, %v3464
        %v3466 = vrot.slane %v3452, %v3465
        %v3467 = vcombine.low %v3442, %v3450
        %v3468 = vcombine.high %v3442, %v3450
        %v3470 = vunpack.c.l.s4 1934713408
        %v3471 = vunpack.c.0.s8 %v3470
        %v3472 = vlaneseq
        %v3473 = vshrl.u32 %v3472, 7
        %v3474 = vsub.s32 %v3471, %v3473
        %v3475 = vrot.slane %v3467, %v3474
        %v3477 = vunpack.c.l.s4 1934713408
        %v3478 = vunpack.c.0.s8 %v3477
        %v3479 = vlaneseq
        %v3480 = vshrl.u32 %v3479, 7
        %v3481 = vsub.s32 %v3478, %v3480
        %v3482 = vrot.slane %v3468, %v3481
        %v3483 = vcombine.low %v3459, %v3475
        %v3484 = vcombine.high %v3459, %v3475
        %v3485 = vcombine.low %v3466, %v3482
        %v3486 = vcombine.high %v3466, %v3482
        %v3487 = vpack.c.bf16 %v3483, %v3415
        %v3488 = vpack.c.bf16 %v3484, %v3416
        %v3489 = vpack.c.bf16 %v3485, %v3417
        %v3490 = vpack.c.bf16 %v3486, %v3418
        %3493 = vrot.lane.b32.xlu0 %v3074, 96
        %v3494 = vpop.permute.xlu0 %3493
        %3495 = vrot.lane.b32.xlu0 %v3078, 96
        %v3496 = vpop.permute.xlu0 %3495
        %3499 = vrot.lane.b32.xlu0 %v3074, 64
        %v3500 = vpop.permute.xlu0 %3499
        %3501 = vrot.lane.b32.xlu0 %v3078, 64
        %v3502 = vpop.permute.xlu0 %3501
        %3505 = vrot.lane.b32.xlu0 %v3074, 32
        %v3506 = vpop.permute.xlu0 %3505
        %3507 = vrot.lane.b32.xlu0 %v3078, 32
        %v3508 = vpop.permute.xlu0 %3507
        %v3511 = vcombine.low %v3074, %v3500
        %v3512 = vcombine.high %v3074, %v3500
        %v3514 = vunpack.c.l.s4 1983009808
        %v3515 = vunpack.c.0.s8 %v3514
        %v3516 = vlaneseq
        %v3517 = vshrl.u32 %v3516, 7
        %v3518 = vsub.s32 %v3515, %v3517
        %v3519 = vrot.slane %v3511, %v3518
        %v3521 = vunpack.c.l.s4 1983009808
        %v3522 = vunpack.c.0.s8 %v3521
        %v3523 = vlaneseq
        %v3524 = vshrl.u32 %v3523, 7
        %v3525 = vsub.s32 %v3522, %v3524
        %v3526 = vrot.slane %v3512, %v3525
        %v3527 = vcombine.low %v3494, %v3506
        %v3528 = vcombine.high %v3494, %v3506
        %v3530 = vunpack.c.l.s4 1983009808
        %v3531 = vunpack.c.0.s8 %v3530
        %v3532 = vlaneseq
        %v3533 = vshrl.u32 %v3532, 7
        %v3534 = vsub.s32 %v3531, %v3533
        %v3535 = vrot.slane %v3527, %v3534
        %v3537 = vunpack.c.l.s4 1983009808
        %v3538 = vunpack.c.0.s8 %v3537
        %v3539 = vlaneseq
        %v3540 = vshrl.u32 %v3539, 7
        %v3541 = vsub.s32 %v3538, %v3540
        %v3542 = vrot.slane %v3528, %v3541
        %v3543 = vcombine.low %v3519, %v3535
        %v3544 = vcombine.high %v3519, %v3535
        %v3546 = vunpack.c.l.s4 1934713408
        %v3547 = vunpack.c.0.s8 %v3546
        %v3548 = vlaneseq
        %v3549 = vshrl.u32 %v3548, 7
        %v3550 = vsub.s32 %v3547, %v3549
        %v3551 = vrot.slane %v3543, %v3550
        %v3553 = vunpack.c.l.s4 1934713408
        %v3554 = vunpack.c.0.s8 %v3553
        %v3555 = vlaneseq
        %v3556 = vshrl.u32 %v3555, 7
        %v3557 = vsub.s32 %v3554, %v3556
        %v3558 = vrot.slane %v3544, %v3557
        %v3559 = vcombine.low %v3526, %v3542
        %v3560 = vcombine.high %v3526, %v3542
        %v3562 = vunpack.c.l.s4 1934713408
        %v3563 = vunpack.c.0.s8 %v3562
        %v3564 = vlaneseq
        %v3565 = vshrl.u32 %v3564, 7
        %v3566 = vsub.s32 %v3563, %v3565
        %v3567 = vrot.slane %v3559, %v3566
        %v3569 = vunpack.c.l.s4 1934713408
        %v3570 = vunpack.c.0.s8 %v3569
        %v3571 = vlaneseq
        %v3572 = vshrl.u32 %v3571, 7
        %v3573 = vsub.s32 %v3570, %v3572
        %v3574 = vrot.slane %v3560, %v3573
        %v3575 = vcombine.high %v3551, 0.0
        %v3576 = vcombine.high %v3558, 0.0
        %v3577 = vcombine.high %v3567, 0.0
        %v3578 = vcombine.high %v3574, 0.0
        %v3579 = vcombine.low %v3078, %v3502
        %v3580 = vcombine.high %v3078, %v3502
        %v3582 = vunpack.c.l.s4 1983009808
        %v3583 = vunpack.c.0.s8 %v3582
        %v3584 = vlaneseq
        %v3585 = vshrl.u32 %v3584, 7
        %v3586 = vsub.s32 %v3583, %v3585
        %v3587 = vrot.slane %v3579, %v3586
        %v3589 = vunpack.c.l.s4 1983009808
        %v3590 = vunpack.c.0.s8 %v3589
        %v3591 = vlaneseq
        %v3592 = vshrl.u32 %v3591, 7
        %v3593 = vsub.s32 %v3590, %v3592
        %v3594 = vrot.slane %v3580, %v3593
        %v3595 = vcombine.low %v3496, %v3508
        %v3596 = vcombine.high %v3496, %v3508
        %v3598 = vunpack.c.l.s4 1983009808
        %v3599 = vunpack.c.0.s8 %v3598
        %v3600 = vlaneseq
        %v3601 = vshrl.u32 %v3600, 7
        %v3602 = vsub.s32 %v3599, %v3601
        %v3603 = vrot.slane %v3595, %v3602
        %v3605 = vunpack.c.l.s4 1983009808
        %v3606 = vunpack.c.0.s8 %v3605
        %v3607 = vlaneseq
        %v3608 = vshrl.u32 %v3607, 7
        %v3609 = vsub.s32 %v3606, %v3608
        %v3610 = vrot.slane %v3596, %v3609
        %v3611 = vcombine.low %v3587, %v3603
        %v3612 = vcombine.high %v3587, %v3603
        %v3614 = vunpack.c.l.s4 1934713408
        %v3615 = vunpack.c.0.s8 %v3614
        %v3616 = vlaneseq
        %v3617 = vshrl.u32 %v3616, 7
        %v3618 = vsub.s32 %v3615, %v3617
        %v3619 = vrot.slane %v3611, %v3618
        %v3621 = vunpack.c.l.s4 1934713408
        %v3622 = vunpack.c.0.s8 %v3621
        %v3623 = vlaneseq
        %v3624 = vshrl.u32 %v3623, 7
        %v3625 = vsub.s32 %v3622, %v3624
        %v3626 = vrot.slane %v3612, %v3625
        %v3627 = vcombine.low %v3594, %v3610
        %v3628 = vcombine.high %v3594, %v3610
        %v3630 = vunpack.c.l.s4 1934713408
        %v3631 = vunpack.c.0.s8 %v3630
        %v3632 = vlaneseq
        %v3633 = vshrl.u32 %v3632, 7
        %v3634 = vsub.s32 %v3631, %v3633
        %v3635 = vrot.slane %v3627, %v3634
        %v3637 = vunpack.c.l.s4 1934713408
        %v3638 = vunpack.c.0.s8 %v3637
        %v3639 = vlaneseq
        %v3640 = vshrl.u32 %v3639, 7
        %v3641 = vsub.s32 %v3638, %v3640
        %v3642 = vrot.slane %v3628, %v3641
        %v3643 = vcombine.high %v3619, 0.0
        %v3644 = vcombine.high %v3626, 0.0
        %v3645 = vcombine.high %v3635, 0.0
        %v3646 = vcombine.high %v3642, 0.0
        %v3647 = vcombine.low %v3551, %v3558
        %v3649 = vunpack.c.l.s4 1983009808
        %v3650 = vunpack.c.0.s8 %v3649
        %v3651 = vlaneseq
        %v3652 = vshrl.u32 %v3651, 7
        %v3653 = vsub.s32 %v3650, %v3652
        %v3654 = vrot.slane %v3647, %v3653
        %v3655 = vcombine.low %v3575, %v3576
        %v3657 = vunpack.c.l.s4 1983009808
        %v3658 = vunpack.c.0.s8 %v3657
        %v3659 = vlaneseq
        %v3660 = vshrl.u32 %v3659, 7
        %v3661 = vsub.s32 %v3658, %v3660
        %v3662 = vrot.slane %v3655, %v3661
        %v3663 = vcombine.low %v3567, %v3574
        %v3665 = vunpack.c.l.s4 1983009808
        %v3666 = vunpack.c.0.s8 %v3665
        %v3667 = vlaneseq
        %v3668 = vshrl.u32 %v3667, 7
        %v3669 = vsub.s32 %v3666, %v3668
        %v3670 = vrot.slane %v3663, %v3669
        %v3671 = vcombine.low %v3577, %v3578
        %v3673 = vunpack.c.l.s4 1983009808
        %v3674 = vunpack.c.0.s8 %v3673
        %v3675 = vlaneseq
        %v3676 = vshrl.u32 %v3675, 7
        %v3677 = vsub.s32 %v3674, %v3676
        %v3678 = vrot.slane %v3671, %v3677
        %v3679 = vcombine.low %v3654, %v3662
        %v3680 = vcombine.high %v3654, %v3662
        %v3682 = vunpack.c.l.s4 1934713408
        %v3683 = vunpack.c.0.s8 %v3682
        %v3684 = vlaneseq
        %v3685 = vshrl.u32 %v3684, 7
        %v3686 = vsub.s32 %v3683, %v3685
        %v3687 = vrot.slane %v3679, %v3686
        %v3689 = vunpack.c.l.s4 1934713408
        %v3690 = vunpack.c.0.s8 %v3689
        %v3691 = vlaneseq
        %v3692 = vshrl.u32 %v3691, 7
        %v3693 = vsub.s32 %v3690, %v3692
        %v3694 = vrot.slane %v3680, %v3693
        %v3695 = vcombine.low %v3670, %v3678
        %v3696 = vcombine.high %v3670, %v3678
        %v3698 = vunpack.c.l.s4 1934713408
        %v3699 = vunpack.c.0.s8 %v3698
        %v3700 = vlaneseq
        %v3701 = vshrl.u32 %v3700, 7
        %v3702 = vsub.s32 %v3699, %v3701
        %v3703 = vrot.slane %v3695, %v3702
        %v3705 = vunpack.c.l.s4 1934713408
        %v3706 = vunpack.c.0.s8 %v3705
        %v3707 = vlaneseq
        %v3708 = vshrl.u32 %v3707, 7
        %v3709 = vsub.s32 %v3706, %v3708
        %v3710 = vrot.slane %v3696, %v3709
        %v3711 = vcombine.low %v3687, %v3703
        %v3712 = vcombine.high %v3687, %v3703
        %v3713 = vcombine.low %v3694, %v3710
        %v3714 = vcombine.high %v3694, %v3710
        %v3715 = vcombine.low %v3619, %v3626
        %v3717 = vunpack.c.l.s4 1983009808
        %v3718 = vunpack.c.0.s8 %v3717
        %v3719 = vlaneseq
        %v3720 = vshrl.u32 %v3719, 7
        %v3721 = vsub.s32 %v3718, %v3720
        %v3722 = vrot.slane %v3715, %v3721
        %v3723 = vcombine.low %v3643, %v3644
        %v3725 = vunpack.c.l.s4 1983009808
        %v3726 = vunpack.c.0.s8 %v3725
        %v3727 = vlaneseq
        %v3728 = vshrl.u32 %v3727, 7
        %v3729 = vsub.s32 %v3726, %v3728
        %v3730 = vrot.slane %v3723, %v3729
        %v3731 = vcombine.low %v3635, %v3642
        %v3733 = vunpack.c.l.s4 1983009808
        %v3734 = vunpack.c.0.s8 %v3733
        %v3735 = vlaneseq
        %v3736 = vshrl.u32 %v3735, 7
        %v3737 = vsub.s32 %v3734, %v3736
        %v3738 = vrot.slane %v3731, %v3737
        %v3739 = vcombine.low %v3645, %v3646
        %v3741 = vunpack.c.l.s4 1983009808
        %v3742 = vunpack.c.0.s8 %v3741
        %v3743 = vlaneseq
        %v3744 = vshrl.u32 %v3743, 7
        %v3745 = vsub.s32 %v3742, %v3744
        %v3746 = vrot.slane %v3739, %v3745
        %v3747 = vcombine.low %v3722, %v3730
        %v3748 = vcombine.high %v3722, %v3730
        %v3750 = vunpack.c.l.s4 1934713408
        %v3751 = vunpack.c.0.s8 %v3750
        %v3752 = vlaneseq
        %v3753 = vshrl.u32 %v3752, 7
        %v3754 = vsub.s32 %v3751, %v3753
        %v3755 = vrot.slane %v3747, %v3754
        %v3757 = vunpack.c.l.s4 1934713408
        %v3758 = vunpack.c.0.s8 %v3757
        %v3759 = vlaneseq
        %v3760 = vshrl.u32 %v3759, 7
        %v3761 = vsub.s32 %v3758, %v3760
        %v3762 = vrot.slane %v3748, %v3761
        %v3763 = vcombine.low %v3738, %v3746
        %v3764 = vcombine.high %v3738, %v3746
        %v3766 = vunpack.c.l.s4 1934713408
        %v3767 = vunpack.c.0.s8 %v3766
        %v3768 = vlaneseq
        %v3769 = vshrl.u32 %v3768, 7
        %v3770 = vsub.s32 %v3767, %v3769
        %v3771 = vrot.slane %v3763, %v3770
        %v3773 = vunpack.c.l.s4 1934713408
        %v3774 = vunpack.c.0.s8 %v3773
        %v3775 = vlaneseq
        %v3776 = vshrl.u32 %v3775, 7
        %v3777 = vsub.s32 %v3774, %v3776
        %v3778 = vrot.slane %v3764, %v3777
        %v3779 = vcombine.low %v3755, %v3771
        %v3780 = vcombine.high %v3755, %v3771
        %v3781 = vcombine.low %v3762, %v3778
        %v3782 = vcombine.high %v3762, %v3778
        %v3783 = vpack.c.bf16 %v3779, %v3711
        %v3784 = vpack.c.bf16 %v3780, %v3712
        %v3785 = vpack.c.bf16 %v3781, %v3713
        %v3786 = vpack.c.bf16 %v3782, %v3714
        %3789 = vrot.lane.b32.xlu0 %v3076, 96
        %v3790 = vpop.permute.xlu0 %3789
        %3791 = vrot.lane.b32.xlu0 %v3080, 96
        %v3792 = vpop.permute.xlu0 %3791
        %3795 = vrot.lane.b32.xlu0 %v3076, 64
        %v3796 = vpop.permute.xlu0 %3795
        %3797 = vrot.lane.b32.xlu0 %v3080, 64
        %v3798 = vpop.permute.xlu0 %3797
        %3801 = vrot.lane.b32.xlu0 %v3076, 32
        %v3802 = vpop.permute.xlu0 %3801
        %3803 = vrot.lane.b32.xlu0 %v3080, 32
        %v3804 = vpop.permute.xlu0 %3803
        %v3807 = vcombine.low %v3076, %v3796
        %v3808 = vcombine.high %v3076, %v3796
        %v3810 = vunpack.c.l.s4 1983009808
        %v3811 = vunpack.c.0.s8 %v3810
        %v3812 = vlaneseq
        %v3813 = vshrl.u32 %v3812, 7
        %v3814 = vsub.s32 %v3811, %v3813
        %v3815 = vrot.slane %v3807, %v3814
        %v3817 = vunpack.c.l.s4 1983009808
        %v3818 = vunpack.c.0.s8 %v3817
        %v3819 = vlaneseq
        %v3820 = vshrl.u32 %v3819, 7
        %v3821 = vsub.s32 %v3818, %v3820
        %v3822 = vrot.slane %v3808, %v3821
        %v3823 = vcombine.low %v3790, %v3802
        %v3824 = vcombine.high %v3790, %v3802
        %v3826 = vunpack.c.l.s4 1983009808
        %v3827 = vunpack.c.0.s8 %v3826
        %v3828 = vlaneseq
        %v3829 = vshrl.u32 %v3828, 7
        %v3830 = vsub.s32 %v3827, %v3829
        %v3831 = vrot.slane %v3823, %v3830
        %v3833 = vunpack.c.l.s4 1983009808
        %v3834 = vunpack.c.0.s8 %v3833
        %v3835 = vlaneseq
        %v3836 = vshrl.u32 %v3835, 7
        %v3837 = vsub.s32 %v3834, %v3836
        %v3838 = vrot.slane %v3824, %v3837
        %v3839 = vcombine.low %v3815, %v3831
        %v3840 = vcombine.high %v3815, %v3831
        %v3842 = vunpack.c.l.s4 1934713408
        %v3843 = vunpack.c.0.s8 %v3842
        %v3844 = vlaneseq
        %v3845 = vshrl.u32 %v3844, 7
        %v3846 = vsub.s32 %v3843, %v3845
        %v3847 = vrot.slane %v3839, %v3846
        %v3849 = vunpack.c.l.s4 1934713408
        %v3850 = vunpack.c.0.s8 %v3849
        %v3851 = vlaneseq
        %v3852 = vshrl.u32 %v3851, 7
        %v3853 = vsub.s32 %v3850, %v3852
        %v3854 = vrot.slane %v3840, %v3853
        %v3855 = vcombine.low %v3822, %v3838
        %v3856 = vcombine.high %v3822, %v3838
        %v3858 = vunpack.c.l.s4 1934713408
        %v3859 = vunpack.c.0.s8 %v3858
        %v3860 = vlaneseq
        %v3861 = vshrl.u32 %v3860, 7
        %v3862 = vsub.s32 %v3859, %v3861
        %v3863 = vrot.slane %v3855, %v3862
        %v3865 = vunpack.c.l.s4 1934713408
        %v3866 = vunpack.c.0.s8 %v3865
        %v3867 = vlaneseq
        %v3868 = vshrl.u32 %v3867, 7
        %v3869 = vsub.s32 %v3866, %v3868
        %v3870 = vrot.slane %v3856, %v3869
        %v3871 = vcombine.high %v3847, 0.0
        %v3872 = vcombine.high %v3854, 0.0
        %v3873 = vcombine.high %v3863, 0.0
        %v3874 = vcombine.high %v3870, 0.0
        %v3875 = vcombine.low %v3080, %v3798
        %v3876 = vcombine.high %v3080, %v3798
        %v3878 = vunpack.c.l.s4 1983009808
        %v3879 = vunpack.c.0.s8 %v3878
        %v3880 = vlaneseq
        %v3881 = vshrl.u32 %v3880, 7
        %v3882 = vsub.s32 %v3879, %v3881
        %v3883 = vrot.slane %v3875, %v3882
        %v3885 = vunpack.c.l.s4 1983009808
        %v3886 = vunpack.c.0.s8 %v3885
        %v3887 = vlaneseq
        %v3888 = vshrl.u32 %v3887, 7
        %v3889 = vsub.s32 %v3886, %v3888
        %v3890 = vrot.slane %v3876, %v3889
        %v3891 = vcombine.low %v3792, %v3804
        %v3892 = vcombine.high %v3792, %v3804
        %v3894 = vunpack.c.l.s4 1983009808
        %v3895 = vunpack.c.0.s8 %v3894
        %v3896 = vlaneseq
        %v3897 = vshrl.u32 %v3896, 7
        %v3898 = vsub.s32 %v3895, %v3897
        %v3899 = vrot.slane %v3891, %v3898
        %v3901 = vunpack.c.l.s4 1983009808
        %v3902 = vunpack.c.0.s8 %v3901
        %v3903 = vlaneseq
        %v3904 = vshrl.u32 %v3903, 7
        %v3905 = vsub.s32 %v3902, %v3904
        %v3906 = vrot.slane %v3892, %v3905
        %v3907 = vcombine.low %v3883, %v3899
        %v3908 = vcombine.high %v3883, %v3899
        %v3910 = vunpack.c.l.s4 1934713408
        %v3911 = vunpack.c.0.s8 %v3910
        %v3912 = vlaneseq
        %v3913 = vshrl.u32 %v3912, 7
        %v3914 = vsub.s32 %v3911, %v3913
        %v3915 = vrot.slane %v3907, %v3914
        %v3917 = vunpack.c.l.s4 1934713408
        %v3918 = vunpack.c.0.s8 %v3917
        %v3919 = vlaneseq
        %v3920 = vshrl.u32 %v3919, 7
        %v3921 = vsub.s32 %v3918, %v3920
        %v3922 = vrot.slane %v3908, %v3921
        %v3923 = vcombine.low %v3890, %v3906
        %v3924 = vcombine.high %v3890, %v3906
        %v3926 = vunpack.c.l.s4 1934713408
        %v3927 = vunpack.c.0.s8 %v3926
        %v3928 = vlaneseq
        %v3929 = vshrl.u32 %v3928, 7
        %v3930 = vsub.s32 %v3927, %v3929
        %v3931 = vrot.slane %v3923, %v3930
        %v3933 = vunpack.c.l.s4 1934713408
        %v3934 = vunpack.c.0.s8 %v3933
        %v3935 = vlaneseq
        %v3936 = vshrl.u32 %v3935, 7
        %v3937 = vsub.s32 %v3934, %v3936
        %v3938 = vrot.slane %v3924, %v3937
        %v3939 = vcombine.high %v3915, 0.0
        %v3940 = vcombine.high %v3922, 0.0
        %v3941 = vcombine.high %v3931, 0.0
        %v3942 = vcombine.high %v3938, 0.0
        %v3943 = vcombine.low %v3847, %v3854
        %v3945 = vunpack.c.l.s4 1983009808
        %v3946 = vunpack.c.0.s8 %v3945
        %v3947 = vlaneseq
        %v3948 = vshrl.u32 %v3947, 7
        %v3949 = vsub.s32 %v3946, %v3948
        %v3950 = vrot.slane %v3943, %v3949
        %v3951 = vcombine.low %v3871, %v3872
        %v3953 = vunpack.c.l.s4 1983009808
        %v3954 = vunpack.c.0.s8 %v3953
        %v3955 = vlaneseq
        %v3956 = vshrl.u32 %v3955, 7
        %v3957 = vsub.s32 %v3954, %v3956
        %v3958 = vrot.slane %v3951, %v3957
        %v3959 = vcombine.low %v3863, %v3870
        %v3961 = vunpack.c.l.s4 1983009808
        %v3962 = vunpack.c.0.s8 %v3961
        %v3963 = vlaneseq
        %v3964 = vshrl.u32 %v3963, 7
        %v3965 = vsub.s32 %v3962, %v3964
        %v3966 = vrot.slane %v3959, %v3965
        %v3967 = vcombine.low %v3873, %v3874
        %v3969 = vunpack.c.l.s4 1983009808
        %v3970 = vunpack.c.0.s8 %v3969
        %v3971 = vlaneseq
        %v3972 = vshrl.u32 %v3971, 7
        %v3973 = vsub.s32 %v3970, %v3972
        %v3974 = vrot.slane %v3967, %v3973
        %v3975 = vcombine.low %v3950, %v3958
        %v3976 = vcombine.high %v3950, %v3958
        %v3978 = vunpack.c.l.s4 1934713408
        %v3979 = vunpack.c.0.s8 %v3978
        %v3980 = vlaneseq
        %v3981 = vshrl.u32 %v3980, 7
        %v3982 = vsub.s32 %v3979, %v3981
        %v3983 = vrot.slane %v3975, %v3982
        %v3985 = vunpack.c.l.s4 1934713408
        %v3986 = vunpack.c.0.s8 %v3985
        %v3987 = vlaneseq
        %v3988 = vshrl.u32 %v3987, 7
        %v3989 = vsub.s32 %v3986, %v3988
        %v3990 = vrot.slane %v3976, %v3989
        %v3991 = vcombine.low %v3966, %v3974
        %v3992 = vcombine.high %v3966, %v3974
        %v3994 = vunpack.c.l.s4 1934713408
        %v3995 = vunpack.c.0.s8 %v3994
        %v3996 = vlaneseq
        %v3997 = vshrl.u32 %v3996, 7
        %v3998 = vsub.s32 %v3995, %v3997
        %v3999 = vrot.slane %v3991, %v3998
        %v4001 = vunpack.c.l.s4 1934713408
        %v4002 = vunpack.c.0.s8 %v4001
        %v4003 = vlaneseq
        %v4004 = vshrl.u32 %v4003, 7
        %v4005 = vsub.s32 %v4002, %v4004
        %v4006 = vrot.slane %v3992, %v4005
        %v4007 = vcombine.low %v3983, %v3999
        %v4008 = vcombine.high %v3983, %v3999
        %v4009 = vcombine.low %v3990, %v4006
        %v4010 = vcombine.high %v3990, %v4006
        %v4011 = vcombine.low %v3915, %v3922
        %v4013 = vunpack.c.l.s4 1983009808
        %v4014 = vunpack.c.0.s8 %v4013
        %v4015 = vlaneseq
        %v4016 = vshrl.u32 %v4015, 7
        %v4017 = vsub.s32 %v4014, %v4016
        %v4018 = vrot.slane %v4011, %v4017
        %v4019 = vcombine.low %v3939, %v3940
        %v4021 = vunpack.c.l.s4 1983009808
        %v4022 = vunpack.c.0.s8 %v4021
        %v4023 = vlaneseq
        %v4024 = vshrl.u32 %v4023, 7
        %v4025 = vsub.s32 %v4022, %v4024
        %v4026 = vrot.slane %v4019, %v4025
        %v4027 = vcombine.low %v3931, %v3938
        %v4029 = vunpack.c.l.s4 1983009808
        %v4030 = vunpack.c.0.s8 %v4029
        %v4031 = vlaneseq
        %v4032 = vshrl.u32 %v4031, 7
        %v4033 = vsub.s32 %v4030, %v4032
        %v4034 = vrot.slane %v4027, %v4033
        %v4035 = vcombine.low %v3941, %v3942
        %v4037 = vunpack.c.l.s4 1983009808
        %v4038 = vunpack.c.0.s8 %v4037
        %v4039 = vlaneseq
        %v4040 = vshrl.u32 %v4039, 7
        %v4041 = vsub.s32 %v4038, %v4040
        %v4042 = vrot.slane %v4035, %v4041
        %v4043 = vcombine.low %v4018, %v4026
        %v4044 = vcombine.high %v4018, %v4026
        %v4046 = vunpack.c.l.s4 1934713408
        %v4047 = vunpack.c.0.s8 %v4046
        %v4048 = vlaneseq
        %v4049 = vshrl.u32 %v4048, 7
        %v4050 = vsub.s32 %v4047, %v4049
        %v4051 = vrot.slane %v4043, %v4050
        %v4053 = vunpack.c.l.s4 1934713408
        %v4054 = vunpack.c.0.s8 %v4053
        %v4055 = vlaneseq
        %v4056 = vshrl.u32 %v4055, 7
        %v4057 = vsub.s32 %v4054, %v4056
        %v4058 = vrot.slane %v4044, %v4057
        %v4059 = vcombine.low %v4034, %v4042
        %v4060 = vcombine.high %v4034, %v4042
        %v4062 = vunpack.c.l.s4 1934713408
        %v4063 = vunpack.c.0.s8 %v4062
        %v4064 = vlaneseq
        %v4065 = vshrl.u32 %v4064, 7
        %v4066 = vsub.s32 %v4063, %v4065
        %v4067 = vrot.slane %v4059, %v4066
        %v4069 = vunpack.c.l.s4 1934713408
        %v4070 = vunpack.c.0.s8 %v4069
        %v4071 = vlaneseq
        %v4072 = vshrl.u32 %v4071, 7
        %v4073 = vsub.s32 %v4070, %v4072
        %v4074 = vrot.slane %v4060, %v4073
        %v4075 = vcombine.low %v4051, %v4067
        %v4076 = vcombine.high %v4051, %v4067
        %v4077 = vcombine.low %v4058, %v4074
        %v4078 = vcombine.high %v4058, %v4074
        %v4079 = vpack.c.bf16 %v4075, %v4007
        %v4080 = vpack.c.bf16 %v4076, %v4008
        %v4081 = vpack.c.bf16 %v4077, %v4009
        %v4082 = vpack.c.bf16 %v4078, %v4010
        %v4084 = vsel %vm1998, %v3487, 0
        %v4087 = vsel %vm1998, %v3783, 0
        %4089 = vmatprep.subr.bf16.mxu0 0
        %4090 = vmatpush1.bf16.xpose.msra.mxu0 %v4087
        %4091 = vmatprep.subr.bf16.mxu0 0
        %4092 = vmatpush1.bf16.xpose.msra.mxu0 0
        %4093 = vmatprep.subr.bf16.mxu0 0
        %4094 = vmatpush1.bf16.xpose.msra.mxu0 0
        %4095 = vmatprep.subr.bf16.mxu0 0
        %4096 = vmatpush1.bf16.xpose.msra.mxu0 0
        %4097 = vmatprep.subr.bf16.mxu0 0
        %4098 = vmatpush1.bf16.xpose.msra.mxu0 0
        %4099 = vmatprep.subr.bf16.mxu0 0
        %4100 = vmatpush1.bf16.xpose.msra.mxu0 0
        %4101 = vmatprep.subr.bf16.mxu0 0
        %4102 = vmatpush1.bf16.xpose.msra.mxu0 0
        %4103 = vmatprep.subr.bf16.mxu0 0
        %4104 = vmatpush1.bf16.xpose.msra.mxu0 0
        %4105 = vmatprep.subr.bf16.mxu0 0
        %4106 = vmatpush1.bf16.xpose.msra.mxu0 0
        %4107 = vmatprep.subr.bf16.mxu0 0
        %4108 = vmatpush1.bf16.xpose.msra.mxu0 0
        %4109 = vmatprep.subr.bf16.mxu0 0
        %4110 = vmatpush1.bf16.xpose.msra.mxu0 0
        %4111 = vmatprep.subr.bf16.mxu0 0
        %4112 = vmatpush1.bf16.xpose.msra.mxu0 0
        %4113 = vmatprep.subr.bf16.mxu0 0
        %4114 = vmatpush1.bf16.xpose.msra.mxu0 0
        %4115 = vmatprep.subr.bf16.mxu0 0
        %4116 = vmatpush1.bf16.xpose.msra.mxu0 0
        %4117 = vmatprep.subr.bf16.mxu0 0
        %4118 = vmatpush1.bf16.xpose.msra.mxu0 0
        %4119 = vmatprep.subr.bf16.mxu0 0
        %4120 = vmatpush1.bf16.xpose.msra.mxu0 0
        %4121 = vmatprep.mubr.bf16.mxu0 0
        %4122 = vmatmul.mubr.bf16.gmra.mrb[0].mxu0 %v4084
        %v4123 = vpop.f32.mrb[0].mxu0
        %v4124 = vadd.f32 0.0, %v4123
        %v4125 = vpop.f32.mrb[0].mxu0
        %v4126 = vpop.f32.mrb[0].mxu0
        %v4127 = vadd.f32 0.0, %v4126
        %v4128 = vpop.f32.mrb[0].mxu0
        %4129 = vdwg.mxu0
        %v4131 = vsel %vm1998, %v3488, 0
        %v4134 = vsel %vm1998, %v3784, 0
        %4136 = vmatprep.subr.bf16.mxu0 0
        %4137 = vmatpush1.bf16.xpose.msra.mxu0 %v4134
        %4138 = vmatprep.subr.bf16.mxu0 0
        %4139 = vmatpush1.bf16.xpose.msra.mxu0 0
        %4140 = vmatprep.subr.bf16.mxu0 0
        %4141 = vmatpush1.bf16.xpose.msra.mxu0 0
        %4142 = vmatprep.subr.bf16.mxu0 0
        %4143 = vmatpush1.bf16.xpose.msra.mxu0 0
        %4144 = vmatprep.subr.bf16.mxu0 0
        %4145 = vmatpush1.bf16.xpose.msra.mxu0 0
        %4146 = vmatprep.subr.bf16.mxu0 0
        %4147 = vmatpush1.bf16.xpose.msra.mxu0 0
        %4148 = vmatprep.subr.bf16.mxu0 0
        %4149 = vmatpush1.bf16.xpose.msra.mxu0 0
        %4150 = vmatprep.subr.bf16.mxu0 0
        %4151 = vmatpush1.bf16.xpose.msra.mxu0 0
        %4152 = vmatprep.subr.bf16.mxu0 0
        %4153 = vmatpush1.bf16.xpose.msra.mxu0 0
        %4154 = vmatprep.subr.bf16.mxu0 0
        %4155 = vmatpush1.bf16.xpose.msra.mxu0 0
        %4156 = vmatprep.subr.bf16.mxu0 0
        %4157 = vmatpush1.bf16.xpose.msra.mxu0 0
        %4158 = vmatprep.subr.bf16.mxu0 0
        %4159 = vmatpush1.bf16.xpose.msra.mxu0 0
        %4160 = vmatprep.subr.bf16.mxu0 0
        %4161 = vmatpush1.bf16.xpose.msra.mxu0 0
        %4162 = vmatprep.subr.bf16.mxu0 0
        %4163 = vmatpush1.bf16.xpose.msra.mxu0 0
        %4164 = vmatprep.subr.bf16.mxu0 0
        %4165 = vmatpush1.bf16.xpose.msra.mxu0 0
        %4166 = vmatprep.subr.bf16.mxu0 0
        %4167 = vmatpush1.bf16.xpose.msra.mxu0 0
        %4168 = vmatprep.mubr.bf16.mxu0 0
        %4169 = vmatmul.mubr.bf16.gmra.mrb[0].mxu0 %v4131
        %v4170 = vpop.f32.mrb[0].mxu0
        %v4171 = vadd.f32 0.0, %v4170
        %v4172 = vpop.f32.mrb[0].mxu0
        %v4173 = vpop.f32.mrb[0].mxu0
        %v4174 = vadd.f32 0.0, %v4173
        %v4175 = vpop.f32.mrb[0].mxu0
        %4176 = vdwg.mxu0
        %v4178 = vsel %vm1998, %v3489, 0
        %v4181 = vsel %vm1998, %v3785, 0
        %4183 = vmatprep.subr.bf16.mxu0 0
        %4184 = vmatpush1.bf16.xpose.msra.mxu0 %v4181
        %4185 = vmatprep.subr.bf16.mxu0 0
        %4186 = vmatpush1.bf16.xpose.msra.mxu0 0
        %4187 = vmatprep.subr.bf16.mxu0 0
        %4188 = vmatpush1.bf16.xpose.msra.mxu0 0
        %4189 = vmatprep.subr.bf16.mxu0 0
        %4190 = vmatpush1.bf16.xpose.msra.mxu0 0
        %4191 = vmatprep.subr.bf16.mxu0 0
        %4192 = vmatpush1.bf16.xpose.msra.mxu0 0
        %4193 = vmatprep.subr.bf16.mxu0 0
        %4194 = vmatpush1.bf16.xpose.msra.mxu0 0
        %4195 = vmatprep.subr.bf16.mxu0 0
        %4196 = vmatpush1.bf16.xpose.msra.mxu0 0
        %4197 = vmatprep.subr.bf16.mxu0 0
        %4198 = vmatpush1.bf16.xpose.msra.mxu0 0
        %4199 = vmatprep.subr.bf16.mxu0 0
        %4200 = vmatpush1.bf16.xpose.msra.mxu0 0
        %4201 = vmatprep.subr.bf16.mxu0 0
        %4202 = vmatpush1.bf16.xpose.msra.mxu0 0
        %4203 = vmatprep.subr.bf16.mxu0 0
        %4204 = vmatpush1.bf16.xpose.msra.mxu0 0
        %4205 = vmatprep.subr.bf16.mxu0 0
        %4206 = vmatpush1.bf16.xpose.msra.mxu0 0
        %4207 = vmatprep.subr.bf16.mxu0 0
        %4208 = vmatpush1.bf16.xpose.msra.mxu0 0
        %4209 = vmatprep.subr.bf16.mxu0 0
        %4210 = vmatpush1.bf16.xpose.msra.mxu0 0
        %4211 = vmatprep.subr.bf16.mxu0 0
        %4212 = vmatpush1.bf16.xpose.msra.mxu0 0
        %4213 = vmatprep.subr.bf16.mxu0 0
        %4214 = vmatpush1.bf16.xpose.msra.mxu0 0
        %4215 = vmatprep.mubr.bf16.mxu0 0
        %4216 = vmatmul.mubr.bf16.gmra.mrb[0].mxu0 %v4178
        %v4217 = vpop.f32.mrb[0].mxu0
        %v4218 = vadd.f32 0.0, %v4217
        %v4219 = vpop.f32.mrb[0].mxu0
        %v4220 = vpop.f32.mrb[0].mxu0
        %v4221 = vadd.f32 0.0, %v4220
        %v4222 = vpop.f32.mrb[0].mxu0
        %4223 = vdwg.mxu0
        %v4225 = vsel %vm1998, %v3490, 0
        %v4228 = vsel %vm1998, %v3786, 0
        %4230 = vmatprep.subr.bf16.mxu0 0
        %4231 = vmatpush1.bf16.xpose.msra.mxu0 %v4228
        %4232 = vmatprep.subr.bf16.mxu0 0
        %4233 = vmatpush1.bf16.xpose.msra.mxu0 0
        %4234 = vmatprep.subr.bf16.mxu0 0
        %4235 = vmatpush1.bf16.xpose.msra.mxu0 0
        %4236 = vmatprep.subr.bf16.mxu0 0
        %4237 = vmatpush1.bf16.xpose.msra.mxu0 0
        %4238 = vmatprep.subr.bf16.mxu0 0
        %4239 = vmatpush1.bf16.xpose.msra.mxu0 0
        %4240 = vmatprep.subr.bf16.mxu0 0
        %4241 = vmatpush1.bf16.xpose.msra.mxu0 0
        %4242 = vmatprep.subr.bf16.mxu0 0
        %4243 = vmatpush1.bf16.xpose.msra.mxu0 0
        %4244 = vmatprep.subr.bf16.mxu0 0
        %4245 = vmatpush1.bf16.xpose.msra.mxu0 0
        %4246 = vmatprep.subr.bf16.mxu0 0
        %4247 = vmatpush1.bf16.xpose.msra.mxu0 0
        %4248 = vmatprep.subr.bf16.mxu0 0
        %4249 = vmatpush1.bf16.xpose.msra.mxu0 0
        %4250 = vmatprep.subr.bf16.mxu0 0
        %4251 = vmatpush1.bf16.xpose.msra.mxu0 0
        %4252 = vmatprep.subr.bf16.mxu0 0
        %4253 = vmatpush1.bf16.xpose.msra.mxu0 0
        %4254 = vmatprep.subr.bf16.mxu0 0
        %4255 = vmatpush1.bf16.xpose.msra.mxu0 0
        %4256 = vmatprep.subr.bf16.mxu0 0
        %4257 = vmatpush1.bf16.xpose.msra.mxu0 0
        %4258 = vmatprep.subr.bf16.mxu0 0
        %4259 = vmatpush1.bf16.xpose.msra.mxu0 0
        %4260 = vmatprep.subr.bf16.mxu0 0
        %4261 = vmatpush1.bf16.xpose.msra.mxu0 0
        %4262 = vmatprep.mubr.bf16.mxu0 0
        %4263 = vmatmul.mubr.bf16.gmra.mrb[0].mxu0 %v4225
        %v4264 = vpop.f32.mrb[0].mxu0
        %v4265 = vadd.f32 0.0, %v4264
        %v4266 = vpop.f32.mrb[0].mxu0
        %v4267 = vpop.f32.mrb[0].mxu0
        %v4268 = vadd.f32 0.0, %v4267
        %v4269 = vpop.f32.mrb[0].mxu0
        %4270 = vdwg.mxu0
        %v4271 = vsel %vm2187, %v4124, -inf
        %4272 = vmax.xlane.f32.xlu0 %v4271
        %v4273 = vpop.xlane.xlu0 %4272
        %v4274 = vsel %vm2187, %v4127, -inf
        %4275 = vmax.xlane.f32.xlu0 %v4274
        %v4276 = vpop.xlane.xlu0 %4275
        %v4277 = vsel %vm2187, %v4171, -inf
        %4278 = vmax.xlane.f32.xlu0 %v4277
        %v4279 = vpop.xlane.xlu0 %4278
        %v4280 = vsel %vm2187, %v4174, -inf
        %4281 = vmax.xlane.f32.xlu0 %v4280
        %v4282 = vpop.xlane.xlu0 %4281
        %v4283 = vsel %vm2187, %v4218, -inf
        %4284 = vmax.xlane.f32.xlu0 %v4283
        %v4285 = vpop.xlane.xlu0 %4284
        %v4286 = vsel %vm2187, %v4221, -inf
        %4287 = vmax.xlane.f32.xlu0 %v4286
        %v4288 = vpop.xlane.xlu0 %4287
        %v4289 = vsel %vm2187, %v4265, -inf
        %4290 = vmax.xlane.f32.xlu0 %v4289
        %v4291 = vpop.xlane.xlu0 %4290
        %v4292 = vsel %vm2187, %v4268, -inf
        %4293 = vmax.xlane.f32.xlu0 %v4292
        %v4294 = vpop.xlane.xlu0 %4293
        %v4295 = vsub.f32 %v4124, %v4273
        %v4296 = vsub.f32 %v4127, %v4276
        %v4297 = vsub.f32 %v4171, %v4279
        %v4298 = vsub.f32 %v4174, %v4282
        %v4299 = vsub.f32 %v4218, %v4285
        %v4300 = vsub.f32 %v4221, %v4288
        %v4301 = vsub.f32 %v4265, %v4291
        %v4302 = vsub.f32 %v4268, %v4294
        %v4303 = vmul.f32 %v4295, 1.442695
        %v4304 = vpow.pop %v4303
        %v4305 = vmul.f32 %v4296, 1.442695
        %v4306 = vpow.pop %v4305
        %v4307 = vmul.f32 %v4297, 1.442695
        %v4308 = vpow.pop %v4307
        %v4309 = vmul.f32 %v4298, 1.442695
        %v4310 = vpow.pop %v4309
        %v4311 = vmul.f32 %v4299, 1.442695
        %v4312 = vpow.pop %v4311
        %v4313 = vmul.f32 %v4300, 1.442695
        %v4314 = vpow.pop %v4313
        %v4315 = vmul.f32 %v4301, 1.442695
        %v4316 = vpow.pop %v4315
        %v4317 = vmul.f32 %v4302, 1.442695
        %v4318 = vpow.pop %v4317
        %v4319 = vsel %vm2187, %v4304, 0.0
        %4320 = vadd.xlane.f32.xlu0 %v4319
        %v4321 = vpop.xlane.xlu0 %4320
        %v4322 = vsel %vm2187, %v4306, 0.0
        %4323 = vadd.xlane.f32.xlu0 %v4322
        %v4324 = vpop.xlane.xlu0 %4323
        %v4325 = vsel %vm2187, %v4308, 0.0
        %4326 = vadd.xlane.f32.xlu0 %v4325
        %v4327 = vpop.xlane.xlu0 %4326
        %v4328 = vsel %vm2187, %v4310, 0.0
        %4329 = vadd.xlane.f32.xlu0 %v4328
        %v4330 = vpop.xlane.xlu0 %4329
        %v4331 = vsel %vm2187, %v4312, 0.0
        %4332 = vadd.xlane.f32.xlu0 %v4331
        %v4333 = vpop.xlane.xlu0 %4332
        %v4334 = vsel %vm2187, %v4314, 0.0
        %4335 = vadd.xlane.f32.xlu0 %v4334
        %v4336 = vpop.xlane.xlu0 %4335
        %v4337 = vsel %vm2187, %v4316, 0.0
        %4338 = vadd.xlane.f32.xlu0 %v4337
        %v4339 = vpop.xlane.xlu0 %4338
        %v4340 = vsel %vm2187, %v4318, 0.0
        %4341 = vadd.xlane.f32.xlu0 %v4340
        %v4342 = vpop.xlane.xlu0 %4341
        %v4343 = vrcp.pop %v4321
        %v4344 = vrcp.pop %v4324
        %v4345 = vrcp.pop %v4327
        %v4346 = vrcp.pop %v4330
        %v4347 = vrcp.pop %v4333
        %v4348 = vrcp.pop %v4336
        %v4349 = vrcp.pop %v4339
        %v4350 = vrcp.pop %v4342
        %v4351 = vmul.f32 %v4304, %v4343
        %v4352 = vmul.f32 %v4306, %v4344
        %v4353 = vmul.f32 %v4308, %v4345
        %v4354 = vmul.f32 %v4310, %v4346
        %v4355 = vmul.f32 %v4312, %v4347
        %v4356 = vmul.f32 %v4314, %v4348
        %v4357 = vmul.f32 %v4316, %v4349
        %v4358 = vmul.f32 %v4318, %v4350
        %v4359 = vpack.c.bf16 %v4352, %v4351
        %v4360 = vpack.c.bf16 %v4354, %v4353
        %v4361 = vpack.c.bf16 %v4356, %v4355
        %v4362 = vpack.c.bf16 %v4358, %v4357
        %v4364 = vsel %vm2187, %v4359, 0
        %4366 = vmatprep.subr.bf16.mxu0 0
        %4367 = vmatpush1.bf16.msra.mxu0 %v4079
        %4368 = vmatprep.subr.bf16.mxu0 0
        %4369 = vmatpush1.bf16.msra.mxu0 0
        %4370 = vmatprep.subr.bf16.mxu0 0
        %4371 = vmatpush1.bf16.msra.mxu0 0
        %4372 = vmatprep.subr.bf16.mxu0 0
        %4373 = vmatpush1.bf16.msra.mxu0 0
        %4374 = vmatprep.subr.bf16.mxu0 0
        %4375 = vmatpush1.bf16.msra.mxu0 0
        %4376 = vmatprep.subr.bf16.mxu0 0
        %4377 = vmatpush1.bf16.msra.mxu0 0
        %4378 = vmatprep.subr.bf16.mxu0 0
        %4379 = vmatpush1.bf16.msra.mxu0 0
        %4380 = vmatprep.subr.bf16.mxu0 0
        %4381 = vmatpush1.bf16.msra.mxu0 0
        %4382 = vmatprep.subr.bf16.mxu0 0
        %4383 = vmatpush1.bf16.msra.mxu0 0
        %4384 = vmatprep.subr.bf16.mxu0 0
        %4385 = vmatpush1.bf16.msra.mxu0 0
        %4386 = vmatprep.subr.bf16.mxu0 0
        %4387 = vmatpush1.bf16.msra.mxu0 0
        %4388 = vmatprep.subr.bf16.mxu0 0
        %4389 = vmatpush1.bf16.msra.mxu0 0
        %4390 = vmatprep.subr.bf16.mxu0 0
        %4391 = vmatpush1.bf16.msra.mxu0 0
        %4392 = vmatprep.subr.bf16.mxu0 0
        %4393 = vmatpush1.bf16.msra.mxu0 0
        %4394 = vmatprep.subr.bf16.mxu0 0
        %4395 = vmatpush1.bf16.msra.mxu0 0
        %4396 = vmatprep.subr.bf16.mxu0 0
        %4397 = vmatpush1.bf16.msra.mxu0 0
        %4398 = vmatprep.mubr.bf16.mxu0 0
        %4399 = vmatmul.mubr.bf16.gmra.mrb[0].mxu0 %v4364
        %v4400 = vpop.f32.mrb[0].mxu0
        %v4401 = vadd.f32 0.0, %v4400
        %v4402 = vpop.f32.mrb[0].mxu0
        %v4403 = vpop.f32.mrb[0].mxu0
        %v4404 = vadd.f32 0.0, %v4403
        %v4405 = vpop.f32.mrb[0].mxu0
        %4406 = vdwg.mxu0
        %v4408 = vsel %vm2187, %v4360, 0
        %4410 = vmatprep.subr.bf16.mxu0 0
        %4411 = vmatpush1.bf16.msra.mxu0 %v4080
        %4412 = vmatprep.subr.bf16.mxu0 0
        %4413 = vmatpush1.bf16.msra.mxu0 0
        %4414 = vmatprep.subr.bf16.mxu0 0
        %4415 = vmatpush1.bf16.msra.mxu0 0
        %4416 = vmatprep.subr.bf16.mxu0 0
        %4417 = vmatpush1.bf16.msra.mxu0 0
        %4418 = vmatprep.subr.bf16.mxu0 0
        %4419 = vmatpush1.bf16.msra.mxu0 0
        %4420 = vmatprep.subr.bf16.mxu0 0
        %4421 = vmatpush1.bf16.msra.mxu0 0
        %4422 = vmatprep.subr.bf16.mxu0 0
        %4423 = vmatpush1.bf16.msra.mxu0 0
        %4424 = vmatprep.subr.bf16.mxu0 0
        %4425 = vmatpush1.bf16.msra.mxu0 0
        %4426 = vmatprep.subr.bf16.mxu0 0
        %4427 = vmatpush1.bf16.msra.mxu0 0
        %4428 = vmatprep.subr.bf16.mxu0 0
        %4429 = vmatpush1.bf16.msra.mxu0 0
        %4430 = vmatprep.subr.bf16.mxu0 0
        %4431 = vmatpush1.bf16.msra.mxu0 0
        %4432 = vmatprep.subr.bf16.mxu0 0
        %4433 = vmatpush1.bf16.msra.mxu0 0
        %4434 = vmatprep.subr.bf16.mxu0 0
        %4435 = vmatpush1.bf16.msra.mxu0 0
        %4436 = vmatprep.subr.bf16.mxu0 0
        %4437 = vmatpush1.bf16.msra.mxu0 0
        %4438 = vmatprep.subr.bf16.mxu0 0
        %4439 = vmatpush1.bf16.msra.mxu0 0
        %4440 = vmatprep.subr.bf16.mxu0 0
        %4441 = vmatpush1.bf16.msra.mxu0 0
        %4442 = vmatprep.mubr.bf16.mxu0 0
        %4443 = vmatmul.mubr.bf16.gmra.mrb[0].mxu0 %v4408
        %v4444 = vpop.f32.mrb[0].mxu0
        %v4445 = vadd.f32 0.0, %v4444
        %v4446 = vpop.f32.mrb[0].mxu0
        %v4447 = vpop.f32.mrb[0].mxu0
        %v4448 = vadd.f32 0.0, %v4447
        %v4449 = vpop.f32.mrb[0].mxu0
        %4450 = vdwg.mxu0
        %v4452 = vsel %vm2187, %v4361, 0
        %4454 = vmatprep.subr.bf16.mxu0 0
        %4455 = vmatpush1.bf16.msra.mxu0 %v4081
        %4456 = vmatprep.subr.bf16.mxu0 0
        %4457 = vmatpush1.bf16.msra.mxu0 0
        %4458 = vmatprep.subr.bf16.mxu0 0
        %4459 = vmatpush1.bf16.msra.mxu0 0
        %4460 = vmatprep.subr.bf16.mxu0 0
        %4461 = vmatpush1.bf16.msra.mxu0 0
        %4462 = vmatprep.subr.bf16.mxu0 0
        %4463 = vmatpush1.bf16.msra.mxu0 0
        %4464 = vmatprep.subr.bf16.mxu0 0
        %4465 = vmatpush1.bf16.msra.mxu0 0
        %4466 = vmatprep.subr.bf16.mxu0 0
        %4467 = vmatpush1.bf16.msra.mxu0 0
        %4468 = vmatprep.subr.bf16.mxu0 0
        %4469 = vmatpush1.bf16.msra.mxu0 0
        %4470 = vmatprep.subr.bf16.mxu0 0
        %4471 = vmatpush1.bf16.msra.mxu0 0
        %4472 = vmatprep.subr.bf16.mxu0 0
        %4473 = vmatpush1.bf16.msra.mxu0 0
        %4474 = vmatprep.subr.bf16.mxu0 0
        %4475 = vmatpush1.bf16.msra.mxu0 0
        %4476 = vmatprep.subr.bf16.mxu0 0
        %4477 = vmatpush1.bf16.msra.mxu0 0
        %4478 = vmatprep.subr.bf16.mxu0 0
        %4479 = vmatpush1.bf16.msra.mxu0 0
        %4480 = vmatprep.subr.bf16.mxu0 0
        %4481 = vmatpush1.bf16.msra.mxu0 0
        %4482 = vmatprep.subr.bf16.mxu0 0
        %4483 = vmatpush1.bf16.msra.mxu0 0
        %4484 = vmatprep.subr.bf16.mxu0 0
        %4485 = vmatpush1.bf16.msra.mxu0 0
        %4486 = vmatprep.mubr.bf16.mxu0 0
        %4487 = vmatmul.mubr.bf16.gmra.mrb[0].mxu0 %v4452
        %v4488 = vpop.f32.mrb[0].mxu0
        %v4489 = vadd.f32 0.0, %v4488
        %v4490 = vpop.f32.mrb[0].mxu0
        %v4491 = vpop.f32.mrb[0].mxu0
        %v4492 = vadd.f32 0.0, %v4491
        %v4493 = vpop.f32.mrb[0].mxu0
        %4494 = vdwg.mxu0
        %v4496 = vsel %vm2187, %v4362, 0
        %4498 = vmatprep.subr.bf16.mxu0 0
        %4499 = vmatpush1.bf16.msra.mxu0 %v4082
        %4500 = vmatprep.subr.bf16.mxu0 0
        %4501 = vmatpush1.bf16.msra.mxu0 0
        %4502 = vmatprep.subr.bf16.mxu0 0
        %4503 = vmatpush1.bf16.msra.mxu0 0
        %4504 = vmatprep.subr.bf16.mxu0 0
        %4505 = vmatpush1.bf16.msra.mxu0 0
        %4506 = vmatprep.subr.bf16.mxu0 0
        %4507 = vmatpush1.bf16.msra.mxu0 0
        %4508 = vmatprep.subr.bf16.mxu0 0
        %4509 = vmatpush1.bf16.msra.mxu0 0
        %4510 = vmatprep.subr.bf16.mxu0 0
        %4511 = vmatpush1.bf16.msra.mxu0 0
        %4512 = vmatprep.subr.bf16.mxu0 0
        %4513 = vmatpush1.bf16.msra.mxu0 0
        %4514 = vmatprep.subr.bf16.mxu0 0
        %4515 = vmatpush1.bf16.msra.mxu0 0
        %4516 = vmatprep.subr.bf16.mxu0 0
        %4517 = vmatpush1.bf16.msra.mxu0 0
        %4518 = vmatprep.subr.bf16.mxu0 0
        %4519 = vmatpush1.bf16.msra.mxu0 0
        %4520 = vmatprep.subr.bf16.mxu0 0
        %4521 = vmatpush1.bf16.msra.mxu0 0
        %4522 = vmatprep.subr.bf16.mxu0 0
        %4523 = vmatpush1.bf16.msra.mxu0 0
        %4524 = vmatprep.subr.bf16.mxu0 0
        %4525 = vmatpush1.bf16.msra.mxu0 0
        %4526 = vmatprep.subr.bf16.mxu0 0
        %4527 = vmatpush1.bf16.msra.mxu0 0
        %4528 = vmatprep.subr.bf16.mxu0 0
        %4529 = vmatpush1.bf16.msra.mxu0 0
        %4530 = vmatprep.mubr.bf16.mxu0 0
        %4531 = vmatmul.mubr.bf16.gmra.mrb[0].mxu0 %v4496
        %v4532 = vpop.f32.mrb[0].mxu0
        %v4533 = vadd.f32 0.0, %v4532
        %v4534 = vpop.f32.mrb[0].mxu0
        %v4535 = vpop.f32.mrb[0].mxu0
        %v4536 = vadd.f32 0.0, %v4535
        %v4537 = vpop.f32.mrb[0].mxu0
        %4538 = vdwg.mxu0
        %v4539 = vcombine.low %v4401, %v4489
        %v4540 = vcombine.high %v4401, %v4489
        %v4542 = vunpack.c.l.s4 1983009808
        %v4543 = vunpack.c.0.s8 %v4542
        %v4544 = vlaneseq
        %v4545 = vshrl.u32 %v4544, 7
        %v4546 = vsub.s32 %v4543, %v4545
        %v4547 = vrot.slane %v4539, %v4546
        %v4549 = vunpack.c.l.s4 1983009808
        %v4550 = vunpack.c.0.s8 %v4549
        %v4551 = vlaneseq
        %v4552 = vshrl.u32 %v4551, 7
        %v4553 = vsub.s32 %v4550, %v4552
        %v4554 = vrot.slane %v4540, %v4553
        %v4555 = vcombine.low %v4445, %v4533
        %v4556 = vcombine.high %v4445, %v4533
        %v4558 = vunpack.c.l.s4 1983009808
        %v4559 = vunpack.c.0.s8 %v4558
        %v4560 = vlaneseq
        %v4561 = vshrl.u32 %v4560, 7
        %v4562 = vsub.s32 %v4559, %v4561
        %v4563 = vrot.slane %v4555, %v4562
        %v4565 = vunpack.c.l.s4 1983009808
        %v4566 = vunpack.c.0.s8 %v4565
        %v4567 = vlaneseq
        %v4568 = vshrl.u32 %v4567, 7
        %v4569 = vsub.s32 %v4566, %v4568
        %v4570 = vrot.slane %v4556, %v4569
        %v4571 = vcombine.low %v4547, %v4563
        %v4572 = vcombine.high %v4547, %v4563
        %v4574 = vunpack.c.l.s4 1934713408
        %v4575 = vunpack.c.0.s8 %v4574
        %v4576 = vlaneseq
        %v4577 = vshrl.u32 %v4576, 7
        %v4578 = vsub.s32 %v4575, %v4577
        %v4579 = vrot.slane %v4571, %v4578
        %v4581 = vunpack.c.l.s4 1934713408
        %v4582 = vunpack.c.0.s8 %v4581
        %v4583 = vlaneseq
        %v4584 = vshrl.u32 %v4583, 7
        %v4585 = vsub.s32 %v4582, %v4584
        %v4586 = vrot.slane %v4572, %v4585
        %v4587 = vcombine.low %v4554, %v4570
        %v4588 = vcombine.high %v4554, %v4570
        %v4590 = vunpack.c.l.s4 1934713408
        %v4591 = vunpack.c.0.s8 %v4590
        %v4592 = vlaneseq
        %v4593 = vshrl.u32 %v4592, 7
        %v4594 = vsub.s32 %v4591, %v4593
        %v4595 = vrot.slane %v4587, %v4594
        %v4597 = vunpack.c.l.s4 1934713408
        %v4598 = vunpack.c.0.s8 %v4597
        %v4599 = vlaneseq
        %v4600 = vshrl.u32 %v4599, 7
        %v4601 = vsub.s32 %v4598, %v4600
        %v4602 = vrot.slane %v4588, %v4601
        %v4603 = vcombine.high %v4579, 0.0
        %v4604 = vcombine.high %v4586, 0.0
        %v4605 = vcombine.high %v4595, 0.0
        %v4606 = vcombine.high %v4602, 0.0
        %v4607 = vcombine.low %v4404, %v4492
        %v4608 = vcombine.high %v4404, %v4492
        %v4610 = vunpack.c.l.s4 1983009808
        %v4611 = vunpack.c.0.s8 %v4610
        %v4612 = vlaneseq
        %v4613 = vshrl.u32 %v4612, 7
        %v4614 = vsub.s32 %v4611, %v4613
        %v4615 = vrot.slane %v4607, %v4614
        %v4617 = vunpack.c.l.s4 1983009808
        %v4618 = vunpack.c.0.s8 %v4617
        %v4619 = vlaneseq
        %v4620 = vshrl.u32 %v4619, 7
        %v4621 = vsub.s32 %v4618, %v4620
        %v4622 = vrot.slane %v4608, %v4621
        %v4623 = vcombine.low %v4448, %v4536
        %v4624 = vcombine.high %v4448, %v4536
        %v4626 = vunpack.c.l.s4 1983009808
        %v4627 = vunpack.c.0.s8 %v4626
        %v4628 = vlaneseq
        %v4629 = vshrl.u32 %v4628, 7
        %v4630 = vsub.s32 %v4627, %v4629
        %v4631 = vrot.slane %v4623, %v4630
        %v4633 = vunpack.c.l.s4 1983009808
        %v4634 = vunpack.c.0.s8 %v4633
        %v4635 = vlaneseq
        %v4636 = vshrl.u32 %v4635, 7
        %v4637 = vsub.s32 %v4634, %v4636
        %v4638 = vrot.slane %v4624, %v4637
        %v4639 = vcombine.low %v4615, %v4631
        %v4640 = vcombine.high %v4615, %v4631
        %v4642 = vunpack.c.l.s4 1934713408
        %v4643 = vunpack.c.0.s8 %v4642
        %v4644 = vlaneseq
        %v4645 = vshrl.u32 %v4644, 7
        %v4646 = vsub.s32 %v4643, %v4645
        %v4647 = vrot.slane %v4639, %v4646
        %v4649 = vunpack.c.l.s4 1934713408
        %v4650 = vunpack.c.0.s8 %v4649
        %v4651 = vlaneseq
        %v4652 = vshrl.u32 %v4651, 7
        %v4653 = vsub.s32 %v4650, %v4652
        %v4654 = vrot.slane %v4640, %v4653
        %v4655 = vcombine.low %v4622, %v4638
        %v4656 = vcombine.high %v4622, %v4638
        %v4658 = vunpack.c.l.s4 1934713408
        %v4659 = vunpack.c.0.s8 %v4658
        %v4660 = vlaneseq
        %v4661 = vshrl.u32 %v4660, 7
        %v4662 = vsub.s32 %v4659, %v4661
        %v4663 = vrot.slane %v4655, %v4662
        %v4665 = vunpack.c.l.s4 1934713408
        %v4666 = vunpack.c.0.s8 %v4665
        %v4667 = vlaneseq
        %v4668 = vshrl.u32 %v4667, 7
        %v4669 = vsub.s32 %v4666, %v4668
        %v4670 = vrot.slane %v4656, %v4669
        %v4671 = vcombine.high %v4647, 0.0
        %v4672 = vcombine.high %v4654, 0.0
        %v4673 = vcombine.high %v4663, 0.0
        %v4674 = vcombine.high %v4670, 0.0
        %v4675 = vcombine.low %v4579, %v4586
        %v4677 = vunpack.c.l.s4 1983009808
        %v4678 = vunpack.c.0.s8 %v4677
        %v4679 = vlaneseq
        %v4680 = vshrl.u32 %v4679, 7
        %v4681 = vsub.s32 %v4678, %v4680
        %v4682 = vrot.slane %v4675, %v4681
        %v4683 = vcombine.low %v4603, %v4604
        %v4685 = vunpack.c.l.s4 1983009808
        %v4686 = vunpack.c.0.s8 %v4685
        %v4687 = vlaneseq
        %v4688 = vshrl.u32 %v4687, 7
        %v4689 = vsub.s32 %v4686, %v4688
        %v4690 = vrot.slane %v4683, %v4689
        %v4691 = vcombine.low %v4595, %v4602
        %v4693 = vunpack.c.l.s4 1983009808
        %v4694 = vunpack.c.0.s8 %v4693
        %v4695 = vlaneseq
        %v4696 = vshrl.u32 %v4695, 7
        %v4697 = vsub.s32 %v4694, %v4696
        %v4698 = vrot.slane %v4691, %v4697
        %v4699 = vcombine.low %v4605, %v4606
        %v4701 = vunpack.c.l.s4 1983009808
        %v4702 = vunpack.c.0.s8 %v4701
        %v4703 = vlaneseq
        %v4704 = vshrl.u32 %v4703, 7
        %v4705 = vsub.s32 %v4702, %v4704
        %v4706 = vrot.slane %v4699, %v4705
        %v4707 = vcombine.low %v4682, %v4690
        %v4708 = vcombine.high %v4682, %v4690
        %v4710 = vunpack.c.l.s4 1934713408
        %v4711 = vunpack.c.0.s8 %v4710
        %v4712 = vlaneseq
        %v4713 = vshrl.u32 %v4712, 7
        %v4714 = vsub.s32 %v4711, %v4713
        %v4715 = vrot.slane %v4707, %v4714
        %v4717 = vunpack.c.l.s4 1934713408
        %v4718 = vunpack.c.0.s8 %v4717
        %v4719 = vlaneseq
        %v4720 = vshrl.u32 %v4719, 7
        %v4721 = vsub.s32 %v4718, %v4720
        %v4722 = vrot.slane %v4708, %v4721
        %v4723 = vcombine.low %v4698, %v4706
        %v4724 = vcombine.high %v4698, %v4706
        %v4726 = vunpack.c.l.s4 1934713408
        %v4727 = vunpack.c.0.s8 %v4726
        %v4728 = vlaneseq
        %v4729 = vshrl.u32 %v4728, 7
        %v4730 = vsub.s32 %v4727, %v4729
        %v4731 = vrot.slane %v4723, %v4730
        %v4733 = vunpack.c.l.s4 1934713408
        %v4734 = vunpack.c.0.s8 %v4733
        %v4735 = vlaneseq
        %v4736 = vshrl.u32 %v4735, 7
        %v4737 = vsub.s32 %v4734, %v4736
        %v4738 = vrot.slane %v4724, %v4737
        %v4739 = vcombine.low %v4715, %v4731
        %v4740 = vcombine.high %v4715, %v4731
        %v4741 = vcombine.low %v4722, %v4738
        %v4742 = vcombine.high %v4722, %v4738
        %v4743 = vcombine.low %v4647, %v4654
        %v4745 = vunpack.c.l.s4 1983009808
        %v4746 = vunpack.c.0.s8 %v4745
        %v4747 = vlaneseq
        %v4748 = vshrl.u32 %v4747, 7
        %v4749 = vsub.s32 %v4746, %v4748
        %v4750 = vrot.slane %v4743, %v4749
        %v4751 = vcombine.low %v4671, %v4672
        %v4753 = vunpack.c.l.s4 1983009808
        %v4754 = vunpack.c.0.s8 %v4753
        %v4755 = vlaneseq
        %v4756 = vshrl.u32 %v4755, 7
        %v4757 = vsub.s32 %v4754, %v4756
        %v4758 = vrot.slane %v4751, %v4757
        %v4759 = vcombine.low %v4663, %v4670
        %v4761 = vunpack.c.l.s4 1983009808
        %v4762 = vunpack.c.0.s8 %v4761
        %v4763 = vlaneseq
        %v4764 = vshrl.u32 %v4763, 7
        %v4765 = vsub.s32 %v4762, %v4764
        %v4766 = vrot.slane %v4759, %v4765
        %v4767 = vcombine.low %v4673, %v4674
        %v4769 = vunpack.c.l.s4 1983009808
        %v4770 = vunpack.c.0.s8 %v4769
        %v4771 = vlaneseq
        %v4772 = vshrl.u32 %v4771, 7
        %v4773 = vsub.s32 %v4770, %v4772
        %v4774 = vrot.slane %v4767, %v4773
        %v4775 = vcombine.low %v4750, %v4758
        %v4776 = vcombine.high %v4750, %v4758
        %v4778 = vunpack.c.l.s4 1934713408
        %v4779 = vunpack.c.0.s8 %v4778
        %v4780 = vlaneseq
        %v4781 = vshrl.u32 %v4780, 7
        %v4782 = vsub.s32 %v4779, %v4781
        %v4783 = vrot.slane %v4775, %v4782
        %v4785 = vunpack.c.l.s4 1934713408
        %v4786 = vunpack.c.0.s8 %v4785
        %v4787 = vlaneseq
        %v4788 = vshrl.u32 %v4787, 7
        %v4789 = vsub.s32 %v4786, %v4788
        %v4790 = vrot.slane %v4776, %v4789
        %v4791 = vcombine.low %v4766, %v4774
        %v4792 = vcombine.high %v4766, %v4774
        %v4794 = vunpack.c.l.s4 1934713408
        %v4795 = vunpack.c.0.s8 %v4794
        %v4796 = vlaneseq
        %v4797 = vshrl.u32 %v4796, 7
        %v4798 = vsub.s32 %v4795, %v4797
        %v4799 = vrot.slane %v4791, %v4798
        %v4801 = vunpack.c.l.s4 1934713408
        %v4802 = vunpack.c.0.s8 %v4801
        %v4803 = vlaneseq
        %v4804 = vshrl.u32 %v4803, 7
        %v4805 = vsub.s32 %v4802, %v4804
        %v4806 = vrot.slane %v4792, %v4805
        %v4807 = vcombine.low %v4783, %v4799
        %v4808 = vcombine.high %v4783, %v4799
        %v4809 = vcombine.low %v4790, %v4806
        %v4810 = vcombine.high %v4790, %v4806
        %4813 = vrot.lane.b32.xlu0 %v4740, 32
        %v4814 = vpop.permute.xlu0 %4813
        %4815 = vrot.lane.b32.xlu0 %v4808, 32
        %v4816 = vpop.permute.xlu0 %4815
        %4821 = vrot.lane.b32.xlu0 %v4741, 64
        %v4822 = vpop.permute.xlu0 %4821
        %4823 = vrot.lane.b32.xlu0 %v4809, 64
        %v4824 = vpop.permute.xlu0 %4823
        %4829 = vrot.lane.b32.xlu0 %v4742, 96
        %v4830 = vpop.permute.xlu0 %4829
        %4831 = vrot.lane.b32.xlu0 %v4810, 96
        %v4832 = vpop.permute.xlu0 %4831
        %v4835 = vsel %vm1998, %v4739, %v4814
        %v4836 = vsel %vm1998, %v4807, %v4816
        %v4837 = vsel %vm2754, %v4835, %v4822
        %v4838 = vsel %vm2754, %v4836, %v4824
        %v4839 = vsel %vm2757, %v4837, %v4830
        %v4840 = vsel %vm2757, %v4838, %v4832
        %v4841 = vpack.c.bf16 %v4840, %v4839
        %v4842 = vld [vmem:[#allocation13] sm:$0xf]
        %v4843 = vld [vmem:[#allocation13 + $0x4] sm:$0xf]
        %v4844 = vld [vmem:[#allocation13 + $0x8] sm:$0xf]
        %v4845 = vld [vmem:[#allocation13 + $0xc] sm:$0xf]
        %v4846 = vld [vmem:[#allocation13 + $0x10] sm:$0xf]
        %v4847 = vld [vmem:[#allocation13 + $0x14] sm:$0xf]
        %v4848 = vld [vmem:[#allocation13 + $0x18] sm:$0xf]
        %v4849 = vld [vmem:[#allocation13 + $0x1c] sm:$0xf]
        %v4850 = vld [vmem:[#allocation13 + $0x20] sm:$0xf]
        %v4851 = vld [vmem:[#allocation13 + $0x24] sm:$0xf]
        %v4852 = vld [vmem:[#allocation13 + $0x28] sm:$0xf]
        %v4853 = vld [vmem:[#allocation13 + $0x2c] sm:$0xf]
        %v4854 = vld [vmem:[#allocation13 + $0x30] sm:$0xf]
        %v4855 = vld [vmem:[#allocation13 + $0x34] sm:$0xf]
        %v4856 = vld [vmem:[#allocation13 + $0x38] sm:$0xf]
        %v4857 = vld [vmem:[#allocation13 + $0x3c] sm:$0xf]
        %v4858 = vld [vmem:[%s13] sm:$0x1]
        %v4860 = vlaneseq
        %v4861 = vshrl.u32 %v4860, 7
        %v4862 = vsub.s32 0, %v4861
        %v4863 = vrot.slane %v4858, %v4862
        %v4881 = vunpack.c.l.b16 %v4842
        %v4882 = vunpack.c.l.b16 %v4843
        %v4883 = vunpack.c.l.b16 %v4844
        %v4884 = vunpack.c.l.b16 %v4845
        %v4885 = vunpack.c.l.b16 %v4846
        %v4886 = vunpack.c.l.b16 %v4847
        %v4887 = vunpack.c.l.b16 %v4848
        %v4888 = vunpack.c.l.b16 %v4849
        %v4889 = vunpack.c.l.b16 %v4850
        %v4890 = vunpack.c.l.b16 %v4851
        %v4891 = vunpack.c.l.b16 %v4852
        %v4892 = vunpack.c.l.b16 %v4853
        %v4893 = vunpack.c.l.b16 %v4854
        %v4894 = vunpack.c.l.b16 %v4855
        %v4895 = vunpack.c.l.b16 %v4856
        %v4896 = vunpack.c.l.b16 %v4857
        %v4897 = vpack.c.b16 %v4882, %v4881
        %v4898 = vpack.c.b16 %v4884, %v4883
        %v4899 = vpack.c.b16 %v4886, %v4885
        %v4900 = vpack.c.b16 %v4888, %v4887
        %v4901 = vpack.c.b16 %v4890, %v4889
        %v4902 = vpack.c.b16 %v4892, %v4891
        %v4903 = vpack.c.b16 %v4894, %v4893
        %v4904 = vpack.c.b16 %v4896, %v4895
        %4913 = vmatprep.subr.bf16.mxu0 0
        %4914 = vmatpush1.bf16.msra.mxu0 %v4897
        %4915 = vmatprep.subr.bf16.mxu0 0
        %4916 = vmatpush1.bf16.msra.mxu0 %v4898
        %4917 = vmatprep.subr.bf16.mxu0 0
        %4918 = vmatpush1.bf16.msra.mxu0 %v4899
        %4919 = vmatprep.subr.bf16.mxu0 0
        %4920 = vmatpush1.bf16.msra.mxu0 %v4900
        %4921 = vmatprep.subr.bf16.mxu0 0
        %4922 = vmatpush1.bf16.msra.mxu0 %v4901
        %4923 = vmatprep.subr.bf16.mxu0 0
        %4924 = vmatpush1.bf16.msra.mxu0 %v4902
        %4925 = vmatprep.subr.bf16.mxu0 0
        %4926 = vmatpush1.bf16.msra.mxu0 %v4903
        %4927 = vmatprep.subr.bf16.mxu0 0
        %4928 = vmatpush1.bf16.msra.mxu0 %v4904
        %4929 = vmatprep.subr.bf16.mxu0 0
        %4930 = vmatpush1.bf16.msra.mxu0 0
        %4931 = vmatprep.subr.bf16.mxu0 0
        %4932 = vmatpush1.bf16.msra.mxu0 0
        %4933 = vmatprep.subr.bf16.mxu0 0
        %4934 = vmatpush1.bf16.msra.mxu0 0
        %4935 = vmatprep.subr.bf16.mxu0 0
        %4936 = vmatpush1.bf16.msra.mxu0 0
        %4937 = vmatprep.subr.bf16.mxu0 0
        %4938 = vmatpush1.bf16.msra.mxu0 0
        %4939 = vmatprep.subr.bf16.mxu0 0
        %4940 = vmatpush1.bf16.msra.mxu0 0
        %4941 = vmatprep.subr.bf16.mxu0 0
        %4942 = vmatpush1.bf16.msra.mxu0 0
        %4943 = vmatprep.subr.bf16.mxu0 0
        %4944 = vmatpush1.bf16.msra.mxu0 0
        %4945 = vmatprep.mubr.bf16.mxu0 0
        %4946 = vmatmul.mubr.bf16.gmra.mrb[0].mxu0 %v4841
        %v4947 = vpop.f32.mrb[0].mxu0
        %v4948 = vadd.f32 %v4863, %v4947
        %v4949 = vpop.f32.mrb[0].mxu0
        %v4950 = vpop.f32.mrb[0].mxu0
        %v4951 = vadd.f32 %v4863, %v4950
        %v4952 = vpop.f32.mrb[0].mxu0
        %4953 = vdwg.mxu0
        %v4954 = vadd.f32 %v4948, %v2928
        %v4955 = vadd.f32 %v4951, %v2929
        %v4956 = vld [vmem:[%s14] sm:$0x1]
        %v4957 = vld [vmem:[%s15] sm:$0x1]
        %4958 = vadd.xlane.f32.xlu0 %v4954
        %v4959 = vpop.xlane.xlu0 %4958
        %4960 = vadd.xlane.f32.xlu0 %v4955
        %v4961 = vpop.xlane.xlu0 %4960
        %v4962 = vmul.f32 %v4959, %v2881
        %v4963 = vmul.f32 %v4961, %v2881
        %v4964 = vsub.f32 %v4954, %v4962
        %v4965 = vsub.f32 %v4955, %v4963
        %v4966 = vmul.f32 %v4964, %v4964
        %v4967 = vmul.f32 %v4965, %v4965
        %4968 = vadd.xlane.f32.xlu0 %v4966
        %v4969 = vpop.xlane.xlu0 %4968
        %4970 = vadd.xlane.f32.xlu0 %v4967
        %v4971 = vpop.xlane.xlu0 %4970
        %v4972 = vmul.f32 %v4969, %v2881
        %v4973 = vmul.f32 %v4971, %v2881
        %v4974 = vadd.f32 %v4972, 1e-05
        %v4975 = vadd.f32 %v4973, 1e-05
        %v4976 = vrsqrt.pop %v4974
        %v4977 = vmul.f32 %v4974, %v4976
        %vm4978 = vcmp.eq.f32.partialorder %v4974, inf
        %v4979 = vsel %vm4978, %v4974, %v4977
        %vm4980 = vcmp.eq.f32.partialorder %v4974, 0.0
        %v4981 = vand.u32 %v4974, 2147483648
        %v4982 = vsel %vm4980, %v4981, %v4979
        %v4983 = vrsqrt.pop %v4975
        %v4984 = vmul.f32 %v4975, %v4983
        %vm4985 = vcmp.eq.f32.partialorder %v4975, inf
        %v4986 = vsel %vm4985, %v4975, %v4984
        %vm4987 = vcmp.eq.f32.partialorder %v4975, 0.0
        %v4988 = vand.u32 %v4975, 2147483648
        %v4989 = vsel %vm4987, %v4988, %v4986
        %v4990 = vrcp.pop %v4982
        %v4991 = vmul.f32 %v4964, %v4990
        %v4992 = vrcp.pop %v4989
        %v4993 = vmul.f32 %v4965, %v4992
        %v4995 = vlaneseq
        %v4996 = vshrl.u32 %v4995, 7
        %v4997 = vsub.s32 0, %v4996
        %v4998 = vrot.slane %v4956, %v4997
        %v5000 = vmul.f32 %v4998, %v4991
        %v5001 = vmul.f32 %v4998, %v4993
        %v5003 = vlaneseq
        %v5004 = vshrl.u32 %v5003, 7
        %v5005 = vsub.s32 0, %v5004
        %v5006 = vrot.slane %v4957, %v5005
        %v5008 = vadd.f32 %v5000, %v5006
        %v5009 = vadd.f32 %v5001, %v5006
        %v5010 = vpack.c.bf16 %v5009, %v5008
        %v5011 = vld [vmem:[#allocation14] sm:$0xff]
        %v5012 = vld [vmem:[#allocation14 + $0x8] sm:$0xff]
        %v5013 = vld [vmem:[#allocation14 + $0x10] sm:$0xff]
        %v5014 = vld [vmem:[#allocation14 + $0x18] sm:$0xff]
        %v5015 = vld [vmem:[#allocation14 + $0x20] sm:$0xff]
        %v5016 = vld [vmem:[#allocation14 + $0x28] sm:$0xff]
        %v5017 = vld [vmem:[#allocation14 + $0x30] sm:$0xff]
        %v5018 = vld [vmem:[#allocation14 + $0x38] sm:$0xff]
        %v5019 = vld [vmem:[#allocation14 + $0x40] sm:$0xff]
        %v5020 = vld [vmem:[#allocation14 + $0x48] sm:$0xff]
        %v5021 = vld [vmem:[#allocation14 + $0x50] sm:$0xff]
        %v5022 = vld [vmem:[#allocation14 + $0x58] sm:$0xff]
        %v5023 = vld [vmem:[#allocation14 + $0x60] sm:$0xff]
        %v5024 = vld [vmem:[#allocation14 + $0x68] sm:$0xff]
        %v5025 = vld [vmem:[#allocation14 + $0x70] sm:$0xff]
        %v5026 = vld [vmem:[#allocation14 + $0x78] sm:$0xff]
        %v5027 = vld [vmem:[%s17] sm:$0x3]
        %v5029 = vlaneseq
        %v5030 = vshrl.u32 %v5029, 7
        %v5031 = vsub.s32 0, %v5030
        %v5032 = vrot.slane %v5027, %v5031
        %v5033 = vlaneseq
        %v5034 = vshrl.u32 %v5033, 7
        %v5035 = vsub.s32 1, %v5034
        %v5036 = vrot.slane %v5027, %v5035
        %v5055 = vunpack.c.l.b16 %v5011
        %v5056 = vunpack.c.h.b16 %v5011
        %v5057 = vunpack.c.l.b16 %v5012
        %v5058 = vunpack.c.h.b16 %v5012
        %v5059 = vunpack.c.l.b16 %v5013
        %v5060 = vunpack.c.h.b16 %v5013
        %v5061 = vunpack.c.l.b16 %v5014
        %v5062 = vunpack.c.h.b16 %v5014
        %v5063 = vunpack.c.l.b16 %v5015
        %v5064 = vunpack.c.h.b16 %v5015
        %v5065 = vunpack.c.l.b16 %v5016
        %v5066 = vunpack.c.h.b16 %v5016
        %v5067 = vunpack.c.l.b16 %v5017
        %v5068 = vunpack.c.h.b16 %v5017
        %v5069 = vunpack.c.l.b16 %v5018
        %v5070 = vunpack.c.h.b16 %v5018
        %v5071 = vunpack.c.l.b16 %v5019
        %v5072 = vunpack.c.h.b16 %v5019
        %v5073 = vunpack.c.l.b16 %v5020
        %v5074 = vunpack.c.h.b16 %v5020
        %v5075 = vunpack.c.l.b16 %v5021
        %v5076 = vunpack.c.h.b16 %v5021
        %v5077 = vunpack.c.l.b16 %v5022
        %v5078 = vunpack.c.h.b16 %v5022
        %v5079 = vunpack.c.l.b16 %v5023
        %v5080 = vunpack.c.h.b16 %v5023
        %v5081 = vunpack.c.l.b16 %v5024
        %v5082 = vunpack.c.h.b16 %v5024
        %v5083 = vunpack.c.l.b16 %v5025
        %v5084 = vunpack.c.h.b16 %v5025
        %v5085 = vunpack.c.l.b16 %v5026
        %v5086 = vunpack.c.h.b16 %v5026
        %v5087 = vpack.c.b16 %v5057, %v5055
        %v5088 = vpack.c.b16 %v5058, %v5056
        %v5089 = vpack.c.b16 %v5061, %v5059
        %v5090 = vpack.c.b16 %v5062, %v5060
        %v5091 = vpack.c.b16 %v5065, %v5063
        %v5092 = vpack.c.b16 %v5066, %v5064
        %v5093 = vpack.c.b16 %v5069, %v5067
        %v5094 = vpack.c.b16 %v5070, %v5068
        %v5095 = vpack.c.b16 %v5073, %v5071
        %v5096 = vpack.c.b16 %v5074, %v5072
        %v5097 = vpack.c.b16 %v5077, %v5075
        %v5098 = vpack.c.b16 %v5078, %v5076
        %v5099 = vpack.c.b16 %v5081, %v5079
        %v5100 = vpack.c.b16 %v5082, %v5080
        %v5101 = vpack.c.b16 %v5085, %v5083
        %v5102 = vpack.c.b16 %v5086, %v5084
        %5119 = vmatprep.subr.bf16.mxu0 %v5088
        %5120 = vmatpush1.bf16.msra.mxu0 %v5087
        %5121 = vmatprep.subr.bf16.mxu0 %v5090
        %5122 = vmatpush1.bf16.msra.mxu0 %v5089
        %5123 = vmatprep.subr.bf16.mxu0 %v5092
        %5124 = vmatpush1.bf16.msra.mxu0 %v5091
        %5125 = vmatprep.subr.bf16.mxu0 %v5094
        %5126 = vmatpush1.bf16.msra.mxu0 %v5093
        %5127 = vmatprep.subr.bf16.mxu0 %v5096
        %5128 = vmatpush1.bf16.msra.mxu0 %v5095
        %5129 = vmatprep.subr.bf16.mxu0 %v5098
        %5130 = vmatpush1.bf16.msra.mxu0 %v5097
        %5131 = vmatprep.subr.bf16.mxu0 %v5100
        %5132 = vmatpush1.bf16.msra.mxu0 %v5099
        %5133 = vmatprep.subr.bf16.mxu0 %v5102
        %5134 = vmatpush1.bf16.msra.mxu0 %v5101
        %5135 = vmatprep.subr.bf16.mxu0 0
        %5136 = vmatpush1.bf16.msra.mxu0 0
        %5137 = vmatprep.subr.bf16.mxu0 0
        %5138 = vmatpush1.bf16.msra.mxu0 0
        %5139 = vmatprep.subr.bf16.mxu0 0
        %5140 = vmatpush1.bf16.msra.mxu0 0
        %5141 = vmatprep.subr.bf16.mxu0 0
        %5142 = vmatpush1.bf16.msra.mxu0 0
        %5143 = vmatprep.subr.bf16.mxu0 0
        %5144 = vmatpush1.bf16.msra.mxu0 0
        %5145 = vmatprep.subr.bf16.mxu0 0
        %5146 = vmatpush1.bf16.msra.mxu0 0
        %5147 = vmatprep.subr.bf16.mxu0 0
        %5148 = vmatpush1.bf16.msra.mxu0 0
        %5149 = vmatprep.subr.bf16.mxu0 0
        %5150 = vmatpush1.bf16.msra.mxu0 0
        %5151 = vmatprep.mubr.bf16.mxu0 0
        %5152 = vmatmul.mubr.bf16.gmra.mrb[0].mxu0 %v5010
        %v5153 = vpop.f32.mrb[0].mxu0
        %v5154 = vadd.f32 %v5032, %v5153
        %v5155 = vpop.f32.mrb[0].mxu0
        %v5156 = vadd.f32 %v5036, %v5155
        %v5157 = vpop.f32.mrb[0].mxu0
        %v5158 = vadd.f32 %v5032, %v5157
        %v5159 = vpop.f32.mrb[0].mxu0
        %v5160 = vadd.f32 %v5036, %v5159
        %5161 = vdwg.mxu0
        %v5162 = vmax.f32 %v5154, 0.0
        %v5163 = vmax.f32 %v5156, 0.0
        %v5164 = vmax.f32 %v5158, 0.0
        %v5165 = vmax.f32 %v5160, 0.0
        %v5166 = vpack.c.bf16 %v5164, %v5162
        %v5167 = vpack.c.bf16 %v5165, %v5163
        %v5168 = vld [vmem:[#allocation16] sm:$0xf]
        %v5169 = vld [vmem:[#allocation16 + $0x4] sm:$0xf]
        %v5170 = vld [vmem:[#allocation16 + $0x8] sm:$0xf]
        %v5171 = vld [vmem:[#allocation16 + $0xc] sm:$0xf]
        %v5172 = vld [vmem:[#allocation16 + $0x10] sm:$0xf]
        %v5173 = vld [vmem:[#allocation16 + $0x14] sm:$0xf]
        %v5174 = vld [vmem:[#allocation16 + $0x18] sm:$0xf]
        %v5175 = vld [vmem:[#allocation16 + $0x1c] sm:$0xf]
        %v5176 = vld [vmem:[#allocation16 + $0x20] sm:$0xf]
        %v5177 = vld [vmem:[#allocation16 + $0x24] sm:$0xf]
        %v5178 = vld [vmem:[#allocation16 + $0x28] sm:$0xf]
        %v5179 = vld [vmem:[#allocation16 + $0x2c] sm:$0xf]
        %v5180 = vld [vmem:[#allocation16 + $0x30] sm:$0xf]
        %v5181 = vld [vmem:[#allocation16 + $0x34] sm:$0xf]
        %v5182 = vld [vmem:[#allocation16 + $0x38] sm:$0xf]
        %v5183 = vld [vmem:[#allocation16 + $0x3c] sm:$0xf]
        %v5184 = vld [vmem:[#allocation16 + $0x40] sm:$0xf]
        %v5185 = vld [vmem:[#allocation16 + $0x44] sm:$0xf]
        %v5186 = vld [vmem:[#allocation16 + $0x48] sm:$0xf]
        %v5187 = vld [vmem:[#allocation16 + $0x4c] sm:$0xf]
        %v5188 = vld [vmem:[#allocation16 + $0x50] sm:$0xf]
        %v5189 = vld [vmem:[#allocation16 + $0x54] sm:$0xf]
        %v5190 = vld [vmem:[#allocation16 + $0x58] sm:$0xf]
        %v5191 = vld [vmem:[#allocation16 + $0x5c] sm:$0xf]
        %v5192 = vld [vmem:[#allocation16 + $0x60] sm:$0xf]
        %v5193 = vld [vmem:[#allocation16 + $0x64] sm:$0xf]
        %v5194 = vld [vmem:[#allocation16 + $0x68] sm:$0xf]
        %v5195 = vld [vmem:[#allocation16 + $0x6c] sm:$0xf]
        %v5196 = vld [vmem:[#allocation16 + $0x70] sm:$0xf]
        %v5197 = vld [vmem:[#allocation16 + $0x74] sm:$0xf]
        %v5198 = vld [vmem:[#allocation16 + $0x78] sm:$0xf]
        %v5199 = vld [vmem:[#allocation16 + $0x7c] sm:$0xf]
        %v5200 = vld [vmem:[%s19] sm:$0x1]
        %v5202 = vlaneseq
        %v5203 = vshrl.u32 %v5202, 7
        %v5204 = vsub.s32 0, %v5203
        %v5205 = vrot.slane %v5200, %v5204
        %v5239 = vunpack.c.l.b16 %v5168
        %v5240 = vunpack.c.l.b16 %v5169
        %v5241 = vunpack.c.l.b16 %v5170
        %v5242 = vunpack.c.l.b16 %v5171
        %v5243 = vunpack.c.l.b16 %v5172
        %v5244 = vunpack.c.l.b16 %v5173
        %v5245 = vunpack.c.l.b16 %v5174
        %v5246 = vunpack.c.l.b16 %v5175
        %v5247 = vunpack.c.l.b16 %v5176
        %v5248 = vunpack.c.l.b16 %v5177
        %v5249 = vunpack.c.l.b16 %v5178
        %v5250 = vunpack.c.l.b16 %v5179
        %v5251 = vunpack.c.l.b16 %v5180
        %v5252 = vunpack.c.l.b16 %v5181
        %v5253 = vunpack.c.l.b16 %v5182
        %v5254 = vunpack.c.l.b16 %v5183
        %v5255 = vunpack.c.l.b16 %v5184
        %v5256 = vunpack.c.l.b16 %v5185
        %v5257 = vunpack.c.l.b16 %v5186
        %v5258 = vunpack.c.l.b16 %v5187
        %v5259 = vunpack.c.l.b16 %v5188
        %v5260 = vunpack.c.l.b16 %v5189
        %v5261 = vunpack.c.l.b16 %v5190
        %v5262 = vunpack.c.l.b16 %v5191
        %v5263 = vunpack.c.l.b16 %v5192
        %v5264 = vunpack.c.l.b16 %v5193
        %v5265 = vunpack.c.l.b16 %v5194
        %v5266 = vunpack.c.l.b16 %v5195
        %v5267 = vunpack.c.l.b16 %v5196
        %v5268 = vunpack.c.l.b16 %v5197
        %v5269 = vunpack.c.l.b16 %v5198
        %v5270 = vunpack.c.l.b16 %v5199
        %v5271 = vpack.c.b16 %v5240, %v5239
        %v5272 = vpack.c.b16 %v5242, %v5241
        %v5273 = vpack.c.b16 %v5244, %v5243
        %v5274 = vpack.c.b16 %v5246, %v5245
        %v5275 = vpack.c.b16 %v5248, %v5247
        %v5276 = vpack.c.b16 %v5250, %v5249
        %v5277 = vpack.c.b16 %v5252, %v5251
        %v5278 = vpack.c.b16 %v5254, %v5253
        %v5279 = vpack.c.b16 %v5256, %v5255
        %v5280 = vpack.c.b16 %v5258, %v5257
        %v5281 = vpack.c.b16 %v5260, %v5259
        %v5282 = vpack.c.b16 %v5262, %v5261
        %v5283 = vpack.c.b16 %v5264, %v5263
        %v5284 = vpack.c.b16 %v5266, %v5265
        %v5285 = vpack.c.b16 %v5268, %v5267
        %v5286 = vpack.c.b16 %v5270, %v5269
        %5303 = vmatprep.subr.bf16.mxu0 0
        %5304 = vmatpush1.bf16.msra.mxu0 %v5271
        %5305 = vmatprep.subr.bf16.mxu0 0
        %5306 = vmatpush1.bf16.msra.mxu0 %v5272
        %5307 = vmatprep.subr.bf16.mxu0 0
        %5308 = vmatpush1.bf16.msra.mxu0 %v5273
        %5309 = vmatprep.subr.bf16.mxu0 0
        %5310 = vmatpush1.bf16.msra.mxu0 %v5274
        %5311 = vmatprep.subr.bf16.mxu0 0
        %5312 = vmatpush1.bf16.msra.mxu0 %v5275
        %5313 = vmatprep.subr.bf16.mxu0 0
        %5314 = vmatpush1.bf16.msra.mxu0 %v5276
        %5315 = vmatprep.subr.bf16.mxu0 0
        %5316 = vmatpush1.bf16.msra.mxu0 %v5277
        %5317 = vmatprep.subr.bf16.mxu0 0
        %5318 = vmatpush1.bf16.msra.mxu0 %v5278
        %5319 = vmatprep.subr.bf16.mxu0 0
        %5320 = vmatpush1.bf16.msra.mxu0 %v5279
        %5321 = vmatprep.subr.bf16.mxu0 0
        %5322 = vmatpush1.bf16.msra.mxu0 %v5280
        %5323 = vmatprep.subr.bf16.mxu0 0
        %5324 = vmatpush1.bf16.msra.mxu0 %v5281
        %5325 = vmatprep.subr.bf16.mxu0 0
        %5326 = vmatpush1.bf16.msra.mxu0 %v5282
        %5327 = vmatprep.subr.bf16.mxu0 0
        %5328 = vmatpush1.bf16.msra.mxu0 %v5283
        %5329 = vmatprep.subr.bf16.mxu0 0
        %5330 = vmatpush1.bf16.msra.mxu0 %v5284
        %5331 = vmatprep.subr.bf16.mxu0 0
        %5332 = vmatpush1.bf16.msra.mxu0 %v5285
        %5333 = vmatprep.subr.bf16.mxu0 0
        %5334 = vmatpush1.bf16.msra.mxu0 %v5286
        %5335 = vmatprep.mubr.bf16.mxu0 %v5167
        %5336 = vmatmul.mubr.bf16.gmra.mrb[0].mxu0 %v5166
        %v5337 = vpop.f32.mrb[0].mxu0
        %v5338 = vadd.f32 %v5205, %v5337
        %v5339 = vpop.f32.mrb[0].mxu0
        %v5340 = vpop.f32.mrb[0].mxu0
        %v5341 = vadd.f32 %v5205, %v5340
        %v5342 = vpop.f32.mrb[0].mxu0
        %5343 = vdwg.mxu0
        %v5344 = vadd.f32 %v5338, %v5008
        %v5345 = vadd.f32 %v5341, %v5009
        %v5346 = vld [vmem:[%s20] sm:$0x1]
        %v5347 = vld [vmem:[%s21] sm:$0x1]
        %5348 = vadd.xlane.f32.xlu0 %v5344
        %v5349 = vpop.xlane.xlu0 %5348
        %5350 = vadd.xlane.f32.xlu0 %v5345
        %v5351 = vpop.xlane.xlu0 %5350
        %v5352 = vmul.f32 %v5349, %v2881
        %v5353 = vmul.f32 %v5351, %v2881
        %v5354 = vsub.f32 %v5344, %v5352
        %v5355 = vsub.f32 %v5345, %v5353
        %v5356 = vmul.f32 %v5354, %v5354
        %v5357 = vmul.f32 %v5355, %v5355
        %5358 = vadd.xlane.f32.xlu0 %v5356
        %v5359 = vpop.xlane.xlu0 %5358
        %5360 = vadd.xlane.f32.xlu0 %v5357
        %v5361 = vpop.xlane.xlu0 %5360
        %v5362 = vmul.f32 %v5359, %v2881
        %v5363 = vmul.f32 %v5361, %v2881
        %v5364 = vadd.f32 %v5362, 1e-05
        %v5365 = vadd.f32 %v5363, 1e-05
        %v5366 = vrsqrt.pop %v5364
        %v5367 = vmul.f32 %v5364, %v5366
        %vm5368 = vcmp.eq.f32.partialorder %v5364, inf
        %v5369 = vsel %vm5368, %v5364, %v5367
        %vm5370 = vcmp.eq.f32.partialorder %v5364, 0.0
        %v5371 = vand.u32 %v5364, 2147483648
        %v5372 = vsel %vm5370, %v5371, %v5369
        %v5373 = vrsqrt.pop %v5365
        %v5374 = vmul.f32 %v5365, %v5373
        %vm5375 = vcmp.eq.f32.partialorder %v5365, inf
        %v5376 = vsel %vm5375, %v5365, %v5374
        %vm5377 = vcmp.eq.f32.partialorder %v5365, 0.0
        %v5378 = vand.u32 %v5365, 2147483648
        %v5379 = vsel %vm5377, %v5378, %v5376
        %v5380 = vrcp.pop %v5372
        %v5381 = vmul.f32 %v5354, %v5380
        %v5382 = vrcp.pop %v5379
        %v5383 = vmul.f32 %v5355, %v5382
        %v5385 = vlaneseq
        %v5386 = vshrl.u32 %v5385, 7
        %v5387 = vsub.s32 0, %v5386
        %v5388 = vrot.slane %v5346, %v5387
        %v5390 = vmul.f32 %v5388, %v5381
        %v5391 = vmul.f32 %v5388, %v5383
        %v5393 = vlaneseq
        %v5394 = vshrl.u32 %v5393, 7
        %v5395 = vsub.s32 0, %v5394
        %v5396 = vrot.slane %v5347, %v5395
        %v5398 = vadd.f32 %v5390, %v5396
        %v5399 = vadd.f32 %v5391, %v5396
        %5400 = vst [vmem:[%s842] sm:$0xff] %v5398
        %5401 = vst [vmem:[%s842 + $0x8] sm:$0xff] %v5399
        %s5402 = sand.u32 %s525, 1
        %s5403 = scalar_lea.sflag [#allocation4], %s5402
        %s5404 = sand.u32 %s525, 1
        %s5405 = smul.addr %s5404, 16
        %s5406 = scalar_lea.vmem [#allocation17], %s5405
        // Predicated region
        $region145: #{tpu_custom_call.1} parent=107 // pred_check
          %p5407 = pneg %p535
        $region146: #{tpu_custom_call.1} parent=107 // pred_check_branch
          %5409 = sbr.rel (%p5407) target = $region148
        $region147: #{tpu_custom_call.1} parent=107 // pred_region
          %s5411 = ssub.s32 256, 256
          %5412 = vsyncadd %s5403, %s5411
          %s5413 = smul.addr %s45, 2
          %s5414 = smul.addr %s5413, 128
          %s5415 = scalar_lea.hbm %s22, %s5414
          %s5416 = sshll.u32 %s5406, 4
          %s5417 = int_to_ptr.vmem [resolvable:$true] %s5416
          %5422 = dma.vmem_to_hbm [thread:$0]  %s5417, 256, %s5415, %s5403, 128, 128, 8
        $region148: #{tpu_custom_call.1} parent=107 // pred_fallthru
          _
      $region108: #{tpu_custom_call.1} parent=5 // pred_fallthru
        _
      %p5423 = scmp.le.s32.totalorder 2, %s40
      // Predicated region
      $region149: #{tpu_custom_call.1} parent=5 // pred_check
        %p5424 = pneg %p5423
      $region150: #{tpu_custom_call.1} parent=5 // pred_check_branch
        %5426 = sbr.rel (%p5424) target = $region152
      $region151: #{tpu_custom_call.1} parent=5 // pred_region
        %s5427 = ssub.s32 %s40, 2
        // Predicated region
        $region153: #{tpu_custom_call.1} parent=151 // pred_check
          %p5428 = pneg %p541
        $region154: #{tpu_custom_call.1} parent=151 // pred_check_branch
          %5430 = sbr.rel (%p5428) target = $region156
        $region155: #{tpu_custom_call.1} parent=151 // pred_region
          %s5431 = sand.u32 %s526, 1
          %s5432 = scalar_lea.sflag [#allocation4], %s5431
          %s5433 = sand.u32 %s526, 1
          %s5434 = smul.addr %s5433, 16
          %s5435 = scalar_lea.vmem [#allocation17], %s5434
          %5436 = dma.done %s5432, 256
        $region156: #{tpu_custom_call.1} parent=151 // pred_fallthru
          _
      $region152: #{tpu_custom_call.1} parent=5 // pred_fallthru
        _
    $region6: #{tpu_custom_call.1} parent=1 // loop_footer
      %s44 = sadd.s32 1, %s40
    $region7: #{tpu_custom_call.1} parent=1 // loop_footer_branch
      %39 = sbr.rel target = $region3
    $region8: #{tpu_custom_call.1} parent=1 // loop_exit
      _
    %5437 = vsyncpa [#allocation3], 1
    %s5438 = scalar_lea.sflag [#allocation3], 1
    %5439 = vsyncpa %s5438, 1
    %5440 = vsyncpa [#allocation6], 1
    %s5441 = scalar_lea.sflag [#allocation6], 1
    %5442 = vsyncpa %s5441, 1
    %5443 = vsyncpa [#allocation9], 1
    %5444 = vsyncpa [#allocation12], 1
    %5445 = vsyncpa [#allocation15], 1
    %5446 = vsyncpa [#allocation4], 1
    %s5447 = scalar_lea.sflag [#allocation4], 1
    %5448 = vsyncpa %s5447, 1

// kernel: tpu_custom_call.1
$region0: #{tpu_custom_call.1}
  #allocation0 [shape = 'u32[]', space=smem, size = 0x4, offset = 0x4, fixed_abs, tag = 'smem constant byte address 0x4 - core index']
  #allocation1 [shape = 'u32[144,128]{1,0:T(1,128)}', space=vmem, size = 0x12000, scoped, tag = 'internal scratch']
  %s0 = inlined_call_operand.hbm [shape: f32[2,16,128], index: 0, kind: input, shape index: {}]
  %s1 = inlined_call_operand.hbm [shape: f32[2,16,128], index: 1, kind: input, shape index: {}]
  %s2 = inlined_call_operand.hbm [shape: bf16[128,384], index: 2, kind: input, shape index: {}]
  %s3 = inlined_call_operand.vmem [shape: f32[1,384], index: 3, kind: input, shape index: {}]
  %s4 = inlined_call_operand.hbm [shape: bf16[128,128], index: 4, kind: input, shape index: {}]
  %s5 = inlined_call_operand.vmem [shape: f32[1,128], index: 5, kind: input, shape index: {}]
  %s6 = inlined_call_operand.vmem [shape: f32[1,128], index: 6, kind: input, shape index: {}]
  %s7 = inlined_call_operand.vmem [shape: f32[1,128], index: 7, kind: input, shape index: {}]
  %s8 = inlined_call_operand.hbm [shape: bf16[128,128], index: 8, kind: input, shape index: {}]
  %s9 = inlined_call_operand.vmem [shape: f32[1,128], index: 9, kind: input, shape index: {}]
  %s10 = inlined_call_operand.hbm [shape: bf16[128,256], index: 10, kind: input, shape index: {}]
  %s11 = inlined_call_operand.vmem [shape: f32[1,256], index: 11, kind: input, shape index: {}]
  %s12 = inlined_call_operand.hbm [shape: bf16[128,128], index: 12, kind: input, shape index: {}]
  %s13 = inlined_call_operand.vmem [shape: f32[1,128], index: 13, kind: input, shape index: {}]
  %s14 = inlined_call_operand.vmem [shape: f32[1,128], index: 14, kind: input, shape index: {}]
  %s15 = inlined_call_operand.vmem [shape: f32[1,128], index: 15, kind: input, shape index: {}]
  %s16 = inlined_call_operand.hbm [shape: bf16[128,256], index: 16, kind: input, shape index: {}]
  %s17 = inlined_call_operand.vmem [shape: f32[1,256], index: 17, kind: input, shape index: {}]
  %s18 = inlined_call_operand.hbm [shape: bf16[256,128], index: 18, kind: input, shape index: {}]
  %s19 = inlined_call_operand.vmem [shape: f32[1,128], index: 19, kind: input, shape index: {}]
  %s20 = inlined_call_operand.vmem [shape: f32[1,128], index: 20, kind: input, shape index: {}]
  %s21 = inlined_call_operand.vmem [shape: f32[1,128], index: 21, kind: input, shape index: {}]
  %s22 = inlined_call_operand.hbm [shape: f32[2,16,128], index: 22, kind: output, shape index: {}]
  %s23 = sld [smem:[#allocation0]]
  $region157: #{tpu_custom_call.1} parent=0
    _
  %s25 = ssub.s32 1, %s23
  %s26 = scalar_select 0, %s25, %s23
  $region1: #{tpu_custom_call.1} parent=0
    #allocation2 [shape = 'u8[16384]{0}', space=vmem, size = 0x4000, scoped, tag = 'input window, operand 0']
    #allocation3 [shape = 's32[2]{0}', space=sflag, size = 0x8, scoped, tag = 'scoped memory for tpu_custom_call.1']
    #allocation4 [shape = 's32[2]{0}', space=sflag, size = 0x8, scoped, tag = 'scoped memory for tpu_custom_call.1']
    #allocation5 [shape = 'u8[16384]{0}', space=vmem, size = 0x4000, scoped, tag = 'input window, operand 1']
    #allocation6 [shape = 's32[2]{0}', space=sflag, size = 0x8, scoped, tag = 'scoped memory for tpu_custom_call.1']
    #allocation7 [shape = 'u8[98304]{0}', space=vmem, size = 0x18000, scoped, tag = 'input window, operand 2, single buffered']
    #allocation8 [shape = 'u8[32768]{0}', space=vmem, size = 0x8000, scoped, tag = 'input window, operand 4, single buffered']
    #allocation9 [shape = 's32[1]{0}', space=sflag, size = 0x4, scoped, tag = 'scoped memory for tpu_custom_call.1']
    #allocation10 [shape = 'u8[32768]{0}', space=vmem, size = 0x8000, scoped, tag = 'input window, operand 8, single buffered']
    #allocation11 [shape = 'u8[65536]{0}', space=vmem, size = 0x10000, scoped, tag = 'input window, operand 10, single buffered']
    #allocation12 [shape = 's32[1]{0}', space=sflag, size = 0x4, scoped, tag = 'scoped memory for tpu_custom_call.1']
    #allocation13 [shape = 'u8[32768]{0}', space=vmem, size = 0x8000, scoped, tag = 'input window, operand 12, single buffered']
    #allocation14 [shape = 'u8[65536]{0}', space=vmem, size = 0x10000, scoped, tag = 'input window, operand 16, single buffered']
    #allocation15 [shape = 's32[1]{0}', space=sflag, size = 0x4, scoped, tag = 'scoped memory for tpu_custom_call.1']
    #allocation16 [shape = 'u8[65536]{0}', space=vmem, size = 0x10000, scoped, tag = 'input window, operand 18, single buffered']
    #allocation17 [shape = 'u8[16384]{0}', space=vmem, size = 0x4000, scoped, tag = 'output window, operand 0']
    %27 = vsyncpa [#allocation3], 0
    %s28 = scalar_lea.sflag [#allocation3], 1
    %29 = vsyncpa %s28, 0
    %30 = vsyncpa [#allocation6], 0
    %s31 = scalar_lea.sflag [#allocation6], 1
    %32 = vsyncpa %s31, 0
    %33 = vsyncpa [#allocation9], 0
    %34 = vsyncpa [#allocation12], 0
    %35 = vsyncpa [#allocation15], 0
    %36 = vsyncpa [#allocation4], 0
    %s37 = scalar_lea.sflag [#allocation4], 1
    %38 = vsyncpa %s37, 0
    loop: start=0, step=1, limit=4
    $region2: #{tpu_custom_call.1} parent=1 // loop_pre_header
      _
    $region3: #{tpu_custom_call.1} parent=1 // loop_header
      %s40 = sphi 0, %s44
      %p41 = scmp.ge.s32.totalorder %s40, 4
      %s50 = sphi 0, %s52
      %s53 = sphi 0, %s50
      %s54 = sphi 0, %s53
      %s70 = sphi 0, %s54
      %s76 = sphi 0, %s78
      %s79 = sphi 0, %s76
      %s80 = sphi 0, %s79
      %s96 = sphi 0, %s80
      %s100 = sphi 0, %s100
      %s102 = sphi 0, %s100
      %s103 = sphi 0, %s102
      %s117 = sphi 0, %s103
      %s121 = sphi 0, %s121
      %s123 = sphi 0, %s121
      %s124 = sphi 0, %s123
      %s138 = sphi 0, %s124
      %s142 = sphi 0, %s142
      %s144 = sphi 0, %s142
      %s145 = sphi 0, %s144
      %s159 = sphi 0, %s145
      %s163 = sphi 0, %s163
      %s165 = sphi 0, %s163
      %s166 = sphi 0, %s165
      %s180 = sphi 0, %s166
      %s184 = sphi 0, %s184
      %s186 = sphi 0, %s184
      %s187 = sphi 0, %s186
      %s201 = sphi 0, %s187
      %s205 = sphi 0, %s205
      %s207 = sphi 0, %s205
      %s208 = sphi 0, %s207
      %s222 = sphi 0, %s208
      %s226 = sphi 0, %s226
      %s228 = sphi 0, %s226
      %s229 = sphi 0, %s228
      %s243 = sphi 0, %s229
      %s247 = sphi 0, %s247
      %s249 = sphi 0, %s247
      %s250 = sphi 0, %s249
      %s264 = sphi 0, %s250
      %s268 = sphi 0, %s268
      %s270 = sphi 0, %s268
      %s271 = sphi 0, %s270
      %s285 = sphi 0, %s271
      %s289 = sphi 0, %s289
      %s291 = sphi 0, %s289
      %s292 = sphi 0, %s291
      %s306 = sphi 0, %s292
      %s310 = sphi 0, %s310
      %s312 = sphi 0, %s310
      %s313 = sphi 0, %s312
      %s327 = sphi 0, %s313
      %s331 = sphi 0, %s331
      %s333 = sphi 0, %s331
      %s334 = sphi 0, %s333
      %s348 = sphi 0, %s334
      %s352 = sphi 0, %s352
      %s354 = sphi 0, %s352
      %s355 = sphi 0, %s354
      %s369 = sphi 0, %s355
      %s373 = sphi 0, %s373
      %s375 = sphi 0, %s373
      %s376 = sphi 0, %s375
      %s390 = sphi 0, %s376
      %s394 = sphi 0, %s394
      %s396 = sphi 0, %s394
      %s397 = sphi 0, %s396
      %s411 = sphi 0, %s397
      %s415 = sphi 0, %s415
      %s417 = sphi 0, %s415
      %s418 = sphi 0, %s417
      %s432 = sphi 0, %s418
      %s436 = sphi 0, %s436
      %s438 = sphi 0, %s436
      %s439 = sphi 0, %s438
      %s453 = sphi 0, %s439
      %s457 = sphi 0, %s457
      %s459 = sphi 0, %s457
      %s460 = sphi 0, %s459
      %s474 = sphi 0, %s460
      %s478 = sphi 0, %s478
      %s480 = sphi 0, %s478
      %s481 = sphi 0, %s480
      %s495 = sphi 0, %s481
      %s499 = sphi 0, %s499
      %s501 = sphi 0, %s499
      %s502 = sphi 0, %s501
      %s516 = sphi 0, %s502
      %s522 = sphi 0, %s524
      %s525 = sphi 0, %s522
      %s526 = sphi 0, %s525
      %s542 = sphi 0, %s526
    $region4: #{tpu_custom_call.1} parent=1 // loop_header_branch
      %43 = sbr.rel (%p41) target = $region8
    $region5: #{tpu_custom_call.1} parent=1 // loop_body
      %s45 = ssub.s32 %s40, 1
      %s46 = ssub.s32 %s40, 2
      %s47 = sadd.s32 %s40, 1
      %s48 = ssub.s32 %s40, %s47
      %p49 = scmp.eq.s32.totalorder %s48, 0
      %s51 = sadd.s32 %s50, 1
      %s52 = scalar_select %p49, %s50, %s51
      %p55 = pneg %p49
      %p56 = scmp.eq.s32.totalorder %s40, 1
      %p57 = por %p55, %p56
      %p58 = scmp.ne.s32.totalorder %s50, %s53
      %p59 = scmp.eq.s32.totalorder %s40, 0
      %p60 = por %p58, %p59
      %p61 = scmp.ne.s32.totalorder %s50, %s53
      %p62 = scmp.eq.s32.totalorder %s45, 1
      %p63 = por %p61, %p62
      %p64 = scmp.ne.s32.totalorder %s53, %s54
      %p65 = scmp.eq.s32.totalorder %s45, 0
      %p66 = por %p64, %p65
      %p67 = scmp.ne.s32.totalorder %s53, %s54
      %p68 = scmp.eq.s32.totalorder %s46, 1
      %p69 = por %p67, %p68
      %p71 = scmp.ne.s32.totalorder %s54, %s70
      %p72 = scmp.eq.s32.totalorder %s46, 0
      %p73 = por %p71, %p72
      %s74 = ssub.s32 %s40, %s47
      %p75 = scmp.eq.s32.totalorder %s74, 0
      %s77 = sadd.s32 %s76, 1
      %s78 = scalar_select %p75, %s76, %s77
      %p81 = pneg %p75
      %p82 = scmp.eq.s32.totalorder %s40, 1
      %p83 = por %p81, %p82
      %p84 = scmp.ne.s32.totalorder %s76, %s79
      %p85 = scmp.eq.s32.totalorder %s40, 0
      %p86 = por %p84, %p85
      %p87 = scmp.ne.s32.totalorder %s76, %s79
      %p88 = scmp.eq.s32.totalorder %s45, 1
      %p89 = por %p87, %p88
      %p90 = scmp.ne.s32.totalorder %s79, %s80
      %p91 = scmp.eq.s32.totalorder %s45, 0
      %p92 = por %p90, %p91
      %p93 = scmp.ne.s32.totalorder %s79, %s80
      %p94 = scmp.eq.s32.totalorder %s46, 1
      %p95 = por %p93, %p94
      %p97 = scmp.ne.s32.totalorder %s80, %s96
      %p98 = scmp.eq.s32.totalorder %s46, 0
      %p99 = por %p97, %p98
      %s101 = sadd.s32 %s100, 1
      %p104 = scmp.eq.s32.totalorder %s40, 1
      %p105 = scmp.ne.s32.totalorder %s100, %s102
      %p106 = scmp.eq.s32.totalorder %s40, 0
      %p107 = por %p105, %p106
      %p108 = scmp.ne.s32.totalorder %s100, %s102
      %p109 = scmp.eq.s32.totalorder %s45, 1
      %p110 = por %p108, %p109
      %p111 = scmp.ne.s32.totalorder %s102, %s103
      %p112 = scmp.eq.s32.totalorder %s45, 0
      %p113 = por %p111, %p112
      %p114 = scmp.ne.s32.totalorder %s102, %s103
      %p115 = scmp.eq.s32.totalorder %s46, 1
      %p116 = por %p114, %p115
      %p118 = scmp.ne.s32.totalorder %s103, %s117
      %p119 = scmp.eq.s32.totalorder %s46, 0
      %p120 = por %p118, %p119
      %s122 = sadd.s32 %s121, 1
      %p125 = scmp.eq.s32.totalorder %s40, 1
      %p126 = scmp.ne.s32.totalorder %s121, %s123
      %p127 = scmp.eq.s32.totalorder %s40, 0
      %p128 = por %p126, %p127
      %p129 = scmp.ne.s32.totalorder %s121, %s123
      %p130 = scmp.eq.s32.totalorder %s45, 1
      %p131 = por %p129, %p130
      %p132 = scmp.ne.s32.totalorder %s123, %s124
      %p133 = scmp.eq.s32.totalorder %s45, 0
      %p134 = por %p132, %p133
      %p135 = scmp.ne.s32.totalorder %s123, %s124
      %p136 = scmp.eq.s32.totalorder %s46, 1
      %p137 = por %p135, %p136
      %p139 = scmp.ne.s32.totalorder %s124, %s138
      %p140 = scmp.eq.s32.totalorder %s46, 0
      %p141 = por %p139, %p140
      %s143 = sadd.s32 %s142, 1
      %p146 = scmp.eq.s32.totalorder %s40, 1
      %p147 = scmp.ne.s32.totalorder %s142, %s144
      %p148 = scmp.eq.s32.totalorder %s40, 0
      %p149 = por %p147, %p148
      %p150 = scmp.ne.s32.totalorder %s142, %s144
      %p151 = scmp.eq.s32.totalorder %s45, 1
      %p152 = por %p150, %p151
      %p153 = scmp.ne.s32.totalorder %s144, %s145
      %p154 = scmp.eq.s32.totalorder %s45, 0
      %p155 = por %p153, %p154
      %p156 = scmp.ne.s32.totalorder %s144, %s145
      %p157 = scmp.eq.s32.totalorder %s46, 1
      %p158 = por %p156, %p157
      %p160 = scmp.ne.s32.totalorder %s145, %s159
      %p161 = scmp.eq.s32.totalorder %s46, 0
      %p162 = por %p160, %p161
      %s164 = sadd.s32 %s163, 1
      %p167 = scmp.eq.s32.totalorder %s40, 1
      %p168 = scmp.ne.s32.totalorder %s163, %s165
      %p169 = scmp.eq.s32.totalorder %s40, 0
      %p170 = por %p168, %p169
      %p171 = scmp.ne.s32.totalorder %s163, %s165
      %p172 = scmp.eq.s32.totalorder %s45, 1
      %p173 = por %p171, %p172
      %p174 = scmp.ne.s32.totalorder %s165, %s166
      %p175 = scmp.eq.s32.totalorder %s45, 0
      %p176 = por %p174, %p175
      %p177 = scmp.ne.s32.totalorder %s165, %s166
      %p178 = scmp.eq.s32.totalorder %s46, 1
      %p179 = por %p177, %p178
      %p181 = scmp.ne.s32.totalorder %s166, %s180
      %p182 = scmp.eq.s32.totalorder %s46, 0
      %p183 = por %p181, %p182
      %s185 = sadd.s32 %s184, 1
      %p188 = scmp.eq.s32.totalorder %s40, 1
      %p189 = scmp.ne.s32.totalorder %s184, %s186
      %p190 = scmp.eq.s32.totalorder %s40, 0
      %p191 = por %p189, %p190
      %p192 = scmp.ne.s32.totalorder %s184, %s186
      %p193 = scmp.eq.s32.totalorder %s45, 1
      %p194 = por %p192, %p193
      %p195 = scmp.ne.s32.totalorder %s186, %s187
      %p196 = scmp.eq.s32.totalorder %s45, 0
      %p197 = por %p195, %p196
      %p198 = scmp.ne.s32.totalorder %s186, %s187
      %p199 = scmp.eq.s32.totalorder %s46, 1
      %p200 = por %p198, %p199
      %p202 = scmp.ne.s32.totalorder %s187, %s201
      %p203 = scmp.eq.s32.totalorder %s46, 0
      %p204 = por %p202, %p203
      %s206 = sadd.s32 %s205, 1
      %p209 = scmp.eq.s32.totalorder %s40, 1
      %p210 = scmp.ne.s32.totalorder %s205, %s207
      %p211 = scmp.eq.s32.totalorder %s40, 0
      %p212 = por %p210, %p211
      %p213 = scmp.ne.s32.totalorder %s205, %s207
      %p214 = scmp.eq.s32.totalorder %s45, 1
      %p215 = por %p213, %p214
      %p216 = scmp.ne.s32.totalorder %s207, %s208
      %p217 = scmp.eq.s32.totalorder %s45, 0
      %p218 = por %p216, %p217
      %p219 = scmp.ne.s32.totalorder %s207, %s208
      %p220 = scmp.eq.s32.totalorder %s46, 1
      %p221 = por %p219, %p220
      %p223 = scmp.ne.s32.totalorder %s208, %s222
      %p224 = scmp.eq.s32.totalorder %s46, 0
      %p225 = por %p223, %p224
      %s227 = sadd.s32 %s226, 1
      %p230 = scmp.eq.s32.totalorder %s40, 1
      %p231 = scmp.ne.s32.totalorder %s226, %s228
      %p232 = scmp.eq.s32.totalorder %s40, 0
      %p233 = por %p231, %p232
      %p234 = scmp.ne.s32.totalorder %s226, %s228
      %p235 = scmp.eq.s32.totalorder %s45, 1
      %p236 = por %p234, %p235
      %p237 = scmp.ne.s32.totalorder %s228, %s229
      %p238 = scmp.eq.s32.totalorder %s45, 0
      %p239 = por %p237, %p238
      %p240 = scmp.ne.s32.totalorder %s228, %s229
      %p241 = scmp.eq.s32.totalorder %s46, 1
      %p242 = por %p240, %p241
      %p244 = scmp.ne.s32.totalorder %s229, %s243
      %p245 = scmp.eq.s32.totalorder %s46, 0
      %p246 = por %p244, %p245
      %s248 = sadd.s32 %s247, 1
      %p251 = scmp.eq.s32.totalorder %s40, 1
      %p252 = scmp.ne.s32.totalorder %s247, %s249
      %p253 = scmp.eq.s32.totalorder %s40, 0
      %p254 = por %p252, %p253
      %p255 = scmp.ne.s32.totalorder %s247, %s249
      %p256 = scmp.eq.s32.totalorder %s45, 1
      %p257 = por %p255, %p256
      %p258 = scmp.ne.s32.totalorder %s249, %s250
      %p259 = scmp.eq.s32.totalorder %s45, 0
      %p260 = por %p258, %p259
      %p261 = scmp.ne.s32.totalorder %s249, %s250
      %p262 = scmp.eq.s32.totalorder %s46, 1
      %p263 = por %p261, %p262
      %p265 = scmp.ne.s32.totalorder %s250, %s264
      %p266 = scmp.eq.s32.totalorder %s46, 0
      %p267 = por %p265, %p266
      %s269 = sadd.s32 %s268, 1
      %p272 = scmp.eq.s32.totalorder %s40, 1
      %p273 = scmp.ne.s32.totalorder %s268, %s270
      %p274 = scmp.eq.s32.totalorder %s40, 0
      %p275 = por %p273, %p274
      %p276 = scmp.ne.s32.totalorder %s268, %s270
      %p277 = scmp.eq.s32.totalorder %s45, 1
      %p278 = por %p276, %p277
      %p279 = scmp.ne.s32.totalorder %s270, %s271
      %p280 = scmp.eq.s32.totalorder %s45, 0
      %p281 = por %p279, %p280
      %p282 = scmp.ne.s32.totalorder %s270, %s271
      %p283 = scmp.eq.s32.totalorder %s46, 1
      %p284 = por %p282, %p283
      %p286 = scmp.ne.s32.totalorder %s271, %s285
      %p287 = scmp.eq.s32.totalorder %s46, 0
      %p288 = por %p286, %p287
      %s290 = sadd.s32 %s289, 1
      %p293 = scmp.eq.s32.totalorder %s40, 1
      %p294 = scmp.ne.s32.totalorder %s289, %s291
      %p295 = scmp.eq.s32.totalorder %s40, 0
      %p296 = por %p294, %p295
      %p297 = scmp.ne.s32.totalorder %s289, %s291
      %p298 = scmp.eq.s32.totalorder %s45, 1
      %p299 = por %p297, %p298
      %p300 = scmp.ne.s32.totalorder %s291, %s292
      %p301 = scmp.eq.s32.totalorder %s45, 0
      %p302 = por %p300, %p301
      %p303 = scmp.ne.s32.totalorder %s291, %s292
      %p304 = scmp.eq.s32.totalorder %s46, 1
      %p305 = por %p303, %p304
      %p307 = scmp.ne.s32.totalorder %s292, %s306
      %p308 = scmp.eq.s32.totalorder %s46, 0
      %p309 = por %p307, %p308
      %s311 = sadd.s32 %s310, 1
      %p314 = scmp.eq.s32.totalorder %s40, 1
      %p315 = scmp.ne.s32.totalorder %s310, %s312
      %p316 = scmp.eq.s32.totalorder %s40, 0
      %p317 = por %p315, %p316
      %p318 = scmp.ne.s32.totalorder %s310, %s312
      %p319 = scmp.eq.s32.totalorder %s45, 1
      %p320 = por %p318, %p319
      %p321 = scmp.ne.s32.totalorder %s312, %s313
      %p322 = scmp.eq.s32.totalorder %s45, 0
      %p323 = por %p321, %p322
      %p324 = scmp.ne.s32.totalorder %s312, %s313
      %p325 = scmp.eq.s32.totalorder %s46, 1
      %p326 = por %p324, %p325
      %p328 = scmp.ne.s32.totalorder %s313, %s327
      %p329 = scmp.eq.s32.totalorder %s46, 0
      %p330 = por %p328, %p329
      %s332 = sadd.s32 %s331, 1
      %p335 = scmp.eq.s32.totalorder %s40, 1
      %p336 = scmp.ne.s32.totalorder %s331, %s333
      %p337 = scmp.eq.s32.totalorder %s40, 0
      %p338 = por %p336, %p337
      %p339 = scmp.ne.s32.totalorder %s331, %s333
      %p340 = scmp.eq.s32.totalorder %s45, 1
      %p341 = por %p339, %p340
      %p342 = scmp.ne.s32.totalorder %s333, %s334
      %p343 = scmp.eq.s32.totalorder %s45, 0
      %p344 = por %p342, %p343
      %p345 = scmp.ne.s32.totalorder %s333, %s334
      %p346 = scmp.eq.s32.totalorder %s46, 1
      %p347 = por %p345, %p346
      %p349 = scmp.ne.s32.totalorder %s334, %s348
      %p350 = scmp.eq.s32.totalorder %s46, 0
      %p351 = por %p349, %p350
      %s353 = sadd.s32 %s352, 1
      %p356 = scmp.eq.s32.totalorder %s40, 1
      %p357 = scmp.ne.s32.totalorder %s352, %s354
      %p358 = scmp.eq.s32.totalorder %s40, 0
      %p359 = por %p357, %p358
      %p360 = scmp.ne.s32.totalorder %s352, %s354
      %p361 = scmp.eq.s32.totalorder %s45, 1
      %p362 = por %p360, %p361
      %p363 = scmp.ne.s32.totalorder %s354, %s355
      %p364 = scmp.eq.s32.totalorder %s45, 0
      %p365 = por %p363, %p364
      %p366 = scmp.ne.s32.totalorder %s354, %s355
      %p367 = scmp.eq.s32.totalorder %s46, 1
      %p368 = por %p366, %p367
      %p370 = scmp.ne.s32.totalorder %s355, %s369
      %p371 = scmp.eq.s32.totalorder %s46, 0
      %p372 = por %p370, %p371
      %s374 = sadd.s32 %s373, 1
      %p377 = scmp.eq.s32.totalorder %s40, 1
      %p378 = scmp.ne.s32.totalorder %s373, %s375
      %p379 = scmp.eq.s32.totalorder %s40, 0
      %p380 = por %p378, %p379
      %p381 = scmp.ne.s32.totalorder %s373, %s375
      %p382 = scmp.eq.s32.totalorder %s45, 1
      %p383 = por %p381, %p382
      %p384 = scmp.ne.s32.totalorder %s375, %s376
      %p385 = scmp.eq.s32.totalorder %s45, 0
      %p386 = por %p384, %p385
      %p387 = scmp.ne.s32.totalorder %s375, %s376
      %p388 = scmp.eq.s32.totalorder %s46, 1
      %p389 = por %p387, %p388
      %p391 = scmp.ne.s32.totalorder %s376, %s390
      %p392 = scmp.eq.s32.totalorder %s46, 0
      %p393 = por %p391, %p392
      %s395 = sadd.s32 %s394, 1
      %p398 = scmp.eq.s32.totalorder %s40, 1
      %p399 = scmp.ne.s32.totalorder %s394, %s396
      %p400 = scmp.eq.s32.totalorder %s40, 0
      %p401 = por %p399, %p400
      %p402 = scmp.ne.s32.totalorder %s394, %s396
      %p403 = scmp.eq.s32.totalorder %s45, 1
      %p404 = por %p402, %p403
      %p405 = scmp.ne.s32.totalorder %s396, %s397
      %p406 = scmp.eq.s32.totalorder %s45, 0
      %p407 = por %p405, %p406
      %p408 = scmp.ne.s32.totalorder %s396, %s397
      %p409 = scmp.eq.s32.totalorder %s46, 1
      %p410 = por %p408, %p409
      %p412 = scmp.ne.s32.totalorder %s397, %s411
      %p413 = scmp.eq.s32.totalorder %s46, 0
      %p414 = por %p412, %p413
      %s416 = sadd.s32 %s415, 1
      %p419 = scmp.eq.s32.totalorder %s40, 1
      %p420 = scmp.ne.s32.totalorder %s415, %s417
      %p421 = scmp.eq.s32.totalorder %s40, 0
      %p422 = por %p420, %p421
      %p423 = scmp.ne.s32.totalorder %s415, %s417
      %p424 = scmp.eq.s32.totalorder %s45, 1
      %p425 = por %p423, %p424
      %p426 = scmp.ne.s32.totalorder %s417, %s418
      %p427 = scmp.eq.s32.totalorder %s45, 0
      %p428 = por %p426, %p427
      %p429 = scmp.ne.s32.totalorder %s417, %s418
      %p430 = scmp.eq.s32.totalorder %s46, 1
      %p431 = por %p429, %p430
      %p433 = scmp.ne.s32.totalorder %s418, %s432
      %p434 = scmp.eq.s32.totalorder %s46, 0
      %p435 = por %p433, %p434
      %s437 = sadd.s32 %s436, 1
      %p440 = scmp.eq.s32.totalorder %s40, 1
      %p441 = scmp.ne.s32.totalorder %s436, %s438
      %p442 = scmp.eq.s32.totalorder %s40, 0
      %p443 = por %p441, %p442
      %p444 = scmp.ne.s32.totalorder %s436, %s438
      %p445 = scmp.eq.s32.totalorder %s45, 1
      %p446 = por %p444, %p445
      %p447 = scmp.ne.s32.totalorder %s438, %s439
      %p448 = scmp.eq.s32.totalorder %s45, 0
      %p449 = por %p447, %p448
      %p450 = scmp.ne.s32.totalorder %s438, %s439
      %p451 = scmp.eq.s32.totalorder %s46, 1
      %p452 = por %p450, %p451
      %p454 = scmp.ne.s32.totalorder %s439, %s453
      %p455 = scmp.eq.s32.totalorder %s46, 0
      %p456 = por %p454, %p455
      %s458 = sadd.s32 %s457, 1
      %p461 = scmp.eq.s32.totalorder %s40, 1
      %p462 = scmp.ne.s32.totalorder %s457, %s459
      %p463 = scmp.eq.s32.totalorder %s40, 0
      %p464 = por %p462, %p463
      %p465 = scmp.ne.s32.totalorder %s457, %s459
      %p466 = scmp.eq.s32.totalorder %s45, 1
      %p467 = por %p465, %p466
      %p468 = scmp.ne.s32.totalorder %s459, %s460
      %p469 = scmp.eq.s32.totalorder %s45, 0
      %p470 = por %p468, %p469
      %p471 = scmp.ne.s32.totalorder %s459, %s460
      %p472 = scmp.eq.s32.totalorder %s46, 1
      %p473 = por %p471, %p472
      %p475 = scmp.ne.s32.totalorder %s460, %s474
      %p476 = scmp.eq.s32.totalorder %s46, 0
      %p477 = por %p475, %p476
      %s479 = sadd.s32 %s478, 1
      %p482 = scmp.eq.s32.totalorder %s40, 1
      %p483 = scmp.ne.s32.totalorder %s478, %s480
      %p484 = scmp.eq.s32.totalorder %s40, 0
      %p485 = por %p483, %p484
      %p486 = scmp.ne.s32.totalorder %s478, %s480
      %p487 = scmp.eq.s32.totalorder %s45, 1
      %p488 = por %p486, %p487
      %p489 = scmp.ne.s32.totalorder %s480, %s481
      %p490 = scmp.eq.s32.totalorder %s45, 0
      %p491 = por %p489, %p490
      %p492 = scmp.ne.s32.totalorder %s480, %s481
      %p493 = scmp.eq.s32.totalorder %s46, 1
      %p494 = por %p492, %p493
      %p496 = scmp.ne.s32.totalorder %s481, %s495
      %p497 = scmp.eq.s32.totalorder %s46, 0
      %p498 = por %p496, %p497
      %s500 = sadd.s32 %s499, 1
      %p503 = scmp.eq.s32.totalorder %s40, 1
      %p504 = scmp.ne.s32.totalorder %s499, %s501
      %p505 = scmp.eq.s32.totalorder %s40, 0
      %p506 = por %p504, %p505
      %p507 = scmp.ne.s32.totalorder %s499, %s501
      %p508 = scmp.eq.s32.totalorder %s45, 1
      %p509 = por %p507, %p508
      %p510 = scmp.ne.s32.totalorder %s501, %s502
      %p511 = scmp.eq.s32.totalorder %s45, 0
      %p512 = por %p510, %p511
      %p513 = scmp.ne.s32.totalorder %s501, %s502
      %p514 = scmp.eq.s32.totalorder %s46, 1
      %p515 = por %p513, %p514
      %p517 = scmp.ne.s32.totalorder %s502, %s516
      %p518 = scmp.eq.s32.totalorder %s46, 0
      %p519 = por %p517, %p518
      %s520 = ssub.s32 %s40, %s47
      %p521 = scmp.eq.s32.totalorder %s520, 0
      %s523 = sadd.s32 %s522, 1
      %s524 = scalar_select %p521, %s522, %s523
      %p527 = pneg %p521
      %p528 = scmp.eq.s32.totalorder %s40, 1
      %p529 = por %p527, %p528
      %p530 = scmp.ne.s32.totalorder %s522, %s525
      %p531 = scmp.eq.s32.totalorder %s40, 0
      %p532 = por %p530, %p531
      %p533 = scmp.ne.s32.totalorder %s522, %s525
      %p534 = scmp.eq.s32.totalorder %s45, 1
      %p535 = por %p533, %p534
      %p536 = scmp.ne.s32.totalorder %s525, %s526
      %p537 = scmp.eq.s32.totalorder %s45, 0
      %p538 = por %p536, %p537
      %p539 = scmp.ne.s32.totalorder %s525, %s526
      %p540 = scmp.eq.s32.totalorder %s46, 1
      %p541 = por %p539, %p540
      %p543 = scmp.ne.s32.totalorder %s526, %s542
      %p544 = scmp.eq.s32.totalorder %s46, 0
      %p545 = por %p543, %p544
      %p546 = scmp.le.s32.totalorder 1, %s40
      %p547 = scmp.lt.s32.totalorder %s40, 3
      %p548 = pnand %p546, %p547
      %p549 = pneg %p548
      // Predicated region
      $region9: #{tpu_custom_call.1} parent=5 // pred_check
        _
      $region10: #{tpu_custom_call.1} parent=5 // pred_check_branch
        %551 = sbr.rel (%p548) target = $region12
      $region11: #{tpu_custom_call.1} parent=5 // pred_region
        %s552 = ssub.s32 %s40, 1
        // Predicated region
        $region13: #{tpu_custom_call.1} parent=11 // pred_check
          %p553 = pneg %p113
        $region14: #{tpu_custom_call.1} parent=11 // pred_check_branch
          %555 = sbr.rel (%p553) target = $region16
        $region15: #{tpu_custom_call.1} parent=11 // pred_region
          %s557 = ssub.s32 3072, 3072
          %558 = vsyncadd [#allocation6], %s557
          %s559 = sshll.u32 [#allocation7], 4
          %s560 = int_to_ptr.vmem [resolvable:$true] %s559
          %565 = dma.hbm_to_vmem [thread:$0]  %s2, 3072, %s560, [#allocation6], 192, 192, 12
        $region16: #{tpu_custom_call.1} parent=11 // pred_fallthru
          _
        // Predicated region
        $region17: #{tpu_custom_call.1} parent=11 // pred_check
          %p566 = pneg %p134
        $region18: #{tpu_custom_call.1} parent=11 // pred_check_branch
          %568 = sbr.rel (%p566) target = $region20
        $region19: #{tpu_custom_call.1} parent=11 // pred_region
          _
        $region20: #{tpu_custom_call.1} parent=11 // pred_fallthru
          _
        // Predicated region
        $region21: #{tpu_custom_call.1} parent=11 // pred_check
          %p569 = pneg %p155
        $region22: #{tpu_custom_call.1} parent=11 // pred_check_branch
          %571 = sbr.rel (%p569) target = $region24
        $region23: #{tpu_custom_call.1} parent=11 // pred_region
          %s573 = ssub.s32 1024, 1024
          %574 = vsyncadd [#allocation9], %s573
          %s575 = sshll.u32 [#allocation8], 4
          %s576 = int_to_ptr.vmem [resolvable:$true] %s575
          %581 = dma.hbm_to_vmem [thread:$0]  %s4, 1024, %s576, [#allocation9], 64, 64, 4
        $region24: #{tpu_custom_call.1} parent=11 // pred_fallthru
          _
        // Predicated region
        $region25: #{tpu_custom_call.1} parent=11 // pred_check
          %p582 = pneg %p176
        $region26: #{tpu_custom_call.1} parent=11 // pred_check_branch
          %584 = sbr.rel (%p582) target = $region28
        $region27: #{tpu_custom_call.1} parent=11 // pred_region
          _
        $region28: #{tpu_custom_call.1} parent=11 // pred_fallthru
          _
        // Predicated region
        $region29: #{tpu_custom_call.1} parent=11 // pred_check
          %p585 = pneg %p197
        $region30: #{tpu_custom_call.1} parent=11 // pred_check_branch
          %587 = sbr.rel (%p585) target = $region32
        $region31: #{tpu_custom_call.1} parent=11 // pred_region
          _
        $region32: #{tpu_custom_call.1} parent=11 // pred_fallthru
          _
        // Predicated region
        $region33: #{tpu_custom_call.1} parent=11 // pred_check
          %p588 = pneg %p218
        $region34: #{tpu_custom_call.1} parent=11 // pred_check_branch
          %590 = sbr.rel (%p588) target = $region36
        $region35: #{tpu_custom_call.1} parent=11 // pred_region
          _
        $region36: #{tpu_custom_call.1} parent=11 // pred_fallthru
          _
        // Predicated region
        $region37: #{tpu_custom_call.1} parent=11 // pred_check
          %p591 = pneg %p239
        $region38: #{tpu_custom_call.1} parent=11 // pred_check_branch
          %593 = sbr.rel (%p591) target = $region40
        $region39: #{tpu_custom_call.1} parent=11 // pred_region
          %s595 = ssub.s32 1024, 1024
          %596 = vsyncadd [#allocation9], %s595
          %s597 = sshll.u32 [#allocation10], 4
          %s598 = int_to_ptr.vmem [resolvable:$true] %s597
          %603 = dma.hbm_to_vmem [thread:$0]  %s8, 1024, %s598, [#allocation9], 64, 64, 4
        $region40: #{tpu_custom_call.1} parent=11 // pred_fallthru
          _
        // Predicated region
        $region41: #{tpu_custom_call.1} parent=11 // pred_check
          %p604 = pneg %p260
        $region42: #{tpu_custom_call.1} parent=11 // pred_check_branch
          %606 = sbr.rel (%p604) target = $region44
        $region43: #{tpu_custom_call.1} parent=11 // pred_region
          _
        $region44: #{tpu_custom_call.1} parent=11 // pred_fallthru
          _
        // Predicated region
        $region45: #{tpu_custom_call.1} parent=11 // pred_check
          %p607 = pneg %p281
        $region46: #{tpu_custom_call.1} parent=11 // pred_check_branch
          %609 = sbr.rel (%p607) target = $region48
        $region47: #{tpu_custom_call.1} parent=11 // pred_region
          %s611 = ssub.s32 2048, 2048
          %612 = vsyncadd [#allocation12], %s611
          %s613 = sshll.u32 [#allocation11], 4
          %s614 = int_to_ptr.vmem [resolvable:$true] %s613
          %619 = dma.hbm_to_vmem [thread:$0]  %s10, 2048, %s614, [#allocation12], 128, 128, 8
        $region48: #{tpu_custom_call.1} parent=11 // pred_fallthru
          _
        // Predicated region
        $region49: #{tpu_custom_call.1} parent=11 // pred_check
          %p620 = pneg %p302
        $region50: #{tpu_custom_call.1} parent=11 // pred_check_branch
          %622 = sbr.rel (%p620) target = $region52
        $region51: #{tpu_custom_call.1} parent=11 // pred_region
          _
        $region52: #{tpu_custom_call.1} parent=11 // pred_fallthru
          _
        // Predicated region
        $region53: #{tpu_custom_call.1} parent=11 // pred_check
          %p623 = pneg %p323
        $region54: #{tpu_custom_call.1} parent=11 // pred_check_branch
          %625 = sbr.rel (%p623) target = $region56
        $region55: #{tpu_custom_call.1} parent=11 // pred_region
          %s627 = ssub.s32 1024, 1024
          %628 = vsyncadd [#allocation12], %s627
          %s629 = sshll.u32 [#allocation13], 4
          %s630 = int_to_ptr.vmem [resolvable:$true] %s629
          %635 = dma.hbm_to_vmem [thread:$0]  %s12, 1024, %s630, [#allocation12], 64, 64, 4
        $region56: #{tpu_custom_call.1} parent=11 // pred_fallthru
          _
        // Predicated region
        $region57: #{tpu_custom_call.1} parent=11 // pred_check
          %p636 = pneg %p344
        $region58: #{tpu_custom_call.1} parent=11 // pred_check_branch
          %638 = sbr.rel (%p636) target = $region60
        $region59: #{tpu_custom_call.1} parent=11 // pred_region
          _
        $region60: #{tpu_custom_call.1} parent=11 // pred_fallthru
          _
        // Predicated region
        $region61: #{tpu_custom_call.1} parent=11 // pred_check
          %p639 = pneg %p365
        $region62: #{tpu_custom_call.1} parent=11 // pred_check_branch
          %641 = sbr.rel (%p639) target = $region64
        $region63: #{tpu_custom_call.1} parent=11 // pred_region
          _
        $region64: #{tpu_custom_call.1} parent=11 // pred_fallthru
          _
        // Predicated region
        $region65: #{tpu_custom_call.1} parent=11 // pred_check
          %p642 = pneg %p386
        $region66: #{tpu_custom_call.1} parent=11 // pred_check_branch
          %644 = sbr.rel (%p642) target = $region68
        $region67: #{tpu_custom_call.1} parent=11 // pred_region
          _
        $region68: #{tpu_custom_call.1} parent=11 // pred_fallthru
          _
        // Predicated region
        $region69: #{tpu_custom_call.1} parent=11 // pred_check
          %p645 = pneg %p407
        $region70: #{tpu_custom_call.1} parent=11 // pred_check_branch
          %647 = sbr.rel (%p645) target = $region72
        $region71: #{tpu_custom_call.1} parent=11 // pred_region
          %s649 = ssub.s32 2048, 2048
          %650 = vsyncadd [#allocation15], %s649
          %s651 = sshll.u32 [#allocation14], 4
          %s652 = int_to_ptr.vmem [resolvable:$true] %s651
          %657 = dma.hbm_to_vmem [thread:$0]  %s16, 2048, %s652, [#allocation15], 128, 128, 8
        $region72: #{tpu_custom_call.1} parent=11 // pred_fallthru
          _
        // Predicated region
        $region73: #{tpu_custom_call.1} parent=11 // pred_check
          %p658 = pneg %p428
        $region74: #{tpu_custom_call.1} parent=11 // pred_check_branch
          %660 = sbr.rel (%p658) target = $region76
        $region75: #{tpu_custom_call.1} parent=11 // pred_region
          _
        $region76: #{tpu_custom_call.1} parent=11 // pred_fallthru
          _
        // Predicated region
        $region77: #{tpu_custom_call.1} parent=11 // pred_check
          %p661 = pneg %p449
        $region78: #{tpu_custom_call.1} parent=11 // pred_check_branch
          %663 = sbr.rel (%p661) target = $region80
        $region79: #{tpu_custom_call.1} parent=11 // pred_region
          %s665 = ssub.s32 2048, 2048
          %666 = vsyncadd [#allocation15], %s665
          %s667 = sshll.u32 [#allocation16], 4
          %s668 = int_to_ptr.vmem [resolvable:$true] %s667
          %673 = dma.hbm_to_vmem [thread:$0]  %s18, 2048, %s668, [#allocation15], 64, 64, 4
        $region80: #{tpu_custom_call.1} parent=11 // pred_fallthru
          _
        // Predicated region
        $region81: #{tpu_custom_call.1} parent=11 // pred_check
          %p674 = pneg %p470
        $region82: #{tpu_custom_call.1} parent=11 // pred_check_branch
          %676 = sbr.rel (%p674) target = $region84
        $region83: #{tpu_custom_call.1} parent=11 // pred_region
          _
        $region84: #{tpu_custom_call.1} parent=11 // pred_fallthru
          _
        // Predicated region
        $region85: #{tpu_custom_call.1} parent=11 // pred_check
          %p677 = pneg %p491
        $region86: #{tpu_custom_call.1} parent=11 // pred_check_branch
          %679 = sbr.rel (%p677) target = $region88
        $region87: #{tpu_custom_call.1} parent=11 // pred_region
          _
        $region88: #{tpu_custom_call.1} parent=11 // pred_fallthru
          _
        // Predicated region
        $region89: #{tpu_custom_call.1} parent=11 // pred_check
          %p680 = pneg %p512
        $region90: #{tpu_custom_call.1} parent=11 // pred_check_branch
          %682 = sbr.rel (%p680) target = $region92
        $region91: #{tpu_custom_call.1} parent=11 // pred_region
          _
        $region92: #{tpu_custom_call.1} parent=11 // pred_fallthru
          _
      $region12: #{tpu_custom_call.1} parent=5 // pred_fallthru
        _
      %p683 = scmp.lt.s32.totalorder %s40, 2
      // Predicated region
      $region93: #{tpu_custom_call.1} parent=5 // pred_check
        %p684 = pneg %p683
      $region94: #{tpu_custom_call.1} parent=5 // pred_check_branch
        %686 = sbr.rel (%p684) target = $region96
      $region95: #{tpu_custom_call.1} parent=5 // pred_region
        // Predicated region
        $region97: #{tpu_custom_call.1} parent=95 // pred_check
          %p687 = pneg %p60
        $region98: #{tpu_custom_call.1} parent=95 // pred_check_branch
          %689 = sbr.rel (%p687) target = $region100
        $region99: #{tpu_custom_call.1} parent=95 // pred_region
          %s690 = sand.u32 %s50, 1
          %s691 = scalar_lea.sflag [#allocation3], %s690
          %s692 = sand.u32 %s50, 1
          %s693 = smul.addr %s692, 16
          %s694 = scalar_lea.vmem [#allocation2], %s693
          %s696 = ssub.s32 256, 256
          %697 = vsyncadd %s691, %s696
          %s698 = smul.addr %s40, 2
          %s699 = smul.addr %s698, 128
          %s700 = scalar_lea.hbm %s0, %s699
          %s701 = sshll.u32 %s694, 4
          %s702 = int_to_ptr.vmem [resolvable:$true] %s701
          %707 = dma.hbm_to_vmem [thread:$0]  %s700, 256, %s702, %s691, 128, 128, 8
        $region100: #{tpu_custom_call.1} parent=95 // pred_fallthru
          _
        // Predicated region
        $region101: #{tpu_custom_call.1} parent=95 // pred_check
          %p708 = pneg %p86
        $region102: #{tpu_custom_call.1} parent=95 // pred_check_branch
          %710 = sbr.rel (%p708) target = $region104
        $region103: #{tpu_custom_call.1} parent=95 // pred_region
          %s711 = sand.u32 %s40, 1
          %s712 = scalar_lea.sflag [#allocation6], %s711
          %s713 = sand.u32 %s76, 1
          %s714 = smul.addr %s713, 16
          %s715 = scalar_lea.vmem [#allocation5], %s714
          %s717 = ssub.s32 256, 256
          %718 = vsyncadd %s712, %s717
          %s719 = smul.addr %s40, 2
          %s720 = smul.addr %s719, 128
          %s721 = scalar_lea.hbm %s1, %s720
          %s722 = sshll.u32 %s715, 4
          %s723 = int_to_ptr.vmem [resolvable:$true] %s722
          %728 = dma.hbm_to_vmem [thread:$0]  %s721, 256, %s723, %s712, 128, 128, 8
        $region104: #{tpu_custom_call.1} parent=95 // pred_fallthru
          _
      $region96: #{tpu_custom_call.1} parent=5 // pred_fallthru
        _
      %p729 = scmp.le.s32.totalorder 1, %s40
      %p730 = scmp.lt.s32.totalorder %s40, 3
      %p731 = pnand %p729, %p730
      %p732 = pneg %p731
      // Predicated region
      $region105: #{tpu_custom_call.1} parent=5 // pred_check
        _
      $region106: #{tpu_custom_call.1} parent=5 // pred_check_branch
        %734 = sbr.rel (%p731) target = $region108
      $region107: #{tpu_custom_call.1} parent=5 // pred_region
        %s735 = ssub.s32 %s40, 1
        %s736 = sand.u32 %s53, 1
        %s737 = scalar_lea.sflag [#allocation3], %s736
        %s738 = sand.u32 %s53, 1
        %s739 = smul.addr %s738, 16
        %s740 = scalar_lea.vmem [#allocation2], %s739
        // Predicated region
        $region109: #{tpu_custom_call.1} parent=107 // pred_check
          %p741 = pneg %p66
        $region110: #{tpu_custom_call.1} parent=107 // pred_check_branch
          %743 = sbr.rel (%p741) target = $region112
        $region111: #{tpu_custom_call.1} parent=107 // pred_region
          %744 = dma.done %s737, 256
        $region112: #{tpu_custom_call.1} parent=107 // pred_fallthru
          _
        %s745 = sand.u32 %s45, 1
        %s746 = scalar_lea.sflag [#allocation6], %s745
        %s747 = sand.u32 %s79, 1
        %s748 = smul.addr %s747, 16
        %s749 = scalar_lea.vmem [#allocation5], %s748
        // Predicated region
        $region113: #{tpu_custom_call.1} parent=107 // pred_check
          %p750 = pneg %p92
        $region114: #{tpu_custom_call.1} parent=107 // pred_check_branch
          %752 = sbr.rel (%p750) target = $region116
        $region115: #{tpu_custom_call.1} parent=107 // pred_region
          %753 = dma.done %s746, 256
        $region116: #{tpu_custom_call.1} parent=107 // pred_fallthru
          _
        // Predicated region
        $region117: #{tpu_custom_call.1} parent=107 // pred_check
          %p754 = pneg %p113
        $region118: #{tpu_custom_call.1} parent=107 // pred_check_branch
          %756 = sbr.rel (%p754) target = $region120
        $region119: #{tpu_custom_call.1} parent=107 // pred_region
          %757 = dma.done [#allocation6], 3072
        $region120: #{tpu_custom_call.1} parent=107 // pred_fallthru
          _
        // Predicated region
        $region121: #{tpu_custom_call.1} parent=107 // pred_check
          %p758 = pneg %p155
        $region122: #{tpu_custom_call.1} parent=107 // pred_check_branch
          %760 = sbr.rel (%p758) target = $region124
        $region123: #{tpu_custom_call.1} parent=107 // pred_region
          %761 = dma.done [#allocation9], 1024
        $region124: #{tpu_custom_call.1} parent=107 // pred_fallthru
          _
        // Predicated region
        $region125: #{tpu_custom_call.1} parent=107 // pred_check
          %p762 = pneg %p239
        $region126: #{tpu_custom_call.1} parent=107 // pred_check_branch
          %764 = sbr.rel (%p762) target = $region128
        $region127: #{tpu_custom_call.1} parent=107 // pred_region
          %765 = dma.done [#allocation9], 1024
        $region128: #{tpu_custom_call.1} parent=107 // pred_fallthru
          _
        // Predicated region
        $region129: #{tpu_custom_call.1} parent=107 // pred_check
          %p766 = pneg %p281
        $region130: #{tpu_custom_call.1} parent=107 // pred_check_branch
          %768 = sbr.rel (%p766) target = $region132
        $region131: #{tpu_custom_call.1} parent=107 // pred_region
          %769 = dma.done [#allocation12], 2048
        $region132: #{tpu_custom_call.1} parent=107 // pred_fallthru
          _
        // Predicated region
        $region133: #{tpu_custom_call.1} parent=107 // pred_check
          %p770 = pneg %p323
        $region134: #{tpu_custom_call.1} parent=107 // pred_check_branch
          %772 = sbr.rel (%p770) target = $region136
        $region135: #{tpu_custom_call.1} parent=107 // pred_region
          %773 = dma.done [#allocation12], 1024
        $region136: #{tpu_custom_call.1} parent=107 // pred_fallthru
          _
        // Predicated region
        $region137: #{tpu_custom_call.1} parent=107 // pred_check
          %p774 = pneg %p407
        $region138: #{tpu_custom_call.1} parent=107 // pred_check_branch
          %776 = sbr.rel (%p774) target = $region140
        $region139: #{tpu_custom_call.1} parent=107 // pred_region
          %777 = dma.done [#allocation15], 2048
        $region140: #{tpu_custom_call.1} parent=107 // pred_fallthru
          _
        // Predicated region
        $region141: #{tpu_custom_call.1} parent=107 // pred_check
          %p778 = pneg %p449
        $region142: #{tpu_custom_call.1} parent=107 // pred_check_branch
          %780 = sbr.rel (%p778) target = $region144
        $region143: #{tpu_custom_call.1} parent=107 // pred_region
          %781 = dma.done [#allocation15], 2048
        $region144: #{tpu_custom_call.1} parent=107 // pred_fallthru
          _
        %s782 = sand.u32 %s53, 1
        %s783 = scalar_lea.sflag [#allocation3], %s782
        %s784 = sand.u32 %s53, 1
        %s785 = smul.addr %s784, 16
        %s786 = scalar_lea.vmem [#allocation2], %s785
        %p787 = pneg %p66
        %p788 = pneg %p63
        %s789 = sand.u32 %s45, 1
        %s790 = scalar_lea.sflag [#allocation6], %s789
        %s791 = sand.u32 %s79, 1
        %s792 = smul.addr %s791, 16
        %s793 = scalar_lea.vmem [#allocation5], %s792
        %p794 = pneg %p92
        %p795 = pneg %p89
        %p796 = pneg %p113
        %p797 = pneg %p110
        %p798 = pneg %p134
        %p799 = pneg %p131
        %p800 = pneg %p155
        %p801 = pneg %p152
        %p802 = pneg %p176
        %p803 = pneg %p173
        %p804 = pneg %p197
        %p805 = pneg %p194
        %p806 = pneg %p218
        %p807 = pneg %p215
        %p808 = pneg %p239
        %p809 = pneg %p236
        %p810 = pneg %p260
        %p811 = pneg %p257
        %p812 = pneg %p281
        %p813 = pneg %p278
        %p814 = pneg %p302
        %p815 = pneg %p299
        %p816 = pneg %p323
        %p817 = pneg %p320
        %p818 = pneg %p344
        %p819 = pneg %p341
        %p820 = pneg %p365
        %p821 = pneg %p362
        %p822 = pneg %p386
        %p823 = pneg %p383
        %p824 = pneg %p407
        %p825 = pneg %p404
        %p826 = pneg %p428
        %p827 = pneg %p425
        %p828 = pneg %p449
        %p829 = pneg %p446
        %p830 = pneg %p470
        %p831 = pneg %p467
        %p832 = pneg %p491
        %p833 = pneg %p488
        %p834 = pneg %p512
        %p835 = pneg %p509
        %p836 = pneg %p538
        %p837 = pneg %p535
        %s838 = sand.u32 %s525, 1
        %s839 = scalar_lea.sflag [#allocation4], %s838
        %s840 = sand.u32 %s525, 1
        %s841 = smul.addr %s840, 16
        %s842 = scalar_lea.vmem [#allocation17], %s841
        %v844 = vld [vmem:[%s740] sm:$0xff]
        %v845 = vld [vmem:[%s740 + $0x8] sm:$0xff]
        %v846 = vld [vmem:[%s749] sm:$0xff]
        %v847 = vld [vmem:[%s749 + $0x8] sm:$0xff]
        %v848 = vpack.c.bf16 %v847, %v846
        %v849 = vld [vmem:[#allocation7] sm:$0xff]
        %v850 = vld [vmem:[#allocation7 + $0x8] sm:$0xf]
        %v851 = vld [vmem:[#allocation7 + $0xc] sm:$0xff]
        %v852 = vld [vmem:[#allocation7 + $0x14] sm:$0xf]
        %v853 = vld [vmem:[#allocation7 + $0x18] sm:$0xff]
        %v854 = vld [vmem:[#allocation7 + $0x20] sm:$0xf]
        %v855 = vld [vmem:[#allocation7 + $0x24] sm:$0xff]
        %v856 = vld [vmem:[#allocation7 + $0x2c] sm:$0xf]
        %v857 = vld [vmem:[#allocation7 + $0x30] sm:$0xff]
        %v858 = vld [vmem:[#allocation7 + $0x38] sm:$0xf]
        %v859 = vld [vmem:[#allocation7 + $0x3c] sm:$0xff]
        %v860 = vld [vmem:[#allocation7 + $0x44] sm:$0xf]
        %v861 = vld [vmem:[#allocation7 + $0x48] sm:$0xff]
        %v862 = vld [vmem:[#allocation7 + $0x50] sm:$0xf]
        %v863 = vld [vmem:[#allocation7 + $0x54] sm:$0xff]
        %v864 = vld [vmem:[#allocation7 + $0x5c] sm:$0xf]
        %v865 = vld [vmem:[#allocation7 + $0x60] sm:$0xff]
        %v866 = vld [vmem:[#allocation7 + $0x68] sm:$0xf]
        %v867 = vld [vmem:[#allocation7 + $0x6c] sm:$0xff]
        %v868 = vld [vmem:[#allocation7 + $0x74] sm:$0xf]
        %v869 = vld [vmem:[#allocation7 + $0x78] sm:$0xff]
        %v870 = vld [vmem:[#allocation7 + $0x80] sm:$0xf]
        %v871 = vld [vmem:[#allocation7 + $0x84] sm:$0xff]
        %v872 = vld [vmem:[#allocation7 + $0x8c] sm:$0xf]
        %v873 = vld [vmem:[#allocation7 + $0x90] sm:$0xff]
        %v874 = vld [vmem:[#allocation7 + $0x98] sm:$0xf]
        %v875 = vld [vmem:[#allocation7 + $0x9c] sm:$0xff]
        %v876 = vld [vmem:[#allocation7 + $0xa4] sm:$0xf]
        %v877 = vld [vmem:[#allocation7 + $0xa8] sm:$0xff]
        %v878 = vld [vmem:[#allocation7 + $0xb0] sm:$0xf]
        %v879 = vld [vmem:[#allocation7 + $0xb4] sm:$0xff]
        %v880 = vld [vmem:[#allocation7 + $0xbc] sm:$0xf]
        %v881 = vld [vmem:[%s3] sm:$0x7]
        %v883 = vlaneseq
        %v884 = vshrl.u32 %v883, 7
        %v885 = vsub.s32 0, %v884
        %v886 = vrot.slane %v881, %v885
        %v887 = vlaneseq
        %v888 = vshrl.u32 %v887, 7
        %v889 = vsub.s32 1, %v888
        %v890 = vrot.slane %v881, %v889
        %v891 = vlaneseq
        %v892 = vshrl.u32 %v891, 7
        %v893 = vsub.s32 2, %v892
        %v894 = vrot.slane %v881, %v893
        %v930 = vunpack.c.l.b16 %v849
        %v931 = vunpack.c.h.b16 %v849
        %v932 = vunpack.c.l.b16 %v850
        %v933 = vunpack.c.l.b16 %v851
        %v934 = vunpack.c.h.b16 %v851
        %v935 = vunpack.c.l.b16 %v852
        %v936 = vunpack.c.l.b16 %v853
        %v937 = vunpack.c.h.b16 %v853
        %v938 = vunpack.c.l.b16 %v854
        %v939 = vunpack.c.l.b16 %v855
        %v940 = vunpack.c.h.b16 %v855
        %v941 = vunpack.c.l.b16 %v856
        %v942 = vunpack.c.l.b16 %v857
        %v943 = vunpack.c.h.b16 %v857
        %v944 = vunpack.c.l.b16 %v858
        %v945 = vunpack.c.l.b16 %v859
        %v946 = vunpack.c.h.b16 %v859
        %v947 = vunpack.c.l.b16 %v860
        %v948 = vunpack.c.l.b16 %v861
        %v949 = vunpack.c.h.b16 %v861
        %v950 = vunpack.c.l.b16 %v862
        %v951 = vunpack.c.l.b16 %v863
        %v952 = vunpack.c.h.b16 %v863
        %v953 = vunpack.c.l.b16 %v864
        %v954 = vunpack.c.l.b16 %v865
        %v955 = vunpack.c.h.b16 %v865
        %v956 = vunpack.c.l.b16 %v866
        %v957 = vunpack.c.l.b16 %v867
        %v958 = vunpack.c.h.b16 %v867
        %v959 = vunpack.c.l.b16 %v868
        %v960 = vunpack.c.l.b16 %v869
        %v961 = vunpack.c.h.b16 %v869
        %v962 = vunpack.c.l.b16 %v870
        %v963 = vunpack.c.l.b16 %v871
        %v964 = vunpack.c.h.b16 %v871
        %v965 = vunpack.c.l.b16 %v872
        %v966 = vunpack.c.l.b16 %v873
        %v967 = vunpack.c.h.b16 %v873
        %v968 = vunpack.c.l.b16 %v874
        %v969 = vunpack.c.l.b16 %v875
        %v970 = vunpack.c.h.b16 %v875
        %v971 = vunpack.c.l.b16 %v876
        %v972 = vunpack.c.l.b16 %v877
        %v973 = vunpack.c.h.b16 %v877
        %v974 = vunpack.c.l.b16 %v878
        %v975 = vunpack.c.l.b16 %v879
        %v976 = vunpack.c.h.b16 %v879
        %v977 = vunpack.c.l.b16 %v880
        %v978 = vpack.c.b16 %v933, %v930
        %v979 = vpack.c.b16 %v934, %v931
        %v980 = vpack.c.b16 %v935, %v932
        %v981 = vpack.c.b16 %v939, %v936
        %v982 = vpack.c.b16 %v940, %v937
        %v983 = vpack.c.b16 %v941, %v938
        %v984 = vpack.c.b16 %v945, %v942
        %v985 = vpack.c.b16 %v946, %v943
        %v986 = vpack.c.b16 %v947, %v944
        %v987 = vpack.c.b16 %v951, %v948
        %v988 = vpack.c.b16 %v952, %v949
        %v989 = vpack.c.b16 %v953, %v950
        %v990 = vpack.c.b16 %v957, %v954
        %v991 = vpack.c.b16 %v958, %v955
        %v992 = vpack.c.b16 %v959, %v956
        %v993 = vpack.c.b16 %v963, %v960
        %v994 = vpack.c.b16 %v964, %v961
        %v995 = vpack.c.b16 %v965, %v962
        %v996 = vpack.c.b16 %v969, %v966
        %v997 = vpack.c.b16 %v970, %v967
        %v998 = vpack.c.b16 %v971, %v968
        %v999 = vpack.c.b16 %v975, %v972
        %v1000 = vpack.c.b16 %v976, %v973
        %v1001 = vpack.c.b16 %v977, %v974
        %1026 = vmatprep.subr.bf16.mxu0 %v979
        %1027 = vmatpush1.bf16.msra.mxu0 %v978
        %1028 = vmatprep.subr.bf16.mxu0 %v982
        %1029 = vmatpush1.bf16.msra.mxu0 %v981
        %1030 = vmatprep.subr.bf16.mxu0 %v985
        %1031 = vmatpush1.bf16.msra.mxu0 %v984
        %1032 = vmatprep.subr.bf16.mxu0 %v988
        %1033 = vmatpush1.bf16.msra.mxu0 %v987
        %1034 = vmatprep.subr.bf16.mxu0 %v991
        %1035 = vmatpush1.bf16.msra.mxu0 %v990
        %1036 = vmatprep.subr.bf16.mxu0 %v994
        %1037 = vmatpush1.bf16.msra.mxu0 %v993
        %1038 = vmatprep.subr.bf16.mxu0 %v997
        %1039 = vmatpush1.bf16.msra.mxu0 %v996
        %1040 = vmatprep.subr.bf16.mxu0 %v1000
        %1041 = vmatpush1.bf16.msra.mxu0 %v999
        %1042 = vmatprep.subr.bf16.mxu0 0
        %1043 = vmatpush1.bf16.msra.mxu0 0
        %1044 = vmatprep.subr.bf16.mxu0 0
        %1045 = vmatpush1.bf16.msra.mxu0 0
        %1046 = vmatprep.subr.bf16.mxu0 0
        %1047 = vmatpush1.bf16.msra.mxu0 0
        %1048 = vmatprep.subr.bf16.mxu0 0
        %1049 = vmatpush1.bf16.msra.mxu0 0
        %1050 = vmatprep.subr.bf16.mxu0 0
        %1051 = vmatpush1.bf16.msra.mxu0 0
        %1052 = vmatprep.subr.bf16.mxu0 0
        %1053 = vmatpush1.bf16.msra.mxu0 0
        %1054 = vmatprep.subr.bf16.mxu0 0
        %1055 = vmatpush1.bf16.msra.mxu0 0
        %1056 = vmatprep.subr.bf16.mxu0 0
        %1057 = vmatpush1.bf16.msra.mxu0 0
        %1058 = vmatprep.mubr.bf16.mxu0 0
        %1059 = vmatmul.mubr.bf16.gmra.mrb[0].mxu0 %v848
        %v1060 = vpop.f32.mrb[0].mxu0
        %v1061 = vadd.f32 %v886, %v1060
        %v1062 = vpop.f32.mrb[0].mxu0
        %v1063 = vadd.f32 %v890, %v1062
        %v1064 = vpop.f32.mrb[0].mxu0
        %v1065 = vadd.f32 %v886, %v1064
        %v1066 = vpop.f32.mrb[0].mxu0
        %v1067 = vadd.f32 %v890, %v1066
        %1068 = vdwg.mxu0
        %1069 = vmatprep.subr.bf16.mxu0 0
        %1070 = vmatpush1.bf16.msra.mxu0 %v980
        %1071 = vmatprep.subr.bf16.mxu0 0
        %1072 = vmatpush1.bf16.msra.mxu0 %v983
        %1073 = vmatprep.subr.bf16.mxu0 0
        %1074 = vmatpush1.bf16.msra.mxu0 %v986
        %1075 = vmatprep.subr.bf16.mxu0 0
        %1076 = vmatpush1.bf16.msra.mxu0 %v989
        %1077 = vmatprep.subr.bf16.mxu0 0
        %1078 = vmatpush1.bf16.msra.mxu0 %v992
        %1079 = vmatprep.subr.bf16.mxu0 0
        %1080 = vmatpush1.bf16.msra.mxu0 %v995
        %1081 = vmatprep.subr.bf16.mxu0 0
        %1082 = vmatpush1.bf16.msra.mxu0 %v998
        %1083 = vmatprep.subr.bf16.mxu0 0
        %1084 = vmatpush1.bf16.msra.mxu0 %v1001
        %1085 = vmatprep.subr.bf16.mxu0 0
        %1086 = vmatpush1.bf16.msra.mxu0 0
        %1087 = vmatprep.subr.bf16.mxu0 0
        %1088 = vmatpush1.bf16.msra.mxu0 0
        %1089 = vmatprep.subr.bf16.mxu0 0
        %1090 = vmatpush1.bf16.msra.mxu0 0
        %1091 = vmatprep.subr.bf16.mxu0 0
        %1092 = vmatpush1.bf16.msra.mxu0 0
        %1093 = vmatprep.subr.bf16.mxu0 0
        %1094 = vmatpush1.bf16.msra.mxu0 0
        %1095 = vmatprep.subr.bf16.mxu0 0
        %1096 = vmatpush1.bf16.msra.mxu0 0
        %1097 = vmatprep.subr.bf16.mxu0 0
        %1098 = vmatpush1.bf16.msra.mxu0 0
        %1099 = vmatprep.subr.bf16.mxu0 0
        %1100 = vmatpush1.bf16.msra.mxu0 0
        %1101 = vmatprep.mubr.bf16.mxu0 0
        %1102 = vmatmul.mubr.bf16.gmra.mrb[0].mxu0 %v848
        %v1103 = vpop.f32.mrb[0].mxu0
        %v1104 = vadd.f32 %v894, %v1103
        %v1105 = vpop.f32.mrb[0].mxu0
        %v1106 = vpop.f32.mrb[0].mxu0
        %v1107 = vadd.f32 %v894, %v1106
        %v1108 = vpop.f32.mrb[0].mxu0
        %1109 = vdwg.mxu0
        %1112 = vrot.lane.b32.xlu0 %v1061, 96
        %v1113 = vpop.permute.xlu0 %1112
        %1114 = vrot.lane.b32.xlu0 %v1065, 96
        %v1115 = vpop.permute.xlu0 %1114
        %1118 = vrot.lane.b32.xlu0 %v1061, 64
        %v1119 = vpop.permute.xlu0 %1118
        %1120 = vrot.lane.b32.xlu0 %v1065, 64
        %v1121 = vpop.permute.xlu0 %1120
        %1124 = vrot.lane.b32.xlu0 %v1061, 32
        %v1125 = vpop.permute.xlu0 %1124
        %1126 = vrot.lane.b32.xlu0 %v1065, 32
        %v1127 = vpop.permute.xlu0 %1126
        %v1130 = vcombine.low %v1061, %v1119
        %v1131 = vcombine.high %v1061, %v1119
        %v1133 = vunpack.c.l.s4 1983009808
        %v1134 = vunpack.c.0.s8 %v1133
        %v1135 = vlaneseq
        %v1136 = vshrl.u32 %v1135, 7
        %v1137 = vsub.s32 %v1134, %v1136
        %v1138 = vrot.slane %v1130, %v1137
        %v1140 = vunpack.c.l.s4 1983009808
        %v1141 = vunpack.c.0.s8 %v1140
        %v1142 = vlaneseq
        %v1143 = vshrl.u32 %v1142, 7
        %v1144 = vsub.s32 %v1141, %v1143
        %v1145 = vrot.slane %v1131, %v1144
        %v1146 = vcombine.low %v1113, %v1125
        %v1147 = vcombine.high %v1113, %v1125
        %v1149 = vunpack.c.l.s4 1983009808
        %v1150 = vunpack.c.0.s8 %v1149
        %v1151 = vlaneseq
        %v1152 = vshrl.u32 %v1151, 7
        %v1153 = vsub.s32 %v1150, %v1152
        %v1154 = vrot.slane %v1146, %v1153
        %v1156 = vunpack.c.l.s4 1983009808
        %v1157 = vunpack.c.0.s8 %v1156
        %v1158 = vlaneseq
        %v1159 = vshrl.u32 %v1158, 7
        %v1160 = vsub.s32 %v1157, %v1159
        %v1161 = vrot.slane %v1147, %v1160
        %v1162 = vcombine.low %v1138, %v1154
        %v1163 = vcombine.high %v1138, %v1154
        %v1165 = vunpack.c.l.s4 1934713408
        %v1166 = vunpack.c.0.s8 %v1165
        %v1167 = vlaneseq
        %v1168 = vshrl.u32 %v1167, 7
        %v1169 = vsub.s32 %v1166, %v1168
        %v1170 = vrot.slane %v1162, %v1169
        %v1172 = vunpack.c.l.s4 1934713408
        %v1173 = vunpack.c.0.s8 %v1172
        %v1174 = vlaneseq
        %v1175 = vshrl.u32 %v1174, 7
        %v1176 = vsub.s32 %v1173, %v1175
        %v1177 = vrot.slane %v1163, %v1176
        %v1178 = vcombine.low %v1145, %v1161
        %v1179 = vcombine.high %v1145, %v1161
        %v1181 = vunpack.c.l.s4 1934713408
        %v1182 = vunpack.c.0.s8 %v1181
        %v1183 = vlaneseq
        %v1184 = vshrl.u32 %v1183, 7
        %v1185 = vsub.s32 %v1182, %v1184
        %v1186 = vrot.slane %v1178, %v1185
        %v1188 = vunpack.c.l.s4 1934713408
        %v1189 = vunpack.c.0.s8 %v1188
        %v1190 = vlaneseq
        %v1191 = vshrl.u32 %v1190, 7
        %v1192 = vsub.s32 %v1189, %v1191
        %v1193 = vrot.slane %v1179, %v1192
        %v1194 = vcombine.high %v1170, 0.0
        %v1195 = vcombine.high %v1177, 0.0
        %v1196 = vcombine.high %v1186, 0.0
        %v1197 = vcombine.high %v1193, 0.0
        %v1198 = vcombine.low %v1065, %v1121
        %v1199 = vcombine.high %v1065, %v1121
        %v1201 = vunpack.c.l.s4 1983009808
        %v1202 = vunpack.c.0.s8 %v1201
        %v1203 = vlaneseq
        %v1204 = vshrl.u32 %v1203, 7
        %v1205 = vsub.s32 %v1202, %v1204
        %v1206 = vrot.slane %v1198, %v1205
        %v1208 = vunpack.c.l.s4 1983009808
        %v1209 = vunpack.c.0.s8 %v1208
        %v1210 = vlaneseq
        %v1211 = vshrl.u32 %v1210, 7
        %v1212 = vsub.s32 %v1209, %v1211
        %v1213 = vrot.slane %v1199, %v1212
        %v1214 = vcombine.low %v1115, %v1127
        %v1215 = vcombine.high %v1115, %v1127
        %v1217 = vunpack.c.l.s4 1983009808
        %v1218 = vunpack.c.0.s8 %v1217
        %v1219 = vlaneseq
        %v1220 = vshrl.u32 %v1219, 7
        %v1221 = vsub.s32 %v1218, %v1220
        %v1222 = vrot.slane %v1214, %v1221
        %v1224 = vunpack.c.l.s4 1983009808
        %v1225 = vunpack.c.0.s8 %v1224
        %v1226 = vlaneseq
        %v1227 = vshrl.u32 %v1226, 7
        %v1228 = vsub.s32 %v1225, %v1227
        %v1229 = vrot.slane %v1215, %v1228
        %v1230 = vcombine.low %v1206, %v1222
        %v1231 = vcombine.high %v1206, %v1222
        %v1233 = vunpack.c.l.s4 1934713408
        %v1234 = vunpack.c.0.s8 %v1233
        %v1235 = vlaneseq
        %v1236 = vshrl.u32 %v1235, 7
        %v1237 = vsub.s32 %v1234, %v1236
        %v1238 = vrot.slane %v1230, %v1237
        %v1240 = vunpack.c.l.s4 1934713408
        %v1241 = vunpack.c.0.s8 %v1240
        %v1242 = vlaneseq
        %v1243 = vshrl.u32 %v1242, 7
        %v1244 = vsub.s32 %v1241, %v1243
        %v1245 = vrot.slane %v1231, %v1244
        %v1246 = vcombine.low %v1213, %v1229
        %v1247 = vcombine.high %v1213, %v1229
        %v1249 = vunpack.c.l.s4 1934713408
        %v1250 = vunpack.c.0.s8 %v1249
        %v1251 = vlaneseq
        %v1252 = vshrl.u32 %v1251, 7
        %v1253 = vsub.s32 %v1250, %v1252
        %v1254 = vrot.slane %v1246, %v1253
        %v1256 = vunpack.c.l.s4 1934713408
        %v1257 = vunpack.c.0.s8 %v1256
        %v1258 = vlaneseq
        %v1259 = vshrl.u32 %v1258, 7
        %v1260 = vsub.s32 %v1257, %v1259
        %v1261 = vrot.slane %v1247, %v1260
        %v1262 = vcombine.high %v1238, 0.0
        %v1263 = vcombine.high %v1245, 0.0
        %v1264 = vcombine.high %v1254, 0.0
        %v1265 = vcombine.high %v1261, 0.0
        %v1266 = vcombine.low %v1170, %v1177
        %v1268 = vunpack.c.l.s4 1983009808
        %v1269 = vunpack.c.0.s8 %v1268
        %v1270 = vlaneseq
        %v1271 = vshrl.u32 %v1270, 7
        %v1272 = vsub.s32 %v1269, %v1271
        %v1273 = vrot.slane %v1266, %v1272
        %v1274 = vcombine.low %v1194, %v1195
        %v1276 = vunpack.c.l.s4 1983009808
        %v1277 = vunpack.c.0.s8 %v1276
        %v1278 = vlaneseq
        %v1279 = vshrl.u32 %v1278, 7
        %v1280 = vsub.s32 %v1277, %v1279
        %v1281 = vrot.slane %v1274, %v1280
        %v1282 = vcombine.low %v1186, %v1193
        %v1284 = vunpack.c.l.s4 1983009808
        %v1285 = vunpack.c.0.s8 %v1284
        %v1286 = vlaneseq
        %v1287 = vshrl.u32 %v1286, 7
        %v1288 = vsub.s32 %v1285, %v1287
        %v1289 = vrot.slane %v1282, %v1288
        %v1290 = vcombine.low %v1196, %v1197
        %v1292 = vunpack.c.l.s4 1983009808
        %v1293 = vunpack.c.0.s8 %v1292
        %v1294 = vlaneseq
        %v1295 = vshrl.u32 %v1294, 7
        %v1296 = vsub.s32 %v1293, %v1295
        %v1297 = vrot.slane %v1290, %v1296
        %v1298 = vcombine.low %v1273, %v1281
        %v1299 = vcombine.high %v1273, %v1281
        %v1301 = vunpack.c.l.s4 1934713408
        %v1302 = vunpack.c.0.s8 %v1301
        %v1303 = vlaneseq
        %v1304 = vshrl.u32 %v1303, 7
        %v1305 = vsub.s32 %v1302, %v1304
        %v1306 = vrot.slane %v1298, %v1305
        %v1308 = vunpack.c.l.s4 1934713408
        %v1309 = vunpack.c.0.s8 %v1308
        %v1310 = vlaneseq
        %v1311 = vshrl.u32 %v1310, 7
        %v1312 = vsub.s32 %v1309, %v1311
        %v1313 = vrot.slane %v1299, %v1312
        %v1314 = vcombine.low %v1289, %v1297
        %v1315 = vcombine.high %v1289, %v1297
        %v1317 = vunpack.c.l.s4 1934713408
        %v1318 = vunpack.c.0.s8 %v1317
        %v1319 = vlaneseq
        %v1320 = vshrl.u32 %v1319, 7
        %v1321 = vsub.s32 %v1318, %v1320
        %v1322 = vrot.slane %v1314, %v1321
        %v1324 = vunpack.c.l.s4 1934713408
        %v1325 = vunpack.c.0.s8 %v1324
        %v1326 = vlaneseq
        %v1327 = vshrl.u32 %v1326, 7
        %v1328 = vsub.s32 %v1325, %v1327
        %v1329 = vrot.slane %v1315, %v1328
        %v1330 = vcombine.low %v1306, %v1322
        %v1331 = vcombine.high %v1306, %v1322
        %v1332 = vcombine.low %v1313, %v1329
        %v1333 = vcombine.high %v1313, %v1329
        %v1334 = vcombine.low %v1238, %v1245
        %v1336 = vunpack.c.l.s4 1983009808
        %v1337 = vunpack.c.0.s8 %v1336
        %v1338 = vlaneseq
        %v1339 = vshrl.u32 %v1338, 7
        %v1340 = vsub.s32 %v1337, %v1339
        %v1341 = vrot.slane %v1334, %v1340
        %v1342 = vcombine.low %v1262, %v1263
        %v1344 = vunpack.c.l.s4 1983009808
        %v1345 = vunpack.c.0.s8 %v1344
        %v1346 = vlaneseq
        %v1347 = vshrl.u32 %v1346, 7
        %v1348 = vsub.s32 %v1345, %v1347
        %v1349 = vrot.slane %v1342, %v1348
        %v1350 = vcombine.low %v1254, %v1261
        %v1352 = vunpack.c.l.s4 1983009808
        %v1353 = vunpack.c.0.s8 %v1352
        %v1354 = vlaneseq
        %v1355 = vshrl.u32 %v1354, 7
        %v1356 = vsub.s32 %v1353, %v1355
        %v1357 = vrot.slane %v1350, %v1356
        %v1358 = vcombine.low %v1264, %v1265
        %v1360 = vunpack.c.l.s4 1983009808
        %v1361 = vunpack.c.0.s8 %v1360
        %v1362 = vlaneseq
        %v1363 = vshrl.u32 %v1362, 7
        %v1364 = vsub.s32 %v1361, %v1363
        %v1365 = vrot.slane %v1358, %v1364
        %v1366 = vcombine.low %v1341, %v1349
        %v1367 = vcombine.high %v1341, %v1349
        %v1369 = vunpack.c.l.s4 1934713408
        %v1370 = vunpack.c.0.s8 %v1369
        %v1371 = vlaneseq
        %v1372 = vshrl.u32 %v1371, 7
        %v1373 = vsub.s32 %v1370, %v1372
        %v1374 = vrot.slane %v1366, %v1373
        %v1376 = vunpack.c.l.s4 1934713408
        %v1377 = vunpack.c.0.s8 %v1376
        %v1378 = vlaneseq
        %v1379 = vshrl.u32 %v1378, 7
        %v1380 = vsub.s32 %v1377, %v1379
        %v1381 = vrot.slane %v1367, %v1380
        %v1382 = vcombine.low %v1357, %v1365
        %v1383 = vcombine.high %v1357, %v1365
        %v1385 = vunpack.c.l.s4 1934713408
        %v1386 = vunpack.c.0.s8 %v1385
        %v1387 = vlaneseq
        %v1388 = vshrl.u32 %v1387, 7
        %v1389 = vsub.s32 %v1386, %v1388
        %v1390 = vrot.slane %v1382, %v1389
        %v1392 = vunpack.c.l.s4 1934713408
        %v1393 = vunpack.c.0.s8 %v1392
        %v1394 = vlaneseq
        %v1395 = vshrl.u32 %v1394, 7
        %v1396 = vsub.s32 %v1393, %v1395
        %v1397 = vrot.slane %v1383, %v1396
        %v1398 = vcombine.low %v1374, %v1390
        %v1399 = vcombine.high %v1374, %v1390
        %v1400 = vcombine.low %v1381, %v1397
        %v1401 = vcombine.high %v1381, %v1397
        %v1402 = vpack.c.bf16 %v1398, %v1330
        %v1403 = vpack.c.bf16 %v1399, %v1331
        %v1404 = vpack.c.bf16 %v1400, %v1332
        %v1405 = vpack.c.bf16 %v1401, %v1333
        %1408 = vrot.lane.b32.xlu0 %v1063, 96
        %v1409 = vpop.permute.xlu0 %1408
        %1410 = vrot.lane.b32.xlu0 %v1067, 96
        %v1411 = vpop.permute.xlu0 %1410
        %1414 = vrot.lane.b32.xlu0 %v1063, 64
        %v1415 = vpop.permute.xlu0 %1414
        %1416 = vrot.lane.b32.xlu0 %v1067, 64
        %v1417 = vpop.permute.xlu0 %1416
        %1420 = vrot.lane.b32.xlu0 %v1063, 32
        %v1421 = vpop.permute.xlu0 %1420
        %1422 = vrot.lane.b32.xlu0 %v1067, 32
        %v1423 = vpop.permute.xlu0 %1422
        %v1426 = vcombine.low %v1063, %v1415
        %v1427 = vcombine.high %v1063, %v1415
        %v1429 = vunpack.c.l.s4 1983009808
        %v1430 = vunpack.c.0.s8 %v1429
        %v1431 = vlaneseq
        %v1432 = vshrl.u32 %v1431, 7
        %v1433 = vsub.s32 %v1430, %v1432
        %v1434 = vrot.slane %v1426, %v1433
        %v1436 = vunpack.c.l.s4 1983009808
        %v1437 = vunpack.c.0.s8 %v1436
        %v1438 = vlaneseq
        %v1439 = vshrl.u32 %v1438, 7
        %v1440 = vsub.s32 %v1437, %v1439
        %v1441 = vrot.slane %v1427, %v1440
        %v1442 = vcombine.low %v1409, %v1421
        %v1443 = vcombine.high %v1409, %v1421
        %v1445 = vunpack.c.l.s4 1983009808
        %v1446 = vunpack.c.0.s8 %v1445
        %v1447 = vlaneseq
        %v1448 = vshrl.u32 %v1447, 7
        %v1449 = vsub.s32 %v1446, %v1448
        %v1450 = vrot.slane %v1442, %v1449
        %v1452 = vunpack.c.l.s4 1983009808
        %v1453 = vunpack.c.0.s8 %v1452
        %v1454 = vlaneseq
        %v1455 = vshrl.u32 %v1454, 7
        %v1456 = vsub.s32 %v1453, %v1455
        %v1457 = vrot.slane %v1443, %v1456
        %v1458 = vcombine.low %v1434, %v1450
        %v1459 = vcombine.high %v1434, %v1450
        %v1461 = vunpack.c.l.s4 1934713408
        %v1462 = vunpack.c.0.s8 %v1461
        %v1463 = vlaneseq
        %v1464 = vshrl.u32 %v1463, 7
        %v1465 = vsub.s32 %v1462, %v1464
        %v1466 = vrot.slane %v1458, %v1465
        %v1468 = vunpack.c.l.s4 1934713408
        %v1469 = vunpack.c.0.s8 %v1468
        %v1470 = vlaneseq
        %v1471 = vshrl.u32 %v1470, 7
        %v1472 = vsub.s32 %v1469, %v1471
        %v1473 = vrot.slane %v1459, %v1472
        %v1474 = vcombine.low %v1441, %v1457
        %v1475 = vcombine.high %v1441, %v1457
        %v1477 = vunpack.c.l.s4 1934713408
        %v1478 = vunpack.c.0.s8 %v1477
        %v1479 = vlaneseq
        %v1480 = vshrl.u32 %v1479, 7
        %v1481 = vsub.s32 %v1478, %v1480
        %v1482 = vrot.slane %v1474, %v1481
        %v1484 = vunpack.c.l.s4 1934713408
        %v1485 = vunpack.c.0.s8 %v1484
        %v1486 = vlaneseq
        %v1487 = vshrl.u32 %v1486, 7
        %v1488 = vsub.s32 %v1485, %v1487
        %v1489 = vrot.slane %v1475, %v1488
        %v1490 = vcombine.high %v1466, 0.0
        %v1491 = vcombine.high %v1473, 0.0
        %v1492 = vcombine.high %v1482, 0.0
        %v1493 = vcombine.high %v1489, 0.0
        %v1494 = vcombine.low %v1067, %v1417
        %v1495 = vcombine.high %v1067, %v1417
        %v1497 = vunpack.c.l.s4 1983009808
        %v1498 = vunpack.c.0.s8 %v1497
        %v1499 = vlaneseq
        %v1500 = vshrl.u32 %v1499, 7
        %v1501 = vsub.s32 %v1498, %v1500
        %v1502 = vrot.slane %v1494, %v1501
        %v1504 = vunpack.c.l.s4 1983009808
        %v1505 = vunpack.c.0.s8 %v1504
        %v1506 = vlaneseq
        %v1507 = vshrl.u32 %v1506, 7
        %v1508 = vsub.s32 %v1505, %v1507
        %v1509 = vrot.slane %v1495, %v1508
        %v1510 = vcombine.low %v1411, %v1423
        %v1511 = vcombine.high %v1411, %v1423
        %v1513 = vunpack.c.l.s4 1983009808
        %v1514 = vunpack.c.0.s8 %v1513
        %v1515 = vlaneseq
        %v1516 = vshrl.u32 %v1515, 7
        %v1517 = vsub.s32 %v1514, %v1516
        %v1518 = vrot.slane %v1510, %v1517
        %v1520 = vunpack.c.l.s4 1983009808
        %v1521 = vunpack.c.0.s8 %v1520
        %v1522 = vlaneseq
        %v1523 = vshrl.u32 %v1522, 7
        %v1524 = vsub.s32 %v1521, %v1523
        %v1525 = vrot.slane %v1511, %v1524
        %v1526 = vcombine.low %v1502, %v1518
        %v1527 = vcombine.high %v1502, %v1518
        %v1529 = vunpack.c.l.s4 1934713408
        %v1530 = vunpack.c.0.s8 %v1529
        %v1531 = vlaneseq
        %v1532 = vshrl.u32 %v1531, 7
        %v1533 = vsub.s32 %v1530, %v1532
        %v1534 = vrot.slane %v1526, %v1533
        %v1536 = vunpack.c.l.s4 1934713408
        %v1537 = vunpack.c.0.s8 %v1536
        %v1538 = vlaneseq
        %v1539 = vshrl.u32 %v1538, 7
        %v1540 = vsub.s32 %v1537, %v1539
        %v1541 = vrot.slane %v1527, %v1540
        %v1542 = vcombine.low %v1509, %v1525
        %v1543 = vcombine.high %v1509, %v1525
        %v1545 = vunpack.c.l.s4 1934713408
        %v1546 = vunpack.c.0.s8 %v1545
        %v1547 = vlaneseq
        %v1548 = vshrl.u32 %v1547, 7
        %v1549 = vsub.s32 %v1546, %v1548
        %v1550 = vrot.slane %v1542, %v1549
        %v1552 = vunpack.c.l.s4 1934713408
        %v1553 = vunpack.c.0.s8 %v1552
        %v1554 = vlaneseq
        %v1555 = vshrl.u32 %v1554, 7
        %v1556 = vsub.s32 %v1553, %v1555
        %v1557 = vrot.slane %v1543, %v1556
        %v1558 = vcombine.high %v1534, 0.0
        %v1559 = vcombine.high %v1541, 0.0
        %v1560 = vcombine.high %v1550, 0.0
        %v1561 = vcombine.high %v1557, 0.0
        %v1562 = vcombine.low %v1466, %v1473
        %v1564 = vunpack.c.l.s4 1983009808
        %v1565 = vunpack.c.0.s8 %v1564
        %v1566 = vlaneseq
        %v1567 = vshrl.u32 %v1566, 7
        %v1568 = vsub.s32 %v1565, %v1567
        %v1569 = vrot.slane %v1562, %v1568
        %v1570 = vcombine.low %v1490, %v1491
        %v1572 = vunpack.c.l.s4 1983009808
        %v1573 = vunpack.c.0.s8 %v1572
        %v1574 = vlaneseq
        %v1575 = vshrl.u32 %v1574, 7
        %v1576 = vsub.s32 %v1573, %v1575
        %v1577 = vrot.slane %v1570, %v1576
        %v1578 = vcombine.low %v1482, %v1489
        %v1580 = vunpack.c.l.s4 1983009808
        %v1581 = vunpack.c.0.s8 %v1580
        %v1582 = vlaneseq
        %v1583 = vshrl.u32 %v1582, 7
        %v1584 = vsub.s32 %v1581, %v1583
        %v1585 = vrot.slane %v1578, %v1584
        %v1586 = vcombine.low %v1492, %v1493
        %v1588 = vunpack.c.l.s4 1983009808
        %v1589 = vunpack.c.0.s8 %v1588
        %v1590 = vlaneseq
        %v1591 = vshrl.u32 %v1590, 7
        %v1592 = vsub.s32 %v1589, %v1591
        %v1593 = vrot.slane %v1586, %v1592
        %v1594 = vcombine.low %v1569, %v1577
        %v1595 = vcombine.high %v1569, %v1577
        %v1597 = vunpack.c.l.s4 1934713408
        %v1598 = vunpack.c.0.s8 %v1597
        %v1599 = vlaneseq
        %v1600 = vshrl.u32 %v1599, 7
        %v1601 = vsub.s32 %v1598, %v1600
        %v1602 = vrot.slane %v1594, %v1601
        %v1604 = vunpack.c.l.s4 1934713408
        %v1605 = vunpack.c.0.s8 %v1604
        %v1606 = vlaneseq
        %v1607 = vshrl.u32 %v1606, 7
        %v1608 = vsub.s32 %v1605, %v1607
        %v1609 = vrot.slane %v1595, %v1608
        %v1610 = vcombine.low %v1585, %v1593
        %v1611 = vcombine.high %v1585, %v1593
        %v1613 = vunpack.c.l.s4 1934713408
        %v1614 = vunpack.c.0.s8 %v1613
        %v1615 = vlaneseq
        %v1616 = vshrl.u32 %v1615, 7
        %v1617 = vsub.s32 %v1614, %v1616
        %v1618 = vrot.slane %v1610, %v1617
        %v1620 = vunpack.c.l.s4 1934713408
        %v1621 = vunpack.c.0.s8 %v1620
        %v1622 = vlaneseq
        %v1623 = vshrl.u32 %v1622, 7
        %v1624 = vsub.s32 %v1621, %v1623
        %v1625 = vrot.slane %v1611, %v1624
        %v1626 = vcombine.low %v1602, %v1618
        %v1627 = vcombine.high %v1602, %v1618
        %v1628 = vcombine.low %v1609, %v1625
        %v1629 = vcombine.high %v1609, %v1625
        %v1630 = vcombine.low %v1534, %v1541
        %v1632 = vunpack.c.l.s4 1983009808
        %v1633 = vunpack.c.0.s8 %v1632
        %v1634 = vlaneseq
        %v1635 = vshrl.u32 %v1634, 7
        %v1636 = vsub.s32 %v1633, %v1635
        %v1637 = vrot.slane %v1630, %v1636
        %v1638 = vcombine.low %v1558, %v1559
        %v1640 = vunpack.c.l.s4 1983009808
        %v1641 = vunpack.c.0.s8 %v1640
        %v1642 = vlaneseq
        %v1643 = vshrl.u32 %v1642, 7
        %v1644 = vsub.s32 %v1641, %v1643
        %v1645 = vrot.slane %v1638, %v1644
        %v1646 = vcombine.low %v1550, %v1557
        %v1648 = vunpack.c.l.s4 1983009808
        %v1649 = vunpack.c.0.s8 %v1648
        %v1650 = vlaneseq
        %v1651 = vshrl.u32 %v1650, 7
        %v1652 = vsub.s32 %v1649, %v1651
        %v1653 = vrot.slane %v1646, %v1652
        %v1654 = vcombine.low %v1560, %v1561
        %v1656 = vunpack.c.l.s4 1983009808
        %v1657 = vunpack.c.0.s8 %v1656
        %v1658 = vlaneseq
        %v1659 = vshrl.u32 %v1658, 7
        %v1660 = vsub.s32 %v1657, %v1659
        %v1661 = vrot.slane %v1654, %v1660
        %v1662 = vcombine.low %v1637, %v1645
        %v1663 = vcombine.high %v1637, %v1645
        %v1665 = vunpack.c.l.s4 1934713408
        %v1666 = vunpack.c.0.s8 %v1665
        %v1667 = vlaneseq
        %v1668 = vshrl.u32 %v1667, 7
        %v1669 = vsub.s32 %v1666, %v1668
        %v1670 = vrot.slane %v1662, %v1669
        %v1672 = vunpack.c.l.s4 1934713408
        %v1673 = vunpack.c.0.s8 %v1672
        %v1674 = vlaneseq
        %v1675 = vshrl.u32 %v1674, 7
        %v1676 = vsub.s32 %v1673, %v1675
        %v1677 = vrot.slane %v1663, %v1676
        %v1678 = vcombine.low %v1653, %v1661
        %v1679 = vcombine.high %v1653, %v1661
        %v1681 = vunpack.c.l.s4 1934713408
        %v1682 = vunpack.c.0.s8 %v1681
        %v1683 = vlaneseq
        %v1684 = vshrl.u32 %v1683, 7
        %v1685 = vsub.s32 %v1682, %v1684
        %v1686 = vrot.slane %v1678, %v1685
        %v1688 = vunpack.c.l.s4 1934713408
        %v1689 = vunpack.c.0.s8 %v1688
        %v1690 = vlaneseq
        %v1691 = vshrl.u32 %v1690, 7
        %v1692 = vsub.s32 %v1689, %v1691
        %v1693 = vrot.slane %v1679, %v1692
        %v1694 = vcombine.low %v1670, %v1686
        %v1695 = vcombine.high %v1670, %v1686
        %v1696 = vcombine.low %v1677, %v1693
        %v1697 = vcombine.high %v1677, %v1693
        %v1698 = vpack.c.bf16 %v1694, %v1626
        %v1699 = vpack.c.bf16 %v1695, %v1627
        %v1700 = vpack.c.bf16 %v1696, %v1628
        %v1701 = vpack.c.bf16 %v1697, %v1629
        %1704 = vrot.lane.b32.xlu0 %v1104, 96
        %v1705 = vpop.permute.xlu0 %1704
        %1706 = vrot.lane.b32.xlu0 %v1107, 96
        %v1707 = vpop.permute.xlu0 %1706
        %1710 = vrot.lane.b32.xlu0 %v1104, 64
        %v1711 = vpop.permute.xlu0 %1710
        %1712 = vrot.lane.b32.xlu0 %v1107, 64
        %v1713 = vpop.permute.xlu0 %1712
        %1716 = vrot.lane.b32.xlu0 %v1104, 32
        %v1717 = vpop.permute.xlu0 %1716
        %1718 = vrot.lane.b32.xlu0 %v1107, 32
        %v1719 = vpop.permute.xlu0 %1718
        %v1722 = vcombine.low %v1104, %v1711
        %v1723 = vcombine.high %v1104, %v1711
        %v1725 = vunpack.c.l.s4 1983009808
        %v1726 = vunpack.c.0.s8 %v1725
        %v1727 = vlaneseq
        %v1728 = vshrl.u32 %v1727, 7
        %v1729 = vsub.s32 %v1726, %v1728
        %v1730 = vrot.slane %v1722, %v1729
        %v1732 = vunpack.c.l.s4 1983009808
        %v1733 = vunpack.c.0.s8 %v1732
        %v1734 = vlaneseq
        %v1735 = vshrl.u32 %v1734, 7
        %v1736 = vsub.s32 %v1733, %v1735
        %v1737 = vrot.slane %v1723, %v1736
        %v1738 = vcombine.low %v1705, %v1717
        %v1739 = vcombine.high %v1705, %v1717
        %v1741 = vunpack.c.l.s4 1983009808
        %v1742 = vunpack.c.0.s8 %v1741
        %v1743 = vlaneseq
        %v1744 = vshrl.u32 %v1743, 7
        %v1745 = vsub.s32 %v1742, %v1744
        %v1746 = vrot.slane %v1738, %v1745
        %v1748 = vunpack.c.l.s4 1983009808
        %v1749 = vunpack.c.0.s8 %v1748
        %v1750 = vlaneseq
        %v1751 = vshrl.u32 %v1750, 7
        %v1752 = vsub.s32 %v1749, %v1751
        %v1753 = vrot.slane %v1739, %v1752
        %v1754 = vcombine.low %v1730, %v1746
        %v1755 = vcombine.high %v1730, %v1746
        %v1757 = vunpack.c.l.s4 1934713408
        %v1758 = vunpack.c.0.s8 %v1757
        %v1759 = vlaneseq
        %v1760 = vshrl.u32 %v1759, 7
        %v1761 = vsub.s32 %v1758, %v1760
        %v1762 = vrot.slane %v1754, %v1761
        %v1764 = vunpack.c.l.s4 1934713408
        %v1765 = vunpack.c.0.s8 %v1764
        %v1766 = vlaneseq
        %v1767 = vshrl.u32 %v1766, 7
        %v1768 = vsub.s32 %v1765, %v1767
        %v1769 = vrot.slane %v1755, %v1768
        %v1770 = vcombine.low %v1737, %v1753
        %v1771 = vcombine.high %v1737, %v1753
        %v1773 = vunpack.c.l.s4 1934713408
        %v1774 = vunpack.c.0.s8 %v1773
        %v1775 = vlaneseq
        %v1776 = vshrl.u32 %v1775, 7
        %v1777 = vsub.s32 %v1774, %v1776
        %v1778 = vrot.slane %v1770, %v1777
        %v1780 = vunpack.c.l.s4 1934713408
        %v1781 = vunpack.c.0.s8 %v1780
        %v1782 = vlaneseq
        %v1783 = vshrl.u32 %v1782, 7
        %v1784 = vsub.s32 %v1781, %v1783
        %v1785 = vrot.slane %v1771, %v1784
        %v1786 = vcombine.high %v1762, 0.0
        %v1787 = vcombine.high %v1769, 0.0
        %v1788 = vcombine.high %v1778, 0.0
        %v1789 = vcombine.high %v1785, 0.0
        %v1790 = vcombine.low %v1107, %v1713
        %v1791 = vcombine.high %v1107, %v1713
        %v1793 = vunpack.c.l.s4 1983009808
        %v1794 = vunpack.c.0.s8 %v1793
        %v1795 = vlaneseq
        %v1796 = vshrl.u32 %v1795, 7
        %v1797 = vsub.s32 %v1794, %v1796
        %v1798 = vrot.slane %v1790, %v1797
        %v1800 = vunpack.c.l.s4 1983009808
        %v1801 = vunpack.c.0.s8 %v1800
        %v1802 = vlaneseq
        %v1803 = vshrl.u32 %v1802, 7
        %v1804 = vsub.s32 %v1801, %v1803
        %v1805 = vrot.slane %v1791, %v1804
        %v1806 = vcombine.low %v1707, %v1719
        %v1807 = vcombine.high %v1707, %v1719
        %v1809 = vunpack.c.l.s4 1983009808
        %v1810 = vunpack.c.0.s8 %v1809
        %v1811 = vlaneseq
        %v1812 = vshrl.u32 %v1811, 7
        %v1813 = vsub.s32 %v1810, %v1812
        %v1814 = vrot.slane %v1806, %v1813
        %v1816 = vunpack.c.l.s4 1983009808
        %v1817 = vunpack.c.0.s8 %v1816
        %v1818 = vlaneseq
        %v1819 = vshrl.u32 %v1818, 7
        %v1820 = vsub.s32 %v1817, %v1819
        %v1821 = vrot.slane %v1807, %v1820
        %v1822 = vcombine.low %v1798, %v1814
        %v1823 = vcombine.high %v1798, %v1814
        %v1825 = vunpack.c.l.s4 1934713408
        %v1826 = vunpack.c.0.s8 %v1825
        %v1827 = vlaneseq
        %v1828 = vshrl.u32 %v1827, 7
        %v1829 = vsub.s32 %v1826, %v1828
        %v1830 = vrot.slane %v1822, %v1829
        %v1832 = vunpack.c.l.s4 1934713408
        %v1833 = vunpack.c.0.s8 %v1832
        %v1834 = vlaneseq
        %v1835 = vshrl.u32 %v1834, 7
        %v1836 = vsub.s32 %v1833, %v1835
        %v1837 = vrot.slane %v1823, %v1836
        %v1838 = vcombine.low %v1805, %v1821
        %v1839 = vcombine.high %v1805, %v1821
        %v1841 = vunpack.c.l.s4 1934713408
        %v1842 = vunpack.c.0.s8 %v1841
        %v1843 = vlaneseq
        %v1844 = vshrl.u32 %v1843, 7
        %v1845 = vsub.s32 %v1842, %v1844
        %v1846 = vrot.slane %v1838, %v1845
        %v1848 = vunpack.c.l.s4 1934713408
        %v1849 = vunpack.c.0.s8 %v1848
        %v1850 = vlaneseq
        %v1851 = vshrl.u32 %v1850, 7
        %v1852 = vsub.s32 %v1849, %v1851
        %v1853 = vrot.slane %v1839, %v1852
        %v1854 = vcombine.high %v1830, 0.0
        %v1855 = vcombine.high %v1837, 0.0
        %v1856 = vcombine.high %v1846, 0.0
        %v1857 = vcombine.high %v1853, 0.0
        %v1858 = vcombine.low %v1762, %v1769
        %v1860 = vunpack.c.l.s4 1983009808
        %v1861 = vunpack.c.0.s8 %v1860
        %v1862 = vlaneseq
        %v1863 = vshrl.u32 %v1862, 7
        %v1864 = vsub.s32 %v1861, %v1863
        %v1865 = vrot.slane %v1858, %v1864
        %v1866 = vcombine.low %v1786, %v1787
        %v1868 = vunpack.c.l.s4 1983009808
        %v1869 = vunpack.c.0.s8 %v1868
        %v1870 = vlaneseq
        %v1871 = vshrl.u32 %v1870, 7
        %v1872 = vsub.s32 %v1869, %v1871
        %v1873 = vrot.slane %v1866, %v1872
        %v1874 = vcombine.low %v1778, %v1785
        %v1876 = vunpack.c.l.s4 1983009808
        %v1877 = vunpack.c.0.s8 %v1876
        %v1878 = vlaneseq
        %v1879 = vshrl.u32 %v1878, 7
        %v1880 = vsub.s32 %v1877, %v1879
        %v1881 = vrot.slane %v1874, %v1880
        %v1882 = vcombine.low %v1788, %v1789
        %v1884 = vunpack.c.l.s4 1983009808
        %v1885 = vunpack.c.0.s8 %v1884
        %v1886 = vlaneseq
        %v1887 = vshrl.u32 %v1886, 7
        %v1888 = vsub.s32 %v1885, %v1887
        %v1889 = vrot.slane %v1882, %v1888
        %v1890 = vcombine.low %v1865, %v1873
        %v1891 = vcombine.high %v1865, %v1873
        %v1893 = vunpack.c.l.s4 1934713408
        %v1894 = vunpack.c.0.s8 %v1893
        %v1895 = vlaneseq
        %v1896 = vshrl.u32 %v1895, 7
        %v1897 = vsub.s32 %v1894, %v1896
        %v1898 = vrot.slane %v1890, %v1897
        %v1900 = vunpack.c.l.s4 1934713408
        %v1901 = vunpack.c.0.s8 %v1900
        %v1902 = vlaneseq
        %v1903 = vshrl.u32 %v1902, 7
        %v1904 = vsub.s32 %v1901, %v1903
        %v1905 = vrot.slane %v1891, %v1904
        %v1906 = vcombine.low %v1881, %v1889
        %v1907 = vcombine.high %v1881, %v1889
        %v1909 = vunpack.c.l.s4 1934713408
        %v1910 = vunpack.c.0.s8 %v1909
        %v1911 = vlaneseq
        %v1912 = vshrl.u32 %v1911, 7
        %v1913 = vsub.s32 %v1910, %v1912
        %v1914 = vrot.slane %v1906, %v1913
        %v1916 = vunpack.c.l.s4 1934713408
        %v1917 = vunpack.c.0.s8 %v1916
        %v1918 = vlaneseq
        %v1919 = vshrl.u32 %v1918, 7
        %v1920 = vsub.s32 %v1917, %v1919
        %v1921 = vrot.slane %v1907, %v1920
        %v1922 = vcombine.low %v1898, %v1914
        %v1923 = vcombine.high %v1898, %v1914
        %v1924 = vcombine.low %v1905, %v1921
        %v1925 = vcombine.high %v1905, %v1921
        %v1926 = vcombine.low %v1830, %v1837
        %v1928 = vunpack.c.l.s4 1983009808
        %v1929 = vunpack.c.0.s8 %v1928
        %v1930 = vlaneseq
        %v1931 = vshrl.u32 %v1930, 7
        %v1932 = vsub.s32 %v1929, %v1931
        %v1933 = vrot.slane %v1926, %v1932
        %v1934 = vcombine.low %v1854, %v1855
        %v1936 = vunpack.c.l.s4 1983009808
        %v1937 = vunpack.c.0.s8 %v1936
        %v1938 = vlaneseq
        %v1939 = vshrl.u32 %v1938, 7
        %v1940 = vsub.s32 %v1937, %v1939
        %v1941 = vrot.slane %v1934, %v1940
        %v1942 = vcombine.low %v1846, %v1853
        %v1944 = vunpack.c.l.s4 1983009808
        %v1945 = vunpack.c.0.s8 %v1944
        %v1946 = vlaneseq
        %v1947 = vshrl.u32 %v1946, 7
        %v1948 = vsub.s32 %v1945, %v1947
        %v1949 = vrot.slane %v1942, %v1948
        %v1950 = vcombine.low %v1856, %v1857
        %v1952 = vunpack.c.l.s4 1983009808
        %v1953 = vunpack.c.0.s8 %v1952
        %v1954 = vlaneseq
        %v1955 = vshrl.u32 %v1954, 7
        %v1956 = vsub.s32 %v1953, %v1955
        %v1957 = vrot.slane %v1950, %v1956
        %v1958 = vcombine.low %v1933, %v1941
        %v1959 = vcombine.high %v1933, %v1941
        %v1961 = vunpack.c.l.s4 1934713408
        %v1962 = vunpack.c.0.s8 %v1961
        %v1963 = vlaneseq
        %v1964 = vshrl.u32 %v1963, 7
        %v1965 = vsub.s32 %v1962, %v1964
        %v1966 = vrot.slane %v1958, %v1965
        %v1968 = vunpack.c.l.s4 1934713408
        %v1969 = vunpack.c.0.s8 %v1968
        %v1970 = vlaneseq
        %v1971 = vshrl.u32 %v1970, 7
        %v1972 = vsub.s32 %v1969, %v1971
        %v1973 = vrot.slane %v1959, %v1972
        %v1974 = vcombine.low %v1949, %v1957
        %v1975 = vcombine.high %v1949, %v1957
        %v1977 = vunpack.c.l.s4 1934713408
        %v1978 = vunpack.c.0.s8 %v1977
        %v1979 = vlaneseq
        %v1980 = vshrl.u32 %v1979, 7
        %v1981 = vsub.s32 %v1978, %v1980
        %v1982 = vrot.slane %v1974, %v1981
        %v1984 = vunpack.c.l.s4 1934713408
        %v1985 = vunpack.c.0.s8 %v1984
        %v1986 = vlaneseq
        %v1987 = vshrl.u32 %v1986, 7
        %v1988 = vsub.s32 %v1985, %v1987
        %v1989 = vrot.slane %v1975, %v1988
        %v1990 = vcombine.low %v1966, %v1982
        %v1991 = vcombine.high %v1966, %v1982
        %v1992 = vcombine.low %v1973, %v1989
        %v1993 = vcombine.high %v1973, %v1989
        %v1994 = vpack.c.bf16 %v1990, %v1922
        %v1995 = vpack.c.bf16 %v1991, %v1923
        %v1996 = vpack.c.bf16 %v1992, %v1924
        %v1997 = vpack.c.bf16 %v1993, %v1925
        %vm1998 = vcmask 261120
        %v2000 = vsel %vm1998, %v1402, 0
        %v2003 = vsel %vm1998, %v1698, 0
        %2005 = vmatprep.subr.bf16.mxu0 0
        %2006 = vmatpush1.bf16.xpose.msra.mxu0 %v2003
        %2007 = vmatprep.subr.bf16.mxu0 0
        %2008 = vmatpush1.bf16.xpose.msra.mxu0 0
        %2009 = vmatprep.subr.bf16.mxu0 0
        %2010 = vmatpush1.bf16.xpose.msra.mxu0 0
        %2011 = vmatprep.subr.bf16.mxu0 0
        %2012 = vmatpush1.bf16.xpose.msra.mxu0 0
        %2013 = vmatprep.subr.bf16.mxu0 0
        %2014 = vmatpush1.bf16.xpose.msra.mxu0 0
        %2015 = vmatprep.subr.bf16.mxu0 0
        %2016 = vmatpush1.bf16.xpose.msra.mxu0 0
        %2017 = vmatprep.subr.bf16.mxu0 0
        %2018 = vmatpush1.bf16.xpose.msra.mxu0 0
        %2019 = vmatprep.subr.bf16.mxu0 0
        %2020 = vmatpush1.bf16.xpose.msra.mxu0 0
        %2021 = vmatprep.subr.bf16.mxu0 0
        %2022 = vmatpush1.bf16.xpose.msra.mxu0 0
        %2023 = vmatprep.subr.bf16.mxu0 0
        %2024 = vmatpush1.bf16.xpose.msra.mxu0 0
        %2025 = vmatprep.subr.bf16.mxu0 0
        %2026 = vmatpush1.bf16.xpose.msra.mxu0 0
        %2027 = vmatprep.subr.bf16.mxu0 0
        %2028 = vmatpush1.bf16.xpose.msra.mxu0 0
        %2029 = vmatprep.subr.bf16.mxu0 0
        %2030 = vmatpush1.bf16.xpose.msra.mxu0 0
        %2031 = vmatprep.subr.bf16.mxu0 0
        %2032 = vmatpush1.bf16.xpose.msra.mxu0 0
        %2033 = vmatprep.subr.bf16.mxu0 0
        %2034 = vmatpush1.bf16.xpose.msra.mxu0 0
        %2035 = vmatprep.subr.bf16.mxu0 0
        %2036 = vmatpush1.bf16.xpose.msra.mxu0 0
        %2037 = vmatprep.mubr.bf16.mxu0 0
        %2038 = vmatmul.mubr.bf16.gmra.mrb[0].mxu0 %v2000
        %v2039 = vpop.f32.mrb[0].mxu0
        %v2040 = vadd.f32 0.0, %v2039
        %v2041 = vpop.f32.mrb[0].mxu0
        %v2042 = vpop.f32.mrb[0].mxu0
        %v2043 = vadd.f32 0.0, %v2042
        %v2044 = vpop.f32.mrb[0].mxu0
        %2045 = vdwg.mxu0
        %v2047 = vsel %vm1998, %v1403, 0
        %v2050 = vsel %vm1998, %v1699, 0
        %2052 = vmatprep.subr.bf16.mxu0 0
        %2053 = vmatpush1.bf16.xpose.msra.mxu0 %v2050
        %2054 = vmatprep.subr.bf16.mxu0 0
        %2055 = vmatpush1.bf16.xpose.msra.mxu0 0
        %2056 = vmatprep.subr.bf16.mxu0 0
        %2057 = vmatpush1.bf16.xpose.msra.mxu0 0
        %2058 = vmatprep.subr.bf16.mxu0 0
        %2059 = vmatpush1.bf16.xpose.msra.mxu0 0
        %2060 = vmatprep.subr.bf16.mxu0 0
        %2061 = vmatpush1.bf16.xpose.msra.mxu0 0
        %2062 = vmatprep.subr.bf16.mxu0 0
        %2063 = vmatpush1.bf16.xpose.msra.mxu0 0
        %2064 = vmatprep.subr.bf16.mxu0 0
        %2065 = vmatpush1.bf16.xpose.msra.mxu0 0
        %2066 = vmatprep.subr.bf16.mxu0 0
        %2067 = vmatpush1.bf16.xpose.msra.mxu0 0
        %2068 = vmatprep.subr.bf16.mxu0 0
        %2069 = vmatpush1.bf16.xpose.msra.mxu0 0
        %2070 = vmatprep.subr.bf16.mxu0 0
        %2071 = vmatpush1.bf16.xpose.msra.mxu0 0
        %2072 = vmatprep.subr.bf16.mxu0 0
        %2073 = vmatpush1.bf16.xpose.msra.mxu0 0
        %2074 = vmatprep.subr.bf16.mxu0 0
        %2075 = vmatpush1.bf16.xpose.msra.mxu0 0
        %2076 = vmatprep.subr.bf16.mxu0 0
        %2077 = vmatpush1.bf16.xpose.msra.mxu0 0
        %2078 = vmatprep.subr.bf16.mxu0 0
        %2079 = vmatpush1.bf16.xpose.msra.mxu0 0
        %2080 = vmatprep.subr.bf16.mxu0 0
        %2081 = vmatpush1.bf16.xpose.msra.mxu0 0
        %2082 = vmatprep.subr.bf16.mxu0 0
        %2083 = vmatpush1.bf16.xpose.msra.mxu0 0
        %2084 = vmatprep.mubr.bf16.mxu0 0
        %2085 = vmatmul.mubr.bf16.gmra.mrb[0].mxu0 %v2047
        %v2086 = vpop.f32.mrb[0].mxu0
        %v2087 = vadd.f32 0.0, %v2086
        %v2088 = vpop.f32.mrb[0].mxu0
        %v2089 = vpop.f32.mrb[0].mxu0
        %v2090 = vadd.f32 0.0, %v2089
        %v2091 = vpop.f32.mrb[0].mxu0
        %2092 = vdwg.mxu0
        %v2094 = vsel %vm1998, %v1404, 0
        %v2097 = vsel %vm1998, %v1700, 0
        %2099 = vmatprep.subr.bf16.mxu0 0
        %2100 = vmatpush1.bf16.xpose.msra.mxu0 %v2097
        %2101 = vmatprep.subr.bf16.mxu0 0
        %2102 = vmatpush1.bf16.xpose.msra.mxu0 0
        %2103 = vmatprep.subr.bf16.mxu0 0
        %2104 = vmatpush1.bf16.xpose.msra.mxu0 0
        %2105 = vmatprep.subr.bf16.mxu0 0
        %2106 = vmatpush1.bf16.xpose.msra.mxu0 0
        %2107 = vmatprep.subr.bf16.mxu0 0
        %2108 = vmatpush1.bf16.xpose.msra.mxu0 0
        %2109 = vmatprep.subr.bf16.mxu0 0
        %2110 = vmatpush1.bf16.xpose.msra.mxu0 0
        %2111 = vmatprep.subr.bf16.mxu0 0
        %2112 = vmatpush1.bf16.xpose.msra.mxu0 0
        %2113 = vmatprep.subr.bf16.mxu0 0
        %2114 = vmatpush1.bf16.xpose.msra.mxu0 0
        %2115 = vmatprep.subr.bf16.mxu0 0
        %2116 = vmatpush1.bf16.xpose.msra.mxu0 0
        %2117 = vmatprep.subr.bf16.mxu0 0
        %2118 = vmatpush1.bf16.xpose.msra.mxu0 0
        %2119 = vmatprep.subr.bf16.mxu0 0
        %2120 = vmatpush1.bf16.xpose.msra.mxu0 0
        %2121 = vmatprep.subr.bf16.mxu0 0
        %2122 = vmatpush1.bf16.xpose.msra.mxu0 0
        %2123 = vmatprep.subr.bf16.mxu0 0
        %2124 = vmatpush1.bf16.xpose.msra.mxu0 0
        %2125 = vmatprep.subr.bf16.mxu0 0
        %2126 = vmatpush1.bf16.xpose.msra.mxu0 0
        %2127 = vmatprep.subr.bf16.mxu0 0
        %2128 = vmatpush1.bf16.xpose.msra.mxu0 0
        %2129 = vmatprep.subr.bf16.mxu0 0
        %2130 = vmatpush1.bf16.xpose.msra.mxu0 0
        %2131 = vmatprep.mubr.bf16.mxu0 0
        %2132 = vmatmul.mubr.bf16.gmra.mrb[0].mxu0 %v2094
        %v2133 = vpop.f32.mrb[0].mxu0
        %v2134 = vadd.f32 0.0, %v2133
        %v2135 = vpop.f32.mrb[0].mxu0
        %v2136 = vpop.f32.mrb[0].mxu0
        %v2137 = vadd.f32 0.0, %v2136
        %v2138 = vpop.f32.mrb[0].mxu0
        %2139 = vdwg.mxu0
        %v2141 = vsel %vm1998, %v1405, 0
        %v2144 = vsel %vm1998, %v1701, 0
        %2146 = vmatprep.subr.bf16.mxu0 0
        %2147 = vmatpush1.bf16.xpose.msra.mxu0 %v2144
        %2148 = vmatprep.subr.bf16.mxu0 0
        %2149 = vmatpush1.bf16.xpose.msra.mxu0 0
        %2150 = vmatprep.subr.bf16.mxu0 0
        %2151 = vmatpush1.bf16.xpose.msra.mxu0 0
        %2152 = vmatprep.subr.bf16.mxu0 0
        %2153 = vmatpush1.bf16.xpose.msra.mxu0 0
        %2154 = vmatprep.subr.bf16.mxu0 0
        %2155 = vmatpush1.bf16.xpose.msra.mxu0 0
        %2156 = vmatprep.subr.bf16.mxu0 0
        %2157 = vmatpush1.bf16.xpose.msra.mxu0 0
        %2158 = vmatprep.subr.bf16.mxu0 0
        %2159 = vmatpush1.bf16.xpose.msra.mxu0 0
        %2160 = vmatprep.subr.bf16.mxu0 0
        %2161 = vmatpush1.bf16.xpose.msra.mxu0 0
        %2162 = vmatprep.subr.bf16.mxu0 0
        %2163 = vmatpush1.bf16.xpose.msra.mxu0 0
        %2164 = vmatprep.subr.bf16.mxu0 0
        %2165 = vmatpush1.bf16.xpose.msra.mxu0 0
        %2166 = vmatprep.subr.bf16.mxu0 0
        %2167 = vmatpush1.bf16.xpose.msra.mxu0 0
        %2168 = vmatprep.subr.bf16.mxu0 0
        %2169 = vmatpush1.bf16.xpose.msra.mxu0 0
        %2170 = vmatprep.subr.bf16.mxu0 0
        %2171 = vmatpush1.bf16.xpose.msra.mxu0 0
        %2172 = vmatprep.subr.bf16.mxu0 0
        %2173 = vmatpush1.bf16.xpose.msra.mxu0 0
        %2174 = vmatprep.subr.bf16.mxu0 0
        %2175 = vmatpush1.bf16.xpose.msra.mxu0 0
        %2176 = vmatprep.subr.bf16.mxu0 0
        %2177 = vmatpush1.bf16.xpose.msra.mxu0 0
        %2178 = vmatprep.mubr.bf16.mxu0 0
        %2179 = vmatmul.mubr.bf16.gmra.mrb[0].mxu0 %v2141
        %v2180 = vpop.f32.mrb[0].mxu0
        %v2181 = vadd.f32 0.0, %v2180
        %v2182 = vpop.f32.mrb[0].mxu0
        %v2183 = vpop.f32.mrb[0].mxu0
        %v2184 = vadd.f32 0.0, %v2183
        %v2185 = vpop.f32.mrb[0].mxu0
        %2186 = vdwg.mxu0
        %vm2187 = vcmask 130048
        %v2188 = vsel %vm2187, %v2040, -inf
        %2189 = vmax.xlane.f32.xlu0 %v2188
        %v2190 = vpop.xlane.xlu0 %2189
        %v2191 = vsel %vm2187, %v2043, -inf
        %2192 = vmax.xlane.f32.xlu0 %v2191
        %v2193 = vpop.xlane.xlu0 %2192
        %v2194 = vsel %vm2187, %v2087, -inf
        %2195 = vmax.xlane.f32.xlu0 %v2194
        %v2196 = vpop.xlane.xlu0 %2195
        %v2197 = vsel %vm2187, %v2090, -inf
        %2198 = vmax.xlane.f32.xlu0 %v2197
        %v2199 = vpop.xlane.xlu0 %2198
        %v2200 = vsel %vm2187, %v2134, -inf
        %2201 = vmax.xlane.f32.xlu0 %v2200
        %v2202 = vpop.xlane.xlu0 %2201
        %v2203 = vsel %vm2187, %v2137, -inf
        %2204 = vmax.xlane.f32.xlu0 %v2203
        %v2205 = vpop.xlane.xlu0 %2204
        %v2206 = vsel %vm2187, %v2181, -inf
        %2207 = vmax.xlane.f32.xlu0 %v2206
        %v2208 = vpop.xlane.xlu0 %2207
        %v2209 = vsel %vm2187, %v2184, -inf
        %2210 = vmax.xlane.f32.xlu0 %v2209
        %v2211 = vpop.xlane.xlu0 %2210
        %v2212 = vsub.f32 %v2040, %v2190
        %v2213 = vsub.f32 %v2043, %v2193
        %v2214 = vsub.f32 %v2087, %v2196
        %v2215 = vsub.f32 %v2090, %v2199
        %v2216 = vsub.f32 %v2134, %v2202
        %v2217 = vsub.f32 %v2137, %v2205
        %v2218 = vsub.f32 %v2181, %v2208
        %v2219 = vsub.f32 %v2184, %v2211
        %v2220 = vmul.f32 %v2212, 1.442695
        %v2221 = vpow.pop %v2220
        %v2222 = vmul.f32 %v2213, 1.442695
        %v2223 = vpow.pop %v2222
        %v2224 = vmul.f32 %v2214, 1.442695
        %v2225 = vpow.pop %v2224
        %v2226 = vmul.f32 %v2215, 1.442695
        %v2227 = vpow.pop %v2226
        %v2228 = vmul.f32 %v2216, 1.442695
        %v2229 = vpow.pop %v2228
        %v2230 = vmul.f32 %v2217, 1.442695
        %v2231 = vpow.pop %v2230
        %v2232 = vmul.f32 %v2218, 1.442695
        %v2233 = vpow.pop %v2232
        %v2234 = vmul.f32 %v2219, 1.442695
        %v2235 = vpow.pop %v2234
        %v2236 = vsel %vm2187, %v2221, 0.0
        %2237 = vadd.xlane.f32.xlu0 %v2236
        %v2238 = vpop.xlane.xlu0 %2237
        %v2239 = vsel %vm2187, %v2223, 0.0
        %2240 = vadd.xlane.f32.xlu0 %v2239
        %v2241 = vpop.xlane.xlu0 %2240
        %v2242 = vsel %vm2187, %v2225, 0.0
        %2243 = vadd.xlane.f32.xlu0 %v2242
        %v2244 = vpop.xlane.xlu0 %2243
        %v2245 = vsel %vm2187, %v2227, 0.0
        %2246 = vadd.xlane.f32.xlu0 %v2245
        %v2247 = vpop.xlane.xlu0 %2246
        %v2248 = vsel %vm2187, %v2229, 0.0
        %2249 = vadd.xlane.f32.xlu0 %v2248
        %v2250 = vpop.xlane.xlu0 %2249
        %v2251 = vsel %vm2187, %v2231, 0.0
        %2252 = vadd.xlane.f32.xlu0 %v2251
        %v2253 = vpop.xlane.xlu0 %2252
        %v2254 = vsel %vm2187, %v2233, 0.0
        %2255 = vadd.xlane.f32.xlu0 %v2254
        %v2256 = vpop.xlane.xlu0 %2255
        %v2257 = vsel %vm2187, %v2235, 0.0
        %2258 = vadd.xlane.f32.xlu0 %v2257
        %v2259 = vpop.xlane.xlu0 %2258
        %v2260 = vrcp.pop %v2238
        %v2261 = vrcp.pop %v2241
        %v2262 = vrcp.pop %v2244
        %v2263 = vrcp.pop %v2247
        %v2264 = vrcp.pop %v2250
        %v2265 = vrcp.pop %v2253
        %v2266 = vrcp.pop %v2256
        %v2267 = vrcp.pop %v2259
        %v2268 = vmul.f32 %v2221, %v2260
        %v2269 = vmul.f32 %v2223, %v2261
        %v2270 = vmul.f32 %v2225, %v2262
        %v2271 = vmul.f32 %v2227, %v2263
        %v2272 = vmul.f32 %v2229, %v2264
        %v2273 = vmul.f32 %v2231, %v2265
        %v2274 = vmul.f32 %v2233, %v2266
        %v2275 = vmul.f32 %v2235, %v2267
        %v2276 = vpack.c.bf16 %v2269, %v2268
        %v2277 = vpack.c.bf16 %v2271, %v2270
        %v2278 = vpack.c.bf16 %v2273, %v2272
        %v2279 = vpack.c.bf16 %v2275, %v2274
        %v2281 = vsel %vm2187, %v2276, 0
        %2283 = vmatprep.subr.bf16.mxu0 0
        %2284 = vmatpush1.bf16.msra.mxu0 %v1994
        %2285 = vmatprep.subr.bf16.mxu0 0
        %2286 = vmatpush1.bf16.msra.mxu0 0
        %2287 = vmatprep.subr.bf16.mxu0 0
        %2288 = vmatpush1.bf16.msra.mxu0 0
        %2289 = vmatprep.subr.bf16.mxu0 0
        %2290 = vmatpush1.bf16.msra.mxu0 0
        %2291 = vmatprep.subr.bf16.mxu0 0
        %2292 = vmatpush1.bf16.msra.mxu0 0
        %2293 = vmatprep.subr.bf16.mxu0 0
        %2294 = vmatpush1.bf16.msra.mxu0 0
        %2295 = vmatprep.subr.bf16.mxu0 0
        %2296 = vmatpush1.bf16.msra.mxu0 0
        %2297 = vmatprep.subr.bf16.mxu0 0
        %2298 = vmatpush1.bf16.msra.mxu0 0
        %2299 = vmatprep.subr.bf16.mxu0 0
        %2300 = vmatpush1.bf16.msra.mxu0 0
        %2301 = vmatprep.subr.bf16.mxu0 0
        %2302 = vmatpush1.bf16.msra.mxu0 0
        %2303 = vmatprep.subr.bf16.mxu0 0
        %2304 = vmatpush1.bf16.msra.mxu0 0
        %2305 = vmatprep.subr.bf16.mxu0 0
        %2306 = vmatpush1.bf16.msra.mxu0 0
        %2307 = vmatprep.subr.bf16.mxu0 0
        %2308 = vmatpush1.bf16.msra.mxu0 0
        %2309 = vmatprep.subr.bf16.mxu0 0
        %2310 = vmatpush1.bf16.msra.mxu0 0
        %2311 = vmatprep.subr.bf16.mxu0 0
        %2312 = vmatpush1.bf16.msra.mxu0 0
        %2313 = vmatprep.subr.bf16.mxu0 0
        %2314 = vmatpush1.bf16.msra.mxu0 0
        %2315 = vmatprep.mubr.bf16.mxu0 0
        %2316 = vmatmul.mubr.bf16.gmra.mrb[0].mxu0 %v2281
        %v2317 = vpop.f32.mrb[0].mxu0
        %v2318 = vadd.f32 0.0, %v2317
        %v2319 = vpop.f32.mrb[0].mxu0
        %v2320 = vpop.f32.mrb[0].mxu0
        %v2321 = vadd.f32 0.0, %v2320
        %v2322 = vpop.f32.mrb[0].mxu0
        %2323 = vdwg.mxu0
        %v2325 = vsel %vm2187, %v2277, 0
        %2327 = vmatprep.subr.bf16.mxu0 0
        %2328 = vmatpush1.bf16.msra.mxu0 %v1995
        %2329 = vmatprep.subr.bf16.mxu0 0
        %2330 = vmatpush1.bf16.msra.mxu0 0
        %2331 = vmatprep.subr.bf16.mxu0 0
        %2332 = vmatpush1.bf16.msra.mxu0 0
        %2333 = vmatprep.subr.bf16.mxu0 0
        %2334 = vmatpush1.bf16.msra.mxu0 0
        %2335 = vmatprep.subr.bf16.mxu0 0
        %2336 = vmatpush1.bf16.msra.mxu0 0
        %2337 = vmatprep.subr.bf16.mxu0 0
        %2338 = vmatpush1.bf16.msra.mxu0 0
        %2339 = vmatprep.subr.bf16.mxu0 0
        %2340 = vmatpush1.bf16.msra.mxu0 0
        %2341 = vmatprep.subr.bf16.mxu0 0
        %2342 = vmatpush1.bf16.msra.mxu0 0
        %2343 = vmatprep.subr.bf16.mxu0 0
        %2344 = vmatpush1.bf16.msra.mxu0 0
        %2345 = vmatprep.subr.bf16.mxu0 0
        %2346 = vmatpush1.bf16.msra.mxu0 0
        %2347 = vmatprep.subr.bf16.mxu0 0
        %2348 = vmatpush1.bf16.msra.mxu0 0
        %2349 = vmatprep.subr.bf16.mxu0 0
        %2350 = vmatpush1.bf16.msra.mxu0 0
        %2351 = vmatprep.subr.bf16.mxu0 0
        %2352 = vmatpush1.bf16.msra.mxu0 0
        %2353 = vmatprep.subr.bf16.mxu0 0
        %2354 = vmatpush1.bf16.msra.mxu0 0
        %2355 = vmatprep.subr.bf16.mxu0 0
        %2356 = vmatpush1.bf16.msra.mxu0 0
        %2357 = vmatprep.subr.bf16.mxu0 0
        %2358 = vmatpush1.bf16.msra.mxu0 0
        %2359 = vmatprep.mubr.bf16.mxu0 0
        %2360 = vmatmul.mubr.bf16.gmra.mrb[0].mxu0 %v2325
        %v2361 = vpop.f32.mrb[0].mxu0
        %v2362 = vadd.f32 0.0, %v2361
        %v2363 = vpop.f32.mrb[0].mxu0
        %v2364 = vpop.f32.mrb[0].mxu0
        %v2365 = vadd.f32 0.0, %v2364
        %v2366 = vpop.f32.mrb[0].mxu0
        %2367 = vdwg.mxu0
        %v2369 = vsel %vm2187, %v2278, 0
        %2371 = vmatprep.subr.bf16.mxu0 0
        %2372 = vmatpush1.bf16.msra.mxu0 %v1996
        %2373 = vmatprep.subr.bf16.mxu0 0
        %2374 = vmatpush1.bf16.msra.mxu0 0
        %2375 = vmatprep.subr.bf16.mxu0 0
        %2376 = vmatpush1.bf16.msra.mxu0 0
        %2377 = vmatprep.subr.bf16.mxu0 0
        %2378 = vmatpush1.bf16.msra.mxu0 0
        %2379 = vmatprep.subr.bf16.mxu0 0
        %2380 = vmatpush1.bf16.msra.mxu0 0
        %2381 = vmatprep.subr.bf16.mxu0 0
        %2382 = vmatpush1.bf16.msra.mxu0 0
        %2383 = vmatprep.subr.bf16.mxu0 0
        %2384 = vmatpush1.bf16.msra.mxu0 0
        %2385 = vmatprep.subr.bf16.mxu0 0
        %2386 = vmatpush1.bf16.msra.mxu0 0
        %2387 = vmatprep.subr.bf16.mxu0 0
        %2388 = vmatpush1.bf16.msra.mxu0 0
        %2389 = vmatprep.subr.bf16.mxu0 0
        %2390 = vmatpush1.bf16.msra.mxu0 0
        %2391 = vmatprep.subr.bf16.mxu0 0
        %2392 = vmatpush1.bf16.msra.mxu0 0
        %2393 = vmatprep.subr.bf16.mxu0 0
        %2394 = vmatpush1.bf16.msra.mxu0 0
        %2395 = vmatprep.subr.bf16.mxu0 0
        %2396 = vmatpush1.bf16.msra.mxu0 0
        %2397 = vmatprep.subr.bf16.mxu0 0
        %2398 = vmatpush1.bf16.msra.mxu0 0
        %2399 = vmatprep.subr.bf16.mxu0 0
        %2400 = vmatpush1.bf16.msra.mxu0 0
        %2401 = vmatprep.subr.bf16.mxu0 0
        %2402 = vmatpush1.bf16.msra.mxu0 0
        %2403 = vmatprep.mubr.bf16.mxu0 0
        %2404 = vmatmul.mubr.bf16.gmra.mrb[0].mxu0 %v2369
        %v2405 = vpop.f32.mrb[0].mxu0
        %v2406 = vadd.f32 0.0, %v2405
        %v2407 = vpop.f32.mrb[0].mxu0
        %v2408 = vpop.f32.mrb[0].mxu0
        %v2409 = vadd.f32 0.0, %v2408
        %v2410 = vpop.f32.mrb[0].mxu0
        %2411 = vdwg.mxu0
        %v2413 = vsel %vm2187, %v2279, 0
        %2415 = vmatprep.subr.bf16.mxu0 0
        %2416 = vmatpush1.bf16.msra.mxu0 %v1997
        %2417 = vmatprep.subr.bf16.mxu0 0
        %2418 = vmatpush1.bf16.msra.mxu0 0
        %2419 = vmatprep.subr.bf16.mxu0 0
        %2420 = vmatpush1.bf16.msra.mxu0 0
        %2421 = vmatprep.subr.bf16.mxu0 0
        %2422 = vmatpush1.bf16.msra.mxu0 0
        %2423 = vmatprep.subr.bf16.mxu0 0
        %2424 = vmatpush1.bf16.msra.mxu0 0
        %2425 = vmatprep.subr.bf16.mxu0 0
        %2426 = vmatpush1.bf16.msra.mxu0 0
        %2427 = vmatprep.subr.bf16.mxu0 0
        %2428 = vmatpush1.bf16.msra.mxu0 0
        %2429 = vmatprep.subr.bf16.mxu0 0
        %2430 = vmatpush1.bf16.msra.mxu0 0
        %2431 = vmatprep.subr.bf16.mxu0 0
        %2432 = vmatpush1.bf16.msra.mxu0 0
        %2433 = vmatprep.subr.bf16.mxu0 0
        %2434 = vmatpush1.bf16.msra.mxu0 0
        %2435 = vmatprep.subr.bf16.mxu0 0
        %2436 = vmatpush1.bf16.msra.mxu0 0
        %2437 = vmatprep.subr.bf16.mxu0 0
        %2438 = vmatpush1.bf16.msra.mxu0 0
        %2439 = vmatprep.subr.bf16.mxu0 0
        %2440 = vmatpush1.bf16.msra.mxu0 0
        %2441 = vmatprep.subr.bf16.mxu0 0
        %2442 = vmatpush1.bf16.msra.mxu0 0
        %2443 = vmatprep.subr.bf16.mxu0 0
        %2444 = vmatpush1.bf16.msra.mxu0 0
        %2445 = vmatprep.subr.bf16.mxu0 0
        %2446 = vmatpush1.bf16.msra.mxu0 0
        %2447 = vmatprep.mubr.bf16.mxu0 0
        %2448 = vmatmul.mubr.bf16.gmra.mrb[0].mxu0 %v2413
        %v2449 = vpop.f32.mrb[0].mxu0
        %v2450 = vadd.f32 0.0, %v2449
        %v2451 = vpop.f32.mrb[0].mxu0
        %v2452 = vpop.f32.mrb[0].mxu0
        %v2453 = vadd.f32 0.0, %v2452
        %v2454 = vpop.f32.mrb[0].mxu0
        %2455 = vdwg.mxu0
        %v2456 = vcombine.low %v2318, %v2406
        %v2457 = vcombine.high %v2318, %v2406
        %v2459 = vunpack.c.l.s4 1983009808
        %v2460 = vunpack.c.0.s8 %v2459
        %v2461 = vlaneseq
        %v2462 = vshrl.u32 %v2461, 7
        %v2463 = vsub.s32 %v2460, %v2462
        %v2464 = vrot.slane %v2456, %v2463
        %v2466 = vunpack.c.l.s4 1983009808
        %v2467 = vunpack.c.0.s8 %v2466
        %v2468 = vlaneseq
        %v2469 = vshrl.u32 %v2468, 7
        %v2470 = vsub.s32 %v2467, %v2469
        %v2471 = vrot.slane %v2457, %v2470
        %v2472 = vcombine.low %v2362, %v2450
        %v2473 = vcombine.high %v2362, %v2450
        %v2475 = vunpack.c.l.s4 1983009808
        %v2476 = vunpack.c.0.s8 %v2475
        %v2477 = vlaneseq
        %v2478 = vshrl.u32 %v2477, 7
        %v2479 = vsub.s32 %v2476, %v2478
        %v2480 = vrot.slane %v2472, %v2479
        %v2482 = vunpack.c.l.s4 1983009808
        %v2483 = vunpack.c.0.s8 %v2482
        %v2484 = vlaneseq
        %v2485 = vshrl.u32 %v2484, 7
        %v2486 = vsub.s32 %v2483, %v2485
        %v2487 = vrot.slane %v2473, %v2486
        %v2488 = vcombine.low %v2464, %v2480
        %v2489 = vcombine.high %v2464, %v2480
        %v2491 = vunpack.c.l.s4 1934713408
        %v2492 = vunpack.c.0.s8 %v2491
        %v2493 = vlaneseq
        %v2494 = vshrl.u32 %v2493, 7
        %v2495 = vsub.s32 %v2492, %v2494
        %v2496 = vrot.slane %v2488, %v2495
        %v2498 = vunpack.c.l.s4 1934713408
        %v2499 = vunpack.c.0.s8 %v2498
        %v2500 = vlaneseq
        %v2501 = vshrl.u32 %v2500, 7
        %v2502 = vsub.s32 %v2499, %v2501
        %v2503 = vrot.slane %v2489, %v2502
        %v2504 = vcombine.low %v2471, %v2487
        %v2505 = vcombine.high %v2471, %v2487
        %v2507 = vunpack.c.l.s4 1934713408
        %v2508 = vunpack.c.0.s8 %v2507
        %v2509 = vlaneseq
        %v2510 = vshrl.u32 %v2509, 7
        %v2511 = vsub.s32 %v2508, %v2510
        %v2512 = vrot.slane %v2504, %v2511
        %v2514 = vunpack.c.l.s4 1934713408
        %v2515 = vunpack.c.0.s8 %v2514
        %v2516 = vlaneseq
        %v2517 = vshrl.u32 %v2516, 7
        %v2518 = vsub.s32 %v2515, %v2517
        %v2519 = vrot.slane %v2505, %v2518
        %v2520 = vcombine.high %v2496, 0.0
        %v2521 = vcombine.high %v2503, 0.0
        %v2522 = vcombine.high %v2512, 0.0
        %v2523 = vcombine.high %v2519, 0.0
        %v2524 = vcombine.low %v2321, %v2409
        %v2525 = vcombine.high %v2321, %v2409
        %v2527 = vunpack.c.l.s4 1983009808
        %v2528 = vunpack.c.0.s8 %v2527
        %v2529 = vlaneseq
        %v2530 = vshrl.u32 %v2529, 7
        %v2531 = vsub.s32 %v2528, %v2530
        %v2532 = vrot.slane %v2524, %v2531
        %v2534 = vunpack.c.l.s4 1983009808
        %v2535 = vunpack.c.0.s8 %v2534
        %v2536 = vlaneseq
        %v2537 = vshrl.u32 %v2536, 7
        %v2538 = vsub.s32 %v2535, %v2537
        %v2539 = vrot.slane %v2525, %v2538
        %v2540 = vcombine.low %v2365, %v2453
        %v2541 = vcombine.high %v2365, %v2453
        %v2543 = vunpack.c.l.s4 1983009808
        %v2544 = vunpack.c.0.s8 %v2543
        %v2545 = vlaneseq
        %v2546 = vshrl.u32 %v2545, 7
        %v2547 = vsub.s32 %v2544, %v2546
        %v2548 = vrot.slane %v2540, %v2547
        %v2550 = vunpack.c.l.s4 1983009808
        %v2551 = vunpack.c.0.s8 %v2550
        %v2552 = vlaneseq
        %v2553 = vshrl.u32 %v2552, 7
        %v2554 = vsub.s32 %v2551, %v2553
        %v2555 = vrot.slane %v2541, %v2554
        %v2556 = vcombine.low %v2532, %v2548
        %v2557 = vcombine.high %v2532, %v2548
        %v2559 = vunpack.c.l.s4 1934713408
        %v2560 = vunpack.c.0.s8 %v2559
        %v2561 = vlaneseq
        %v2562 = vshrl.u32 %v2561, 7
        %v2563 = vsub.s32 %v2560, %v2562
        %v2564 = vrot.slane %v2556, %v2563
        %v2566 = vunpack.c.l.s4 1934713408
        %v2567 = vunpack.c.0.s8 %v2566
        %v2568 = vlaneseq
        %v2569 = vshrl.u32 %v2568, 7
        %v2570 = vsub.s32 %v2567, %v2569
        %v2571 = vrot.slane %v2557, %v2570
        %v2572 = vcombine.low %v2539, %v2555
        %v2573 = vcombine.high %v2539, %v2555
        %v2575 = vunpack.c.l.s4 1934713408
        %v2576 = vunpack.c.0.s8 %v2575
        %v2577 = vlaneseq
        %v2578 = vshrl.u32 %v2577, 7
        %v2579 = vsub.s32 %v2576, %v2578
        %v2580 = vrot.slane %v2572, %v2579
        %v2582 = vunpack.c.l.s4 1934713408
        %v2583 = vunpack.c.0.s8 %v2582
        %v2584 = vlaneseq
        %v2585 = vshrl.u32 %v2584, 7
        %v2586 = vsub.s32 %v2583, %v2585
        %v2587 = vrot.slane %v2573, %v2586
        %v2588 = vcombine.high %v2564, 0.0
        %v2589 = vcombine.high %v2571, 0.0
        %v2590 = vcombine.high %v2580, 0.0
        %v2591 = vcombine.high %v2587, 0.0
        %v2592 = vcombine.low %v2496, %v2503
        %v2594 = vunpack.c.l.s4 1983009808
        %v2595 = vunpack.c.0.s8 %v2594
        %v2596 = vlaneseq
        %v2597 = vshrl.u32 %v2596, 7
        %v2598 = vsub.s32 %v2595, %v2597
        %v2599 = vrot.slane %v2592, %v2598
        %v2600 = vcombine.low %v2520, %v2521
        %v2602 = vunpack.c.l.s4 1983009808
        %v2603 = vunpack.c.0.s8 %v2602
        %v2604 = vlaneseq
        %v2605 = vshrl.u32 %v2604, 7
        %v2606 = vsub.s32 %v2603, %v2605
        %v2607 = vrot.slane %v2600, %v2606
        %v2608 = vcombine.low %v2512, %v2519
        %v2610 = vunpack.c.l.s4 1983009808
        %v2611 = vunpack.c.0.s8 %v2610
        %v2612 = vlaneseq
        %v2613 = vshrl.u32 %v2612, 7
        %v2614 = vsub.s32 %v2611, %v2613
        %v2615 = vrot.slane %v2608, %v2614
        %v2616 = vcombine.low %v2522, %v2523
        %v2618 = vunpack.c.l.s4 1983009808
        %v2619 = vunpack.c.0.s8 %v2618
        %v2620 = vlaneseq
        %v2621 = vshrl.u32 %v2620, 7
        %v2622 = vsub.s32 %v2619, %v2621
        %v2623 = vrot.slane %v2616, %v2622
        %v2624 = vcombine.low %v2599, %v2607
        %v2625 = vcombine.high %v2599, %v2607
        %v2627 = vunpack.c.l.s4 1934713408
        %v2628 = vunpack.c.0.s8 %v2627
        %v2629 = vlaneseq
        %v2630 = vshrl.u32 %v2629, 7
        %v2631 = vsub.s32 %v2628, %v2630
        %v2632 = vrot.slane %v2624, %v2631
        %v2634 = vunpack.c.l.s4 1934713408
        %v2635 = vunpack.c.0.s8 %v2634
        %v2636 = vlaneseq
        %v2637 = vshrl.u32 %v2636, 7
        %v2638 = vsub.s32 %v2635, %v2637
        %v2639 = vrot.slane %v2625, %v2638
        %v2640 = vcombine.low %v2615, %v2623
        %v2641 = vcombine.high %v2615, %v2623
        %v2643 = vunpack.c.l.s4 1934713408
        %v2644 = vunpack.c.0.s8 %v2643
        %v2645 = vlaneseq
        %v2646 = vshrl.u32 %v2645, 7
        %v2647 = vsub.s32 %v2644, %v2646
        %v2648 = vrot.slane %v2640, %v2647
        %v2650 = vunpack.c.l.s4 1934713408
        %v2651 = vunpack.c.0.s8 %v2650
        %v2652 = vlaneseq
        %v2653 = vshrl.u32 %v2652, 7
        %v2654 = vsub.s32 %v2651, %v2653
        %v2655 = vrot.slane %v2641, %v2654
        %v2656 = vcombine.low %v2632, %v2648
        %v2657 = vcombine.high %v2632, %v2648
        %v2658 = vcombine.low %v2639, %v2655
        %v2659 = vcombine.high %v2639, %v2655
        %v2660 = vcombine.low %v2564, %v2571
        %v2662 = vunpack.c.l.s4 1983009808
        %v2663 = vunpack.c.0.s8 %v2662
        %v2664 = vlaneseq
        %v2665 = vshrl.u32 %v2664, 7
        %v2666 = vsub.s32 %v2663, %v2665
        %v2667 = vrot.slane %v2660, %v2666
        %v2668 = vcombine.low %v2588, %v2589
        %v2670 = vunpack.c.l.s4 1983009808
        %v2671 = vunpack.c.0.s8 %v2670
        %v2672 = vlaneseq
        %v2673 = vshrl.u32 %v2672, 7
        %v2674 = vsub.s32 %v2671, %v2673
        %v2675 = vrot.slane %v2668, %v2674
        %v2676 = vcombine.low %v2580, %v2587
        %v2678 = vunpack.c.l.s4 1983009808
        %v2679 = vunpack.c.0.s8 %v2678
        %v2680 = vlaneseq
        %v2681 = vshrl.u32 %v2680, 7
        %v2682 = vsub.s32 %v2679, %v2681
        %v2683 = vrot.slane %v2676, %v2682
        %v2684 = vcombine.low %v2590, %v2591
        %v2686 = vunpack.c.l.s4 1983009808
        %v2687 = vunpack.c.0.s8 %v2686
        %v2688 = vlaneseq
        %v2689 = vshrl.u32 %v2688, 7
        %v2690 = vsub.s32 %v2687, %v2689
        %v2691 = vrot.slane %v2684, %v2690
        %v2692 = vcombine.low %v2667, %v2675
        %v2693 = vcombine.high %v2667, %v2675
        %v2695 = vunpack.c.l.s4 1934713408
        %v2696 = vunpack.c.0.s8 %v2695
        %v2697 = vlaneseq
        %v2698 = vshrl.u32 %v2697, 7
        %v2699 = vsub.s32 %v2696, %v2698
        %v2700 = vrot.slane %v2692, %v2699
        %v2702 = vunpack.c.l.s4 1934713408
        %v2703 = vunpack.c.0.s8 %v2702
        %v2704 = vlaneseq
        %v2705 = vshrl.u32 %v2704, 7
        %v2706 = vsub.s32 %v2703, %v2705
        %v2707 = vrot.slane %v2693, %v2706
        %v2708 = vcombine.low %v2683, %v2691
        %v2709 = vcombine.high %v2683, %v2691
        %v2711 = vunpack.c.l.s4 1934713408
        %v2712 = vunpack.c.0.s8 %v2711
        %v2713 = vlaneseq
        %v2714 = vshrl.u32 %v2713, 7
        %v2715 = vsub.s32 %v2712, %v2714
        %v2716 = vrot.slane %v2708, %v2715
        %v2718 = vunpack.c.l.s4 1934713408
        %v2719 = vunpack.c.0.s8 %v2718
        %v2720 = vlaneseq
        %v2721 = vshrl.u32 %v2720, 7
        %v2722 = vsub.s32 %v2719, %v2721
        %v2723 = vrot.slane %v2709, %v2722
        %v2724 = vcombine.low %v2700, %v2716
        %v2725 = vcombine.high %v2700, %v2716
        %v2726 = vcombine.low %v2707, %v2723
        %v2727 = vcombine.high %v2707, %v2723
        %2730 = vrot.lane.b32.xlu0 %v2657, 32
        %v2731 = vpop.permute.xlu0 %2730
        %2732 = vrot.lane.b32.xlu0 %v2725, 32
        %v2733 = vpop.permute.xlu0 %2732
        %2738 = vrot.lane.b32.xlu0 %v2658, 64
        %v2739 = vpop.permute.xlu0 %2738
        %2740 = vrot.lane.b32.xlu0 %v2726, 64
        %v2741 = vpop.permute.xlu0 %2740
        %2746 = vrot.lane.b32.xlu0 %v2659, 96
        %v2747 = vpop.permute.xlu0 %2746
        %2748 = vrot.lane.b32.xlu0 %v2727, 96
        %v2749 = vpop.permute.xlu0 %2748
        %v2752 = vsel %vm1998, %v2656, %v2731
        %v2753 = vsel %vm1998, %v2724, %v2733
        %vm2754 = vcmask 523264
        %v2755 = vsel %vm2754, %v2752, %v2739
        %v2756 = vsel %vm2754, %v2753, %v2741
        %vm2757 = vcmask 785408
        %v2758 = vsel %vm2757, %v2755, %v2747
        %v2759 = vsel %vm2757, %v2756, %v2749
        %v2760 = vpack.c.bf16 %v2759, %v2758
        %v2761 = vld [vmem:[#allocation8] sm:$0xf]
        %v2762 = vld [vmem:[#allocation8 + $0x4] sm:$0xf]
        %v2763 = vld [vmem:[#allocation8 + $0x8] sm:$0xf]
        %v2764 = vld [vmem:[#allocation8 + $0xc] sm:$0xf]
        %v2765 = vld [vmem:[#allocation8 + $0x10] sm:$0xf]
        %v2766 = vld [vmem:[#allocation8 + $0x14] sm:$0xf]
        %v2767 = vld [vmem:[#allocation8 + $0x18] sm:$0xf]
        %v2768 = vld [vmem:[#allocation8 + $0x1c] sm:$0xf]
        %v2769 = vld [vmem:[#allocation8 + $0x20] sm:$0xf]
        %v2770 = vld [vmem:[#allocation8 + $0x24] sm:$0xf]
        %v2771 = vld [vmem:[#allocation8 + $0x28] sm:$0xf]
        %v2772 = vld [vmem:[#allocation8 + $0x2c] sm:$0xf]
        %v2773 = vld [vmem:[#allocation8 + $0x30] sm:$0xf]
        %v2774 = vld [vmem:[#allocation8 + $0x34] sm:$0xf]
        %v2775 = vld [vmem:[#allocation8 + $0x38] sm:$0xf]
        %v2776 = vld [vmem:[#allocation8 + $0x3c] sm:$0xf]
        %v2777 = vld [vmem:[%s5] sm:$0x1]
        %v2779 = vlaneseq
        %v2780 = vshrl.u32 %v2779, 7
        %v2781 = vsub.s32 0, %v2780
        %v2782 = vrot.slane %v2777, %v2781
        %v2800 = vunpack.c.l.b16 %v2761
        %v2801 = vunpack.c.l.b16 %v2762
        %v2802 = vunpack.c.l.b16 %v2763
        %v2803 = vunpack.c.l.b16 %v2764
        %v2804 = vunpack.c.l.b16 %v2765
        %v2805 = vunpack.c.l.b16 %v2766
        %v2806 = vunpack.c.l.b16 %v2767
        %v2807 = vunpack.c.l.b16 %v2768
        %v2808 = vunpack.c.l.b16 %v2769
        %v2809 = vunpack.c.l.b16 %v2770
        %v2810 = vunpack.c.l.b16 %v2771
        %v2811 = vunpack.c.l.b16 %v2772
        %v2812 = vunpack.c.l.b16 %v2773
        %v2813 = vunpack.c.l.b16 %v2774
        %v2814 = vunpack.c.l.b16 %v2775
        %v2815 = vunpack.c.l.b16 %v2776
        %v2816 = vpack.c.b16 %v2801, %v2800
        %v2817 = vpack.c.b16 %v2803, %v2802
        %v2818 = vpack.c.b16 %v2805, %v2804
        %v2819 = vpack.c.b16 %v2807, %v2806
        %v2820 = vpack.c.b16 %v2809, %v2808
        %v2821 = vpack.c.b16 %v2811, %v2810
        %v2822 = vpack.c.b16 %v2813, %v2812
        %v2823 = vpack.c.b16 %v2815, %v2814
        %2832 = vmatprep.subr.bf16.mxu0 0
        %2833 = vmatpush1.bf16.msra.mxu0 %v2816
        %2834 = vmatprep.subr.bf16.mxu0 0
        %2835 = vmatpush1.bf16.msra.mxu0 %v2817
        %2836 = vmatprep.subr.bf16.mxu0 0
        %2837 = vmatpush1.bf16.msra.mxu0 %v2818
        %2838 = vmatprep.subr.bf16.mxu0 0
        %2839 = vmatpush1.bf16.msra.mxu0 %v2819
        %2840 = vmatprep.subr.bf16.mxu0 0
        %2841 = vmatpush1.bf16.msra.mxu0 %v2820
        %2842 = vmatprep.subr.bf16.mxu0 0
        %2843 = vmatpush1.bf16.msra.mxu0 %v2821
        %2844 = vmatprep.subr.bf16.mxu0 0
        %2845 = vmatpush1.bf16.msra.mxu0 %v2822
        %2846 = vmatprep.subr.bf16.mxu0 0
        %2847 = vmatpush1.bf16.msra.mxu0 %v2823
        %2848 = vmatprep.subr.bf16.mxu0 0
        %2849 = vmatpush1.bf16.msra.mxu0 0
        %2850 = vmatprep.subr.bf16.mxu0 0
        %2851 = vmatpush1.bf16.msra.mxu0 0
        %2852 = vmatprep.subr.bf16.mxu0 0
        %2853 = vmatpush1.bf16.msra.mxu0 0
        %2854 = vmatprep.subr.bf16.mxu0 0
        %2855 = vmatpush1.bf16.msra.mxu0 0
        %2856 = vmatprep.subr.bf16.mxu0 0
        %2857 = vmatpush1.bf16.msra.mxu0 0
        %2858 = vmatprep.subr.bf16.mxu0 0
        %2859 = vmatpush1.bf16.msra.mxu0 0
        %2860 = vmatprep.subr.bf16.mxu0 0
        %2861 = vmatpush1.bf16.msra.mxu0 0
        %2862 = vmatprep.subr.bf16.mxu0 0
        %2863 = vmatpush1.bf16.msra.mxu0 0
        %2864 = vmatprep.mubr.bf16.mxu0 0
        %2865 = vmatmul.mubr.bf16.gmra.mrb[0].mxu0 %v2760
        %v2866 = vpop.f32.mrb[0].mxu0
        %v2867 = vadd.f32 %v2782, %v2866
        %v2868 = vpop.f32.mrb[0].mxu0
        %v2869 = vpop.f32.mrb[0].mxu0
        %v2870 = vadd.f32 %v2782, %v2869
        %v2871 = vpop.f32.mrb[0].mxu0
        %2872 = vdwg.mxu0
        %v2873 = vadd.f32 %v2867, %v846
        %v2874 = vadd.f32 %v2870, %v847
        %v2875 = vld [vmem:[%s6] sm:$0x1]
        %v2876 = vld [vmem:[%s7] sm:$0x1]
        %2877 = vadd.xlane.f32.xlu0 %v2873
        %v2878 = vpop.xlane.xlu0 %2877
        %2879 = vadd.xlane.f32.xlu0 %v2874
        %v2880 = vpop.xlane.xlu0 %2879
        %v2881 = vrcp.pop 128.0
        %v2882 = vmul.f32 %v2878, %v2881
        %v2883 = vmul.f32 %v2880, %v2881
        %v2884 = vsub.f32 %v2873, %v2882
        %v2885 = vsub.f32 %v2874, %v2883
        %v2886 = vmul.f32 %v2884, %v2884
        %v2887 = vmul.f32 %v2885, %v2885
        %2888 = vadd.xlane.f32.xlu0 %v2886
        %v2889 = vpop.xlane.xlu0 %2888
        %2890 = vadd.xlane.f32.xlu0 %v2887
        %v2891 = vpop.xlane.xlu0 %2890
        %v2892 = vmul.f32 %v2889, %v2881
        %v2893 = vmul.f32 %v2891, %v2881
        %v2894 = vadd.f32 %v2892, 1e-05
        %v2895 = vadd.f32 %v2893, 1e-05
        %v2896 = vrsqrt.pop %v2894
        %v2897 = vmul.f32 %v2894, %v2896
        %vm2898 = vcmp.eq.f32.partialorder %v2894, inf
        %v2899 = vsel %vm2898, %v2894, %v2897
        %vm2900 = vcmp.eq.f32.partialorder %v2894, 0.0
        %v2901 = vand.u32 %v2894, 2147483648
        %v2902 = vsel %vm2900, %v2901, %v2899
        %v2903 = vrsqrt.pop %v2895
        %v2904 = vmul.f32 %v2895, %v2903
        %vm2905 = vcmp.eq.f32.partialorder %v2895, inf
        %v2906 = vsel %vm2905, %v2895, %v2904
        %vm2907 = vcmp.eq.f32.partialorder %v2895, 0.0
        %v2908 = vand.u32 %v2895, 2147483648
        %v2909 = vsel %vm2907, %v2908, %v2906
        %v2910 = vrcp.pop %v2902
        %v2911 = vmul.f32 %v2884, %v2910
        %v2912 = vrcp.pop %v2909
        %v2913 = vmul.f32 %v2885, %v2912
        %v2915 = vlaneseq
        %v2916 = vshrl.u32 %v2915, 7
        %v2917 = vsub.s32 0, %v2916
        %v2918 = vrot.slane %v2875, %v2917
        %v2920 = vmul.f32 %v2918, %v2911
        %v2921 = vmul.f32 %v2918, %v2913
        %v2923 = vlaneseq
        %v2924 = vshrl.u32 %v2923, 7
        %v2925 = vsub.s32 0, %v2924
        %v2926 = vrot.slane %v2876, %v2925
        %v2928 = vadd.f32 %v2920, %v2926
        %v2929 = vadd.f32 %v2921, %v2926
        %v2930 = vpack.c.bf16 %v845, %v844
        %v2931 = vld [vmem:[#allocation11] sm:$0xff]
        %v2932 = vld [vmem:[#allocation11 + $0x8] sm:$0xff]
        %v2933 = vld [vmem:[#allocation11 + $0x10] sm:$0xff]
        %v2934 = vld [vmem:[#allocation11 + $0x18] sm:$0xff]
        %v2935 = vld [vmem:[#allocation11 + $0x20] sm:$0xff]
        %v2936 = vld [vmem:[#allocation11 + $0x28] sm:$0xff]
        %v2937 = vld [vmem:[#allocation11 + $0x30] sm:$0xff]
        %v2938 = vld [vmem:[#allocation11 + $0x38] sm:$0xff]
        %v2939 = vld [vmem:[#allocation11 + $0x40] sm:$0xff]
        %v2940 = vld [vmem:[#allocation11 + $0x48] sm:$0xff]
        %v2941 = vld [vmem:[#allocation11 + $0x50] sm:$0xff]
        %v2942 = vld [vmem:[#allocation11 + $0x58] sm:$0xff]
        %v2943 = vld [vmem:[#allocation11 + $0x60] sm:$0xff]
        %v2944 = vld [vmem:[#allocation11 + $0x68] sm:$0xff]
        %v2945 = vld [vmem:[#allocation11 + $0x70] sm:$0xff]
        %v2946 = vld [vmem:[#allocation11 + $0x78] sm:$0xff]
        %v2947 = vld [vmem:[%s11] sm:$0x3]
        %v2949 = vlaneseq
        %v2950 = vshrl.u32 %v2949, 7
        %v2951 = vsub.s32 0, %v2950
        %v2952 = vrot.slane %v2947, %v2951
        %v2953 = vlaneseq
        %v2954 = vshrl.u32 %v2953, 7
        %v2955 = vsub.s32 1, %v2954
        %v2956 = vrot.slane %v2947, %v2955
        %v2975 = vunpack.c.l.b16 %v2931
        %v2976 = vunpack.c.h.b16 %v2931
        %v2977 = vunpack.c.l.b16 %v2932
        %v2978 = vunpack.c.h.b16 %v2932
        %v2979 = vunpack.c.l.b16 %v2933
        %v2980 = vunpack.c.h.b16 %v2933
        %v2981 = vunpack.c.l.b16 %v2934
        %v2982 = vunpack.c.h.b16 %v2934
        %v2983 = vunpack.c.l.b16 %v2935
        %v2984 = vunpack.c.h.b16 %v2935
        %v2985 = vunpack.c.l.b16 %v2936
        %v2986 = vunpack.c.h.b16 %v2936
        %v2987 = vunpack.c.l.b16 %v2937
        %v2988 = vunpack.c.h.b16 %v2937
        %v2989 = vunpack.c.l.b16 %v2938
        %v2990 = vunpack.c.h.b16 %v2938
        %v2991 = vunpack.c.l.b16 %v2939
        %v2992 = vunpack.c.h.b16 %v2939
        %v2993 = vunpack.c.l.b16 %v2940
        %v2994 = vunpack.c.h.b16 %v2940
        %v2995 = vunpack.c.l.b16 %v2941
        %v2996 = vunpack.c.h.b16 %v2941
        %v2997 = vunpack.c.l.b16 %v2942
        %v2998 = vunpack.c.h.b16 %v2942
        %v2999 = vunpack.c.l.b16 %v2943
        %v3000 = vunpack.c.h.b16 %v2943
        %v3001 = vunpack.c.l.b16 %v2944
        %v3002 = vunpack.c.h.b16 %v2944
        %v3003 = vunpack.c.l.b16 %v2945
        %v3004 = vunpack.c.h.b16 %v2945
        %v3005 = vunpack.c.l.b16 %v2946
        %v3006 = vunpack.c.h.b16 %v2946
        %v3007 = vpack.c.b16 %v2977, %v2975
        %v3008 = vpack.c.b16 %v2978, %v2976
        %v3009 = vpack.c.b16 %v2981, %v2979
        %v3010 = vpack.c.b16 %v2982, %v2980
        %v3011 = vpack.c.b16 %v2985, %v2983
        %v3012 = vpack.c.b16 %v2986, %v2984
        %v3013 = vpack.c.b16 %v2989, %v2987
        %v3014 = vpack.c.b16 %v2990, %v2988
        %v3015 = vpack.c.b16 %v2993, %v2991
        %v3016 = vpack.c.b16 %v2994, %v2992
        %v3017 = vpack.c.b16 %v2997, %v2995
        %v3018 = vpack.c.b16 %v2998, %v2996
        %v3019 = vpack.c.b16 %v3001, %v2999
        %v3020 = vpack.c.b16 %v3002, %v3000
        %v3021 = vpack.c.b16 %v3005, %v3003
        %v3022 = vpack.c.b16 %v3006, %v3004
        %3039 = vmatprep.subr.bf16.mxu0 %v3008
        %3040 = vmatpush1.bf16.msra.mxu0 %v3007
        %3041 = vmatprep.subr.bf16.mxu0 %v3010
        %3042 = vmatpush1.bf16.msra.mxu0 %v3009
        %3043 = vmatprep.subr.bf16.mxu0 %v3012
        %3044 = vmatpush1.bf16.msra.mxu0 %v3011
        %3045 = vmatprep.subr.bf16.mxu0 %v3014
        %3046 = vmatpush1.bf16.msra.mxu0 %v3013
        %3047 = vmatprep.subr.bf16.mxu0 %v3016
        %3048 = vmatpush1.bf16.msra.mxu0 %v3015
        %3049 = vmatprep.subr.bf16.mxu0 %v3018
        %3050 = vmatpush1.bf16.msra.mxu0 %v3017
        %3051 = vmatprep.subr.bf16.mxu0 %v3020
        %3052 = vmatpush1.bf16.msra.mxu0 %v3019
        %3053 = vmatprep.subr.bf16.mxu0 %v3022
        %3054 = vmatpush1.bf16.msra.mxu0 %v3021
        %3055 = vmatprep.subr.bf16.mxu0 0
        %3056 = vmatpush1.bf16.msra.mxu0 0
        %3057 = vmatprep.subr.bf16.mxu0 0
        %3058 = vmatpush1.bf16.msra.mxu0 0
        %3059 = vmatprep.subr.bf16.mxu0 0
        %3060 = vmatpush1.bf16.msra.mxu0 0
        %3061 = vmatprep.subr.bf16.mxu0 0
        %3062 = vmatpush1.bf16.msra.mxu0 0
        %3063 = vmatprep.subr.bf16.mxu0 0
        %3064 = vmatpush1.bf16.msra.mxu0 0
        %3065 = vmatprep.subr.bf16.mxu0 0
        %3066 = vmatpush1.bf16.msra.mxu0 0
        %3067 = vmatprep.subr.bf16.mxu0 0
        %3068 = vmatpush1.bf16.msra.mxu0 0
        %3069 = vmatprep.subr.bf16.mxu0 0
        %3070 = vmatpush1.bf16.msra.mxu0 0
        %3071 = vmatprep.mubr.bf16.mxu0 0
        %3072 = vmatmul.mubr.bf16.gmra.mrb[0].mxu0 %v2930
        %v3073 = vpop.f32.mrb[0].mxu0
        %v3074 = vadd.f32 %v2952, %v3073
        %v3075 = vpop.f32.mrb[0].mxu0
        %v3076 = vadd.f32 %v2956, %v3075
        %v3077 = vpop.f32.mrb[0].mxu0
        %v3078 = vadd.f32 %v2952, %v3077
        %v3079 = vpop.f32.mrb[0].mxu0
        %v3080 = vadd.f32 %v2956, %v3079
        %3081 = vdwg.mxu0
        %v3082 = vpack.c.bf16 %v2929, %v2928
        %v3083 = vld [vmem:[#allocation10] sm:$0xf]
        %v3084 = vld [vmem:[#allocation10 + $0x4] sm:$0xf]
        %v3085 = vld [vmem:[#allocation10 + $0x8] sm:$0xf]
        %v3086 = vld [vmem:[#allocation10 + $0xc] sm:$0xf]
        %v3087 = vld [vmem:[#allocation10 + $0x10] sm:$0xf]
        %v3088 = vld [vmem:[#allocation10 + $0x14] sm:$0xf]
        %v3089 = vld [vmem:[#allocation10 + $0x18] sm:$0xf]
        %v3090 = vld [vmem:[#allocation10 + $0x1c] sm:$0xf]
        %v3091 = vld [vmem:[#allocation10 + $0x20] sm:$0xf]
        %v3092 = vld [vmem:[#allocation10 + $0x24] sm:$0xf]
        %v3093 = vld [vmem:[#allocation10 + $0x28] sm:$0xf]
        %v3094 = vld [vmem:[#allocation10 + $0x2c] sm:$0xf]
        %v3095 = vld [vmem:[#allocation10 + $0x30] sm:$0xf]
        %v3096 = vld [vmem:[#allocation10 + $0x34] sm:$0xf]
        %v3097 = vld [vmem:[#allocation10 + $0x38] sm:$0xf]
        %v3098 = vld [vmem:[#allocation10 + $0x3c] sm:$0xf]
        %v3099 = vld [vmem:[%s9] sm:$0x1]
        %v3101 = vlaneseq
        %v3102 = vshrl.u32 %v3101, 7
        %v3103 = vsub.s32 0, %v3102
        %v3104 = vrot.slane %v3099, %v3103
        %v3122 = vunpack.c.l.b16 %v3083
        %v3123 = vunpack.c.l.b16 %v3084
        %v3124 = vunpack.c.l.b16 %v3085
        %v3125 = vunpack.c.l.b16 %v3086
        %v3126 = vunpack.c.l.b16 %v3087
        %v3127 = vunpack.c.l.b16 %v3088
        %v3128 = vunpack.c.l.b16 %v3089
        %v3129 = vunpack.c.l.b16 %v3090
        %v3130 = vunpack.c.l.b16 %v3091
        %v3131 = vunpack.c.l.b16 %v3092
        %v3132 = vunpack.c.l.b16 %v3093
        %v3133 = vunpack.c.l.b16 %v3094
        %v3134 = vunpack.c.l.b16 %v3095
        %v3135 = vunpack.c.l.b16 %v3096
        %v3136 = vunpack.c.l.b16 %v3097
        %v3137 = vunpack.c.l.b16 %v3098
        %v3138 = vpack.c.b16 %v3123, %v3122
        %v3139 = vpack.c.b16 %v3125, %v3124
        %v3140 = vpack.c.b16 %v3127, %v3126
        %v3141 = vpack.c.b16 %v3129, %v3128
        %v3142 = vpack.c.b16 %v3131, %v3130
        %v3143 = vpack.c.b16 %v3133, %v3132
        %v3144 = vpack.c.b16 %v3135, %v3134
        %v3145 = vpack.c.b16 %v3137, %v3136
        %3154 = vmatprep.subr.bf16.mxu0 0
        %3155 = vmatpush1.bf16.msra.mxu0 %v3138
        %3156 = vmatprep.subr.bf16.mxu0 0
        %3157 = vmatpush1.bf16.msra.mxu0 %v3139
        %3158 = vmatprep.subr.bf16.mxu0 0
        %3159 = vmatpush1.bf16.msra.mxu0 %v3140
        %3160 = vmatprep.subr.bf16.mxu0 0
        %3161 = vmatpush1.bf16.msra.mxu0 %v3141
        %3162 = vmatprep.subr.bf16.mxu0 0
        %3163 = vmatpush1.bf16.msra.mxu0 %v3142
        %3164 = vmatprep.subr.bf16.mxu0 0
        %3165 = vmatpush1.bf16.msra.mxu0 %v3143
        %3166 = vmatprep.subr.bf16.mxu0 0
        %3167 = vmatpush1.bf16.msra.mxu0 %v3144
        %3168 = vmatprep.subr.bf16.mxu0 0
        %3169 = vmatpush1.bf16.msra.mxu0 %v3145
        %3170 = vmatprep.subr.bf16.mxu0 0
        %3171 = vmatpush1.bf16.msra.mxu0 0
        %3172 = vmatprep.subr.bf16.mxu0 0
        %3173 = vmatpush1.bf16.msra.mxu0 0
        %3174 = vmatprep.subr.bf16.mxu0 0
        %3175 = vmatpush1.bf16.msra.mxu0 0
        %3176 = vmatprep.subr.bf16.mxu0 0
        %3177 = vmatpush1.bf16.msra.mxu0 0
        %3178 = vmatprep.subr.bf16.mxu0 0
        %3179 = vmatpush1.bf16.msra.mxu0 0
        %3180 = vmatprep.subr.bf16.mxu0 0
        %3181 = vmatpush1.bf16.msra.mxu0 0
        %3182 = vmatprep.subr.bf16.mxu0 0
        %3183 = vmatpush1.bf16.msra.mxu0 0
        %3184 = vmatprep.subr.bf16.mxu0 0
        %3185 = vmatpush1.bf16.msra.mxu0 0
        %3186 = vmatprep.mubr.bf16.mxu0 0
        %3187 = vmatmul.mubr.bf16.gmra.mrb[0].mxu0 %v3082
        %v3188 = vpop.f32.mrb[0].mxu0
        %v3189 = vadd.f32 %v3104, %v3188
        %v3190 = vpop.f32.mrb[0].mxu0
        %v3191 = vpop.f32.mrb[0].mxu0
        %v3192 = vadd.f32 %v3104, %v3191
        %v3193 = vpop.f32.mrb[0].mxu0
        %3194 = vdwg.mxu0
        %3197 = vrot.lane.b32.xlu0 %v3189, 96
        %v3198 = vpop.permute.xlu0 %3197
        %3199 = vrot.lane.b32.xlu0 %v3192, 96
        %v3200 = vpop.permute.xlu0 %3199
        %3203 = vrot.lane.b32.xlu0 %v3189, 64
        %v3204 = vpop.permute.xlu0 %3203
        %3205 = vrot.lane.b32.xlu0 %v3192, 64
        %v3206 = vpop.permute.xlu0 %3205
        %3209 = vrot.lane.b32.xlu0 %v3189, 32
        %v3210 = vpop.permute.xlu0 %3209
        %3211 = vrot.lane.b32.xlu0 %v3192, 32
        %v3212 = vpop.permute.xlu0 %3211
        %v3215 = vcombine.low %v3189, %v3204
        %v3216 = vcombine.high %v3189, %v3204
        %v3218 = vunpack.c.l.s4 1983009808
        %v3219 = vunpack.c.0.s8 %v3218
        %v3220 = vlaneseq
        %v3221 = vshrl.u32 %v3220, 7
        %v3222 = vsub.s32 %v3219, %v3221
        %v3223 = vrot.slane %v3215, %v3222
        %v3225 = vunpack.c.l.s4 1983009808
        %v3226 = vunpack.c.0.s8 %v3225
        %v3227 = vlaneseq
        %v3228 = vshrl.u32 %v3227, 7
        %v3229 = vsub.s32 %v3226, %v3228
        %v3230 = vrot.slane %v3216, %v3229
        %v3231 = vcombine.low %v3198, %v3210
        %v3232 = vcombine.high %v3198, %v3210
        %v3234 = vunpack.c.l.s4 1983009808
        %v3235 = vunpack.c.0.s8 %v3234
        %v3236 = vlaneseq
        %v3237 = vshrl.u32 %v3236, 7
        %v3238 = vsub.s32 %v3235, %v3237
        %v3239 = vrot.slane %v3231, %v3238
        %v3241 = vunpack.c.l.s4 1983009808
        %v3242 = vunpack.c.0.s8 %v3241
        %v3243 = vlaneseq
        %v3244 = vshrl.u32 %v3243, 7
        %v3245 = vsub.s32 %v3242, %v3244
        %v3246 = vrot.slane %v3232, %v3245
        %v3247 = vcombine.low %v3223, %v3239
        %v3248 = vcombine.high %v3223, %v3239
        %v3250 = vunpack.c.l.s4 1934713408
        %v3251 = vunpack.c.0.s8 %v3250
        %v3252 = vlaneseq
        %v3253 = vshrl.u32 %v3252, 7
        %v3254 = vsub.s32 %v3251, %v3253
        %v3255 = vrot.slane %v3247, %v3254
        %v3257 = vunpack.c.l.s4 1934713408
        %v3258 = vunpack.c.0.s8 %v3257
        %v3259 = vlaneseq
        %v3260 = vshrl.u32 %v3259, 7
        %v3261 = vsub.s32 %v3258, %v3260
        %v3262 = vrot.slane %v3248, %v3261
        %v3263 = vcombine.low %v3230, %v3246
        %v3264 = vcombine.high %v3230, %v3246
        %v3266 = vunpack.c.l.s4 1934713408
        %v3267 = vunpack.c.0.s8 %v3266
        %v3268 = vlaneseq
        %v3269 = vshrl.u32 %v3268, 7
        %v3270 = vsub.s32 %v3267, %v3269
        %v3271 = vrot.slane %v3263, %v3270
        %v3273 = vunpack.c.l.s4 1934713408
        %v3274 = vunpack.c.0.s8 %v3273
        %v3275 = vlaneseq
        %v3276 = vshrl.u32 %v3275, 7
        %v3277 = vsub.s32 %v3274, %v3276
        %v3278 = vrot.slane %v3264, %v3277
        %v3279 = vcombine.high %v3255, 0.0
        %v3280 = vcombine.high %v3262, 0.0
        %v3281 = vcombine.high %v3271, 0.0
        %v3282 = vcombine.high %v3278, 0.0
        %v3283 = vcombine.low %v3192, %v3206
        %v3284 = vcombine.high %v3192, %v3206
        %v3286 = vunpack.c.l.s4 1983009808
        %v3287 = vunpack.c.0.s8 %v3286
        %v3288 = vlaneseq
        %v3289 = vshrl.u32 %v3288, 7
        %v3290 = vsub.s32 %v3287, %v3289
        %v3291 = vrot.slane %v3283, %v3290
        %v3293 = vunpack.c.l.s4 1983009808
        %v3294 = vunpack.c.0.s8 %v3293
        %v3295 = vlaneseq
        %v3296 = vshrl.u32 %v3295, 7
        %v3297 = vsub.s32 %v3294, %v3296
        %v3298 = vrot.slane %v3284, %v3297
        %v3299 = vcombine.low %v3200, %v3212
        %v3300 = vcombine.high %v3200, %v3212
        %v3302 = vunpack.c.l.s4 1983009808
        %v3303 = vunpack.c.0.s8 %v3302
        %v3304 = vlaneseq
        %v3305 = vshrl.u32 %v3304, 7
        %v3306 = vsub.s32 %v3303, %v3305
        %v3307 = vrot.slane %v3299, %v3306
        %v3309 = vunpack.c.l.s4 1983009808
        %v3310 = vunpack.c.0.s8 %v3309
        %v3311 = vlaneseq
        %v3312 = vshrl.u32 %v3311, 7
        %v3313 = vsub.s32 %v3310, %v3312
        %v3314 = vrot.slane %v3300, %v3313
        %v3315 = vcombine.low %v3291, %v3307
        %v3316 = vcombine.high %v3291, %v3307
        %v3318 = vunpack.c.l.s4 1934713408
        %v3319 = vunpack.c.0.s8 %v3318
        %v3320 = vlaneseq
        %v3321 = vshrl.u32 %v3320, 7
        %v3322 = vsub.s32 %v3319, %v3321
        %v3323 = vrot.slane %v3315, %v3322
        %v3325 = vunpack.c.l.s4 1934713408
        %v3326 = vunpack.c.0.s8 %v3325
        %v3327 = vlaneseq
        %v3328 = vshrl.u32 %v3327, 7
        %v3329 = vsub.s32 %v3326, %v3328
        %v3330 = vrot.slane %v3316, %v3329
        %v3331 = vcombine.low %v3298, %v3314
        %v3332 = vcombine.high %v3298, %v3314
        %v3334 = vunpack.c.l.s4 1934713408
        %v3335 = vunpack.c.0.s8 %v3334
        %v3336 = vlaneseq
        %v3337 = vshrl.u32 %v3336, 7
        %v3338 = vsub.s32 %v3335, %v3337
        %v3339 = vrot.slane %v3331, %v3338
        %v3341 = vunpack.c.l.s4 1934713408
        %v3342 = vunpack.c.0.s8 %v3341
        %v3343 = vlaneseq
        %v3344 = vshrl.u32 %v3343, 7
        %v3345 = vsub.s32 %v3342, %v3344
        %v3346 = vrot.slane %v3332, %v3345
        %v3347 = vcombine.high %v3323, 0.0
        %v3348 = vcombine.high %v3330, 0.0
        %v3349 = vcombine.high %v3339, 0.0
        %v3350 = vcombine.high %v3346, 0.0
        %v3351 = vcombine.low %v3255, %v3262
        %v3353 = vunpack.c.l.s4 1983009808
        %v3354 = vunpack.c.0.s8 %v3353
        %v3355 = vlaneseq
        %v3356 = vshrl.u32 %v3355, 7
        %v3357 = vsub.s32 %v3354, %v3356
        %v3358 = vrot.slane %v3351, %v3357
        %v3359 = vcombine.low %v3279, %v3280
        %v3361 = vunpack.c.l.s4 1983009808
        %v3362 = vunpack.c.0.s8 %v3361
        %v3363 = vlaneseq
        %v3364 = vshrl.u32 %v3363, 7
        %v3365 = vsub.s32 %v3362, %v3364
        %v3366 = vrot.slane %v3359, %v3365
        %v3367 = vcombine.low %v3271, %v3278
        %v3369 = vunpack.c.l.s4 1983009808
        %v3370 = vunpack.c.0.s8 %v3369
        %v3371 = vlaneseq
        %v3372 = vshrl.u32 %v3371, 7
        %v3373 = vsub.s32 %v3370, %v3372
        %v3374 = vrot.slane %v3367, %v3373
        %v3375 = vcombine.low %v3281, %v3282
        %v3377 = vunpack.c.l.s4 1983009808
        %v3378 = vunpack.c.0.s8 %v3377
        %v3379 = vlaneseq
        %v3380 = vshrl.u32 %v3379, 7
        %v3381 = vsub.s32 %v3378, %v3380
        %v3382 = vrot.slane %v3375, %v3381
        %v3383 = vcombine.low %v3358, %v3366
        %v3384 = vcombine.high %v3358, %v3366
        %v3386 = vunpack.c.l.s4 1934713408
        %v3387 = vunpack.c.0.s8 %v3386
        %v3388 = vlaneseq
        %v3389 = vshrl.u32 %v3388, 7
        %v3390 = vsub.s32 %v3387, %v3389
        %v3391 = vrot.slane %v3383, %v3390
        %v3393 = vunpack.c.l.s4 1934713408
        %v3394 = vunpack.c.0.s8 %v3393
        %v3395 = vlaneseq
        %v3396 = vshrl.u32 %v3395, 7
        %v3397 = vsub.s32 %v3394, %v3396
        %v3398 = vrot.slane %v3384, %v3397
        %v3399 = vcombine.low %v3374, %v3382
        %v3400 = vcombine.high %v3374, %v3382
        %v3402 = vunpack.c.l.s4 1934713408
        %v3403 = vunpack.c.0.s8 %v3402
        %v3404 = vlaneseq
        %v3405 = vshrl.u32 %v3404, 7
        %v3406 = vsub.s32 %v3403, %v3405
        %v3407 = vrot.slane %v3399, %v3406
        %v3409 = vunpack.c.l.s4 1934713408
        %v3410 = vunpack.c.0.s8 %v3409
        %v3411 = vlaneseq
        %v3412 = vshrl.u32 %v3411, 7
        %v3413 = vsub.s32 %v3410, %v3412
        %v3414 = vrot.slane %v3400, %v3413
        %v3415 = vcombine.low %v3391, %v3407
        %v3416 = vcombine.high %v3391, %v3407
        %v3417 = vcombine.low %v3398, %v3414
        %v3418 = vcombine.high %v3398, %v3414
        %v3419 = vcombine.low %v3323, %v3330
        %v3421 = vunpack.c.l.s4 1983009808
        %v3422 = vunpack.c.0.s8 %v3421
        %v3423 = vlaneseq
        %v3424 = vshrl.u32 %v3423, 7
        %v3425 = vsub.s32 %v3422, %v3424
        %v3426 = vrot.slane %v3419, %v3425
        %v3427 = vcombine.low %v3347, %v3348
        %v3429 = vunpack.c.l.s4 1983009808
        %v3430 = vunpack.c.0.s8 %v3429
        %v3431 = vlaneseq
        %v3432 = vshrl.u32 %v3431, 7
        %v3433 = vsub.s32 %v3430, %v3432
        %v3434 = vrot.slane %v3427, %v3433
        %v3435 = vcombine.low %v3339, %v3346
        %v3437 = vunpack.c.l.s4 1983009808
        %v3438 = vunpack.c.0.s8 %v3437
        %v3439 = vlaneseq
        %v3440 = vshrl.u32 %v3439, 7
        %v3441 = vsub.s32 %v3438, %v3440
        %v3442 = vrot.slane %v3435, %v3441
        %v3443 = vcombine.low %v3349, %v3350
        %v3445 = vunpack.c.l.s4 1983009808
        %v3446 = vunpack.c.0.s8 %v3445
        %v3447 = vlaneseq
        %v3448 = vshrl.u32 %v3447, 7
        %v3449 = vsub.s32 %v3446, %v3448
        %v3450 = vrot.slane %v3443, %v3449
        %v3451 = vcombine.low %v3426, %v3434
        %v3452 = vcombine.high %v3426, %v3434
        %v3454 = vunpack.c.l.s4 1934713408
        %v3455 = vunpack.c.0.s8 %v3454
        %v3456 = vlaneseq
        %v3457 = vshrl.u32 %v3456, 7
        %v3458 = vsub.s32 %v3455, %v3457
        %v3459 = vrot.slane %v3451, %v3458
        %v3461 = vunpack.c.l.s4 1934713408
        %v3462 = vunpack.c.0.s8 %v3461
        %v3463 = vlaneseq
        %v3464 = vshrl.u32 %v3463, 7
        %v3465 = vsub.s32 %v3462, %v3464
        %v3466 = vrot.slane %v3452, %v3465
        %v3467 = vcombine.low %v3442, %v3450
        %v3468 = vcombine.high %v3442, %v3450
        %v3470 = vunpack.c.l.s4 1934713408
        %v3471 = vunpack.c.0.s8 %v3470
        %v3472 = vlaneseq
        %v3473 = vshrl.u32 %v3472, 7
        %v3474 = vsub.s32 %v3471, %v3473
        %v3475 = vrot.slane %v3467, %v3474
        %v3477 = vunpack.c.l.s4 1934713408
        %v3478 = vunpack.c.0.s8 %v3477
        %v3479 = vlaneseq
        %v3480 = vshrl.u32 %v3479, 7
        %v3481 = vsub.s32 %v3478, %v3480
        %v3482 = vrot.slane %v3468, %v3481
        %v3483 = vcombine.low %v3459, %v3475
        %v3484 = vcombine.high %v3459, %v3475
        %v3485 = vcombine.low %v3466, %v3482
        %v3486 = vcombine.high %v3466, %v3482
        %v3487 = vpack.c.bf16 %v3483, %v3415
        %v3488 = vpack.c.bf16 %v3484, %v3416
        %v3489 = vpack.c.bf16 %v3485, %v3417
        %v3490 = vpack.c.bf16 %v3486, %v3418
        %3493 = vrot.lane.b32.xlu0 %v3074, 96
        %v3494 = vpop.permute.xlu0 %3493
        %3495 = vrot.lane.b32.xlu0 %v3078, 96
        %v3496 = vpop.permute.xlu0 %3495
        %3499 = vrot.lane.b32.xlu0 %v3074, 64
        %v3500 = vpop.permute.xlu0 %3499
        %3501 = vrot.lane.b32.xlu0 %v3078, 64
        %v3502 = vpop.permute.xlu0 %3501
        %3505 = vrot.lane.b32.xlu0 %v3074, 32
        %v3506 = vpop.permute.xlu0 %3505
        %3507 = vrot.lane.b32.xlu0 %v3078, 32
        %v3508 = vpop.permute.xlu0 %3507
        %v3511 = vcombine.low %v3074, %v3500
        %v3512 = vcombine.high %v3074, %v3500
        %v3514 = vunpack.c.l.s4 1983009808
        %v3515 = vunpack.c.0.s8 %v3514
        %v3516 = vlaneseq
        %v3517 = vshrl.u32 %v3516, 7
        %v3518 = vsub.s32 %v3515, %v3517
        %v3519 = vrot.slane %v3511, %v3518
        %v3521 = vunpack.c.l.s4 1983009808
        %v3522 = vunpack.c.0.s8 %v3521
        %v3523 = vlaneseq
        %v3524 = vshrl.u32 %v3523, 7
        %v3525 = vsub.s32 %v3522, %v3524
        %v3526 = vrot.slane %v3512, %v3525
        %v3527 = vcombine.low %v3494, %v3506
        %v3528 = vcombine.high %v3494, %v3506
        %v3530 = vunpack.c.l.s4 1983009808
        %v3531 = vunpack.c.0.s8 %v3530
        %v3532 = vlaneseq
        %v3533 = vshrl.u32 %v3532, 7
        %v3534 = vsub.s32 %v3531, %v3533
        %v3535 = vrot.slane %v3527, %v3534
        %v3537 = vunpack.c.l.s4 1983009808
        %v3538 = vunpack.c.0.s8 %v3537
        %v3539 = vlaneseq
        %v3540 = vshrl.u32 %v3539, 7
        %v3541 = vsub.s32 %v3538, %v3540
        %v3542 = vrot.slane %v3528, %v3541
        %v3543 = vcombine.low %v3519, %v3535
        %v3544 = vcombine.high %v3519, %v3535
        %v3546 = vunpack.c.l.s4 1934713408
        %v3547 = vunpack.c.0.s8 %v3546
        %v3548 = vlaneseq
        %v3549 = vshrl.u32 %v3548, 7
        %v3550 = vsub.s32 %v3547, %v3549
        %v3551 = vrot.slane %v3543, %v3550
        %v3553 = vunpack.c.l.s4 1934713408
        %v3554 = vunpack.c.0.s8 %v3553
        %v3555 = vlaneseq
        %v3556 = vshrl.u32 %v3555, 7
        %v3557 = vsub.s32 %v3554, %v3556
        %v3558 = vrot.slane %v3544, %v3557
        %v3559 = vcombine.low %v3526, %v3542
        %v3560 = vcombine.high %v3526, %v3542
        %v3562 = vunpack.c.l.s4 1934713408
        %v3563 = vunpack.c.0.s8 %v3562
        %v3564 = vlaneseq
        %v3565 = vshrl.u32 %v3564, 7
        %v3566 = vsub.s32 %v3563, %v3565
        %v3567 = vrot.slane %v3559, %v3566
        %v3569 = vunpack.c.l.s4 1934713408
        %v3570 = vunpack.c.0.s8 %v3569
        %v3571 = vlaneseq
        %v3572 = vshrl.u32 %v3571, 7
        %v3573 = vsub.s32 %v3570, %v3572
        %v3574 = vrot.slane %v3560, %v3573
        %v3575 = vcombine.high %v3551, 0.0
        %v3576 = vcombine.high %v3558, 0.0
        %v3577 = vcombine.high %v3567, 0.0
        %v3578 = vcombine.high %v3574, 0.0
        %v3579 = vcombine.low %v3078, %v3502
        %v3580 = vcombine.high %v3078, %v3502
        %v3582 = vunpack.c.l.s4 1983009808
        %v3583 = vunpack.c.0.s8 %v3582
        %v3584 = vlaneseq
        %v3585 = vshrl.u32 %v3584, 7
        %v3586 = vsub.s32 %v3583, %v3585
        %v3587 = vrot.slane %v3579, %v3586
        %v3589 = vunpack.c.l.s4 1983009808
        %v3590 = vunpack.c.0.s8 %v3589
        %v3591 = vlaneseq
        %v3592 = vshrl.u32 %v3591, 7
        %v3593 = vsub.s32 %v3590, %v3592
        %v3594 = vrot.slane %v3580, %v3593
        %v3595 = vcombine.low %v3496, %v3508
        %v3596 = vcombine.high %v3496, %v3508
        %v3598 = vunpack.c.l.s4 1983009808
        %v3599 = vunpack.c.0.s8 %v3598
        %v3600 = vlaneseq
        %v3601 = vshrl.u32 %v3600, 7
        %v3602 = vsub.s32 %v3599, %v3601
        %v3603 = vrot.slane %v3595, %v3602
        %v3605 = vunpack.c.l.s4 1983009808
        %v3606 = vunpack.c.0.s8 %v3605
        %v3607 = vlaneseq
        %v3608 = vshrl.u32 %v3607, 7
        %v3609 = vsub.s32 %v3606, %v3608
        %v3610 = vrot.slane %v3596, %v3609
        %v3611 = vcombine.low %v3587, %v3603
        %v3612 = vcombine.high %v3587, %v3603
        %v3614 = vunpack.c.l.s4 1934713408
        %v3615 = vunpack.c.0.s8 %v3614
        %v3616 = vlaneseq
        %v3617 = vshrl.u32 %v3616, 7
        %v3618 = vsub.s32 %v3615, %v3617
        %v3619 = vrot.slane %v3611, %v3618
        %v3621 = vunpack.c.l.s4 1934713408
        %v3622 = vunpack.c.0.s8 %v3621
        %v3623 = vlaneseq
        %v3624 = vshrl.u32 %v3623, 7
        %v3625 = vsub.s32 %v3622, %v3624
        %v3626 = vrot.slane %v3612, %v3625
        %v3627 = vcombine.low %v3594, %v3610
        %v3628 = vcombine.high %v3594, %v3610
        %v3630 = vunpack.c.l.s4 1934713408
        %v3631 = vunpack.c.0.s8 %v3630
        %v3632 = vlaneseq
        %v3633 = vshrl.u32 %v3632, 7
        %v3634 = vsub.s32 %v3631, %v3633
        %v3635 = vrot.slane %v3627, %v3634
        %v3637 = vunpack.c.l.s4 1934713408
        %v3638 = vunpack.c.0.s8 %v3637
        %v3639 = vlaneseq
        %v3640 = vshrl.u32 %v3639, 7
        %v3641 = vsub.s32 %v3638, %v3640
        %v3642 = vrot.slane %v3628, %v3641
        %v3643 = vcombine.high %v3619, 0.0
        %v3644 = vcombine.high %v3626, 0.0
        %v3645 = vcombine.high %v3635, 0.0
        %v3646 = vcombine.high %v3642, 0.0
        %v3647 = vcombine.low %v3551, %v3558
        %v3649 = vunpack.c.l.s4 1983009808
        %v3650 = vunpack.c.0.s8 %v3649
        %v3651 = vlaneseq
        %v3652 = vshrl.u32 %v3651, 7
        %v3653 = vsub.s32 %v3650, %v3652
        %v3654 = vrot.slane %v3647, %v3653
        %v3655 = vcombine.low %v3575, %v3576
        %v3657 = vunpack.c.l.s4 1983009808
        %v3658 = vunpack.c.0.s8 %v3657
        %v3659 = vlaneseq
        %v3660 = vshrl.u32 %v3659, 7
        %v3661 = vsub.s32 %v3658, %v3660
        %v3662 = vrot.slane %v3655, %v3661
        %v3663 = vcombine.low %v3567, %v3574
        %v3665 = vunpack.c.l.s4 1983009808
        %v3666 = vunpack.c.0.s8 %v3665
        %v3667 = vlaneseq
        %v3668 = vshrl.u32 %v3667, 7
        %v3669 = vsub.s32 %v3666, %v3668
        %v3670 = vrot.slane %v3663, %v3669
        %v3671 = vcombine.low %v3577, %v3578
        %v3673 = vunpack.c.l.s4 1983009808
        %v3674 = vunpack.c.0.s8 %v3673
        %v3675 = vlaneseq
        %v3676 = vshrl.u32 %v3675, 7
        %v3677 = vsub.s32 %v3674, %v3676
        %v3678 = vrot.slane %v3671, %v3677
        %v3679 = vcombine.low %v3654, %v3662
        %v3680 = vcombine.high %v3654, %v3662
        %v3682 = vunpack.c.l.s4 1934713408
        %v3683 = vunpack.c.0.s8 %v3682
        %v3684 = vlaneseq
        %v3685 = vshrl.u32 %v3684, 7
        %v3686 = vsub.s32 %v3683, %v3685
        %v3687 = vrot.slane %v3679, %v3686
        %v3689 = vunpack.c.l.s4 1934713408
        %v3690 = vunpack.c.0.s8 %v3689
        %v3691 = vlaneseq
        %v3692 = vshrl.u32 %v3691, 7
        %v3693 = vsub.s32 %v3690, %v3692
        %v3694 = vrot.slane %v3680, %v3693
        %v3695 = vcombine.low %v3670, %v3678
        %v3696 = vcombine.high %v3670, %v3678
        %v3698 = vunpack.c.l.s4 1934713408
        %v3699 = vunpack.c.0.s8 %v3698
        %v3700 = vlaneseq
        %v3701 = vshrl.u32 %v3700, 7
        %v3702 = vsub.s32 %v3699, %v3701
        %v3703 = vrot.slane %v3695, %v3702
        %v3705 = vunpack.c.l.s4 1934713408
        %v3706 = vunpack.c.0.s8 %v3705
        %v3707 = vlaneseq
        %v3708 = vshrl.u32 %v3707, 7
        %v3709 = vsub.s32 %v3706, %v3708
        %v3710 = vrot.slane %v3696, %v3709
        %v3711 = vcombine.low %v3687, %v3703
        %v3712 = vcombine.high %v3687, %v3703
        %v3713 = vcombine.low %v3694, %v3710
        %v3714 = vcombine.high %v3694, %v3710
        %v3715 = vcombine.low %v3619, %v3626
        %v3717 = vunpack.c.l.s4 1983009808
        %v3718 = vunpack.c.0.s8 %v3717
        %v3719 = vlaneseq
        %v3720 = vshrl.u32 %v3719, 7
        %v3721 = vsub.s32 %v3718, %v3720
        %v3722 = vrot.slane %v3715, %v3721
        %v3723 = vcombine.low %v3643, %v3644
        %v3725 = vunpack.c.l.s4 1983009808
        %v3726 = vunpack.c.0.s8 %v3725
        %v3727 = vlaneseq
        %v3728 = vshrl.u32 %v3727, 7
        %v3729 = vsub.s32 %v3726, %v3728
        %v3730 = vrot.slane %v3723, %v3729
        %v3731 = vcombine.low %v3635, %v3642
        %v3733 = vunpack.c.l.s4 1983009808
        %v3734 = vunpack.c.0.s8 %v3733
        %v3735 = vlaneseq
        %v3736 = vshrl.u32 %v3735, 7
        %v3737 = vsub.s32 %v3734, %v3736
        %v3738 = vrot.slane %v3731, %v3737
        %v3739 = vcombine.low %v3645, %v3646
        %v3741 = vunpack.c.l.s4 1983009808
        %v3742 = vunpack.c.0.s8 %v3741
        %v3743 = vlaneseq
        %v3744 = vshrl.u32 %v3743, 7
        %v3745 = vsub.s32 %v3742, %v3744
        %v3746 = vrot.slane %v3739, %v3745
        %v3747 = vcombine.low %v3722, %v3730
        %v3748 = vcombine.high %v3722, %v3730
        %v3750 = vunpack.c.l.s4 1934713408
        %v3751 = vunpack.c.0.s8 %v3750
        %v3752 = vlaneseq
        %v3753 = vshrl.u32 %v3752, 7
        %v3754 = vsub.s32 %v3751, %v3753
        %v3755 = vrot.slane %v3747, %v3754
        %v3757 = vunpack.c.l.s4 1934713408
        %v3758 = vunpack.c.0.s8 %v3757
        %v3759 = vlaneseq
        %v3760 = vshrl.u32 %v3759, 7
        %v3761 = vsub.s32 %v3758, %v3760
        %v3762 = vrot.slane %v3748, %v3761
        %v3763 = vcombine.low %v3738, %v3746
        %v3764 = vcombine.high %v3738, %v3746
        %v3766 = vunpack.c.l.s4 1934713408
        %v3767 = vunpack.c.0.s8 %v3766
        %v3768 = vlaneseq
        %v3769 = vshrl.u32 %v3768, 7
        %v3770 = vsub.s32 %v3767, %v3769
        %v3771 = vrot.slane %v3763, %v3770
        %v3773 = vunpack.c.l.s4 1934713408
        %v3774 = vunpack.c.0.s8 %v3773
        %v3775 = vlaneseq
        %v3776 = vshrl.u32 %v3775, 7
        %v3777 = vsub.s32 %v3774, %v3776
        %v3778 = vrot.slane %v3764, %v3777
        %v3779 = vcombine.low %v3755, %v3771
        %v3780 = vcombine.high %v3755, %v3771
        %v3781 = vcombine.low %v3762, %v3778
        %v3782 = vcombine.high %v3762, %v3778
        %v3783 = vpack.c.bf16 %v3779, %v3711
        %v3784 = vpack.c.bf16 %v3780, %v3712
        %v3785 = vpack.c.bf16 %v3781, %v3713
        %v3786 = vpack.c.bf16 %v3782, %v3714
        %3789 = vrot.lane.b32.xlu0 %v3076, 96
        %v3790 = vpop.permute.xlu0 %3789
        %3791 = vrot.lane.b32.xlu0 %v3080, 96
        %v3792 = vpop.permute.xlu0 %3791
        %3795 = vrot.lane.b32.xlu0 %v3076, 64
        %v3796 = vpop.permute.xlu0 %3795
        %3797 = vrot.lane.b32.xlu0 %v3080, 64
        %v3798 = vpop.permute.xlu0 %3797
        %3801 = vrot.lane.b32.xlu0 %v3076, 32
        %v3802 = vpop.permute.xlu0 %3801
        %3803 = vrot.lane.b32.xlu0 %v3080, 32
        %v3804 = vpop.permute.xlu0 %3803
        %v3807 = vcombine.low %v3076, %v3796
        %v3808 = vcombine.high %v3076, %v3796
        %v3810 = vunpack.c.l.s4 1983009808
        %v3811 = vunpack.c.0.s8 %v3810
        %v3812 = vlaneseq
        %v3813 = vshrl.u32 %v3812, 7
        %v3814 = vsub.s32 %v3811, %v3813
        %v3815 = vrot.slane %v3807, %v3814
        %v3817 = vunpack.c.l.s4 1983009808
        %v3818 = vunpack.c.0.s8 %v3817
        %v3819 = vlaneseq
        %v3820 = vshrl.u32 %v3819, 7
        %v3821 = vsub.s32 %v3818, %v3820
        %v3822 = vrot.slane %v3808, %v3821
        %v3823 = vcombine.low %v3790, %v3802
        %v3824 = vcombine.high %v3790, %v3802
        %v3826 = vunpack.c.l.s4 1983009808
        %v3827 = vunpack.c.0.s8 %v3826
        %v3828 = vlaneseq
        %v3829 = vshrl.u32 %v3828, 7
        %v3830 = vsub.s32 %v3827, %v3829
        %v3831 = vrot.slane %v3823, %v3830
        %v3833 = vunpack.c.l.s4 1983009808
        %v3834 = vunpack.c.0.s8 %v3833
        %v3835 = vlaneseq
        %v3836 = vshrl.u32 %v3835, 7
        %v3837 = vsub.s32 %v3834, %v3836
        %v3838 = vrot.slane %v3824, %v3837
        %v3839 = vcombine.low %v3815, %v3831
        %v3840 = vcombine.high %v3815, %v3831
        %v3842 = vunpack.c.l.s4 1934713408
        %v3843 = vunpack.c.0.s8 %v3842
        %v3844 = vlaneseq
        %v3845 = vshrl.u32 %v3844, 7
        %v3846 = vsub.s32 %v3843, %v3845
        %v3847 = vrot.slane %v3839, %v3846
        %v3849 = vunpack.c.l.s4 1934713408
        %v3850 = vunpack.c.0.s8 %v3849
        %v3851 = vlaneseq
        %v3852 = vshrl.u32 %v3851, 7
        %v3853 = vsub.s32 %v3850, %v3852
        %v3854 = vrot.slane %v3840, %v3853
        %v3855 = vcombine.low %v3822, %v3838
        %v3856 = vcombine.high %v3822, %v3838
        %v3858 = vunpack.c.l.s4 1934713408
        %v3859 = vunpack.c.0.s8 %v3858
        %v3860 = vlaneseq
        %v3861 = vshrl.u32 %v3860, 7
        %v3862 = vsub.s32 %v3859, %v3861
        %v3863 = vrot.slane %v3855, %v3862
        %v3865 = vunpack.c.l.s4 1934713408
        %v3866 = vunpack.c.0.s8 %v3865
        %v3867 = vlaneseq
        %v3868 = vshrl.u32 %v3867, 7
        %v3869 = vsub.s32 %v3866, %v3868
        %v3870 = vrot.slane %v3856, %v3869
        %v3871 = vcombine.high %v3847, 0.0
        %v3872 = vcombine.high %v3854, 0.0
        %v3873 = vcombine.high %v3863, 0.0
        %v3874 = vcombine.high %v3870, 0.0
        %v3875 = vcombine.low %v3080, %v3798
        %v3876 = vcombine.high %v3080, %v3798
        %v3878 = vunpack.c.l.s4 1983009808
        %v3879 = vunpack.c.0.s8 %v3878
        %v3880 = vlaneseq
        %v3881 = vshrl.u32 %v3880, 7
        %v3882 = vsub.s32 %v3879, %v3881
        %v3883 = vrot.slane %v3875, %v3882
        %v3885 = vunpack.c.l.s4 1983009808
        %v3886 = vunpack.c.0.s8 %v3885
        %v3887 = vlaneseq
        %v3888 = vshrl.u32 %v3887, 7
        %v3889 = vsub.s32 %v3886, %v3888
        %v3890 = vrot.slane %v3876, %v3889
        %v3891 = vcombine.low %v3792, %v3804
        %v3892 = vcombine.high %v3792, %v3804
        %v3894 = vunpack.c.l.s4 1983009808
        %v3895 = vunpack.c.0.s8 %v3894
        %v3896 = vlaneseq
        %v3897 = vshrl.u32 %v3896, 7
        %v3898 = vsub.s32 %v3895, %v3897
        %v3899 = vrot.slane %v3891, %v3898
        %v3901 = vunpack.c.l.s4 1983009808
        %v3902 = vunpack.c.0.s8 %v3901
        %v3903 = vlaneseq
        %v3904 = vshrl.u32 %v3903, 7
        %v3905 = vsub.s32 %v3902, %v3904
        %v3906 = vrot.slane %v3892, %v3905
        %v3907 = vcombine.low %v3883, %v3899
        %v3908 = vcombine.high %v3883, %v3899
        %v3910 = vunpack.c.l.s4 1934713408
        %v3911 = vunpack.c.0.s8 %v3910
        %v3912 = vlaneseq
        %v3913 = vshrl.u32 %v3912, 7
        %v3914 = vsub.s32 %v3911, %v3913
        %v3915 = vrot.slane %v3907, %v3914
        %v3917 = vunpack.c.l.s4 1934713408
        %v3918 = vunpack.c.0.s8 %v3917
        %v3919 = vlaneseq
        %v3920 = vshrl.u32 %v3919, 7
        %v3921 = vsub.s32 %v3918, %v3920
        %v3922 = vrot.slane %v3908, %v3921
        %v3923 = vcombine.low %v3890, %v3906
        %v3924 = vcombine.high %v3890, %v3906
        %v3926 = vunpack.c.l.s4 1934713408
        %v3927 = vunpack.c.0.s8 %v3926
        %v3928 = vlaneseq
        %v3929 = vshrl.u32 %v3928, 7
        %v3930 = vsub.s32 %v3927, %v3929
        %v3931 = vrot.slane %v3923, %v3930
        %v3933 = vunpack.c.l.s4 1934713408
        %v3934 = vunpack.c.0.s8 %v3933
        %v3935 = vlaneseq
        %v3936 = vshrl.u32 %v3935, 7
        %v3937 = vsub.s32 %v3934, %v3936
        %v3938 = vrot.slane %v3924, %v3937
        %v3939 = vcombine.high %v3915, 0.0
        %v3940 = vcombine.high %v3922, 0.0
        %v3941 = vcombine.high %v3931, 0.0
        %v3942 = vcombine.high %v3938, 0.0
        %v3943 = vcombine.low %v3847, %v3854
        %v3945 = vunpack.c.l.s4 1983009808
        %v3946 = vunpack.c.0.s8 %v3945
        %v3947 = vlaneseq
        %v3948 = vshrl.u32 %v3947, 7
        %v3949 = vsub.s32 %v3946, %v3948
        %v3950 = vrot.slane %v3943, %v3949
        %v3951 = vcombine.low %v3871, %v3872
        %v3953 = vunpack.c.l.s4 1983009808
        %v3954 = vunpack.c.0.s8 %v3953
        %v3955 = vlaneseq
        %v3956 = vshrl.u32 %v3955, 7
        %v3957 = vsub.s32 %v3954, %v3956
        %v3958 = vrot.slane %v3951, %v3957
        %v3959 = vcombine.low %v3863, %v3870
        %v3961 = vunpack.c.l.s4 1983009808
        %v3962 = vunpack.c.0.s8 %v3961
        %v3963 = vlaneseq
        %v3964 = vshrl.u32 %v3963, 7
        %v3965 = vsub.s32 %v3962, %v3964
        %v3966 = vrot.slane %v3959, %v3965
        %v3967 = vcombine.low %v3873, %v3874
        %v3969 = vunpack.c.l.s4 1983009808
        %v3970 = vunpack.c.0.s8 %v3969
        %v3971 = vlaneseq
        %v3972 = vshrl.u32 %v3971, 7
        %v3973 = vsub.s32 %v3970, %v3972
        %v3974 = vrot.slane %v3967, %v3973
        %v3975 = vcombine.low %v3950, %v3958
        %v3976 = vcombine.high %v3950, %v3958
        %v3978 = vunpack.c.l.s4 1934713408
        %v3979 = vunpack.c.0.s8 %v3978
        %v3980 = vlaneseq
        %v3981 = vshrl.u32 %v3980, 7
        %v3982 = vsub.s32 %v3979, %v3981
        %v3983 = vrot.slane %v3975, %v3982
        %v3985 = vunpack.c.l.s4 1934713408
        %v3986 = vunpack.c.0.s8 %v3985
        %v3987 = vlaneseq
        %v3988 = vshrl.u32 %v3987, 7
        %v3989 = vsub.s32 %v3986, %v3988
        %v3990 = vrot.slane %v3976, %v3989
        %v3991 = vcombine.low %v3966, %v3974
        %v3992 = vcombine.high %v3966, %v3974
        %v3994 = vunpack.c.l.s4 1934713408
        %v3995 = vunpack.c.0.s8 %v3994
        %v3996 = vlaneseq
        %v3997 = vshrl.u32 %v3996, 7
        %v3998 = vsub.s32 %v3995, %v3997
        %v3999 = vrot.slane %v3991, %v3998
        %v4001 = vunpack.c.l.s4 1934713408
        %v4002 = vunpack.c.0.s8 %v4001
        %v4003 = vlaneseq
        %v4004 = vshrl.u32 %v4003, 7
        %v4005 = vsub.s32 %v4002, %v4004
        %v4006 = vrot.slane %v3992, %v4005
        %v4007 = vcombine.low %v3983, %v3999
        %v4008 = vcombine.high %v3983, %v3999
        %v4009 = vcombine.low %v3990, %v4006
        %v4010 = vcombine.high %v3990, %v4006
        %v4011 = vcombine.low %v3915, %v3922
        %v4013 = vunpack.c.l.s4 1983009808
        %v4014 = vunpack.c.0.s8 %v4013
        %v4015 = vlaneseq
        %v4016 = vshrl.u32 %v4015, 7
        %v4017 = vsub.s32 %v4014, %v4016
        %v4018 = vrot.slane %v4011, %v4017
        %v4019 = vcombine.low %v3939, %v3940
        %v4021 = vunpack.c.l.s4 1983009808
        %v4022 = vunpack.c.0.s8 %v4021
        %v4023 = vlaneseq
        %v4024 = vshrl.u32 %v4023, 7
        %v4025 = vsub.s32 %v4022, %v4024
        %v4026 = vrot.slane %v4019, %v4025
        %v4027 = vcombine.low %v3931, %v3938
        %v4029 = vunpack.c.l.s4 1983009808
        %v4030 = vunpack.c.0.s8 %v4029
        %v4031 = vlaneseq
        %v4032 = vshrl.u32 %v4031, 7
        %v4033 = vsub.s32 %v4030, %v4032
        %v4034 = vrot.slane %v4027, %v4033
        %v4035 = vcombine.low %v3941, %v3942
        %v4037 = vunpack.c.l.s4 1983009808
        %v4038 = vunpack.c.0.s8 %v4037
        %v4039 = vlaneseq
        %v4040 = vshrl.u32 %v4039, 7
        %v4041 = vsub.s32 %v4038, %v4040
        %v4042 = vrot.slane %v4035, %v4041
        %v4043 = vcombine.low %v4018, %v4026
        %v4044 = vcombine.high %v4018, %v4026
        %v4046 = vunpack.c.l.s4 1934713408
        %v4047 = vunpack.c.0.s8 %v4046
        %v4048 = vlaneseq
        %v4049 = vshrl.u32 %v4048, 7
        %v4050 = vsub.s32 %v4047, %v4049
        %v4051 = vrot.slane %v4043, %v4050
        %v4053 = vunpack.c.l.s4 1934713408
        %v4054 = vunpack.c.0.s8 %v4053
        %v4055 = vlaneseq
        %v4056 = vshrl.u32 %v4055, 7
        %v4057 = vsub.s32 %v4054, %v4056
        %v4058 = vrot.slane %v4044, %v4057
        %v4059 = vcombine.low %v4034, %v4042
        %v4060 = vcombine.high %v4034, %v4042
        %v4062 = vunpack.c.l.s4 1934713408
        %v4063 = vunpack.c.0.s8 %v4062
        %v4064 = vlaneseq
        %v4065 = vshrl.u32 %v4064, 7
        %v4066 = vsub.s32 %v4063, %v4065
        %v4067 = vrot.slane %v4059, %v4066
        %v4069 = vunpack.c.l.s4 1934713408
        %v4070 = vunpack.c.0.s8 %v4069
        %v4071 = vlaneseq
        %v4072 = vshrl.u32 %v4071, 7
        %v4073 = vsub.s32 %v4070, %v4072
        %v4074 = vrot.slane %v4060, %v4073
        %v4075 = vcombine.low %v4051, %v4067
        %v4076 = vcombine.high %v4051, %v4067
        %v4077 = vcombine.low %v4058, %v4074
        %v4078 = vcombine.high %v4058, %v4074
        %v4079 = vpack.c.bf16 %v4075, %v4007
        %v4080 = vpack.c.bf16 %v4076, %v4008
        %v4081 = vpack.c.bf16 %v4077, %v4009
        %v4082 = vpack.c.bf16 %v4078, %v4010
        %v4084 = vsel %vm1998, %v3487, 0
        %v4087 = vsel %vm1998, %v3783, 0
        %4089 = vmatprep.subr.bf16.mxu0 0
        %4090 = vmatpush1.bf16.xpose.msra.mxu0 %v4087
        %4091 = vmatprep.subr.bf16.mxu0 0
        %4092 = vmatpush1.bf16.xpose.msra.mxu0 0
        %4093 = vmatprep.subr.bf16.mxu0 0
        %4094 = vmatpush1.bf16.xpose.msra.mxu0 0
        %4095 = vmatprep.subr.bf16.mxu0 0
        %4096 = vmatpush1.bf16.xpose.msra.mxu0 0
        %4097 = vmatprep.subr.bf16.mxu0 0
        %4098 = vmatpush1.bf16.xpose.msra.mxu0 0
        %4099 = vmatprep.subr.bf16.mxu0 0
        %4100 = vmatpush1.bf16.xpose.msra.mxu0 0
        %4101 = vmatprep.subr.bf16.mxu0 0
        %4102 = vmatpush1.bf16.xpose.msra.mxu0 0
        %4103 = vmatprep.subr.bf16.mxu0 0
        %4104 = vmatpush1.bf16.xpose.msra.mxu0 0
        %4105 = vmatprep.subr.bf16.mxu0 0
        %4106 = vmatpush1.bf16.xpose.msra.mxu0 0
        %4107 = vmatprep.subr.bf16.mxu0 0
        %4108 = vmatpush1.bf16.xpose.msra.mxu0 0
        %4109 = vmatprep.subr.bf16.mxu0 0
        %4110 = vmatpush1.bf16.xpose.msra.mxu0 0
        %4111 = vmatprep.subr.bf16.mxu0 0
        %4112 = vmatpush1.bf16.xpose.msra.mxu0 0
        %4113 = vmatprep.subr.bf16.mxu0 0
        %4114 = vmatpush1.bf16.xpose.msra.mxu0 0
        %4115 = vmatprep.subr.bf16.mxu0 0
        %4116 = vmatpush1.bf16.xpose.msra.mxu0 0
        %4117 = vmatprep.subr.bf16.mxu0 0
        %4118 = vmatpush1.bf16.xpose.msra.mxu0 0
        %4119 = vmatprep.subr.bf16.mxu0 0
        %4120 = vmatpush1.bf16.xpose.msra.mxu0 0
        %4121 = vmatprep.mubr.bf16.mxu0 0
        %4122 = vmatmul.mubr.bf16.gmra.mrb[0].mxu0 %v4084
        %v4123 = vpop.f32.mrb[0].mxu0
        %v4124 = vadd.f32 0.0, %v4123
        %v4125 = vpop.f32.mrb[0].mxu0
        %v4126 = vpop.f32.mrb[0].mxu0
        %v4127 = vadd.f32 0.0, %v4126
        %v4128 = vpop.f32.mrb[0].mxu0
        %4129 = vdwg.mxu0
        %v4131 = vsel %vm1998, %v3488, 0
        %v4134 = vsel %vm1998, %v3784, 0
        %4136 = vmatprep.subr.bf16.mxu0 0
        %4137 = vmatpush1.bf16.xpose.msra.mxu0 %v4134
        %4138 = vmatprep.subr.bf16.mxu0 0
        %4139 = vmatpush1.bf16.xpose.msra.mxu0 0
        %4140 = vmatprep.subr.bf16.mxu0 0
        %4141 = vmatpush1.bf16.xpose.msra.mxu0 0
        %4142 = vmatprep.subr.bf16.mxu0 0
        %4143 = vmatpush1.bf16.xpose.msra.mxu0 0
        %4144 = vmatprep.subr.bf16.mxu0 0
        %4145 = vmatpush1.bf16.xpose.msra.mxu0 0
        %4146 = vmatprep.subr.bf16.mxu0 0
        %4147 = vmatpush1.bf16.xpose.msra.mxu0 0
        %4148 = vmatprep.subr.bf16.mxu0 0
        %4149 = vmatpush1.bf16.xpose.msra.mxu0 0
        %4150 = vmatprep.subr.bf16.mxu0 0
        %4151 = vmatpush1.bf16.xpose.msra.mxu0 0
        %4152 = vmatprep.subr.bf16.mxu0 0
        %4153 = vmatpush1.bf16.xpose.msra.mxu0 0
        %4154 = vmatprep.subr.bf16.mxu0 0
        %4155 = vmatpush1.bf16.xpose.msra.mxu0 0
        %4156 = vmatprep.subr.bf16.mxu0 0
        %4157 = vmatpush1.bf16.xpose.msra.mxu0 0
        %4158 = vmatprep.subr.bf16.mxu0 0
        %4159 = vmatpush1.bf16.xpose.msra.mxu0 0
        %4160 = vmatprep.subr.bf16.mxu0 0
        %4161 = vmatpush1.bf16.xpose.msra.mxu0 0
        %4162 = vmatprep.subr.bf16.mxu0 0
        %4163 = vmatpush1.bf16.xpose.msra.mxu0 0
        %4164 = vmatprep.subr.bf16.mxu0 0
        %4165 = vmatpush1.bf16.xpose.msra.mxu0 0
        %4166 = vmatprep.subr.bf16.mxu0 0
        %4167 = vmatpush1.bf16.xpose.msra.mxu0 0
        %4168 = vmatprep.mubr.bf16.mxu0 0
        %4169 = vmatmul.mubr.bf16.gmra.mrb[0].mxu0 %v4131
        %v4170 = vpop.f32.mrb[0].mxu0
        %v4171 = vadd.f32 0.0, %v4170
        %v4172 = vpop.f32.mrb[0].mxu0
        %v4173 = vpop.f32.mrb[0].mxu0
        %v4174 = vadd.f32 0.0, %v4173
        %v4175 = vpop.f32.mrb[0].mxu0
        %4176 = vdwg.mxu0
        %v4178 = vsel %vm1998, %v3489, 0
        %v4181 = vsel %vm1998, %v3785, 0
        %4183 = vmatprep.subr.bf16.mxu0 0
        %4184 = vmatpush1.bf16.xpose.msra.mxu0 %v4181
        %4185 = vmatprep.subr.bf16.mxu0 0
        %4186 = vmatpush1.bf16.xpose.msra.mxu0 0
        %4187 = vmatprep.subr.bf16.mxu0 0
        %4188 = vmatpush1.bf16.xpose.msra.mxu0 0
        %4189 = vmatprep.subr.bf16.mxu0 0
        %4190 = vmatpush1.bf16.xpose.msra.mxu0 0
        %4191 = vmatprep.subr.bf16.mxu0 0
        %4192 = vmatpush1.bf16.xpose.msra.mxu0 0
        %4193 = vmatprep.subr.bf16.mxu0 0
        %4194 = vmatpush1.bf16.xpose.msra.mxu0 0
        %4195 = vmatprep.subr.bf16.mxu0 0
        %4196 = vmatpush1.bf16.xpose.msra.mxu0 0
        %4197 = vmatprep.subr.bf16.mxu0 0
        %4198 = vmatpush1.bf16.xpose.msra.mxu0 0
        %4199 = vmatprep.subr.bf16.mxu0 0
        %4200 = vmatpush1.bf16.xpose.msra.mxu0 0
        %4201 = vmatprep.subr.bf16.mxu0 0
        %4202 = vmatpush1.bf16.xpose.msra.mxu0 0
        %4203 = vmatprep.subr.bf16.mxu0 0
        %4204 = vmatpush1.bf16.xpose.msra.mxu0 0
        %4205 = vmatprep.subr.bf16.mxu0 0
        %4206 = vmatpush1.bf16.xpose.msra.mxu0 0
        %4207 = vmatprep.subr.bf16.mxu0 0
        %4208 = vmatpush1.bf16.xpose.msra.mxu0 0
        %4209 = vmatprep.subr.bf16.mxu0 0
        %4210 = vmatpush1.bf16.xpose.msra.mxu0 0
        %4211 = vmatprep.subr.bf16.mxu0 0
        %4212 = vmatpush1.bf16.xpose.msra.mxu0 0
        %4213 = vmatprep.subr.bf16.mxu0 0
        %4214 = vmatpush1.bf16.xpose.msra.mxu0 0
        %4215 = vmatprep.mubr.bf16.mxu0 0
        %4216 = vmatmul.mubr.bf16.gmra.mrb[0].mxu0 %v4178
        %v4217 = vpop.f32.mrb[0].mxu0
        %v4218 = vadd.f32 0.0, %v4217
        %v4219 = vpop.f32.mrb[0].mxu0
        %v4220 = vpop.f32.mrb[0].mxu0
        %v4221 = vadd.f32 0.0, %v4220
        %v4222 = vpop.f32.mrb[0].mxu0
        %4223 = vdwg.mxu0
        %v4225 = vsel %vm1998, %v3490, 0
        %v4228 = vsel %vm1998, %v3786, 0
        %4230 = vmatprep.subr.bf16.mxu0 0
        %4231 = vmatpush1.bf16.xpose.msra.mxu0 %v4228
        %4232 = vmatprep.subr.bf16.mxu0 0
        %4233 = vmatpush1.bf16.xpose.msra.mxu0 0
        %4234 = vmatprep.subr.bf16.mxu0 0
        %4235 = vmatpush1.bf16.xpose.msra.mxu0 0
        %4236 = vmatprep.subr.bf16.mxu0 0
        %4237 = vmatpush1.bf16.xpose.msra.mxu0 0
        %4238 = vmatprep.subr.bf16.mxu0 0
        %4239 = vmatpush1.bf16.xpose.msra.mxu0 0
        %4240 = vmatprep.subr.bf16.mxu0 0
        %4241 = vmatpush1.bf16.xpose.msra.mxu0 0
        %4242 = vmatprep.subr.bf16.mxu0 0
        %4243 = vmatpush1.bf16.xpose.msra.mxu0 0
        %4244 = vmatprep.subr.bf16.mxu0 0
        %4245 = vmatpush1.bf16.xpose.msra.mxu0 0
        %4246 = vmatprep.subr.bf16.mxu0 0
        %4247 = vmatpush1.bf16.xpose.msra.mxu0 0
        %4248 = vmatprep.subr.bf16.mxu0 0
        %4249 = vmatpush1.bf16.xpose.msra.mxu0 0
        %4250 = vmatprep.subr.bf16.mxu0 0
        %4251 = vmatpush1.bf16.xpose.msra.mxu0 0
        %4252 = vmatprep.subr.bf16.mxu0 0
        %4253 = vmatpush1.bf16.xpose.msra.mxu0 0
        %4254 = vmatprep.subr.bf16.mxu0 0
        %4255 = vmatpush1.bf16.xpose.msra.mxu0 0
        %4256 = vmatprep.subr.bf16.mxu0 0
        %4257 = vmatpush1.bf16.xpose.msra.mxu0 0
        %4258 = vmatprep.subr.bf16.mxu0 0
        %4259 = vmatpush1.bf16.xpose.msra.mxu0 0
        %4260 = vmatprep.subr.bf16.mxu0 0
        %4261 = vmatpush1.bf16.xpose.msra.mxu0 0
        %4262 = vmatprep.mubr.bf16.mxu0 0
        %4263 = vmatmul.mubr.bf16.gmra.mrb[0].mxu0 %v4225
        %v4264 = vpop.f32.mrb[0].mxu0
        %v4265 = vadd.f32 0.0, %v4264
        %v4266 = vpop.f32.mrb[0].mxu0
        %v4267 = vpop.f32.mrb[0].mxu0
        %v4268 = vadd.f32 0.0, %v4267
        %v4269 = vpop.f32.mrb[0].mxu0
        %4270 = vdwg.mxu0
        %v4271 = vsel %vm2187, %v4124, -inf
        %4272 = vmax.xlane.f32.xlu0 %v4271
        %v4273 = vpop.xlane.xlu0 %4272
        %v4274 = vsel %vm2187, %v4127, -inf
        %4275 = vmax.xlane.f32.xlu0 %v4274
        %v4276 = vpop.xlane.xlu0 %4275
        %v4277 = vsel %vm2187, %v4171, -inf
        %4278 = vmax.xlane.f32.xlu0 %v4277
        %v4279 = vpop.xlane.xlu0 %4278
        %v4280 = vsel %vm2187, %v4174, -inf
        %4281 = vmax.xlane.f32.xlu0 %v4280
        %v4282 = vpop.xlane.xlu0 %4281
        %v4283 = vsel %vm2187, %v4218, -inf
        %4284 = vmax.xlane.f32.xlu0 %v4283
        %v4285 = vpop.xlane.xlu0 %4284
        %v4286 = vsel %vm2187, %v4221, -inf
        %4287 = vmax.xlane.f32.xlu0 %v4286
        %v4288 = vpop.xlane.xlu0 %4287
        %v4289 = vsel %vm2187, %v4265, -inf
        %4290 = vmax.xlane.f32.xlu0 %v4289
        %v4291 = vpop.xlane.xlu0 %4290
        %v4292 = vsel %vm2187, %v4268, -inf
        %4293 = vmax.xlane.f32.xlu0 %v4292
        %v4294 = vpop.xlane.xlu0 %4293
        %v4295 = vsub.f32 %v4124, %v4273
        %v4296 = vsub.f32 %v4127, %v4276
        %v4297 = vsub.f32 %v4171, %v4279
        %v4298 = vsub.f32 %v4174, %v4282
        %v4299 = vsub.f32 %v4218, %v4285
        %v4300 = vsub.f32 %v4221, %v4288
        %v4301 = vsub.f32 %v4265, %v4291
        %v4302 = vsub.f32 %v4268, %v4294
        %v4303 = vmul.f32 %v4295, 1.442695
        %v4304 = vpow.pop %v4303
        %v4305 = vmul.f32 %v4296, 1.442695
        %v4306 = vpow.pop %v4305
        %v4307 = vmul.f32 %v4297, 1.442695
        %v4308 = vpow.pop %v4307
        %v4309 = vmul.f32 %v4298, 1.442695
        %v4310 = vpow.pop %v4309
        %v4311 = vmul.f32 %v4299, 1.442695
        %v4312 = vpow.pop %v4311
        %v4313 = vmul.f32 %v4300, 1.442695
        %v4314 = vpow.pop %v4313
        %v4315 = vmul.f32 %v4301, 1.442695
        %v4316 = vpow.pop %v4315
        %v4317 = vmul.f32 %v4302, 1.442695
        %v4318 = vpow.pop %v4317
        %v4319 = vsel %vm2187, %v4304, 0.0
        %4320 = vadd.xlane.f32.xlu0 %v4319
        %v4321 = vpop.xlane.xlu0 %4320
        %v4322 = vsel %vm2187, %v4306, 0.0
        %4323 = vadd.xlane.f32.xlu0 %v4322
        %v4324 = vpop.xlane.xlu0 %4323
        %v4325 = vsel %vm2187, %v4308, 0.0
        %4326 = vadd.xlane.f32.xlu0 %v4325
        %v4327 = vpop.xlane.xlu0 %4326
        %v4328 = vsel %vm2187, %v4310, 0.0
        %4329 = vadd.xlane.f32.xlu0 %v4328
        %v4330 = vpop.xlane.xlu0 %4329
        %v4331 = vsel %vm2187, %v4312, 0.0
        %4332 = vadd.xlane.f32.xlu0 %v4331
        %v4333 = vpop.xlane.xlu0 %4332
        %v4334 = vsel %vm2187, %v4314, 0.0
        %4335 = vadd.xlane.f32.xlu0 %v4334
        %v4336 = vpop.xlane.xlu0 %4335
        %v4337 = vsel %vm2187, %v4316, 0.0
        %4338 = vadd.xlane.f32.xlu0 %v4337
        %v4339 = vpop.xlane.xlu0 %4338
        %v4340 = vsel %vm2187, %v4318, 0.0
        %4341 = vadd.xlane.f32.xlu0 %v4340
        %v4342 = vpop.xlane.xlu0 %4341
        %v4343 = vrcp.pop %v4321
        %v4344 = vrcp.pop %v4324
        %v4345 = vrcp.pop %v4327
        %v4346 = vrcp.pop %v4330
        %v4347 = vrcp.pop %v4333
        %v4348 = vrcp.pop %v4336
        %v4349 = vrcp.pop %v4339
        %v4350 = vrcp.pop %v4342
        %v4351 = vmul.f32 %v4304, %v4343
        %v4352 = vmul.f32 %v4306, %v4344
        %v4353 = vmul.f32 %v4308, %v4345
        %v4354 = vmul.f32 %v4310, %v4346
        %v4355 = vmul.f32 %v4312, %v4347
        %v4356 = vmul.f32 %v4314, %v4348
        %v4357 = vmul.f32 %v4316, %v4349
        %v4358 = vmul.f32 %v4318, %v4350
        %v4359 = vpack.c.bf16 %v4352, %v4351
        %v4360 = vpack.c.bf16 %v4354, %v4353
        %v4361 = vpack.c.bf16 %v4356, %v4355
        %v4362 = vpack.c.bf16 %v4358, %v4357
        %v4364 = vsel %vm2187, %v4359, 0
        %4366 = vmatprep.subr.bf16.mxu0 0
        %4367 = vmatpush1.bf16.msra.mxu0 %v4079
        %4368 = vmatprep.subr.bf16.mxu0 0
        %4369 = vmatpush1.bf16.msra.mxu0 0
        %4370 = vmatprep.subr.bf16.mxu0 0
        %4371 = vmatpush1.bf16.msra.mxu0 0
        %4372 = vmatprep.subr.bf16.mxu0 0
        %4373 = vmatpush1.bf16.msra.mxu0 0
        %4374 = vmatprep.subr.bf16.mxu0 0
        %4375 = vmatpush1.bf16.msra.mxu0 0
        %4376 = vmatprep.subr.bf16.mxu0 0
        %4377 = vmatpush1.bf16.msra.mxu0 0
        %4378 = vmatprep.subr.bf16.mxu0 0
        %4379 = vmatpush1.bf16.msra.mxu0 0
        %4380 = vmatprep.subr.bf16.mxu0 0
        %4381 = vmatpush1.bf16.msra.mxu0 0
        %4382 = vmatprep.subr.bf16.mxu0 0
        %4383 = vmatpush1.bf16.msra.mxu0 0
        %4384 = vmatprep.subr.bf16.mxu0 0
        %4385 = vmatpush1.bf16.msra.mxu0 0
        %4386 = vmatprep.subr.bf16.mxu0 0
        %4387 = vmatpush1.bf16.msra.mxu0 0
        %4388 = vmatprep.subr.bf16.mxu0 0
        %4389 = vmatpush1.bf16.msra.mxu0 0
        %4390 = vmatprep.subr.bf16.mxu0 0
        %4391 = vmatpush1.bf16.msra.mxu0 0
        %4392 = vmatprep.subr.bf16.mxu0 0
        %4393 = vmatpush1.bf16.msra.mxu0 0
        %4394 = vmatprep.subr.bf16.mxu0 0
        %4395 = vmatpush1.bf16.msra.mxu0 0
        %4396 = vmatprep.subr.bf16.mxu0 0
        %4397 = vmatpush1.bf16.msra.mxu0 0
        %4398 = vmatprep.mubr.bf16.mxu0 0
        %4399 = vmatmul.mubr.bf16.gmra.mrb[0].mxu0 %v4364
        %v4400 = vpop.f32.mrb[0].mxu0
        %v4401 = vadd.f32 0.0, %v4400
        %v4402 = vpop.f32.mrb[0].mxu0
        %v4403 = vpop.f32.mrb[0].mxu0
        %v4404 = vadd.f32 0.0, %v4403
        %v4405 = vpop.f32.mrb[0].mxu0
        %4406 = vdwg.mxu0
        %v4408 = vsel %vm2187, %v4360, 0
        %4410 = vmatprep.subr.bf16.mxu0 0
        %4411 = vmatpush1.bf16.msra.mxu0 %v4080
        %4412 = vmatprep.subr.bf16.mxu0 0
        %4413 = vmatpush1.bf16.msra.mxu0 0
        %4414 = vmatprep.subr.bf16.mxu0 0
        %4415 = vmatpush1.bf16.msra.mxu0 0
        %4416 = vmatprep.subr.bf16.mxu0 0
        %4417 = vmatpush1.bf16.msra.mxu0 0
        %4418 = vmatprep.subr.bf16.mxu0 0
        %4419 = vmatpush1.bf16.msra.mxu0 0
        %4420 = vmatprep.subr.bf16.mxu0 0
        %4421 = vmatpush1.bf16.msra.mxu0 0
        %4422 = vmatprep.subr.bf16.mxu0 0
        %4423 = vmatpush1.bf16.msra.mxu0 0
        %4424 = vmatprep.subr.bf16.mxu0 0
        %4425 = vmatpush1.bf16.msra.mxu0 0
        %4426 = vmatprep.subr.bf16.mxu0 0
        %4427 = vmatpush1.bf16.msra.mxu0 0
        %4428 = vmatprep.subr.bf16.mxu0 0
        %4429 = vmatpush1.bf16.msra.mxu0 0
        %4430 = vmatprep.subr.bf16.mxu0 0
        %4431 = vmatpush1.bf16.msra.mxu0 0
        %4432 = vmatprep.subr.bf16.mxu0 0
        %4433 = vmatpush1.bf16.msra.mxu0 0
        %4434 = vmatprep.subr.bf16.mxu0 0
        %4435 = vmatpush1.bf16.msra.mxu0 0
        %4436 = vmatprep.subr.bf16.mxu0 0
        %4437 = vmatpush1.bf16.msra.mxu0 0
        %4438 = vmatprep.subr.bf16.mxu0 0
        %4439 = vmatpush1.bf16.msra.mxu0 0
        %4440 = vmatprep.subr.bf16.mxu0 0
        %4441 = vmatpush1.bf16.msra.mxu0 0
        %4442 = vmatprep.mubr.bf16.mxu0 0
        %4443 = vmatmul.mubr.bf16.gmra.mrb[0].mxu0 %v4408
        %v4444 = vpop.f32.mrb[0].mxu0
        %v4445 = vadd.f32 0.0, %v4444
        %v4446 = vpop.f32.mrb[0].mxu0
        %v4447 = vpop.f32.mrb[0].mxu0
        %v4448 = vadd.f32 0.0, %v4447
        %v4449 = vpop.f32.mrb[0].mxu0
        %4450 = vdwg.mxu0
        %v4452 = vsel %vm2187, %v4361, 0
        %4454 = vmatprep.subr.bf16.mxu0 0
        %4455 = vmatpush1.bf16.msra.mxu0 %v4081
        %4456 = vmatprep.subr.bf16.mxu0 0
        %4457 = vmatpush1.bf16.msra.mxu0 0
        %4458 = vmatprep.subr.bf16.mxu0 0
        %4459 = vmatpush1.bf16.msra.mxu0 0
        %4460 = vmatprep.subr.bf16.mxu0 0
        %4461 = vmatpush1.bf16.msra.mxu0 0
        %4462 = vmatprep.subr.bf16.mxu0 0
        %4463 = vmatpush1.bf16.msra.mxu0 0
        %4464 = vmatprep.subr.bf16.mxu0 0
        %4465 = vmatpush1.bf16.msra.mxu0 0
        %4466 = vmatprep.subr.bf16.mxu0 0
        %4467 = vmatpush1.bf16.msra.mxu0 0
        %4468 = vmatprep.subr.bf16.mxu0 0
        %4469 = vmatpush1.bf16.msra.mxu0 0
        %4470 = vmatprep.subr.bf16.mxu0 0
        %4471 = vmatpush1.bf16.msra.mxu0 0
        %4472 = vmatprep.subr.bf16.mxu0 0
        %4473 = vmatpush1.bf16.msra.mxu0 0
        %4474 = vmatprep.subr.bf16.mxu0 0
        %4475 = vmatpush1.bf16.msra.mxu0 0
        %4476 = vmatprep.subr.bf16.mxu0 0
        %4477 = vmatpush1.bf16.msra.mxu0 0
        %4478 = vmatprep.subr.bf16.mxu0 0
        %4479 = vmatpush1.bf16.msra.mxu0 0
        %4480 = vmatprep.subr.bf16.mxu0 0
        %4481 = vmatpush1.bf16.msra.mxu0 0
        %4482 = vmatprep.subr.bf16.mxu0 0
        %4483 = vmatpush1.bf16.msra.mxu0 0
        %4484 = vmatprep.subr.bf16.mxu0 0
        %4485 = vmatpush1.bf16.msra.mxu0 0
        %4486 = vmatprep.mubr.bf16.mxu0 0
        %4487 = vmatmul.mubr.bf16.gmra.mrb[0].mxu0 %v4452
        %v4488 = vpop.f32.mrb[0].mxu0
        %v4489 = vadd.f32 0.0, %v4488
        %v4490 = vpop.f32.mrb[0].mxu0
        %v4491 = vpop.f32.mrb[0].mxu0
        %v4492 = vadd.f32 0.0, %v4491
        %v4493 = vpop.f32.mrb[0].mxu0
        %4494 = vdwg.mxu0
        %v4496 = vsel %vm2187, %v4362, 0
        %4498 = vmatprep.subr.bf16.mxu0 0
        %4499 = vmatpush1.bf16.msra.mxu0 %v4082
        %4500 = vmatprep.subr.bf16.mxu0 0
        %4501 = vmatpush1.bf16.msra.mxu0 0
        %4502 = vmatprep.subr.bf16.mxu0 0
        %4503 = vmatpush1.bf16.msra.mxu0 0
        %4504 = vmatprep.subr.bf16.mxu0 0
        %4505 = vmatpush1.bf16.msra.mxu0 0
        %4506 = vmatprep.subr.bf16.mxu0 0
        %4507 = vmatpush1.bf16.msra.mxu0 0
        %4508 = vmatprep.subr.bf16.mxu0 0
        %4509 = vmatpush1.bf16.msra.mxu0 0
        %4510 = vmatprep.subr.bf16.mxu0 0
        %4511 = vmatpush1.bf16.msra.mxu0 0
        %4512 = vmatprep.subr.bf16.mxu0 0
        %4513 = vmatpush1.bf16.msra.mxu0 0
        %4514 = vmatprep.subr.bf16.mxu0 0
        %4515 = vmatpush1.bf16.msra.mxu0 0
        %4516 = vmatprep.subr.bf16.mxu0 0
        %4517 = vmatpush1.bf16.msra.mxu0 0
        %4518 = vmatprep.subr.bf16.mxu0 0
        %4519 = vmatpush1.bf16.msra.mxu0 0
        %4520 = vmatprep.subr.bf16.mxu0 0
        %4521 = vmatpush1.bf16.msra.mxu0 0
        %4522 = vmatprep.subr.bf16.mxu0 0
        %4523 = vmatpush1.bf16.msra.mxu0 0
        %4524 = vmatprep.subr.bf16.mxu0 0
        %4525 = vmatpush1.bf16.msra.mxu0 0
        %4526 = vmatprep.subr.bf16.mxu0 0
        %4527 = vmatpush1.bf16.msra.mxu0 0
        %4528 = vmatprep.subr.bf16.mxu0 0
        %4529 = vmatpush1.bf16.msra.mxu0 0
        %4530 = vmatprep.mubr.bf16.mxu0 0
        %4531 = vmatmul.mubr.bf16.gmra.mrb[0].mxu0 %v4496
        %v4532 = vpop.f32.mrb[0].mxu0
        %v4533 = vadd.f32 0.0, %v4532
        %v4534 = vpop.f32.mrb[0].mxu0
        %v4535 = vpop.f32.mrb[0].mxu0
        %v4536 = vadd.f32 0.0, %v4535
        %v4537 = vpop.f32.mrb[0].mxu0
        %4538 = vdwg.mxu0
        %v4539 = vcombine.low %v4401, %v4489
        %v4540 = vcombine.high %v4401, %v4489
        %v4542 = vunpack.c.l.s4 1983009808
        %v4543 = vunpack.c.0.s8 %v4542
        %v4544 = vlaneseq
        %v4545 = vshrl.u32 %v4544, 7
        %v4546 = vsub.s32 %v4543, %v4545
        %v4547 = vrot.slane %v4539, %v4546
        %v4549 = vunpack.c.l.s4 1983009808
        %v4550 = vunpack.c.0.s8 %v4549
        %v4551 = vlaneseq
        %v4552 = vshrl.u32 %v4551, 7
        %v4553 = vsub.s32 %v4550, %v4552
        %v4554 = vrot.slane %v4540, %v4553
        %v4555 = vcombine.low %v4445, %v4533
        %v4556 = vcombine.high %v4445, %v4533
        %v4558 = vunpack.c.l.s4 1983009808
        %v4559 = vunpack.c.0.s8 %v4558
        %v4560 = vlaneseq
        %v4561 = vshrl.u32 %v4560, 7
        %v4562 = vsub.s32 %v4559, %v4561
        %v4563 = vrot.slane %v4555, %v4562
        %v4565 = vunpack.c.l.s4 1983009808
        %v4566 = vunpack.c.0.s8 %v4565
        %v4567 = vlaneseq
        %v4568 = vshrl.u32 %v4567, 7
        %v4569 = vsub.s32 %v4566, %v4568
        %v4570 = vrot.slane %v4556, %v4569
        %v4571 = vcombine.low %v4547, %v4563
        %v4572 = vcombine.high %v4547, %v4563
        %v4574 = vunpack.c.l.s4 1934713408
        %v4575 = vunpack.c.0.s8 %v4574
        %v4576 = vlaneseq
        %v4577 = vshrl.u32 %v4576, 7
        %v4578 = vsub.s32 %v4575, %v4577
        %v4579 = vrot.slane %v4571, %v4578
        %v4581 = vunpack.c.l.s4 1934713408
        %v4582 = vunpack.c.0.s8 %v4581
        %v4583 = vlaneseq
        %v4584 = vshrl.u32 %v4583, 7
        %v4585 = vsub.s32 %v4582, %v4584
        %v4586 = vrot.slane %v4572, %v4585
        %v4587 = vcombine.low %v4554, %v4570
        %v4588 = vcombine.high %v4554, %v4570
        %v4590 = vunpack.c.l.s4 1934713408
        %v4591 = vunpack.c.0.s8 %v4590
        %v4592 = vlaneseq
        %v4593 = vshrl.u32 %v4592, 7
        %v4594 = vsub.s32 %v4591, %v4593
        %v4595 = vrot.slane %v4587, %v4594
        %v4597 = vunpack.c.l.s4 1934713408
        %v4598 = vunpack.c.0.s8 %v4597
        %v4599 = vlaneseq
        %v4600 = vshrl.u32 %v4599, 7
        %v4601 = vsub.s32 %v4598, %v4600
        %v4602 = vrot.slane %v4588, %v4601
        %v4603 = vcombine.high %v4579, 0.0
        %v4604 = vcombine.high %v4586, 0.0
        %v4605 = vcombine.high %v4595, 0.0
        %v4606 = vcombine.high %v4602, 0.0
        %v4607 = vcombine.low %v4404, %v4492
        %v4608 = vcombine.high %v4404, %v4492
        %v4610 = vunpack.c.l.s4 1983009808
        %v4611 = vunpack.c.0.s8 %v4610
        %v4612 = vlaneseq
        %v4613 = vshrl.u32 %v4612, 7
        %v4614 = vsub.s32 %v4611, %v4613
        %v4615 = vrot.slane %v4607, %v4614
        %v4617 = vunpack.c.l.s4 1983009808
        %v4618 = vunpack.c.0.s8 %v4617
        %v4619 = vlaneseq
        %v4620 = vshrl.u32 %v4619, 7
        %v4621 = vsub.s32 %v4618, %v4620
        %v4622 = vrot.slane %v4608, %v4621
        %v4623 = vcombine.low %v4448, %v4536
        %v4624 = vcombine.high %v4448, %v4536
        %v4626 = vunpack.c.l.s4 1983009808
        %v4627 = vunpack.c.0.s8 %v4626
        %v4628 = vlaneseq
        %v4629 = vshrl.u32 %v4628, 7
        %v4630 = vsub.s32 %v4627, %v4629
        %v4631 = vrot.slane %v4623, %v4630
        %v4633 = vunpack.c.l.s4 1983009808
        %v4634 = vunpack.c.0.s8 %v4633
        %v4635 = vlaneseq
        %v4636 = vshrl.u32 %v4635, 7
        %v4637 = vsub.s32 %v4634, %v4636
        %v4638 = vrot.slane %v4624, %v4637
        %v4639 = vcombine.low %v4615, %v4631
        %v4640 = vcombine.high %v4615, %v4631
        %v4642 = vunpack.c.l.s4 1934713408
        %v4643 = vunpack.c.0.s8 %v4642
        %v4644 = vlaneseq
        %v4645 = vshrl.u32 %v4644, 7
        %v4646 = vsub.s32 %v4643, %v4645
        %v4647 = vrot.slane %v4639, %v4646
        %v4649 = vunpack.c.l.s4 1934713408
        %v4650 = vunpack.c.0.s8 %v4649
        %v4651 = vlaneseq
        %v4652 = vshrl.u32 %v4651, 7
        %v4653 = vsub.s32 %v4650, %v4652
        %v4654 = vrot.slane %v4640, %v4653
        %v4655 = vcombine.low %v4622, %v4638
        %v4656 = vcombine.high %v4622, %v4638
        %v4658 = vunpack.c.l.s4 1934713408
        %v4659 = vunpack.c.0.s8 %v4658
        %v4660 = vlaneseq
        %v4661 = vshrl.u32 %v4660, 7
        %v4662 = vsub.s32 %v4659, %v4661
        %v4663 = vrot.slane %v4655, %v4662
        %v4665 = vunpack.c.l.s4 1934713408
        %v4666 = vunpack.c.0.s8 %v4665
        %v4667 = vlaneseq
        %v4668 = vshrl.u32 %v4667, 7
        %v4669 = vsub.s32 %v4666, %v4668
        %v4670 = vrot.slane %v4656, %v4669
        %v4671 = vcombine.high %v4647, 0.0
        %v4672 = vcombine.high %v4654, 0.0
        %v4673 = vcombine.high %v4663, 0.0
        %v4674 = vcombine.high %v4670, 0.0
        %v4675 = vcombine.low %v4579, %v4586
        %v4677 = vunpack.c.l.s4 1983009808
        %v4678 = vunpack.c.0.s8 %v4677
        %v4679 = vlaneseq
        %v4680 = vshrl.u32 %v4679, 7
        %v4681 = vsub.s32 %v4678, %v4680
        %v4682 = vrot.slane %v4675, %v4681
        %v4683 = vcombine.low %v4603, %v4604
        %v4685 = vunpack.c.l.s4 1983009808
        %v4686 = vunpack.c.0.s8 %v4685
        %v4687 = vlaneseq
        %v4688 = vshrl.u32 %v4687, 7
        %v4689 = vsub.s32 %v4686, %v4688
        %v4690 = vrot.slane %v4683, %v4689
        %v4691 = vcombine.low %v4595, %v4602
        %v4693 = vunpack.c.l.s4 1983009808
        %v4694 = vunpack.c.0.s8 %v4693
        %v4695 = vlaneseq
        %v4696 = vshrl.u32 %v4695, 7
        %v4697 = vsub.s32 %v4694, %v4696
        %v4698 = vrot.slane %v4691, %v4697
        %v4699 = vcombine.low %v4605, %v4606
        %v4701 = vunpack.c.l.s4 1983009808
        %v4702 = vunpack.c.0.s8 %v4701
        %v4703 = vlaneseq
        %v4704 = vshrl.u32 %v4703, 7
        %v4705 = vsub.s32 %v4702, %v4704
        %v4706 = vrot.slane %v4699, %v4705
        %v4707 = vcombine.low %v4682, %v4690
        %v4708 = vcombine.high %v4682, %v4690
        %v4710 = vunpack.c.l.s4 1934713408
        %v4711 = vunpack.c.0.s8 %v4710
        %v4712 = vlaneseq
        %v4713 = vshrl.u32 %v4712, 7
        %v4714 = vsub.s32 %v4711, %v4713
        %v4715 = vrot.slane %v4707, %v4714
        %v4717 = vunpack.c.l.s4 1934713408
        %v4718 = vunpack.c.0.s8 %v4717
        %v4719 = vlaneseq
        %v4720 = vshrl.u32 %v4719, 7
        %v4721 = vsub.s32 %v4718, %v4720
        %v4722 = vrot.slane %v4708, %v4721
        %v4723 = vcombine.low %v4698, %v4706
        %v4724 = vcombine.high %v4698, %v4706
        %v4726 = vunpack.c.l.s4 1934713408
        %v4727 = vunpack.c.0.s8 %v4726
        %v4728 = vlaneseq
        %v4729 = vshrl.u32 %v4728, 7
        %v4730 = vsub.s32 %v4727, %v4729
        %v4731 = vrot.slane %v4723, %v4730
        %v4733 = vunpack.c.l.s4 1934713408
        %v4734 = vunpack.c.0.s8 %v4733
        %v4735 = vlaneseq
        %v4736 = vshrl.u32 %v4735, 7
        %v4737 = vsub.s32 %v4734, %v4736
        %v4738 = vrot.slane %v4724, %v4737
        %v4739 = vcombine.low %v4715, %v4731
        %v4740 = vcombine.high %v4715, %v4731
        %v4741 = vcombine.low %v4722, %v4738
        %v4742 = vcombine.high %v4722, %v4738
        %v4743 = vcombine.low %v4647, %v4654
        %v4745 = vunpack.c.l.s4 1983009808
        %v4746 = vunpack.c.0.s8 %v4745
        %v4747 = vlaneseq
        %v4748 = vshrl.u32 %v4747, 7
        %v4749 = vsub.s32 %v4746, %v4748
        %v4750 = vrot.slane %v4743, %v4749
        %v4751 = vcombine.low %v4671, %v4672
        %v4753 = vunpack.c.l.s4 1983009808
        %v4754 = vunpack.c.0.s8 %v4753
        %v4755 = vlaneseq
        %v4756 = vshrl.u32 %v4755, 7
        %v4757 = vsub.s32 %v4754, %v4756
        %v4758 = vrot.slane %v4751, %v4757
        %v4759 = vcombine.low %v4663, %v4670
        %v4761 = vunpack.c.l.s4 1983009808
        %v4762 = vunpack.c.0.s8 %v4761
        %v4763 = vlaneseq
        %v4764 = vshrl.u32 %v4763, 7
        %v4765 = vsub.s32 %v4762, %v4764
        %v4766 = vrot.slane %v4759, %v4765
        %v4767 = vcombine.low %v4673, %v4674
        %v4769 = vunpack.c.l.s4 1983009808
        %v4770 = vunpack.c.0.s8 %v4769
        %v4771 = vlaneseq
        %v4772 = vshrl.u32 %v4771, 7
        %v4773 = vsub.s32 %v4770, %v4772
        %v4774 = vrot.slane %v4767, %v4773
        %v4775 = vcombine.low %v4750, %v4758
        %v4776 = vcombine.high %v4750, %v4758
        %v4778 = vunpack.c.l.s4 1934713408
        %v4779 = vunpack.c.0.s8 %v4778
        %v4780 = vlaneseq
        %v4781 = vshrl.u32 %v4780, 7
        %v4782 = vsub.s32 %v4779, %v4781
        %v4783 = vrot.slane %v4775, %v4782
        %v4785 = vunpack.c.l.s4 1934713408
        %v4786 = vunpack.c.0.s8 %v4785
        %v4787 = vlaneseq
        %v4788 = vshrl.u32 %v4787, 7
        %v4789 = vsub.s32 %v4786, %v4788
        %v4790 = vrot.slane %v4776, %v4789
        %v4791 = vcombine.low %v4766, %v4774
        %v4792 = vcombine.high %v4766, %v4774
        %v4794 = vunpack.c.l.s4 1934713408
        %v4795 = vunpack.c.0.s8 %v4794
        %v4796 = vlaneseq
        %v4797 = vshrl.u32 %v4796, 7
        %v4798 = vsub.s32 %v4795, %v4797
        %v4799 = vrot.slane %v4791, %v4798
        %v4801 = vunpack.c.l.s4 1934713408
        %v4802 = vunpack.c.0.s8 %v4801
        %v4803 = vlaneseq
        %v4804 = vshrl.u32 %v4803, 7
        %v4805 = vsub.s32 %v4802, %v4804
        %v4806 = vrot.slane %v4792, %v4805
        %v4807 = vcombine.low %v4783, %v4799
        %v4808 = vcombine.high %v4783, %v4799
        %v4809 = vcombine.low %v4790, %v4806
        %v4810 = vcombine.high %v4790, %v4806
        %4813 = vrot.lane.b32.xlu0 %v4740, 32
        %v4814 = vpop.permute.xlu0 %4813
        %4815 = vrot.lane.b32.xlu0 %v4808, 32
        %v4816 = vpop.permute.xlu0 %4815
        %4821 = vrot.lane.b32.xlu0 %v4741, 64
        %v4822 = vpop.permute.xlu0 %4821
        %4823 = vrot.lane.b32.xlu0 %v4809, 64
        %v4824 = vpop.permute.xlu0 %4823
        %4829 = vrot.lane.b32.xlu0 %v4742, 96
        %v4830 = vpop.permute.xlu0 %4829
        %4831 = vrot.lane.b32.xlu0 %v4810, 96
        %v4832 = vpop.permute.xlu0 %4831
        %v4835 = vsel %vm1998, %v4739, %v4814
        %v4836 = vsel %vm1998, %v4807, %v4816
        %v4837 = vsel %vm2754, %v4835, %v4822
        %v4838 = vsel %vm2754, %v4836, %v4824
        %v4839 = vsel %vm2757, %v4837, %v4830
        %v4840 = vsel %vm2757, %v4838, %v4832
        %v4841 = vpack.c.bf16 %v4840, %v4839
        %v4842 = vld [vmem:[#allocation13] sm:$0xf]
        %v4843 = vld [vmem:[#allocation13 + $0x4] sm:$0xf]
        %v4844 = vld [vmem:[#allocation13 + $0x8] sm:$0xf]
        %v4845 = vld [vmem:[#allocation13 + $0xc] sm:$0xf]
        %v4846 = vld [vmem:[#allocation13 + $0x10] sm:$0xf]
        %v4847 = vld [vmem:[#allocation13 + $0x14] sm:$0xf]
        %v4848 = vld [vmem:[#allocation13 + $0x18] sm:$0xf]
        %v4849 = vld [vmem:[#allocation13 + $0x1c] sm:$0xf]
        %v4850 = vld [vmem:[#allocation13 + $0x20] sm:$0xf]
        %v4851 = vld [vmem:[#allocation13 + $0x24] sm:$0xf]
        %v4852 = vld [vmem:[#allocation13 + $0x28] sm:$0xf]
        %v4853 = vld [vmem:[#allocation13 + $0x2c] sm:$0xf]
        %v4854 = vld [vmem:[#allocation13 + $0x30] sm:$0xf]
        %v4855 = vld [vmem:[#allocation13 + $0x34] sm:$0xf]
        %v4856 = vld [vmem:[#allocation13 + $0x38] sm:$0xf]
        %v4857 = vld [vmem:[#allocation13 + $0x3c] sm:$0xf]
        %v4858 = vld [vmem:[%s13] sm:$0x1]
        %v4860 = vlaneseq
        %v4861 = vshrl.u32 %v4860, 7
        %v4862 = vsub.s32 0, %v4861
        %v4863 = vrot.slane %v4858, %v4862
        %v4881 = vunpack.c.l.b16 %v4842
        %v4882 = vunpack.c.l.b16 %v4843
        %v4883 = vunpack.c.l.b16 %v4844
        %v4884 = vunpack.c.l.b16 %v4845
        %v4885 = vunpack.c.l.b16 %v4846
        %v4886 = vunpack.c.l.b16 %v4847
        %v4887 = vunpack.c.l.b16 %v4848
        %v4888 = vunpack.c.l.b16 %v4849
        %v4889 = vunpack.c.l.b16 %v4850
        %v4890 = vunpack.c.l.b16 %v4851
        %v4891 = vunpack.c.l.b16 %v4852
        %v4892 = vunpack.c.l.b16 %v4853
        %v4893 = vunpack.c.l.b16 %v4854
        %v4894 = vunpack.c.l.b16 %v4855
        %v4895 = vunpack.c.l.b16 %v4856
        %v4896 = vunpack.c.l.b16 %v4857
        %v4897 = vpack.c.b16 %v4882, %v4881
        %v4898 = vpack.c.b16 %v4884, %v4883
        %v4899 = vpack.c.b16 %v4886, %v4885
        %v4900 = vpack.c.b16 %v4888, %v4887
        %v4901 = vpack.c.b16 %v4890, %v4889
        %v4902 = vpack.c.b16 %v4892, %v4891
        %v4903 = vpack.c.b16 %v4894, %v4893
        %v4904 = vpack.c.b16 %v4896, %v4895
        %4913 = vmatprep.subr.bf16.mxu0 0
        %4914 = vmatpush1.bf16.msra.mxu0 %v4897
        %4915 = vmatprep.subr.bf16.mxu0 0
        %4916 = vmatpush1.bf16.msra.mxu0 %v4898
        %4917 = vmatprep.subr.bf16.mxu0 0
        %4918 = vmatpush1.bf16.msra.mxu0 %v4899
        %4919 = vmatprep.subr.bf16.mxu0 0
        %4920 = vmatpush1.bf16.msra.mxu0 %v4900
        %4921 = vmatprep.subr.bf16.mxu0 0
        %4922 = vmatpush1.bf16.msra.mxu0 %v4901
        %4923 = vmatprep.subr.bf16.mxu0 0
        %4924 = vmatpush1.bf16.msra.mxu0 %v4902
        %4925 = vmatprep.subr.bf16.mxu0 0
        %4926 = vmatpush1.bf16.msra.mxu0 %v4903
        %4927 = vmatprep.subr.bf16.mxu0 0
        %4928 = vmatpush1.bf16.msra.mxu0 %v4904
        %4929 = vmatprep.subr.bf16.mxu0 0
        %4930 = vmatpush1.bf16.msra.mxu0 0
        %4931 = vmatprep.subr.bf16.mxu0 0
        %4932 = vmatpush1.bf16.msra.mxu0 0
        %4933 = vmatprep.subr.bf16.mxu0 0
        %4934 = vmatpush1.bf16.msra.mxu0 0
        %4935 = vmatprep.subr.bf16.mxu0 0
        %4936 = vmatpush1.bf16.msra.mxu0 0
        %4937 = vmatprep.subr.bf16.mxu0 0
        %4938 = vmatpush1.bf16.msra.mxu0 0
        %4939 = vmatprep.subr.bf16.mxu0 0
        %4940 = vmatpush1.bf16.msra.mxu0 0
        %4941 = vmatprep.subr.bf16.mxu0 0
        %4942 = vmatpush1.bf16.msra.mxu0 0
        %4943 = vmatprep.subr.bf16.mxu0 0
        %4944 = vmatpush1.bf16.msra.mxu0 0
        %4945 = vmatprep.mubr.bf16.mxu0 0
        %4946 = vmatmul.mubr.bf16.gmra.mrb[0].mxu0 %v4841
        %v4947 = vpop.f32.mrb[0].mxu0
        %v4948 = vadd.f32 %v4863, %v4947
        %v4949 = vpop.f32.mrb[0].mxu0
        %v4950 = vpop.f32.mrb[0].mxu0
        %v4951 = vadd.f32 %v4863, %v4950
        %v4952 = vpop.f32.mrb[0].mxu0
        %4953 = vdwg.mxu0
        %v4954 = vadd.f32 %v4948, %v2928
        %v4955 = vadd.f32 %v4951, %v2929
        %v4956 = vld [vmem:[%s14] sm:$0x1]
        %v4957 = vld [vmem:[%s15] sm:$0x1]
        %4958 = vadd.xlane.f32.xlu0 %v4954
        %v4959 = vpop.xlane.xlu0 %4958
        %4960 = vadd.xlane.f32.xlu0 %v4955
        %v4961 = vpop.xlane.xlu0 %4960
        %v4962 = vmul.f32 %v4959, %v2881
        %v4963 = vmul.f32 %v4961, %v2881
        %v4964 = vsub.f32 %v4954, %v4962
        %v4965 = vsub.f32 %v4955, %v4963
        %v4966 = vmul.f32 %v4964, %v4964
        %v4967 = vmul.f32 %v4965, %v4965
        %4968 = vadd.xlane.f32.xlu0 %v4966
        %v4969 = vpop.xlane.xlu0 %4968
        %4970 = vadd.xlane.f32.xlu0 %v4967
        %v4971 = vpop.xlane.xlu0 %4970
        %v4972 = vmul.f32 %v4969, %v2881
        %v4973 = vmul.f32 %v4971, %v2881
        %v4974 = vadd.f32 %v4972, 1e-05
        %v4975 = vadd.f32 %v4973, 1e-05
        %v4976 = vrsqrt.pop %v4974
        %v4977 = vmul.f32 %v4974, %v4976
        %vm4978 = vcmp.eq.f32.partialorder %v4974, inf
        %v4979 = vsel %vm4978, %v4974, %v4977
        %vm4980 = vcmp.eq.f32.partialorder %v4974, 0.0
        %v4981 = vand.u32 %v4974, 2147483648
        %v4982 = vsel %vm4980, %v4981, %v4979
        %v4983 = vrsqrt.pop %v4975
        %v4984 = vmul.f32 %v4975, %v4983
        %vm4985 = vcmp.eq.f32.partialorder %v4975, inf
        %v4986 = vsel %vm4985, %v4975, %v4984
        %vm4987 = vcmp.eq.f32.partialorder %v4975, 0.0
        %v4988 = vand.u32 %v4975, 2147483648
        %v4989 = vsel %vm4987, %v4988, %v4986
        %v4990 = vrcp.pop %v4982
        %v4991 = vmul.f32 %v4964, %v4990
        %v4992 = vrcp.pop %v4989
        %v4993 = vmul.f32 %v4965, %v4992
        %v4995 = vlaneseq
        %v4996 = vshrl.u32 %v4995, 7
        %v4997 = vsub.s32 0, %v4996
        %v4998 = vrot.slane %v4956, %v4997
        %v5000 = vmul.f32 %v4998, %v4991
        %v5001 = vmul.f32 %v4998, %v4993
        %v5003 = vlaneseq
        %v5004 = vshrl.u32 %v5003, 7
        %v5005 = vsub.s32 0, %v5004
        %v5006 = vrot.slane %v4957, %v5005
        %v5008 = vadd.f32 %v5000, %v5006
        %v5009 = vadd.f32 %v5001, %v5006
        %v5010 = vpack.c.bf16 %v5009, %v5008
        %v5011 = vld [vmem:[#allocation14] sm:$0xff]
        %v5012 = vld [vmem:[#allocation14 + $0x8] sm:$0xff]
        %v5013 = vld [vmem:[#allocation14 + $0x10] sm:$0xff]
        %v5014 = vld [vmem:[#allocation14 + $0x18] sm:$0xff]
        %v5015 = vld [vmem:[#allocation14 + $0x20] sm:$0xff]
        %v5016 = vld [vmem:[#allocation14 + $0x28] sm:$0xff]
        %v5017 = vld [vmem:[#allocation14 + $0x30] sm:$0xff]
        %v5018 = vld [vmem:[#allocation14 + $0x38] sm:$0xff]
        %v5019 = vld [vmem:[#allocation14 + $0x40] sm:$0xff]
        %v5020 = vld [vmem:[#allocation14 + $0x48] sm:$0xff]
        %v5021 = vld [vmem:[#allocation14 + $0x50] sm:$0xff]
        %v5022 = vld [vmem:[#allocation14 + $0x58] sm:$0xff]
        %v5023 = vld [vmem:[#allocation14 + $0x60] sm:$0xff]
        %v5024 = vld [vmem:[#allocation14 + $0x68] sm:$0xff]
        %v5025 = vld [vmem:[#allocation14 + $0x70] sm:$0xff]
        %v5026 = vld [vmem:[#allocation14 + $0x78] sm:$0xff]
        %v5027 = vld [vmem:[%s17] sm:$0x3]
        %v5029 = vlaneseq
        %v5030 = vshrl.u32 %v5029, 7
        %v5031 = vsub.s32 0, %v5030
        %v5032 = vrot.slane %v5027, %v5031
        %v5033 = vlaneseq
        %v5034 = vshrl.u32 %v5033, 7
        %v5035 = vsub.s32 1, %v5034
        %v5036 = vrot.slane %v5027, %v5035
        %v5055 = vunpack.c.l.b16 %v5011
        %v5056 = vunpack.c.h.b16 %v5011
        %v5057 = vunpack.c.l.b16 %v5012
        %v5058 = vunpack.c.h.b16 %v5012
        %v5059 = vunpack.c.l.b16 %v5013
        %v5060 = vunpack.c.h.b16 %v5013
        %v5061 = vunpack.c.l.b16 %v5014
        %v5062 = vunpack.c.h.b16 %v5014
        %v5063 = vunpack.c.l.b16 %v5015
        %v5064 = vunpack.c.h.b16 %v5015
        %v5065 = vunpack.c.l.b16 %v5016
        %v5066 = vunpack.c.h.b16 %v5016
        %v5067 = vunpack.c.l.b16 %v5017
        %v5068 = vunpack.c.h.b16 %v5017
        %v5069 = vunpack.c.l.b16 %v5018
        %v5070 = vunpack.c.h.b16 %v5018
        %v5071 = vunpack.c.l.b16 %v5019
        %v5072 = vunpack.c.h.b16 %v5019
        %v5073 = vunpack.c.l.b16 %v5020
        %v5074 = vunpack.c.h.b16 %v5020
        %v5075 = vunpack.c.l.b16 %v5021
        %v5076 = vunpack.c.h.b16 %v5021
        %v5077 = vunpack.c.l.b16 %v5022
        %v5078 = vunpack.c.h.b16 %v5022
        %v5079 = vunpack.c.l.b16 %v5023
        %v5080 = vunpack.c.h.b16 %v5023
        %v5081 = vunpack.c.l.b16 %v5024
        %v5082 = vunpack.c.h.b16 %v5024
        %v5083 = vunpack.c.l.b16 %v5025
        %v5084 = vunpack.c.h.b16 %v5025
        %v5085 = vunpack.c.l.b16 %v5026
        %v5086 = vunpack.c.h.b16 %v5026
        %v5087 = vpack.c.b16 %v5057, %v5055
        %v5088 = vpack.c.b16 %v5058, %v5056
        %v5089 = vpack.c.b16 %v5061, %v5059
        %v5090 = vpack.c.b16 %v5062, %v5060
        %v5091 = vpack.c.b16 %v5065, %v5063
        %v5092 = vpack.c.b16 %v5066, %v5064
        %v5093 = vpack.c.b16 %v5069, %v5067
        %v5094 = vpack.c.b16 %v5070, %v5068
        %v5095 = vpack.c.b16 %v5073, %v5071
        %v5096 = vpack.c.b16 %v5074, %v5072
        %v5097 = vpack.c.b16 %v5077, %v5075
        %v5098 = vpack.c.b16 %v5078, %v5076
        %v5099 = vpack.c.b16 %v5081, %v5079
        %v5100 = vpack.c.b16 %v5082, %v5080
        %v5101 = vpack.c.b16 %v5085, %v5083
        %v5102 = vpack.c.b16 %v5086, %v5084
        %5119 = vmatprep.subr.bf16.mxu0 %v5088
        %5120 = vmatpush1.bf16.msra.mxu0 %v5087
        %5121 = vmatprep.subr.bf16.mxu0 %v5090
        %5122 = vmatpush1.bf16.msra.mxu0 %v5089
        %5123 = vmatprep.subr.bf16.mxu0 %v5092
        %5124 = vmatpush1.bf16.msra.mxu0 %v5091
        %5125 = vmatprep.subr.bf16.mxu0 %v5094
        %5126 = vmatpush1.bf16.msra.mxu0 %v5093
        %5127 = vmatprep.subr.bf16.mxu0 %v5096
        %5128 = vmatpush1.bf16.msra.mxu0 %v5095
        %5129 = vmatprep.subr.bf16.mxu0 %v5098
        %5130 = vmatpush1.bf16.msra.mxu0 %v5097
        %5131 = vmatprep.subr.bf16.mxu0 %v5100
        %5132 = vmatpush1.bf16.msra.mxu0 %v5099
        %5133 = vmatprep.subr.bf16.mxu0 %v5102
        %5134 = vmatpush1.bf16.msra.mxu0 %v5101
        %5135 = vmatprep.subr.bf16.mxu0 0
        %5136 = vmatpush1.bf16.msra.mxu0 0
        %5137 = vmatprep.subr.bf16.mxu0 0
        %5138 = vmatpush1.bf16.msra.mxu0 0
        %5139 = vmatprep.subr.bf16.mxu0 0
        %5140 = vmatpush1.bf16.msra.mxu0 0
        %5141 = vmatprep.subr.bf16.mxu0 0
        %5142 = vmatpush1.bf16.msra.mxu0 0
        %5143 = vmatprep.subr.bf16.mxu0 0
        %5144 = vmatpush1.bf16.msra.mxu0 0
        %5145 = vmatprep.subr.bf16.mxu0 0
        %5146 = vmatpush1.bf16.msra.mxu0 0
        %5147 = vmatprep.subr.bf16.mxu0 0
        %5148 = vmatpush1.bf16.msra.mxu0 0
        %5149 = vmatprep.subr.bf16.mxu0 0
        %5150 = vmatpush1.bf16.msra.mxu0 0
        %5151 = vmatprep.mubr.bf16.mxu0 0
        %5152 = vmatmul.mubr.bf16.gmra.mrb[0].mxu0 %v5010
        %v5153 = vpop.f32.mrb[0].mxu0
        %v5154 = vadd.f32 %v5032, %v5153
        %v5155 = vpop.f32.mrb[0].mxu0
        %v5156 = vadd.f32 %v5036, %v5155
        %v5157 = vpop.f32.mrb[0].mxu0
        %v5158 = vadd.f32 %v5032, %v5157
        %v5159 = vpop.f32.mrb[0].mxu0
        %v5160 = vadd.f32 %v5036, %v5159
        %5161 = vdwg.mxu0
        %v5162 = vmax.f32 %v5154, 0.0
        %v5163 = vmax.f32 %v5156, 0.0
        %v5164 = vmax.f32 %v5158, 0.0
        %v5165 = vmax.f32 %v5160, 0.0
        %v5166 = vpack.c.bf16 %v5164, %v5162
        %v5167 = vpack.c.bf16 %v5165, %v5163
        %v5168 = vld [vmem:[#allocation16] sm:$0xf]
        %v5169 = vld [vmem:[#allocation16 + $0x4] sm:$0xf]
        %v5170 = vld [vmem:[#allocation16 + $0x8] sm:$0xf]
        %v5171 = vld [vmem:[#allocation16 + $0xc] sm:$0xf]
        %v5172 = vld [vmem:[#allocation16 + $0x10] sm:$0xf]
        %v5173 = vld [vmem:[#allocation16 + $0x14] sm:$0xf]
        %v5174 = vld [vmem:[#allocation16 + $0x18] sm:$0xf]
        %v5175 = vld [vmem:[#allocation16 + $0x1c] sm:$0xf]
        %v5176 = vld [vmem:[#allocation16 + $0x20] sm:$0xf]
        %v5177 = vld [vmem:[#allocation16 + $0x24] sm:$0xf]
        %v5178 = vld [vmem:[#allocation16 + $0x28] sm:$0xf]
        %v5179 = vld [vmem:[#allocation16 + $0x2c] sm:$0xf]
        %v5180 = vld [vmem:[#allocation16 + $0x30] sm:$0xf]
        %v5181 = vld [vmem:[#allocation16 + $0x34] sm:$0xf]
        %v5182 = vld [vmem:[#allocation16 + $0x38] sm:$0xf]
        %v5183 = vld [vmem:[#allocation16 + $0x3c] sm:$0xf]
        %v5184 = vld [vmem:[#allocation16 + $0x40] sm:$0xf]
        %v5185 = vld [vmem:[#allocation16 + $0x44] sm:$0xf]
        %v5186 = vld [vmem:[#allocation16 + $0x48] sm:$0xf]
        %v5187 = vld [vmem:[#allocation16 + $0x4c] sm:$0xf]
        %v5188 = vld [vmem:[#allocation16 + $0x50] sm:$0xf]
        %v5189 = vld [vmem:[#allocation16 + $0x54] sm:$0xf]
        %v5190 = vld [vmem:[#allocation16 + $0x58] sm:$0xf]
        %v5191 = vld [vmem:[#allocation16 + $0x5c] sm:$0xf]
        %v5192 = vld [vmem:[#allocation16 + $0x60] sm:$0xf]
        %v5193 = vld [vmem:[#allocation16 + $0x64] sm:$0xf]
        %v5194 = vld [vmem:[#allocation16 + $0x68] sm:$0xf]
        %v5195 = vld [vmem:[#allocation16 + $0x6c] sm:$0xf]
        %v5196 = vld [vmem:[#allocation16 + $0x70] sm:$0xf]
        %v5197 = vld [vmem:[#allocation16 + $0x74] sm:$0xf]
        %v5198 = vld [vmem:[#allocation16 + $0x78] sm:$0xf]
        %v5199 = vld [vmem:[#allocation16 + $0x7c] sm:$0xf]
        %v5200 = vld [vmem:[%s19] sm:$0x1]
        %v5202 = vlaneseq
        %v5203 = vshrl.u32 %v5202, 7
        %v5204 = vsub.s32 0, %v5203
        %v5205 = vrot.slane %v5200, %v5204
        %v5239 = vunpack.c.l.b16 %v5168
        %v5240 = vunpack.c.l.b16 %v5169
        %v5241 = vunpack.c.l.b16 %v5170
        %v5242 = vunpack.c.l.b16 %v5171
        %v5243 = vunpack.c.l.b16 %v5172
        %v5244 = vunpack.c.l.b16 %v5173
        %v5245 = vunpack.c.l.b16 %v5174
        %v5246 = vunpack.c.l.b16 %v5175
        %v5247 = vunpack.c.l.b16 %v5176
        %v5248 = vunpack.c.l.b16 %v5177
        %v5249 = vunpack.c.l.b16 %v5178
        %v5250 = vunpack.c.l.b16 %v5179
        %v5251 = vunpack.c.l.b16 %v5180
        %v5252 = vunpack.c.l.b16 %v5181
        %v5253 = vunpack.c.l.b16 %v5182
        %v5254 = vunpack.c.l.b16 %v5183
        %v5255 = vunpack.c.l.b16 %v5184
        %v5256 = vunpack.c.l.b16 %v5185
        %v5257 = vunpack.c.l.b16 %v5186
        %v5258 = vunpack.c.l.b16 %v5187
        %v5259 = vunpack.c.l.b16 %v5188
        %v5260 = vunpack.c.l.b16 %v5189
        %v5261 = vunpack.c.l.b16 %v5190
        %v5262 = vunpack.c.l.b16 %v5191
        %v5263 = vunpack.c.l.b16 %v5192
        %v5264 = vunpack.c.l.b16 %v5193
        %v5265 = vunpack.c.l.b16 %v5194
        %v5266 = vunpack.c.l.b16 %v5195
        %v5267 = vunpack.c.l.b16 %v5196
        %v5268 = vunpack.c.l.b16 %v5197
        %v5269 = vunpack.c.l.b16 %v5198
        %v5270 = vunpack.c.l.b16 %v5199
        %v5271 = vpack.c.b16 %v5240, %v5239
        %v5272 = vpack.c.b16 %v5242, %v5241
        %v5273 = vpack.c.b16 %v5244, %v5243
        %v5274 = vpack.c.b16 %v5246, %v5245
        %v5275 = vpack.c.b16 %v5248, %v5247
        %v5276 = vpack.c.b16 %v5250, %v5249
        %v5277 = vpack.c.b16 %v5252, %v5251
        %v5278 = vpack.c.b16 %v5254, %v5253
        %v5279 = vpack.c.b16 %v5256, %v5255
        %v5280 = vpack.c.b16 %v5258, %v5257
        %v5281 = vpack.c.b16 %v5260, %v5259
        %v5282 = vpack.c.b16 %v5262, %v5261
        %v5283 = vpack.c.b16 %v5264, %v5263
        %v5284 = vpack.c.b16 %v5266, %v5265
        %v5285 = vpack.c.b16 %v5268, %v5267
        %v5286 = vpack.c.b16 %v5270, %v5269
        %5303 = vmatprep.subr.bf16.mxu0 0
        %5304 = vmatpush1.bf16.msra.mxu0 %v5271
        %5305 = vmatprep.subr.bf16.mxu0 0
        %5306 = vmatpush1.bf16.msra.mxu0 %v5272
        %5307 = vmatprep.subr.bf16.mxu0 0
        %5308 = vmatpush1.bf16.msra.mxu0 %v5273
        %5309 = vmatprep.subr.bf16.mxu0 0
        %5310 = vmatpush1.bf16.msra.mxu0 %v5274
        %5311 = vmatprep.subr.bf16.mxu0 0
        %5312 = vmatpush1.bf16.msra.mxu0 %v5275
        %5313 = vmatprep.subr.bf16.mxu0 0
        %5314 = vmatpush1.bf16.msra.mxu0 %v5276
        %5315 = vmatprep.subr.bf16.mxu0 0
        %5316 = vmatpush1.bf16.msra.mxu0 %v5277
        %5317 = vmatprep.subr.bf16.mxu0 0
        %5318 = vmatpush1.bf16.msra.mxu0 %v5278
        %5319 = vmatprep.subr.bf16.mxu0 0
        %5320 = vmatpush1.bf16.msra.mxu0 %v5279
        %5321 = vmatprep.subr.bf16.mxu0 0
        %5322 = vmatpush1.bf16.msra.mxu0 %v5280
        %5323 = vmatprep.subr.bf16.mxu0 0
        %5324 = vmatpush1.bf16.msra.mxu0 %v5281
        %5325 = vmatprep.subr.bf16.mxu0 0
        %5326 = vmatpush1.bf16.msra.mxu0 %v5282
        %5327 = vmatprep.subr.bf16.mxu0 0
        %5328 = vmatpush1.bf16.msra.mxu0 %v5283
        %5329 = vmatprep.subr.bf16.mxu0 0
        %5330 = vmatpush1.bf16.msra.mxu0 %v5284
        %5331 = vmatprep.subr.bf16.mxu0 0
        %5332 = vmatpush1.bf16.msra.mxu0 %v5285
        %5333 = vmatprep.subr.bf16.mxu0 0
        %5334 = vmatpush1.bf16.msra.mxu0 %v5286
        %5335 = vmatprep.mubr.bf16.mxu0 %v5167
        %5336 = vmatmul.mubr.bf16.gmra.mrb[0].mxu0 %v5166
        %v5337 = vpop.f32.mrb[0].mxu0
        %v5338 = vadd.f32 %v5205, %v5337
        %v5339 = vpop.f32.mrb[0].mxu0
        %v5340 = vpop.f32.mrb[0].mxu0
        %v5341 = vadd.f32 %v5205, %v5340
        %v5342 = vpop.f32.mrb[0].mxu0
        %5343 = vdwg.mxu0
        %v5344 = vadd.f32 %v5338, %v5008
        %v5345 = vadd.f32 %v5341, %v5009
        %v5346 = vld [vmem:[%s20] sm:$0x1]
        %v5347 = vld [vmem:[%s21] sm:$0x1]
        %5348 = vadd.xlane.f32.xlu0 %v5344
        %v5349 = vpop.xlane.xlu0 %5348
        %5350 = vadd.xlane.f32.xlu0 %v5345
        %v5351 = vpop.xlane.xlu0 %5350
        %v5352 = vmul.f32 %v5349, %v2881
        %v5353 = vmul.f32 %v5351, %v2881
        %v5354 = vsub.f32 %v5344, %v5352
        %v5355 = vsub.f32 %v5345, %v5353
        %v5356 = vmul.f32 %v5354, %v5354
        %v5357 = vmul.f32 %v5355, %v5355
        %5358 = vadd.xlane.f32.xlu0 %v5356
        %v5359 = vpop.xlane.xlu0 %5358
        %5360 = vadd.xlane.f32.xlu0 %v5357
        %v5361 = vpop.xlane.xlu0 %5360
        %v5362 = vmul.f32 %v5359, %v2881
        %v5363 = vmul.f32 %v5361, %v2881
        %v5364 = vadd.f32 %v5362, 1e-05
        %v5365 = vadd.f32 %v5363, 1e-05
        %v5366 = vrsqrt.pop %v5364
        %v5367 = vmul.f32 %v5364, %v5366
        %vm5368 = vcmp.eq.f32.partialorder %v5364, inf
        %v5369 = vsel %vm5368, %v5364, %v5367
        %vm5370 = vcmp.eq.f32.partialorder %v5364, 0.0
        %v5371 = vand.u32 %v5364, 2147483648
        %v5372 = vsel %vm5370, %v5371, %v5369
        %v5373 = vrsqrt.pop %v5365
        %v5374 = vmul.f32 %v5365, %v5373
        %vm5375 = vcmp.eq.f32.partialorder %v5365, inf
        %v5376 = vsel %vm5375, %v5365, %v5374
        %vm5377 = vcmp.eq.f32.partialorder %v5365, 0.0
        %v5378 = vand.u32 %v5365, 2147483648
        %v5379 = vsel %vm5377, %v5378, %v5376
        %v5380 = vrcp.pop %v5372
        %v5381 = vmul.f32 %v5354, %v5380
        %v5382 = vrcp.pop %v5379
        %v5383 = vmul.f32 %v5355, %v5382
        %v5385 = vlaneseq
        %v5386 = vshrl.u32 %v5385, 7
        %v5387 = vsub.s32 0, %v5386
        %v5388 = vrot.slane %v5346, %v5387
        %v5390 = vmul.f32 %v5388, %v5381
        %v5391 = vmul.f32 %v5388, %v5383
        %v5393 = vlaneseq
        %v5394 = vshrl.u32 %v5393, 7
        %v5395 = vsub.s32 0, %v5394
        %v5396 = vrot.slane %v5347, %v5395
        %v5398 = vadd.f32 %v5390, %v5396
        %v5399 = vadd.f32 %v5391, %v5396
        %5400 = vst [vmem:[%s842] sm:$0xff] %v5398
        %5401 = vst [vmem:[%s842 + $0x8] sm:$0xff] %v5399
        %s5402 = sand.u32 %s525, 1
        %s5403 = scalar_lea.sflag [#allocation4], %s5402
        %s5404 = sand.u32 %s525, 1
        %s5405 = smul.addr %s5404, 16
        %s5406 = scalar_lea.vmem [#allocation17], %s5405
        // Predicated region
        $region145: #{tpu_custom_call.1} parent=107 // pred_check
          %p5407 = pneg %p535
        $region146: #{tpu_custom_call.1} parent=107 // pred_check_branch
          %5409 = sbr.rel (%p5407) target = $region148
        $region147: #{tpu_custom_call.1} parent=107 // pred_region
          %s5411 = ssub.s32 256, 256
          %5412 = vsyncadd %s5403, %s5411
          %s5413 = smul.addr %s45, 2
          %s5414 = smul.addr %s5413, 128
          %s5415 = scalar_lea.hbm %s22, %s5414
          %s5416 = sshll.u32 %s5406, 4
          %s5417 = int_to_ptr.vmem [resolvable:$true] %s5416
          %5422 = dma.vmem_to_hbm [thread:$0]  %s5417, 256, %s5415, %s5403, 128, 128, 8
        $region148: #{tpu_custom_call.1} parent=107 // pred_fallthru
          _
      $region108: #{tpu_custom_call.1} parent=5 // pred_fallthru
        _
      %p5423 = scmp.le.s32.totalorder 2, %s40
      // Predicated region
      $region149: #{tpu_custom_call.1} parent=5 // pred_check
        %p5424 = pneg %p5423
      $region150: #{tpu_custom_call.1} parent=5 // pred_check_branch
        %5426 = sbr.rel (%p5424) target = $region152
      $region151: #{tpu_custom_call.1} parent=5 // pred_region
        %s5427 = ssub.s32 %s40, 2
        // Predicated region
        $region153: #{tpu_custom_call.1} parent=151 // pred_check
          %p5428 = pneg %p541
        $region154: #{tpu_custom_call.1} parent=151 // pred_check_branch
          %5430 = sbr.rel (%p5428) target = $region156
        $region155: #{tpu_custom_call.1} parent=151 // pred_region
          %s5431 = sand.u32 %s526, 1
          %s5432 = scalar_lea.sflag [#allocation4], %s5431
          %s5433 = sand.u32 %s526, 1
          %s5434 = smul.addr %s5433, 16
          %s5435 = scalar_lea.vmem [#allocation17], %s5434
          %5436 = dma.done %s5432, 256
        $region156: #{tpu_custom_call.1} parent=151 // pred_fallthru
          _
      $region152: #{tpu_custom_call.1} parent=5 // pred_fallthru
        _
    $region6: #{tpu_custom_call.1} parent=1 // loop_footer
      %s44 = sadd.s32 1, %s40
    $region7: #{tpu_custom_call.1} parent=1 // loop_footer_branch
      %39 = sbr.rel target = $region3
    $region8: #{tpu_custom_call.1} parent=1 // loop_exit
      _
    %5437 = vsyncpa [#allocation3], 1
    %s5438 = scalar_lea.sflag [#allocation3], 1
    %5439 = vsyncpa %s5438, 1
    %5440 = vsyncpa [#allocation6], 1
    %s5441 = scalar_lea.sflag [#allocation6], 1
    %5442 = vsyncpa %s5441, 1
    %5443 = vsyncpa [#allocation9], 1
    %5444 = vsyncpa [#allocation12], 1
    %5445 = vsyncpa [#allocation15], 1
    %5446 = vsyncpa [#allocation4], 1
    %s5447 = scalar_lea.sflag [#allocation4], 1
    %5448 = vsyncpa %s5447, 1

</llo_original>
